<compile_context>
chip_gen: v5e
topology: v5e:2x2
jax: 0.10.0
libtpu: 0.0.40
codegen_flags: <defaults>
</compile_context>

<pallas_src>
import functools

import jax
import jax.numpy as jnp
from jax.experimental import pallas as pl
from jax.experimental.pallas import tpu as pltpu

_VMEM_LIMIT = 32 * 1024 * 1024


def _num_tensorcores():
    """Best-effort TensorCore count of device 0 (v5e/v6e: 1, v7x: 2)."""
    try:
        d = jax.devices()[0]
        n = getattr(d, "num_cores", None)
        if n:
            return max(1, int(n))
        if "v7" in str(getattr(d, "device_kind", "")).lower():
            return 2
    except Exception:
        pass
    return 1


def _pick_batch_tile(batch, n_cores):
    """One batch tile per TensorCore; more tiles only add sequential grid steps."""
    if n_cores > 1 and batch % n_cores == 0:
        bt = batch // n_cores
        if bt == batch or bt % 8 == 0:
            return bt
    return batch


# ----------------------------------------------------------------------------
# Kernel A: hoisted LSTM input projection  gates_x = x_flat @ W_ih^T + b
# ----------------------------------------------------------------------------
def input_proj_kernel(x_ref, w_ref, b_ref, out_ref):
    # x_ref: (tm, K) bf16   w_ref: (K, N) bf16   b_ref: (1, N) f32
    out_ref[...] = (jnp.dot(x_ref[...], w_ref[...],
                            preferred_element_type=jnp.float32)
                    + b_ref[...])


def run_input_proj(x_flat, w_t_bf16, b_row):
    M, K = x_flat.shape
    N = w_t_bf16.shape[1]
    # Single lane-dense N block (few tiles at these sizes); tile M by the
    # largest multiple-of-8 divisor, falling back to one full-M block.
    tm = M
    for cand in (512, 256, 128, 64, 32, 16, 8):
        if M % cand == 0:
            tm = cand
            break
    return pl.pallas_call(
        input_proj_kernel,
        out_shape=jax.ShapeDtypeStruct((M, N), jnp.float32),
        grid=(M // tm,),
        in_specs=[pl.BlockSpec((tm, K), lambda i: (i, 0)),
                  pl.BlockSpec((K, N), lambda i: (0, 0)),
                  pl.BlockSpec((1, N), lambda i: (0, 0))],
        out_specs=pl.BlockSpec((tm, N), lambda i: (i, 0)),
        compiler_params=pltpu.CompilerParams(
            dimension_semantics=("parallel",),
            vmem_limit_bytes=_VMEM_LIMIT),
    )(x_flat, w_t_bf16, b_row)


# ----------------------------------------------------------------------------
# Kernel B: LSTM recurrence (PyTorch gate order i, f, g, o)
#   grid = (batch tiles [parallel],); the whole time loop runs inside the
#   kernel (statically unrolled: L is short and fixed).
# ----------------------------------------------------------------------------
def lstm_kernel(lens_ref, gx_ref, w_hh_ref, h_out_ref, *, seq_len, hidden_dim):
    # lens_ref: (Bt, 1) int32   gx_ref: (Bt, L, 4H) f32 (x-proj + combined bias)
    # w_hh_ref: (H, 4H) bf16    h_out_ref: (Bt, L, H) f32
    H = hidden_dim
    Bt = gx_ref.shape[0]
    lens = lens_ref[...]                                     # (Bt, 1) int32
    h = jnp.zeros((Bt, H), jnp.float32)
    c = jnp.zeros((Bt, H), jnp.float32)

    def sig(z):
        # tanh form of sigmoid: one EUP push per gate instead of exp + recip
        return 0.5 * jnp.tanh(0.5 * z) + 0.5

    # Short fixed L -> full static unroll. For long sequences this should
    # become a time-chunked lax.fori_loop with the chunk sized to scoped VMEM
    # (v7x has only 64 MiB physical VMEM, re-derive the chunk there).
    for t in range(seq_len):
        gx_t = gx_ref[:, t:t + 1, :][:, 0, :]                # (Bt, 4H)
        gates = gx_t + jnp.dot(h.astype(jnp.bfloat16), w_hh_ref[...],
                               preferred_element_type=jnp.float32)
        i_g = sig(gates[:, 0 * H:1 * H])
        f_g = sig(gates[:, 1 * H:2 * H])
        g_g = jnp.tanh(gates[:, 2 * H:3 * H])
        o_g = sig(gates[:, 3 * H:4 * H])
        c = f_g * c + i_g * g_g
        h = o_g * jnp.tanh(c)
        # pad_packed_sequence semantics: exposed h is zero past each row's len
        mask_t = (lens > t).astype(jnp.float32)              # (Bt, 1)
        h_out_ref[:, t:t + 1, :] = (h * mask_t)[:, None, :]


def run_lstm(gates_x, lens_b1, w_hh_t_bf16):
    B, L, G = gates_x.shape
    H = w_hh_t_bf16.shape[0]
    Bt = _pick_batch_tile(B, _num_tensorcores())
    kernel = functools.partial(lstm_kernel, seq_len=L, hidden_dim=H)
    return pl.pallas_call(
        kernel,
        out_shape=jax.ShapeDtypeStruct((B, L, H), jnp.float32),
        grid=(B // Bt,),
        in_specs=[pl.BlockSpec((Bt, 1), lambda bb: (bb, 0)),
                  pl.BlockSpec((Bt, L, G), lambda bb: (bb, 0, 0)),
                  pl.BlockSpec((H, G), lambda bb: (0, 0))],
        out_specs=pl.BlockSpec((Bt, L, H), lambda bb: (bb, 0, 0)),
        compiler_params=pltpu.CompilerParams(
            dimension_semantics=("parallel",),
            vmem_limit_bytes=_VMEM_LIMIT),
    )(lens_b1, gates_x, w_hh_t_bf16)


# ----------------------------------------------------------------------------
# Kernel C: folded NoQueryAttention + weighted sum + dense head, batched rows
#   grid = (batch tiles [parallel],)
# ----------------------------------------------------------------------------
def attn_dense_kernel(h_ref, v_ref, rb_ref, wd_ref, bd_ref, out_ref):
    # h_ref: (Bb, L, H) f32   v_ref: (1, 1, H) f32   rb_ref: (Bb, 1) f32
    # wd_ref: (H, Ppad) f32   bd_ref: (1, Ppad) f32  out_ref: (Bb, Ppad) f32
    h = h_ref[...]                                            # (Bb, L, H)
    # folded bi_linear score: logit[b,l] = h[b,l] . v_h + row_const[b]
    logits = jnp.sum(h * v_ref[...], axis=-1) + rb_ref[...]   # (Bb, L)
    m = jnp.max(logits, axis=-1, keepdims=True)
    e = jnp.exp(logits - m)
    s = jnp.sum(e, axis=-1, keepdims=True)
    score = e * pl.reciprocal(s, approx=False)                # exact softmax
    ctx = jnp.sum(score[:, :, None] * h, axis=1)              # (Bb, H)
    out_ref[...] = (jnp.dot(ctx, wd_ref[...],
                            preferred_element_type=jnp.float32)
                    + bd_ref[...])                            # (Bb, Ppad)


def run_attn_dense(h_blh, v_row, row_bias, wd_pad, bd_pad):
    B, L, H = h_blh.shape
    Ppad = wd_pad.shape[1]
    Bb = _pick_batch_tile(B, _num_tensorcores())
    return pl.pallas_call(
        attn_dense_kernel,
        out_shape=jax.ShapeDtypeStruct((B, Ppad), jnp.float32),
        grid=(B // Bb,),
        in_specs=[pl.BlockSpec((Bb, L, H), lambda bb: (bb, 0, 0)),
                  pl.BlockSpec((1, 1, H), lambda bb: (0, 0, 0)),
                  pl.BlockSpec((Bb, 1), lambda bb: (bb, 0)),
                  pl.BlockSpec((H, Ppad), lambda bb: (0, 0)),
                  pl.BlockSpec((1, Ppad), lambda bb: (0, 0))],
        out_specs=pl.BlockSpec((Bb, Ppad), lambda bb: (bb, 0)),
        compiler_params=pltpu.CompilerParams(
            dimension_semantics=("parallel",),
            vmem_limit_bytes=_VMEM_LIMIT),
    )(h_blh, v_row, row_bias, wd_pad, bd_pad)


# ----------------------------------------------------------------------------
# Full forward pass (glue in plain JAX, hot paths in the Pallas kernels above)
# ----------------------------------------------------------------------------
def atae_lstm_forward(text_idx, aspect_idx, params, *, out_dim):
    emb = params["embedding"]
    B, L = text_idx.shape
    E = emb.shape[1]
    H = params["w_hh_t_bf16"].shape[0]

    x_len = jnp.sum(text_idx != 0, axis=-1).astype(jnp.int32)                # (B,)
    # guard against an all-padding aspect row (reference would produce NaN)
    aspect_len = jnp.maximum(jnp.sum(aspect_idx != 0, axis=-1), 1).astype(jnp.float32)

    # Embedding lookup + SqueezeEmbedding.
    # TODO(synk): torch truncates to the dynamic x_len_max; JAX needs static
    # shapes, so the full max length L is used (padded positions carry zero
    # embeddings, matching pad_packed_sequence output).
    x = jnp.take(emb, text_idx, axis=0)                                      # (B, L, E)
    seq_mask = (jnp.arange(L)[None, :] < x_len[:, None]).astype(jnp.float32)
    x = x * seq_mask[:, :, None]                                             # zero padded rows

    aspect = jnp.take(emb, aspect_idx, axis=0)                               # (B, La, E)
    aspect_pool = jnp.sum(aspect, axis=1) / aspect_len[:, None]              # (B, E)
    aspect_exp = jnp.broadcast_to(aspect_pool[:, None, :], (B, L, E))
    x_cat = jnp.concatenate([aspect_exp, x], axis=-1)                        # (B, L, 2E)

    # ---- Kernel A: hoisted input projection (batch-major, no HBM transpose) ----
    x_flat = x_cat.reshape(B * L, 2 * E).astype(jnp.bfloat16)
    gates_x = run_input_proj(x_flat, params["w_ih_t_bf16"], params["b_lstm"])
    gates_x = gates_x.reshape(B, L, 4 * H)                                   # (B, L, 4H)

    # ---- Kernel B: LSTM recurrence, whole time loop inside the kernel ----
    h = run_lstm(gates_x, x_len[:, None], params["w_hh_t_bf16"])             # (B, L, H)

    # folded NoQueryAttention row constant (input-dependent only via aspect_pool)
    row_bias = (aspect_pool @ params["v_a"] + params["c_attn"])[:, None]     # (B, 1)

    # ---- Kernel C: attention + bmm(score, h) + dense, all rows batched ----
    out_pad = run_attn_dense(h, params["v_h_row"], row_bias,
                             params["wd_pad"], params["bd_pad"])             # (B, Ppad)
    return out_pad[:, :out_dim]                                              # (B, P)


# ----------------------------------------------------------------------------
# Parameter init (PyTorch module shapes) + one-time prep (hoisted constants)
# ----------------------------------------------------------------------------
def init_params(key, V, E, H, P):
    D = H + E
    ks = jax.random.split(key, 13)

    def u(k, shape, scale):
        return jax.random.uniform(k, shape, jnp.float32, -scale, scale)

    s_lstm = float(H) ** -0.5
    s_attn = float(D) ** -0.5
    s_dense = float(H) ** -0.5

    emb = u(ks[0], (V, E), 0.5).at[0].set(0.0)          # row 0 = padding embedding
    return dict(
        embedding=emb,
        w_ih_t=u(ks[1], (2 * E, 4 * H), s_lstm),        # nn.LSTM weight_ih_l0^T
        w_hh_t=u(ks[2], (H, 4 * H), s_lstm),            # nn.LSTM weight_hh_l0^T
        b_ih=u(ks[3], (1, 4 * H), s_lstm),
        b_hh=u(ks[12], (1, 4 * H), s_lstm),
        wk_t=u(ks[4], (D, D), s_attn),                  # attention.w_k^T
        bk=u(ks[5], (1, D), s_attn),
        wq_t=u(ks[6], (D, D), s_attn),                  # attention.w_q^T
        bq=u(ks[7], (1, D), s_attn),
        q=u(ks[8], (1, D), s_attn),                     # NoQueryAttention.q
        bilinear=u(ks[9], (D, D), s_attn),              # bi_linear weight
        wd_t=u(ks[10], (H, P), s_dense),                # dense.weight^T
        bd=u(ks[11], (1, P), s_dense),                  # dense.bias
    )


def prepare_params(raw):
    """One-time prep hoisted out of the per-call forward: fold the bi_linear
    attention, pad the dense head to a lane-dense width, combine LSTM biases
    and pre-cast MXU weights to bf16."""
    H = raw["w_hh_t"].shape[0]
    P = raw["wd_t"].shape[1]
    Ppad = ((P + 127) // 128) * 128

    # logits = (ha @ wk_t + bk) . qw   with  qw = (q @ wq_t + bq) @ bilinear
    #        = h . v_h  +  (aspect_pool . v_a + c)        (ha = [h, aspect])
    qx = raw["q"] @ raw["wq_t"] + raw["bq"]             # (1, D)
    qw = qx @ raw["bilinear"]                           # (1, D)
    v_full = (raw["wk_t"] @ qw.T)[:, 0]                 # (D,)
    c_attn = (raw["bk"] @ qw.T)[0, 0]                   # scalar

    wd_pad = jnp.zeros((H, Ppad), jnp.float32).at[:, :P].set(raw["wd_t"])
    bd_pad = jnp.zeros((1, Ppad), jnp.float32).at[:, :P].set(raw["bd"])

    params = dict(
        embedding=raw["embedding"],
        w_ih_t_bf16=raw["w_ih_t"].astype(jnp.bfloat16),
        w_hh_t_bf16=raw["w_hh_t"].astype(jnp.bfloat16),
        b_lstm=raw["b_ih"] + raw["b_hh"],
        v_h_row=v_full[:H].reshape(1, 1, H),
        v_a=v_full[H:],
        c_attn=c_attn,
        wd_pad=wd_pad,
        bd_pad=bd_pad,
    )
    return params, P


if __name__ == "__main__":
    # Lane-aligned small config: 2E, 4H, H, D all multiples of 128.
    B, L, La = 16, 8, 4           # batch, max text len, max aspect len
    V, E, H, P = 48, 128, 128, 3  # vocab, embed_dim, hidden_dim, polarities_dim

    key = jax.random.PRNGKey(0)
    pkey, tkey, akey = jax.random.split(key, 3)
    raw = init_params(pkey, V, E, H, P)
    params, out_dim = prepare_params(raw)

    # text indices: varying lengths, several rows full length (so x_len_max == L)
    text_idx = jax.random.randint(tkey, (B, L), 1, V, dtype=jnp.int32)
    lens = jnp.array([L - (i % 4) for i in range(B)], jnp.int32)
    text_idx = jnp.where(jnp.arange(L)[None, :] < lens[:, None], text_idx, 0)

    # aspect indices: lengths cycling 1..La
    aspect_idx = jax.random.randint(akey, (B, La), 1, V, dtype=jnp.int32)
    a_lens = jnp.array([1 + (i % La) for i in range(B)], jnp.int32)
    aspect_idx = jnp.where(jnp.arange(La)[None, :] < a_lens[:, None], aspect_idx, 0)

    fwd = jax.jit(functools.partial(atae_lstm_forward, out_dim=out_dim))
    out = fwd(text_idx, aspect_idx, params)
    out = jax.block_until_ready(out)
    assert out.shape == (B, P) and out.dtype == jnp.float32
    assert bool(jnp.all(jnp.isfinite(out)))
    print("KERNEL_OK")
</pallas_src>

<mosaic_0001>
module attributes {stable_mosaic.version = 11 : i64} {
  func.func @input_proj_kernel(%arg0: i32, %arg1: memref<128x256xbf16, #tpu.memory_space<vmem>>, %arg2: memref<256x512xbf16, #tpu.memory_space<vmem>>, %arg3: memref<1x512xf32, #tpu.memory_space<vmem>>, %arg4: memref<128x512xf32, #tpu.memory_space<vmem>>) attributes {dimension_semantics = [#tpu.dimension_semantics<parallel>], iteration_bounds = array<i64: 1>, scalar_prefetch = 0 : i64, scratch_operands = 0 : i64, tpu.core_type = #tpu.core_type<tc>, window_params = [{transform_indices = @transform_0, window_bounds = array<i64: 128, 256>}, {pipeline_mode = #tpu.pipeline_mode<synchronous>, transform_indices = @transform_1, window_bounds = array<i64: 256, 512>}, {pipeline_mode = #tpu.pipeline_mode<synchronous>, transform_indices = @transform_2, window_bounds = array<i64: 1, 512>}, {transform_indices = @transform_3, window_bounds = array<i64: 128, 512>}]} {
    %c0 = arith.constant 0 : index
    %c0_0 = arith.constant 0 : index
    %0 = vector.load %arg1[%c0, %c0_0] : memref<128x256xbf16, #tpu.memory_space<vmem>>, vector<128x256xbf16>
    %c0_1 = arith.constant 0 : index
    %c0_2 = arith.constant 0 : index
    %1 = vector.load %arg2[%c0_1, %c0_2] : memref<256x512xbf16, #tpu.memory_space<vmem>>, vector<256x512xbf16>
    %cst = arith.constant dense<0.000000e+00> : vector<128x512xf32>
    %2 = tpu.matmul %0, %1, %cst {dimension_numbers = #tpu.dot_dimension_numbers<[1], [0], [0], [1], [0, 0, 1, 1], [], []>} : vector<128x256xbf16>, vector<256x512xbf16>, vector<128x512xf32> -> vector<128x512xf32>
    %c0_3 = arith.constant 0 : index
    %c0_4 = arith.constant 0 : index
    %3 = vector.load %arg3[%c0_3, %c0_4] : memref<1x512xf32, #tpu.memory_space<vmem>>, vector<1x512xf32>
    %4 = vector.broadcast %3 : vector<1x512xf32> to vector<128x512xf32>
    %5 = arith.addf %2, %4 : vector<128x512xf32>
    %c0_5 = arith.constant 0 : index
    %c0_6 = arith.constant 0 : index
    %6 = vector.load %arg4[%c0_5, %c0_6] : memref<128x512xf32, #tpu.memory_space<vmem>>, vector<128x512xf32>
    tpu.vector_store %arg4[%c0_5, %c0_6], %5 {strides = array<i32>} : memref<128x512xf32, #tpu.memory_space<vmem>>, vector<128x512xf32>,
    return
  }
  func.func @transform_0(%arg0: i32) -> (i32, i32) {
    %c0_i32 = arith.constant 0 : i32
    %c0_i32_0 = arith.constant 0 : i32
    return %arg0, %c0_i32 : i32, i32
  }
  func.func @transform_1(%arg0: i32) -> (i32, i32) {
    %c0_i32 = arith.constant 0 : i32
    %c0_i32_0 = arith.constant 0 : i32
    %c0_i32_1 = arith.constant 0 : i32
    return %c0_i32, %c0_i32_0 : i32, i32
  }
  func.func @transform_2(%arg0: i32) -> (i32, i32) {
    %c0_i32 = arith.constant 0 : i32
    %c0_i32_0 = arith.constant 0 : i32
    %c0_i32_1 = arith.constant 0 : i32
    return %c0_i32, %c0_i32_0 : i32, i32
  }
  func.func @transform_3(%arg0: i32) -> (i32, i32) {
    %c0_i32 = arith.constant 0 : i32
    %c0_i32_0 = arith.constant 0 : i32
    return %arg0, %c0_i32 : i32, i32
  }
}

module attributes {stable_mosaic.version = 11 : i64} {
  func.func @attn_dense_kernel(%arg0: i32, %arg1: memref<16x8x128xf32, #tpu.memory_space<vmem>>, %arg2: memref<1x1x128xf32, #tpu.memory_space<vmem>>, %arg3: memref<16x1xf32, #tpu.memory_space<vmem>>, %arg4: memref<128x128xf32, #tpu.memory_space<vmem>>, %arg5: memref<1x128xf32, #tpu.memory_space<vmem>>, %arg6: memref<16x128xf32, #tpu.memory_space<vmem>>) attributes {dimension_semantics = [#tpu.dimension_semantics<parallel>], iteration_bounds = array<i64: 1>, scalar_prefetch = 0 : i64, scratch_operands = 0 : i64, tpu.core_type = #tpu.core_type<tc>, window_params = [{transform_indices = @transform_0, window_bounds = array<i64: 16, 8, 128>}, {pipeline_mode = #tpu.pipeline_mode<synchronous>, transform_indices = @transform_1, window_bounds = array<i64: 1, 1, 128>}, {transform_indices = @transform_2, window_bounds = array<i64: 16, 1>}, {pipeline_mode = #tpu.pipeline_mode<synchronous>, transform_indices = @transform_3, window_bounds = array<i64: 128, 128>}, {pipeline_mode = #tpu.pipeline_mode<synchronous>, transform_indices = @transform_4, window_bounds = array<i64: 1, 128>}, {transform_indices = @transform_5, window_bounds = array<i64: 16, 128>}]} {
    %c0 = arith.constant 0 : index
    %c0_0 = arith.constant 0 : index
    %c0_1 = arith.constant 0 : index
    %0 = vector.load %arg1[%c0, %c0_0, %c0_1] : memref<16x8x128xf32, #tpu.memory_space<vmem>>, vector<16x8x128xf32>
    %c0_2 = arith.constant 0 : index
    %c0_3 = arith.constant 0 : index
    %c0_4 = arith.constant 0 : index
    %1 = vector.load %arg2[%c0_2, %c0_3, %c0_4] : memref<1x1x128xf32, #tpu.memory_space<vmem>>, vector<1x1x128xf32>
    %2 = vector.broadcast %1 : vector<1x1x128xf32> to vector<16x8x128xf32>
    %3 = arith.mulf %0, %2 : vector<16x8x128xf32>
    %cst = arith.constant dense<0.000000e+00> : vector<16x8xf32>
    %4 = vector.multi_reduction <add>, %3, %cst [2] : vector<16x8x128xf32> to vector<16x8xf32>
    %c0_5 = arith.constant 0 : index
    %c0_6 = arith.constant 0 : index
    %5 = vector.load %arg3[%c0_5, %c0_6] : memref<16x1xf32, #tpu.memory_space<vmem>>, vector<16x1xf32>
    %6 = vector.broadcast %5 : vector<16x1xf32> to vector<16x8xf32>
    %7 = arith.addf %4, %6 : vector<16x8xf32>
    %cst_7 = arith.constant dense<0xFF800000> : vector<16xf32>
    %8 = vector.multi_reduction <maximumf>, %7, %cst_7 [1] : vector<16x8xf32> to vector<16xf32>
    %9 = vector.shape_cast %8 : vector<16xf32> to vector<16x1xf32>
    %10 = vector.broadcast %9 : vector<16x1xf32> to vector<16x8xf32>
    %11 = arith.subf %7, %10 : vector<16x8xf32>
    %12 = math.exp %11 : vector<16x8xf32>
    %cst_8 = arith.constant dense<0.000000e+00> : vector<16xf32>
    %13 = vector.multi_reduction <add>, %12, %cst_8 [1] : vector<16x8xf32> to vector<16xf32>
    %14 = vector.shape_cast %13 : vector<16xf32> to vector<16x1xf32>
    %15 = tpu.reciprocal %14 : vector<16x1xf32> -> vector<16x1xf32>
    %16 = vector.broadcast %15 : vector<16x1xf32> to vector<16x8xf32>
    %17 = arith.mulf %12, %16 : vector<16x8xf32>
    %18 = vector.shape_cast %17 : vector<16x8xf32> to vector<16x8x1xf32>
    %19 = vector.broadcast %18 : vector<16x8x1xf32> to vector<16x8x128xf32>
    %20 = arith.mulf %19, %0 : vector<16x8x128xf32>
    %cst_9 = arith.constant dense<0.000000e+00> : vector<16x128xf32>
    %21 = vector.multi_reduction <add>, %20, %cst_9 [1] : vector<16x8x128xf32> to vector<16x128xf32>
    %c0_10 = arith.constant 0 : index
    %c0_11 = arith.constant 0 : index
    %22 = vector.load %arg4[%c0_10, %c0_11] : memref<128x128xf32, #tpu.memory_space<vmem>>, vector<128x128xf32>
    %cst_12 = arith.constant dense<0.000000e+00> : vector<16x128xf32>
    %23 = tpu.matmul %21, %22, %cst_12 {dimension_numbers = #tpu.dot_dimension_numbers<[1], [0], [0], [1], [0, 0, 1, 1], [], []>} : vector<16x128xf32>, vector<128x128xf32>, vector<16x128xf32> -> vector<16x128xf32>
    %c0_13 = arith.constant 0 : index
    %c0_14 = arith.constant 0 : index
    %24 = vector.load %arg5[%c0_13, %c0_14] : memref<1x128xf32, #tpu.memory_space<vmem>>, vector<1x128xf32>
    %25 = vector.broadcast %24 : vector<1x128xf32> to vector<16x128xf32>
    %26 = arith.addf %23, %25 : vector<16x128xf32>
    %c0_15 = arith.constant 0 : index
    %c0_16 = arith.constant 0 : index
    %27 = vector.load %arg6[%c0_15, %c0_16] : memref<16x128xf32, #tpu.memory_space<vmem>>, vector<16x128xf32>
    tpu.vector_store %arg6[%c0_15, %c0_16], %26 {strides = array<i32>} : memref<16x128xf32, #tpu.memory_space<vmem>>, vector<16x128xf32>,
    return
  }
  func.func @transform_0(%arg0: i32) -> (i32, i32, i32) {
    %c0_i32 = arith.constant 0 : i32
    %c0_i32_0 = arith.constant 0 : i32
    %c0_i32_1 = arith.constant 0 : i32
    return %arg0, %c0_i32, %c0_i32_0 : i32, i32, i32
  }
  func.func @transform_1(%arg0: i32) -> (i32, i32, i32) {
    %c0_i32 = arith.constant 0 : i32
    %c0_i32_0 = arith.constant 0 : i32
    %c0_i32_1 = arith.constant 0 : i32
    %c0_i32_2 = arith.constant 0 : i32
    return %c0_i32, %c0_i32_0, %c0_i32_1 : i32, i32, i32
  }
  func.func @transform_2(%arg0: i32) -> (i32, i32) {
    %c0_i32 = arith.constant 0 : i32
    %c0_i32_0 = arith.constant 0 : i32
    return %arg0, %c0_i32 : i32, i32
  }
  func.func @transform_3(%arg0: i32) -> (i32, i32) {
    %c0_i32 = arith.constant 0 : i32
    %c0_i32_0 = arith.constant 0 : i32
    %c0_i32_1 = arith.constant 0 : i32
    return %c0_i32, %c0_i32_0 : i32, i32
  }
  func.func @transform_4(%arg0: i32) -> (i32, i32) {
    %c0_i32 = arith.constant 0 : i32
    %c0_i32_0 = arith.constant 0 : i32
    %c0_i32_1 = arith.constant 0 : i32
    return %c0_i32, %c0_i32_0 : i32, i32
  }
  func.func @transform_5(%arg0: i32) -> (i32, i32) {
    %c0_i32 = arith.constant 0 : i32
    %c0_i32_0 = arith.constant 0 : i32
    return %arg0, %c0_i32 : i32, i32
  }
}

module attributes {stable_mosaic.version = 11 : i64} {
  func.func @lstm_kernel(%arg0: i32, %arg1: memref<16x1xi32, #tpu.memory_space<vmem>>, %arg2: memref<16x8x512xf32, #tpu.memory_space<vmem>>, %arg3: memref<128x512xbf16, #tpu.memory_space<vmem>>, %arg4: memref<16x8x128xf32, #tpu.memory_space<vmem>>) attributes {dimension_semantics = [#tpu.dimension_semantics<parallel>], iteration_bounds = array<i64: 1>, scalar_prefetch = 0 : i64, scratch_operands = 0 : i64, tpu.core_type = #tpu.core_type<tc>, window_params = [{transform_indices = @transform_0, window_bounds = array<i64: 16, 1>}, {transform_indices = @transform_1, window_bounds = array<i64: 16, 8, 512>}, {pipeline_mode = #tpu.pipeline_mode<synchronous>, transform_indices = @transform_2, window_bounds = array<i64: 128, 512>}, {transform_indices = @transform_3, window_bounds = array<i64: 16, 8, 128>}]} {
    %c0 = arith.constant 0 : index
    %c0_0 = arith.constant 0 : index
    %0 = vector.load %arg1[%c0, %c0_0] : memref<16x1xi32, #tpu.memory_space<vmem>>, vector<16x1xi32>
    %cst = arith.constant 0.000000e+00 : f32
    %1 = vector.broadcast %cst : f32 to vector<16x128xf32>
    %cst_1 = arith.constant 0.000000e+00 : f32
    %2 = vector.broadcast %cst_1 : f32 to vector<16x128xf32>
    %c0_2 = arith.constant 0 : index
    %c0_3 = arith.constant 0 : index
    %c0_4 = arith.constant 0 : index
    %3 = vector.load %arg2[%c0_2, %c0_3, %c0_4] : memref<16x8x512xf32, #tpu.memory_space<vmem>>, vector<16x1x512xf32>
    %4 = vector.shape_cast %3 : vector<16x1x512xf32> to vector<16x512xf32>
    %5 = arith.truncf %1 : vector<16x128xf32> to vector<16x128xbf16>
    %c0_5 = arith.constant 0 : index
    %c0_6 = arith.constant 0 : index
    %6 = vector.load %arg3[%c0_5, %c0_6] : memref<128x512xbf16, #tpu.memory_space<vmem>>, vector<128x512xbf16>
    %cst_7 = arith.constant dense<0.000000e+00> : vector<16x512xf32>
    %7 = tpu.matmul %5, %6, %cst_7 {dimension_numbers = #tpu.dot_dimension_numbers<[1], [0], [0], [1], [0, 0, 1, 1], [], []>} : vector<16x128xbf16>, vector<128x512xbf16>, vector<16x512xf32> -> vector<16x512xf32>
    %8 = arith.addf %4, %7 : vector<16x512xf32>
    %9 = vector.extract_strided_slice %8 {offsets = [0, 0], sizes = [16, 128], strides = [1, 1]} : vector<16x512xf32> to vector<16x128xf32>
    %cst_8 = arith.constant 5.000000e-01 : f32
    %10 = vector.broadcast %cst_8 : f32 to vector<16x128xf32>
    %11 = arith.mulf %10, %9 : vector<16x128xf32>
    %12 = math.tanh %11 : vector<16x128xf32>
    %cst_9 = arith.constant 5.000000e-01 : f32
    %13 = vector.broadcast %cst_9 : f32 to vector<16x128xf32>
    %14 = arith.mulf %13, %12 : vector<16x128xf32>
    %cst_10 = arith.constant 5.000000e-01 : f32
    %15 = vector.broadcast %cst_10 : f32 to vector<16x128xf32>
    %16 = arith.addf %14, %15 : vector<16x128xf32>
    %17 = vector.extract_strided_slice %8 {offsets = [0, 128], sizes = [16, 128], strides = [1, 1]} : vector<16x512xf32> to vector<16x128xf32>
    %cst_11 = arith.constant 5.000000e-01 : f32
    %18 = vector.broadcast %cst_11 : f32 to vector<16x128xf32>
    %19 = arith.mulf %18, %17 : vector<16x128xf32>
    %20 = math.tanh %19 : vector<16x128xf32>
    %cst_12 = arith.constant 5.000000e-01 : f32
    %21 = vector.broadcast %cst_12 : f32 to vector<16x128xf32>
    %22 = arith.mulf %21, %20 : vector<16x128xf32>
    %cst_13 = arith.constant 5.000000e-01 : f32
    %23 = vector.broadcast %cst_13 : f32 to vector<16x128xf32>
    %24 = arith.addf %22, %23 : vector<16x128xf32>
    %25 = vector.extract_strided_slice %8 {offsets = [0, 256], sizes = [16, 128], strides = [1, 1]} : vector<16x512xf32> to vector<16x128xf32>
    %26 = math.tanh %25 : vector<16x128xf32>
    %27 = vector.extract_strided_slice %8 {offsets = [0, 384], sizes = [16, 128], strides = [1, 1]} : vector<16x512xf32> to vector<16x128xf32>
    %cst_14 = arith.constant 5.000000e-01 : f32
    %28 = vector.broadcast %cst_14 : f32 to vector<16x128xf32>
    %29 = arith.mulf %28, %27 : vector<16x128xf32>
    %30 = math.tanh %29 : vector<16x128xf32>
    %cst_15 = arith.constant 5.000000e-01 : f32
    %31 = vector.broadcast %cst_15 : f32 to vector<16x128xf32>
    %32 = arith.mulf %31, %30 : vector<16x128xf32>
    %cst_16 = arith.constant 5.000000e-01 : f32
    %33 = vector.broadcast %cst_16 : f32 to vector<16x128xf32>
    %34 = arith.addf %32, %33 : vector<16x128xf32>
    %35 = arith.mulf %24, %2 : vector<16x128xf32>
    %36 = arith.mulf %16, %26 : vector<16x128xf32>
    %37 = arith.addf %35, %36 : vector<16x128xf32>
    %38 = math.tanh %37 : vector<16x128xf32>
    %39 = arith.mulf %34, %38 : vector<16x128xf32>
    %c0_i32 = arith.constant 0 : i32
    %40 = vector.broadcast %c0_i32 : i32 to vector<16x1xi32>
    %41 = arith.cmpi sgt, %0, %40 : vector<16x1xi32>
    %42 = arith.extui %41 : vector<16x1xi1> to vector<16x1xi32>
    %43 = arith.sitofp %42 : vector<16x1xi32> to vector<16x1xf32>
    %44 = vector.broadcast %43 : vector<16x1xf32> to vector<16x128xf32>
    %45 = arith.mulf %39, %44 : vector<16x128xf32>
    %46 = vector.shape_cast %45 : vector<16x128xf32> to vector<16x1x128xf32>
    %c0_17 = arith.constant 0 : index
    %c0_18 = arith.constant 0 : index
    %c0_19 = arith.constant 0 : index
    %47 = vector.load %arg4[%c0_17, %c0_18, %c0_19] : memref<16x8x128xf32, #tpu.memory_space<vmem>>, vector<16x1x128xf32>
    tpu.vector_store %arg4[%c0_17, %c0_18, %c0_19], %46 {strides = array<i32>} : memref<16x8x128xf32, #tpu.memory_space<vmem>>, vector<16x1x128xf32>,
    %c0_20 = arith.constant 0 : index
    %c1 = arith.constant 1 : index
    %c0_21 = arith.constant 0 : index
    %48 = vector.load %arg2[%c0_20, %c1, %c0_21] : memref<16x8x512xf32, #tpu.memory_space<vmem>>, vector<16x1x512xf32>
    %49 = vector.shape_cast %48 : vector<16x1x512xf32> to vector<16x512xf32>
    %50 = arith.truncf %39 : vector<16x128xf32> to vector<16x128xbf16>
    %c0_22 = arith.constant 0 : index
    %c0_23 = arith.constant 0 : index
    %51 = vector.load %arg3[%c0_22, %c0_23] : memref<128x512xbf16, #tpu.memory_space<vmem>>, vector<128x512xbf16>
    %cst_24 = arith.constant dense<0.000000e+00> : vector<16x512xf32>
    %52 = tpu.matmul %50, %51, %cst_24 {dimension_numbers = #tpu.dot_dimension_numbers<[1], [0], [0], [1], [0, 0, 1, 1], [], []>} : vector<16x128xbf16>, vector<128x512xbf16>, vector<16x512xf32> -> vector<16x512xf32>
    %53 = arith.addf %49, %52 : vector<16x512xf32>
    %54 = vector.extract_strided_slice %53 {offsets = [0, 0], sizes = [16, 128], strides = [1, 1]} : vector<16x512xf32> to vector<16x128xf32>
    %cst_25 = arith.constant 5.000000e-01 : f32
    %55 = vector.broadcast %cst_25 : f32 to vector<16x128xf32>
    %56 = arith.mulf %55, %54 : vector<16x128xf32>
    %57 = math.tanh %56 : vector<16x128xf32>
    %cst_26 = arith.constant 5.000000e-01 : f32
    %58 = vector.broadcast %cst_26 : f32 to vector<16x128xf32>
    %59 = arith.mulf %58, %57 : vector<16x128xf32>
    %cst_27 = arith.constant 5.000000e-01 : f32
    %60 = vector.broadcast %cst_27 : f32 to vector<16x128xf32>
    %61 = arith.addf %59, %60 : vector<16x128xf32>
    %62 = vector.extract_strided_slice %53 {offsets = [0, 128], sizes = [16, 128], strides = [1, 1]} : vector<16x512xf32> to vector<16x128xf32>
    %cst_28 = arith.constant 5.000000e-01 : f32
    %63 = vector.broadcast %cst_28 : f32 to vector<16x128xf32>
    %64 = arith.mulf %63, %62 : vector<16x128xf32>
    %65 = math.tanh %64 : vector<16x128xf32>
    %cst_29 = arith.constant 5.000000e-01 : f32
    %66 = vector.broadcast %cst_29 : f32 to vector<16x128xf32>
    %67 = arith.mulf %66, %65 : vector<16x128xf32>
    %cst_30 = arith.constant 5.000000e-01 : f32
    %68 = vector.broadcast %cst_30 : f32 to vector<16x128xf32>
    %69 = arith.addf %67, %68 : vector<16x128xf32>
    %70 = vector.extract_strided_slice %53 {offsets = [0, 256], sizes = [16, 128], strides = [1, 1]} : vector<16x512xf32> to vector<16x128xf32>
    %71 = math.tanh %70 : vector<16x128xf32>
    %72 = vector.extract_strided_slice %53 {offsets = [0, 384], sizes = [16, 128], strides = [1, 1]} : vector<16x512xf32> to vector<16x128xf32>
    %cst_31 = arith.constant 5.000000e-01 : f32
    %73 = vector.broadcast %cst_31 : f32 to vector<16x128xf32>
    %74 = arith.mulf %73, %72 : vector<16x128xf32>
    %75 = math.tanh %74 : vector<16x128xf32>
    %cst_32 = arith.constant 5.000000e-01 : f32
    %76 = vector.broadcast %cst_32 : f32 to vector<16x128xf32>
    %77 = arith.mulf %76, %75 : vector<16x128xf32>
    %cst_33 = arith.constant 5.000000e-01 : f32
    %78 = vector.broadcast %cst_33 : f32 to vector<16x128xf32>
    %79 = arith.addf %77, %78 : vector<16x128xf32>
    %80 = arith.mulf %69, %37 : vector<16x128xf32>
    %81 = arith.mulf %61, %71 : vector<16x128xf32>
    %82 = arith.addf %80, %81 : vector<16x128xf32>
    %83 = math.tanh %82 : vector<16x128xf32>
    %84 = arith.mulf %79, %83 : vector<16x128xf32>
    %c1_i32 = arith.constant 1 : i32
    %85 = vector.broadcast %c1_i32 : i32 to vector<16x1xi32>
    %86 = arith.cmpi sgt, %0, %85 : vector<16x1xi32>
    %87 = arith.extui %86 : vector<16x1xi1> to vector<16x1xi32>
    %88 = arith.sitofp %87 : vector<16x1xi32> to vector<16x1xf32>
    %89 = vector.broadcast %88 : vector<16x1xf32> to vector<16x128xf32>
    %90 = arith.mulf %84, %89 : vector<16x128xf32>
    %91 = vector.shape_cast %90 : vector<16x128xf32> to vector<16x1x128xf32>
    %c0_34 = arith.constant 0 : index
    %c1_35 = arith.constant 1 : index
    %c0_36 = arith.constant 0 : index
    %92 = vector.load %arg4[%c0_34, %c1_35, %c0_36] : memref<16x8x128xf32, #tpu.memory_space<vmem>>, vector<16x1x128xf32>
    tpu.vector_store %arg4[%c0_34, %c1_35, %c0_36], %91 {strides = array<i32>} : memref<16x8x128xf32, #tpu.memory_space<vmem>>, vector<16x1x128xf32>,
    %c0_37 = arith.constant 0 : index
    %c2 = arith.constant 2 : index
    %c0_38 = arith.constant 0 : index
    %93 = vector.load %arg2[%c0_37, %c2, %c0_38] : memref<16x8x512xf32, #tpu.memory_space<vmem>>, vector<16x1x512xf32>
    %94 = vector.shape_cast %93 : vector<16x1x512xf32> to vector<16x512xf32>
    %95 = arith.truncf %84 : vector<16x128xf32> to vector<16x128xbf16>
    %c0_39 = arith.constant 0 : index
    %c0_40 = arith.constant 0 : index
    %96 = vector.load %arg3[%c0_39, %c0_40] : memref<128x512xbf16, #tpu.memory_space<vmem>>, vector<128x512xbf16>
    %cst_41 = arith.constant dense<0.000000e+00> : vector<16x512xf32>
    %97 = tpu.matmul %95, %96, %cst_41 {dimension_numbers = #tpu.dot_dimension_numbers<[1], [0], [0], [1], [0, 0, 1, 1], [], []>} : vector<16x128xbf16>, vector<128x512xbf16>, vector<16x512xf32> -> vector<16x512xf32>
    %98 = arith.addf %94, %97 : vector<16x512xf32>
    %99 = vector.extract_strided_slice %98 {offsets = [0, 0], sizes = [16, 128], strides = [1, 1]} : vector<16x512xf32> to vector<16x128xf32>
    %cst_42 = arith.constant 5.000000e-01 : f32
    %100 = vector.broadcast %cst_42 : f32 to vector<16x128xf32>
    %101 = arith.mulf %100, %99 : vector<16x128xf32>
    %102 = math.tanh %101 : vector<16x128xf32>
    %cst_43 = arith.constant 5.000000e-01 : f32
    %103 = vector.broadcast %cst_43 : f32 to vector<16x128xf32>
    %104 = arith.mulf %103, %102 : vector<16x128xf32>
    %cst_44 = arith.constant 5.000000e-01 : f32
    %105 = vector.broadcast %cst_44 : f32 to vector<16x128xf32>
    %106 = arith.addf %104, %105 : vector<16x128xf32>
    %107 = vector.extract_strided_slice %98 {offsets = [0, 128], sizes = [16, 128], strides = [1, 1]} : vector<16x512xf32> to vector<16x128xf32>
    %cst_45 = arith.constant 5.000000e-01 : f32
    %108 = vector.broadcast %cst_45 : f32 to vector<16x128xf32>
    %109 = arith.mulf %108, %107 : vector<16x128xf32>
    %110 = math.tanh %109 : vector<16x128xf32>
    %cst_46 = arith.constant 5.000000e-01 : f32
    %111 = vector.broadcast %cst_46 : f32 to vector<16x128xf32>
    %112 = arith.mulf %111, %110 : vector<16x128xf32>
    %cst_47 = arith.constant 5.000000e-01 : f32
    %113 = vector.broadcast %cst_47 : f32 to vector<16x128xf32>
    %114 = arith.addf %112, %113 : vector<16x128xf32>
    %115 = vector.extract_strided_slice %98 {offsets = [0, 256], sizes = [16, 128], strides = [1, 1]} : vector<16x512xf32> to vector<16x128xf32>
    %116 = math.tanh %115 : vector<16x128xf32>
    %117 = vector.extract_strided_slice %98 {offsets = [0, 384], sizes = [16, 128], strides = [1, 1]} : vector<16x512xf32> to vector<16x128xf32>
    %cst_48 = arith.constant 5.000000e-01 : f32
    %118 = vector.broadcast %cst_48 : f32 to vector<16x128xf32>
    %119 = arith.mulf %118, %117 : vector<16x128xf32>
    %120 = math.tanh %119 : vector<16x128xf32>
    %cst_49 = arith.constant 5.000000e-01 : f32
    %121 = vector.broadcast %cst_49 : f32 to vector<16x128xf32>
    %122 = arith.mulf %121, %120 : vector<16x128xf32>
    %cst_50 = arith.constant 5.000000e-01 : f32
    %123 = vector.broadcast %cst_50 : f32 to vector<16x128xf32>
    %124 = arith.addf %122, %123 : vector<16x128xf32>
    %125 = arith.mulf %114, %82 : vector<16x128xf32>
    %126 = arith.mulf %106, %116 : vector<16x128xf32>
    %127 = arith.addf %125, %126 : vector<16x128xf32>
    %128 = math.tanh %127 : vector<16x128xf32>
    %129 = arith.mulf %124, %128 : vector<16x128xf32>
    %c2_i32 = arith.constant 2 : i32
    %130 = vector.broadcast %c2_i32 : i32 to vector<16x1xi32>
    %131 = arith.cmpi sgt, %0, %130 : vector<16x1xi32>
    %132 = arith.extui %131 : vector<16x1xi1> to vector<16x1xi32>
    %133 = arith.sitofp %132 : vector<16x1xi32> to vector<16x1xf32>
    %134 = vector.broadcast %133 : vector<16x1xf32> to vector<16x128xf32>
    %135 = arith.mulf %129, %134 : vector<16x128xf32>
    %136 = vector.shape_cast %135 : vector<16x128xf32> to vector<16x1x128xf32>
    %c0_51 = arith.constant 0 : index
    %c2_52 = arith.constant 2 : index
    %c0_53 = arith.constant 0 : index
    %137 = vector.load %arg4[%c0_51, %c2_52, %c0_53] : memref<16x8x128xf32, #tpu.memory_space<vmem>>, vector<16x1x128xf32>
    tpu.vector_store %arg4[%c0_51, %c2_52, %c0_53], %136 {strides = array<i32>} : memref<16x8x128xf32, #tpu.memory_space<vmem>>, vector<16x1x128xf32>,
    %c0_54 = arith.constant 0 : index
    %c3 = arith.constant 3 : index
    %c0_55 = arith.constant 0 : index
    %138 = vector.load %arg2[%c0_54, %c3, %c0_55] : memref<16x8x512xf32, #tpu.memory_space<vmem>>, vector<16x1x512xf32>
    %139 = vector.shape_cast %138 : vector<16x1x512xf32> to vector<16x512xf32>
    %140 = arith.truncf %129 : vector<16x128xf32> to vector<16x128xbf16>
    %c0_56 = arith.constant 0 : index
    %c0_57 = arith.constant 0 : index
    %141 = vector.load %arg3[%c0_56, %c0_57] : memref<128x512xbf16, #tpu.memory_space<vmem>>, vector<128x512xbf16>
    %cst_58 = arith.constant dense<0.000000e+00> : vector<16x512xf32>
    %142 = tpu.matmul %140, %141, %cst_58 {dimension_numbers = #tpu.dot_dimension_numbers<[1], [0], [0], [1], [0, 0, 1, 1], [], []>} : vector<16x128xbf16>, vector<128x512xbf16>, vector<16x512xf32> -> vector<16x512xf32>
    %143 = arith.addf %139, %142 : vector<16x512xf32>
    %144 = vector.extract_strided_slice %143 {offsets = [0, 0], sizes = [16, 128], strides = [1, 1]} : vector<16x512xf32> to vector<16x128xf32>
    %cst_59 = arith.constant 5.000000e-01 : f32
    %145 = vector.broadcast %cst_59 : f32 to vector<16x128xf32>
    %146 = arith.mulf %145, %144 : vector<16x128xf32>
    %147 = math.tanh %146 : vector<16x128xf32>
    %cst_60 = arith.constant 5.000000e-01 : f32
    %148 = vector.broadcast %cst_60 : f32 to vector<16x128xf32>
    %149 = arith.mulf %148, %147 : vector<16x128xf32>
    %cst_61 = arith.constant 5.000000e-01 : f32
    %150 = vector.broadcast %cst_61 : f32 to vector<16x128xf32>
    %151 = arith.addf %149, %150 : vector<16x128xf32>
    %152 = vector.extract_strided_slice %143 {offsets = [0, 128], sizes = [16, 128], strides = [1, 1]} : vector<16x512xf32> to vector<16x128xf32>
    %cst_62 = arith.constant 5.000000e-01 : f32
    %153 = vector.broadcast %cst_62 : f32 to vector<16x128xf32>
    %154 = arith.mulf %153, %152 : vector<16x128xf32>
    %155 = math.tanh %154 : vector<16x128xf32>
    %cst_63 = arith.constant 5.000000e-01 : f32
    %156 = vector.broadcast %cst_63 : f32 to vector<16x128xf32>
    %157 = arith.mulf %156, %155 : vector<16x128xf32>
    %cst_64 = arith.constant 5.000000e-01 : f32
    %158 = vector.broadcast %cst_64 : f32 to vector<16x128xf32>
    %159 = arith.addf %157, %158 : vector<16x128xf32>
    %160 = vector.extract_strided_slice %143 {offsets = [0, 256], sizes = [16, 128], strides = [1, 1]} : vector<16x512xf32> to vector<16x128xf32>
    %161 = math.tanh %160 : vector<16x128xf32>
    %162 = vector.extract_strided_slice %143 {offsets = [0, 384], sizes = [16, 128], strides = [1, 1]} : vector<16x512xf32> to vector<16x128xf32>
    %cst_65 = arith.constant 5.000000e-01 : f32
    %163 = vector.broadcast %cst_65 : f32 to vector<16x128xf32>
    %164 = arith.mulf %163, %162 : vector<16x128xf32>
    %165 = math.tanh %164 : vector<16x128xf32>
    %cst_66 = arith.constant 5.000000e-01 : f32
    %166 = vector.broadcast %cst_66 : f32 to vector<16x128xf32>
    %167 = arith.mulf %166, %165 : vector<16x128xf32>
    %cst_67 = arith.constant 5.000000e-01 : f32
    %168 = vector.broadcast %cst_67 : f32 to vector<16x128xf32>
    %169 = arith.addf %167, %168 : vector<16x128xf32>
    %170 = arith.mulf %159, %127 : vector<16x128xf32>
    %171 = arith.mulf %151, %161 : vector<16x128xf32>
    %172 = arith.addf %170, %171 : vector<16x128xf32>
    %173 = math.tanh %172 : vector<16x128xf32>
    %174 = arith.mulf %169, %173 : vector<16x128xf32>
    %c3_i32 = arith.constant 3 : i32
    %175 = vector.broadcast %c3_i32 : i32 to vector<16x1xi32>
    %176 = arith.cmpi sgt, %0, %175 : vector<16x1xi32>
    %177 = arith.extui %176 : vector<16x1xi1> to vector<16x1xi32>
    %178 = arith.sitofp %177 : vector<16x1xi32> to vector<16x1xf32>
    %179 = vector.broadcast %178 : vector<16x1xf32> to vector<16x128xf32>
    %180 = arith.mulf %174, %179 : vector<16x128xf32>
    %181 = vector.shape_cast %180 : vector<16x128xf32> to vector<16x1x128xf32>
    %c0_68 = arith.constant 0 : index
    %c3_69 = arith.constant 3 : index
    %c0_70 = arith.constant 0 : index
    %182 = vector.load %arg4[%c0_68, %c3_69, %c0_70] : memref<16x8x128xf32, #tpu.memory_space<vmem>>, vector<16x1x128xf32>
    tpu.vector_store %arg4[%c0_68, %c3_69, %c0_70], %181 {strides = array<i32>} : memref<16x8x128xf32, #tpu.memory_space<vmem>>, vector<16x1x128xf32>,
    %c0_71 = arith.constant 0 : index
    %c4 = arith.constant 4 : index
    %c0_72 = arith.constant 0 : index
    %183 = vector.load %arg2[%c0_71, %c4, %c0_72] : memref<16x8x512xf32, #tpu.memory_space<vmem>>, vector<16x1x512xf32>
    %184 = vector.shape_cast %183 : vector<16x1x512xf32> to vector<16x512xf32>
    %185 = arith.truncf %174 : vector<16x128xf32> to vector<16x128xbf16>
    %c0_73 = arith.constant 0 : index
    %c0_74 = arith.constant 0 : index
    %186 = vector.load %arg3[%c0_73, %c0_74] : memref<128x512xbf16, #tpu.memory_space<vmem>>, vector<128x512xbf16>
    %cst_75 = arith.constant dense<0.000000e+00> : vector<16x512xf32>
    %187 = tpu.matmul %185, %186, %cst_75 {dimension_numbers = #tpu.dot_dimension_numbers<[1], [0], [0], [1], [0, 0, 1, 1], [], []>} : vector<16x128xbf16>, vector<128x512xbf16>, vector<16x512xf32> -> vector<16x512xf32>
    %188 = arith.addf %184, %187 : vector<16x512xf32>
    %189 = vector.extract_strided_slice %188 {offsets = [0, 0], sizes = [16, 128], strides = [1, 1]} : vector<16x512xf32> to vector<16x128xf32>
    %cst_76 = arith.constant 5.000000e-01 : f32
    %190 = vector.broadcast %cst_76 : f32 to vector<16x128xf32>
    %191 = arith.mulf %190, %189 : vector<16x128xf32>
    %192 = math.tanh %191 : vector<16x128xf32>
    %cst_77 = arith.constant 5.000000e-01 : f32
    %193 = vector.broadcast %cst_77 : f32 to vector<16x128xf32>
    %194 = arith.mulf %193, %192 : vector<16x128xf32>
    %cst_78 = arith.constant 5.000000e-01 : f32
    %195 = vector.broadcast %cst_78 : f32 to vector<16x128xf32>
    %196 = arith.addf %194, %195 : vector<16x128xf32>
    %197 = vector.extract_strided_slice %188 {offsets = [0, 128], sizes = [16, 128], strides = [1, 1]} : vector<16x512xf32> to vector<16x128xf32>
    %cst_79 = arith.constant 5.000000e-01 : f32
    %198 = vector.broadcast %cst_79 : f32 to vector<16x128xf32>
    %199 = arith.mulf %198, %197 : vector<16x128xf32>
    %200 = math.tanh %199 : vector<16x128xf32>
    %cst_80 = arith.constant 5.000000e-01 : f32
    %201 = vector.broadcast %cst_80 : f32 to vector<16x128xf32>
    %202 = arith.mulf %201, %200 : vector<16x128xf32>
    %cst_81 = arith.constant 5.000000e-01 : f32
    %203 = vector.broadcast %cst_81 : f32 to vector<16x128xf32>
    %204 = arith.addf %202, %203 : vector<16x128xf32>
    %205 = vector.extract_strided_slice %188 {offsets = [0, 256], sizes = [16, 128], strides = [1, 1]} : vector<16x512xf32> to vector<16x128xf32>
    %206 = math.tanh %205 : vector<16x128xf32>
    %207 = vector.extract_strided_slice %188 {offsets = [0, 384], sizes = [16, 128], strides = [1, 1]} : vector<16x512xf32> to vector<16x128xf32>
    %cst_82 = arith.constant 5.000000e-01 : f32
    %208 = vector.broadcast %cst_82 : f32 to vector<16x128xf32>
    %209 = arith.mulf %208, %207 : vector<16x128xf32>
    %210 = math.tanh %209 : vector<16x128xf32>
    %cst_83 = arith.constant 5.000000e-01 : f32
    %211 = vector.broadcast %cst_83 : f32 to vector<16x128xf32>
    %212 = arith.mulf %211, %210 : vector<16x128xf32>
    %cst_84 = arith.constant 5.000000e-01 : f32
    %213 = vector.broadcast %cst_84 : f32 to vector<16x128xf32>
    %214 = arith.addf %212, %213 : vector<16x128xf32>
    %215 = arith.mulf %204, %172 : vector<16x128xf32>
    %216 = arith.mulf %196, %206 : vector<16x128xf32>
    %217 = arith.addf %215, %216 : vector<16x128xf32>
    %218 = math.tanh %217 : vector<16x128xf32>
    %219 = arith.mulf %214, %218 : vector<16x128xf32>
    %c4_i32 = arith.constant 4 : i32
    %220 = vector.broadcast %c4_i32 : i32 to vector<16x1xi32>
    %221 = arith.cmpi sgt, %0, %220 : vector<16x1xi32>
    %222 = arith.extui %221 : vector<16x1xi1> to vector<16x1xi32>
    %223 = arith.sitofp %222 : vector<16x1xi32> to vector<16x1xf32>
    %224 = vector.broadcast %223 : vector<16x1xf32> to vector<16x128xf32>
    %225 = arith.mulf %219, %224 : vector<16x128xf32>
    %226 = vector.shape_cast %225 : vector<16x128xf32> to vector<16x1x128xf32>
    %c0_85 = arith.constant 0 : index
    %c4_86 = arith.constant 4 : index
    %c0_87 = arith.constant 0 : index
    %227 = vector.load %arg4[%c0_85, %c4_86, %c0_87] : memref<16x8x128xf32, #tpu.memory_space<vmem>>, vector<16x1x128xf32>
    tpu.vector_store %arg4[%c0_85, %c4_86, %c0_87], %226 {strides = array<i32>} : memref<16x8x128xf32, #tpu.memory_space<vmem>>, vector<16x1x128xf32>,
    %c0_88 = arith.constant 0 : index
    %c5 = arith.constant 5 : index
    %c0_89 = arith.constant 0 : index
    %228 = vector.load %arg2[%c0_88, %c5, %c0_89] : memref<16x8x512xf32, #tpu.memory_space<vmem>>, vector<16x1x512xf32>
    %229 = vector.shape_cast %228 : vector<16x1x512xf32> to vector<16x512xf32>
    %230 = arith.truncf %219 : vector<16x128xf32> to vector<16x128xbf16>
    %c0_90 = arith.constant 0 : index
    %c0_91 = arith.constant 0 : index
    %231 = vector.load %arg3[%c0_90, %c0_91] : memref<128x512xbf16, #tpu.memory_space<vmem>>, vector<128x512xbf16>
    %cst_92 = arith.constant dense<0.000000e+00> : vector<16x512xf32>
    %232 = tpu.matmul %230, %231, %cst_92 {dimension_numbers = #tpu.dot_dimension_numbers<[1], [0], [0], [1], [0, 0, 1, 1], [], []>} : vector<16x128xbf16>, vector<128x512xbf16>, vector<16x512xf32> -> vector<16x512xf32>
    %233 = arith.addf %229, %232 : vector<16x512xf32>
    %234 = vector.extract_strided_slice %233 {offsets = [0, 0], sizes = [16, 128], strides = [1, 1]} : vector<16x512xf32> to vector<16x128xf32>
    %cst_93 = arith.constant 5.000000e-01 : f32
    %235 = vector.broadcast %cst_93 : f32 to vector<16x128xf32>
    %236 = arith.mulf %235, %234 : vector<16x128xf32>
    %237 = math.tanh %236 : vector<16x128xf32>
    %cst_94 = arith.constant 5.000000e-01 : f32
    %238 = vector.broadcast %cst_94 : f32 to vector<16x128xf32>
    %239 = arith.mulf %238, %237 : vector<16x128xf32>
    %cst_95 = arith.constant 5.000000e-01 : f32
    %240 = vector.broadcast %cst_95 : f32 to vector<16x128xf32>
    %241 = arith.addf %239, %240 : vector<16x128xf32>
    %242 = vector.extract_strided_slice %233 {offsets = [0, 128], sizes = [16, 128], strides = [1, 1]} : vector<16x512xf32> to vector<16x128xf32>
    %cst_96 = arith.constant 5.000000e-01 : f32
    %243 = vector.broadcast %cst_96 : f32 to vector<16x128xf32>
    %244 = arith.mulf %243, %242 : vector<16x128xf32>
    %245 = math.tanh %244 : vector<16x128xf32>
    %cst_97 = arith.constant 5.000000e-01 : f32
    %246 = vector.broadcast %cst_97 : f32 to vector<16x128xf32>
    %247 = arith.mulf %246, %245 : vector<16x128xf32>
    %cst_98 = arith.constant 5.000000e-01 : f32
    %248 = vector.broadcast %cst_98 : f32 to vector<16x128xf32>
    %249 = arith.addf %247, %248 : vector<16x128xf32>
    %250 = vector.extract_strided_slice %233 {offsets = [0, 256], sizes = [16, 128], strides = [1, 1]} : vector<16x512xf32> to vector<16x128xf32>
    %251 = math.tanh %250 : vector<16x128xf32>
    %252 = vector.extract_strided_slice %233 {offsets = [0, 384], sizes = [16, 128], strides = [1, 1]} : vector<16x512xf32> to vector<16x128xf32>
    %cst_99 = arith.constant 5.000000e-01 : f32
    %253 = vector.broadcast %cst_99 : f32 to vector<16x128xf32>
    %254 = arith.mulf %253, %252 : vector<16x128xf32>
    %255 = math.tanh %254 : vector<16x128xf32>
    %cst_100 = arith.constant 5.000000e-01 : f32
    %256 = vector.broadcast %cst_100 : f32 to vector<16x128xf32>
    %257 = arith.mulf %256, %255 : vector<16x128xf32>
    %cst_101 = arith.constant 5.000000e-01 : f32
    %258 = vector.broadcast %cst_101 : f32 to vector<16x128xf32>
    %259 = arith.addf %257, %258 : vector<16x128xf32>
    %260 = arith.mulf %249, %217 : vector<16x128xf32>
    %261 = arith.mulf %241, %251 : vector<16x128xf32>
    %262 = arith.addf %260, %261 : vector<16x128xf32>
    %263 = math.tanh %262 : vector<16x128xf32>
    %264 = arith.mulf %259, %263 : vector<16x128xf32>
    %c5_i32 = arith.constant 5 : i32
    %265 = vector.broadcast %c5_i32 : i32 to vector<16x1xi32>
    %266 = arith.cmpi sgt, %0, %265 : vector<16x1xi32>
    %267 = arith.extui %266 : vector<16x1xi1> to vector<16x1xi32>
    %268 = arith.sitofp %267 : vector<16x1xi32> to vector<16x1xf32>
    %269 = vector.broadcast %268 : vector<16x1xf32> to vector<16x128xf32>
    %270 = arith.mulf %264, %269 : vector<16x128xf32>
    %271 = vector.shape_cast %270 : vector<16x128xf32> to vector<16x1x128xf32>
    %c0_102 = arith.constant 0 : index
    %c5_103 = arith.constant 5 : index
    %c0_104 = arith.constant 0 : index
    %272 = vector.load %arg4[%c0_102, %c5_103, %c0_104] : memref<16x8x128xf32, #tpu.memory_space<vmem>>, vector<16x1x128xf32>
    tpu.vector_store %arg4[%c0_102, %c5_103, %c0_104], %271 {strides = array<i32>} : memref<16x8x128xf32, #tpu.memory_space<vmem>>, vector<16x1x128xf32>,
    %c0_105 = arith.constant 0 : index
    %c6 = arith.constant 6 : index
    %c0_106 = arith.constant 0 : index
    %273 = vector.load %arg2[%c0_105, %c6, %c0_106] : memref<16x8x512xf32, #tpu.memory_space<vmem>>, vector<16x1x512xf32>
    %274 = vector.shape_cast %273 : vector<16x1x512xf32> to vector<16x512xf32>
    %275 = arith.truncf %264 : vector<16x128xf32> to vector<16x128xbf16>
    %c0_107 = arith.constant 0 : index
    %c0_108 = arith.constant 0 : index
    %276 = vector.load %arg3[%c0_107, %c0_108] : memref<128x512xbf16, #tpu.memory_space<vmem>>, vector<128x512xbf16>
    %cst_109 = arith.constant dense<0.000000e+00> : vector<16x512xf32>
    %277 = tpu.matmul %275, %276, %cst_109 {dimension_numbers = #tpu.dot_dimension_numbers<[1], [0], [0], [1], [0, 0, 1, 1], [], []>} : vector<16x128xbf16>, vector<128x512xbf16>, vector<16x512xf32> -> vector<16x512xf32>
    %278 = arith.addf %274, %277 : vector<16x512xf32>
    %279 = vector.extract_strided_slice %278 {offsets = [0, 0], sizes = [16, 128], strides = [1, 1]} : vector<16x512xf32> to vector<16x128xf32>
    %cst_110 = arith.constant 5.000000e-01 : f32
    %280 = vector.broadcast %cst_110 : f32 to vector<16x128xf32>
    %281 = arith.mulf %280, %279 : vector<16x128xf32>
    %282 = math.tanh %281 : vector<16x128xf32>
    %cst_111 = arith.constant 5.000000e-01 : f32
    %283 = vector.broadcast %cst_111 : f32 to vector<16x128xf32>
    %284 = arith.mulf %283, %282 : vector<16x128xf32>
    %cst_112 = arith.constant 5.000000e-01 : f32
    %285 = vector.broadcast %cst_112 : f32 to vector<16x128xf32>
    %286 = arith.addf %284, %285 : vector<16x128xf32>
    %287 = vector.extract_strided_slice %278 {offsets = [0, 128], sizes = [16, 128], strides = [1, 1]} : vector<16x512xf32> to vector<16x128xf32>
    %cst_113 = arith.constant 5.000000e-01 : f32
    %288 = vector.broadcast %cst_113 : f32 to vector<16x128xf32>
    %289 = arith.mulf %288, %287 : vector<16x128xf32>
    %290 = math.tanh %289 : vector<16x128xf32>
    %cst_114 = arith.constant 5.000000e-01 : f32
    %291 = vector.broadcast %cst_114 : f32 to vector<16x128xf32>
    %292 = arith.mulf %291, %290 : vector<16x128xf32>
    %cst_115 = arith.constant 5.000000e-01 : f32
    %293 = vector.broadcast %cst_115 : f32 to vector<16x128xf32>
    %294 = arith.addf %292, %293 : vector<16x128xf32>
    %295 = vector.extract_strided_slice %278 {offsets = [0, 256], sizes = [16, 128], strides = [1, 1]} : vector<16x512xf32> to vector<16x128xf32>
    %296 = math.tanh %295 : vector<16x128xf32>
    %297 = vector.extract_strided_slice %278 {offsets = [0, 384], sizes = [16, 128], strides = [1, 1]} : vector<16x512xf32> to vector<16x128xf32>
    %cst_116 = arith.constant 5.000000e-01 : f32
    %298 = vector.broadcast %cst_116 : f32 to vector<16x128xf32>
    %299 = arith.mulf %298, %297 : vector<16x128xf32>
    %300 = math.tanh %299 : vector<16x128xf32>
    %cst_117 = arith.constant 5.000000e-01 : f32
    %301 = vector.broadcast %cst_117 : f32 to vector<16x128xf32>
    %302 = arith.mulf %301, %300 : vector<16x128xf32>
    %cst_118 = arith.constant 5.000000e-01 : f32
    %303 = vector.broadcast %cst_118 : f32 to vector<16x128xf32>
    %304 = arith.addf %302, %303 : vector<16x128xf32>
    %305 = arith.mulf %294, %262 : vector<16x128xf32>
    %306 = arith.mulf %286, %296 : vector<16x128xf32>
    %307 = arith.addf %305, %306 : vector<16x128xf32>
    %308 = math.tanh %307 : vector<16x128xf32>
    %309 = arith.mulf %304, %308 : vector<16x128xf32>
    %c6_i32 = arith.constant 6 : i32
    %310 = vector.broadcast %c6_i32 : i32 to vector<16x1xi32>
    %311 = arith.cmpi sgt, %0, %310 : vector<16x1xi32>
    %312 = arith.extui %311 : vector<16x1xi1> to vector<16x1xi32>
    %313 = arith.sitofp %312 : vector<16x1xi32> to vector<16x1xf32>
    %314 = vector.broadcast %313 : vector<16x1xf32> to vector<16x128xf32>
    %315 = arith.mulf %309, %314 : vector<16x128xf32>
    %316 = vector.shape_cast %315 : vector<16x128xf32> to vector<16x1x128xf32>
    %c0_119 = arith.constant 0 : index
    %c6_120 = arith.constant 6 : index
    %c0_121 = arith.constant 0 : index
    %317 = vector.load %arg4[%c0_119, %c6_120, %c0_121] : memref<16x8x128xf32, #tpu.memory_space<vmem>>, vector<16x1x128xf32>
    tpu.vector_store %arg4[%c0_119, %c6_120, %c0_121], %316 {strides = array<i32>} : memref<16x8x128xf32, #tpu.memory_space<vmem>>, vector<16x1x128xf32>,
    %c0_122 = arith.constant 0 : index
    %c7 = arith.constant 7 : index
    %c0_123 = arith.constant 0 : index
    %318 = vector.load %arg2[%c0_122, %c7, %c0_123] : memref<16x8x512xf32, #tpu.memory_space<vmem>>, vector<16x1x512xf32>
    %319 = vector.shape_cast %318 : vector<16x1x512xf32> to vector<16x512xf32>
    %320 = arith.truncf %309 : vector<16x128xf32> to vector<16x128xbf16>
    %c0_124 = arith.constant 0 : index
    %c0_125 = arith.constant 0 : index
    %321 = vector.load %arg3[%c0_124, %c0_125] : memref<128x512xbf16, #tpu.memory_space<vmem>>, vector<128x512xbf16>
    %cst_126 = arith.constant dense<0.000000e+00> : vector<16x512xf32>
    %322 = tpu.matmul %320, %321, %cst_126 {dimension_numbers = #tpu.dot_dimension_numbers<[1], [0], [0], [1], [0, 0, 1, 1], [], []>} : vector<16x128xbf16>, vector<128x512xbf16>, vector<16x512xf32> -> vector<16x512xf32>
    %323 = arith.addf %319, %322 : vector<16x512xf32>
    %324 = vector.extract_strided_slice %323 {offsets = [0, 0], sizes = [16, 128], strides = [1, 1]} : vector<16x512xf32> to vector<16x128xf32>
    %cst_127 = arith.constant 5.000000e-01 : f32
    %325 = vector.broadcast %cst_127 : f32 to vector<16x128xf32>
    %326 = arith.mulf %325, %324 : vector<16x128xf32>
    %327 = math.tanh %326 : vector<16x128xf32>
    %cst_128 = arith.constant 5.000000e-01 : f32
    %328 = vector.broadcast %cst_128 : f32 to vector<16x128xf32>
    %329 = arith.mulf %328, %327 : vector<16x128xf32>
    %cst_129 = arith.constant 5.000000e-01 : f32
    %330 = vector.broadcast %cst_129 : f32 to vector<16x128xf32>
    %331 = arith.addf %329, %330 : vector<16x128xf32>
    %332 = vector.extract_strided_slice %323 {offsets = [0, 128], sizes = [16, 128], strides = [1, 1]} : vector<16x512xf32> to vector<16x128xf32>
    %cst_130 = arith.constant 5.000000e-01 : f32
    %333 = vector.broadcast %cst_130 : f32 to vector<16x128xf32>
    %334 = arith.mulf %333, %332 : vector<16x128xf32>
    %335 = math.tanh %334 : vector<16x128xf32>
    %cst_131 = arith.constant 5.000000e-01 : f32
    %336 = vector.broadcast %cst_131 : f32 to vector<16x128xf32>
    %337 = arith.mulf %336, %335 : vector<16x128xf32>
    %cst_132 = arith.constant 5.000000e-01 : f32
    %338 = vector.broadcast %cst_132 : f32 to vector<16x128xf32>
    %339 = arith.addf %337, %338 : vector<16x128xf32>
    %340 = vector.extract_strided_slice %323 {offsets = [0, 256], sizes = [16, 128], strides = [1, 1]} : vector<16x512xf32> to vector<16x128xf32>
    %341 = math.tanh %340 : vector<16x128xf32>
    %342 = vector.extract_strided_slice %323 {offsets = [0, 384], sizes = [16, 128], strides = [1, 1]} : vector<16x512xf32> to vector<16x128xf32>
    %cst_133 = arith.constant 5.000000e-01 : f32
    %343 = vector.broadcast %cst_133 : f32 to vector<16x128xf32>
    %344 = arith.mulf %343, %342 : vector<16x128xf32>
    %345 = math.tanh %344 : vector<16x128xf32>
    %cst_134 = arith.constant 5.000000e-01 : f32
    %346 = vector.broadcast %cst_134 : f32 to vector<16x128xf32>
    %347 = arith.mulf %346, %345 : vector<16x128xf32>
    %cst_135 = arith.constant 5.000000e-01 : f32
    %348 = vector.broadcast %cst_135 : f32 to vector<16x128xf32>
    %349 = arith.addf %347, %348 : vector<16x128xf32>
    %350 = arith.mulf %339, %307 : vector<16x128xf32>
    %351 = arith.mulf %331, %341 : vector<16x128xf32>
    %352 = arith.addf %350, %351 : vector<16x128xf32>
    %353 = math.tanh %352 : vector<16x128xf32>
    %354 = arith.mulf %349, %353 : vector<16x128xf32>
    %c7_i32 = arith.constant 7 : i32
    %355 = vector.broadcast %c7_i32 : i32 to vector<16x1xi32>
    %356 = arith.cmpi sgt, %0, %355 : vector<16x1xi32>
    %357 = arith.extui %356 : vector<16x1xi1> to vector<16x1xi32>
    %358 = arith.sitofp %357 : vector<16x1xi32> to vector<16x1xf32>
    %359 = vector.broadcast %358 : vector<16x1xf32> to vector<16x128xf32>
    %360 = arith.mulf %354, %359 : vector<16x128xf32>
    %361 = vector.shape_cast %360 : vector<16x128xf32> to vector<16x1x128xf32>
    %c0_136 = arith.constant 0 : index
    %c7_137 = arith.constant 7 : index
    %c0_138 = arith.constant 0 : index
    %362 = vector.load %arg4[%c0_136, %c7_137, %c0_138] : memref<16x8x128xf32, #tpu.memory_space<vmem>>, vector<16x1x128xf32>
    tpu.vector_store %arg4[%c0_136, %c7_137, %c0_138], %361 {strides = array<i32>} : memref<16x8x128xf32, #tpu.memory_space<vmem>>, vector<16x1x128xf32>,
    return
  }
  func.func @transform_0(%arg0: i32) -> (i32, i32) {
    %c0_i32 = arith.constant 0 : i32
    %c0_i32_0 = arith.constant 0 : i32
    return %arg0, %c0_i32 : i32, i32
  }
  func.func @transform_1(%arg0: i32) -> (i32, i32, i32) {
    %c0_i32 = arith.constant 0 : i32
    %c0_i32_0 = arith.constant 0 : i32
    %c0_i32_1 = arith.constant 0 : i32
    return %arg0, %c0_i32, %c0_i32_0 : i32, i32, i32
  }
  func.func @transform_2(%arg0: i32) -> (i32, i32) {
    %c0_i32 = arith.constant 0 : i32
    %c0_i32_0 = arith.constant 0 : i32
    %c0_i32_1 = arith.constant 0 : i32
    return %c0_i32, %c0_i32_0 : i32, i32
  }
  func.func @transform_3(%arg0: i32) -> (i32, i32, i32) {
    %c0_i32 = arith.constant 0 : i32
    %c0_i32_0 = arith.constant 0 : i32
    %c0_i32_1 = arith.constant 0 : i32
    return %arg0, %c0_i32, %c0_i32_0 : i32, i32, i32
  }
}

</mosaic_0001>

<llo_original>
// kernel: atae_lstm_forward.5
$region0: #{atae_lstm_forward.5}
  #allocation0 [shape = 'u32[]', space=smem, size = 0x4, offset = 0x4, fixed_abs, tag = 'smem constant byte address 0x4 - core index']
  #allocation1 [shape = 'u32[72,128]{1,0:T(1,128)}', space=vmem, size = 0x9000, scoped, tag = 'internal scratch']
  %s0 = inlined_call_operand.vmem [shape: f32[16,8,128], index: 0, kind: input, shape index: {}]
  %s1 = inlined_call_operand.vmem [shape: f32[1,1,128], index: 1, kind: input, shape index: {}]
  %s2 = inlined_call_operand.vmem [shape: f32[16,1], index: 2, kind: input, shape index: {}]
  %s3 = inlined_call_operand.vmem [shape: f32[128,128], index: 3, kind: input, shape index: {}]
  %s4 = inlined_call_operand.vmem [shape: f32[1,128], index: 4, kind: input, shape index: {}]
  %s5 = inlined_call_operand.vmem [shape: f32[16,128], index: 5, kind: output, shape index: {}]
  %s6 = sld [smem:[#allocation0]]
  $region30: #{atae_lstm_forward.5} parent=0
    _
  %s8 = ssub.s32 1, %s6
  %s9 = scalar_select 0, %s8, %s6
  // Predicated region
  $region2: #{atae_lstm_forward.5} parent=0 // pred_check
    _
  $region3: #{atae_lstm_forward.5} parent=0 // pred_check_branch
    %11 = sbr.rel (0) target = $region5
  $region4: #{atae_lstm_forward.5} parent=0 // pred_region
    _
  $region5: #{atae_lstm_forward.5} parent=0 // pred_fallthru
    _
  // Predicated region
  $region6: #{atae_lstm_forward.5} parent=0 // pred_check
    _
  $region7: #{atae_lstm_forward.5} parent=0 // pred_check_branch
    %13 = sbr.rel (0) target = $region9
  $region8: #{atae_lstm_forward.5} parent=0 // pred_region
    _
  $region9: #{atae_lstm_forward.5} parent=0 // pred_fallthru
    _
  // Predicated region
  $region10: #{atae_lstm_forward.5} parent=0 // pred_check
    _
  $region11: #{atae_lstm_forward.5} parent=0 // pred_check_branch
    %15 = sbr.rel (0) target = $region13
  $region12: #{atae_lstm_forward.5} parent=0 // pred_region
    _
  $region13: #{atae_lstm_forward.5} parent=0 // pred_fallthru
    _
  // Predicated region
  $region14: #{atae_lstm_forward.5} parent=0 // pred_check
    _
  $region15: #{atae_lstm_forward.5} parent=0 // pred_check_branch
    %17 = sbr.rel (0) target = $region17
  $region16: #{atae_lstm_forward.5} parent=0 // pred_region
    _
  $region17: #{atae_lstm_forward.5} parent=0 // pred_fallthru
    _
  // Predicated region
  $region18: #{atae_lstm_forward.5} parent=0 // pred_check
    _
  $region19: #{atae_lstm_forward.5} parent=0 // pred_check_branch
    %19 = sbr.rel (0) target = $region21
  $region20: #{atae_lstm_forward.5} parent=0 // pred_region
    _
  $region21: #{atae_lstm_forward.5} parent=0 // pred_fallthru
    _
  %v20 = vld [vmem:[%s0] sm:$0xff]
  %v21 = vld [vmem:[%s0 + $0x8] sm:$0xff]
  %v22 = vld [vmem:[%s0 + $0x10] sm:$0xff]
  %v23 = vld [vmem:[%s0 + $0x18] sm:$0xff]
  %v24 = vld [vmem:[%s0 + $0x20] sm:$0xff]
  %v25 = vld [vmem:[%s0 + $0x28] sm:$0xff]
  %v26 = vld [vmem:[%s0 + $0x30] sm:$0xff]
  %v27 = vld [vmem:[%s0 + $0x38] sm:$0xff]
  %v28 = vld [vmem:[%s0 + $0x40] sm:$0xff]
  %v29 = vld [vmem:[%s0 + $0x48] sm:$0xff]
  %v30 = vld [vmem:[%s0 + $0x50] sm:$0xff]
  %v31 = vld [vmem:[%s0 + $0x58] sm:$0xff]
  %v32 = vld [vmem:[%s0 + $0x60] sm:$0xff]
  %v33 = vld [vmem:[%s0 + $0x68] sm:$0xff]
  %v34 = vld [vmem:[%s0 + $0x70] sm:$0xff]
  %v35 = vld [vmem:[%s0 + $0x78] sm:$0xff]
  %v36 = vld [vmem:[%s1] sm:$0x1]
  %v38 = vperm.slane %v36, 0
  %v40 = vmul.f32 %v20, %v38
  %v41 = vmul.f32 %v21, %v38
  %v42 = vmul.f32 %v22, %v38
  %v43 = vmul.f32 %v23, %v38
  %v44 = vmul.f32 %v24, %v38
  %v45 = vmul.f32 %v25, %v38
  %v46 = vmul.f32 %v26, %v38
  %v47 = vmul.f32 %v27, %v38
  %v48 = vmul.f32 %v28, %v38
  %v49 = vmul.f32 %v29, %v38
  %v50 = vmul.f32 %v30, %v38
  %v51 = vmul.f32 %v31, %v38
  %v52 = vmul.f32 %v32, %v38
  %v53 = vmul.f32 %v33, %v38
  %v54 = vmul.f32 %v34, %v38
  %v55 = vmul.f32 %v35, %v38
  %56 = vadd.xlane.f32.xlu0 %v40
  %v57 = vpop.xlane.xlu0 %56
  %58 = vadd.xlane.f32.xlu0 %v41
  %v59 = vpop.xlane.xlu0 %58
  %60 = vadd.xlane.f32.xlu0 %v42
  %v61 = vpop.xlane.xlu0 %60
  %62 = vadd.xlane.f32.xlu0 %v43
  %v63 = vpop.xlane.xlu0 %62
  %64 = vadd.xlane.f32.xlu0 %v44
  %v65 = vpop.xlane.xlu0 %64
  %66 = vadd.xlane.f32.xlu0 %v45
  %v67 = vpop.xlane.xlu0 %66
  %68 = vadd.xlane.f32.xlu0 %v46
  %v69 = vpop.xlane.xlu0 %68
  %70 = vadd.xlane.f32.xlu0 %v47
  %v71 = vpop.xlane.xlu0 %70
  %72 = vadd.xlane.f32.xlu0 %v48
  %v73 = vpop.xlane.xlu0 %72
  %74 = vadd.xlane.f32.xlu0 %v49
  %v75 = vpop.xlane.xlu0 %74
  %76 = vadd.xlane.f32.xlu0 %v50
  %v77 = vpop.xlane.xlu0 %76
  %78 = vadd.xlane.f32.xlu0 %v51
  %v79 = vpop.xlane.xlu0 %78
  %80 = vadd.xlane.f32.xlu0 %v52
  %v81 = vpop.xlane.xlu0 %80
  %82 = vadd.xlane.f32.xlu0 %v53
  %v83 = vpop.xlane.xlu0 %82
  %84 = vadd.xlane.f32.xlu0 %v54
  %v85 = vpop.xlane.xlu0 %84
  %86 = vadd.xlane.f32.xlu0 %v55
  %v87 = vpop.xlane.xlu0 %86
  %v88 = vld [vmem:[%s2] sm:$0xff]
  %v89 = vld [vmem:[%s2 + $0x8] sm:$0xff]
  %91 = vset.pattern.permute.xlu0 0
  %92 = vperm.xlu0 %91, %v88
  %v93 = vpop.permute.xlu0 %92
  %95 = vset.pattern.permute.xlu0 0
  %96 = vperm.xlu0 %95, %v89
  %v97 = vpop.permute.xlu0 %96
  %v98 = vperm.slane %v93, 0
  %v99 = vperm.slane %v93, 1
  %v100 = vperm.slane %v93, 2
  %v101 = vperm.slane %v93, 3
  %v102 = vperm.slane %v93, 4
  %v103 = vperm.slane %v93, 5
  %v104 = vperm.slane %v93, 6
  %v105 = vperm.slane %v93, 7
  %v106 = vperm.slane %v97, 0
  %v107 = vperm.slane %v97, 1
  %v108 = vperm.slane %v97, 2
  %v109 = vperm.slane %v97, 3
  %v110 = vperm.slane %v97, 4
  %v111 = vperm.slane %v97, 5
  %v112 = vperm.slane %v97, 6
  %v113 = vperm.slane %v97, 7
  %v130 = vadd.f32 %v57, %v98
  %v131 = vadd.f32 %v59, %v99
  %v132 = vadd.f32 %v61, %v100
  %v133 = vadd.f32 %v63, %v101
  %v134 = vadd.f32 %v65, %v102
  %v135 = vadd.f32 %v67, %v103
  %v136 = vadd.f32 %v69, %v104
  %v137 = vadd.f32 %v71, %v105
  %v138 = vadd.f32 %v73, %v106
  %v139 = vadd.f32 %v75, %v107
  %v140 = vadd.f32 %v77, %v108
  %v141 = vadd.f32 %v79, %v109
  %v142 = vadd.f32 %v81, %v110
  %v143 = vadd.f32 %v83, %v111
  %v144 = vadd.f32 %v85, %v112
  %v145 = vadd.f32 %v87, %v113
  %162 = vset.pattern.permute.xlu0 0
  %163 = vperm.xlu0 %162, %v130
  %v164 = vpop.permute.xlu0 %163
  %165 = vset.pattern.permute.xlu0 0
  %166 = vperm.xlu0 %165, %v131
  %v167 = vpop.permute.xlu0 %166
  %168 = vset.pattern.permute.xlu0 0
  %169 = vperm.xlu0 %168, %v132
  %v170 = vpop.permute.xlu0 %169
  %171 = vset.pattern.permute.xlu0 0
  %172 = vperm.xlu0 %171, %v133
  %v173 = vpop.permute.xlu0 %172
  %174 = vset.pattern.permute.xlu0 0
  %175 = vperm.xlu0 %174, %v134
  %v176 = vpop.permute.xlu0 %175
  %177 = vset.pattern.permute.xlu0 0
  %178 = vperm.xlu0 %177, %v135
  %v179 = vpop.permute.xlu0 %178
  %180 = vset.pattern.permute.xlu0 0
  %181 = vperm.xlu0 %180, %v136
  %v182 = vpop.permute.xlu0 %181
  %183 = vset.pattern.permute.xlu0 0
  %184 = vperm.xlu0 %183, %v137
  %v185 = vpop.permute.xlu0 %184
  %186 = vset.pattern.permute.xlu0 0
  %187 = vperm.xlu0 %186, %v138
  %v188 = vpop.permute.xlu0 %187
  %189 = vset.pattern.permute.xlu0 0
  %190 = vperm.xlu0 %189, %v139
  %v191 = vpop.permute.xlu0 %190
  %192 = vset.pattern.permute.xlu0 0
  %193 = vperm.xlu0 %192, %v140
  %v194 = vpop.permute.xlu0 %193
  %195 = vset.pattern.permute.xlu0 0
  %196 = vperm.xlu0 %195, %v141
  %v197 = vpop.permute.xlu0 %196
  %198 = vset.pattern.permute.xlu0 0
  %199 = vperm.xlu0 %198, %v142
  %v200 = vpop.permute.xlu0 %199
  %201 = vset.pattern.permute.xlu0 0
  %202 = vperm.xlu0 %201, %v143
  %v203 = vpop.permute.xlu0 %202
  %204 = vset.pattern.permute.xlu0 0
  %205 = vperm.xlu0 %204, %v144
  %v206 = vpop.permute.xlu0 %205
  %207 = vset.pattern.permute.xlu0 0
  %208 = vperm.xlu0 %207, %v145
  %v209 = vpop.permute.xlu0 %208
  %v210 = vlaneseq
  %v211 = vand.u32 %v210, 127
  %v212 = vperm.slane %v164, %v211
  %v213 = vperm.slane %v167, %v211
  %v214 = vperm.slane %v170, %v211
  %v215 = vperm.slane %v173, %v211
  %v216 = vperm.slane %v176, %v211
  %v217 = vperm.slane %v179, %v211
  %v218 = vperm.slane %v182, %v211
  %v219 = vperm.slane %v185, %v211
  %v220 = vperm.slane %v188, %v211
  %v221 = vperm.slane %v191, %v211
  %v222 = vperm.slane %v194, %v211
  %v223 = vperm.slane %v197, %v211
  %v224 = vperm.slane %v200, %v211
  %v225 = vperm.slane %v203, %v211
  %v226 = vperm.slane %v206, %v211
  %v227 = vperm.slane %v209, %v211
  %vm228 = vcmask 1041409
  %v229 = vsel %vm228, %v213, %v212
  %vm230 = vcmask 1042434
  %v231 = vsel %vm230, %v214, %v229
  %vm232 = vcmask 1043459
  %v233 = vsel %vm232, %v215, %v231
  %vm234 = vcmask 1044484
  %v235 = vsel %vm234, %v216, %v233
  %vm236 = vcmask 1045509
  %v237 = vsel %vm236, %v217, %v235
  %vm238 = vcmask 1046534
  %v239 = vsel %vm238, %v218, %v237
  %vm240 = vcmask 1047559
  %v241 = vsel %vm240, %v219, %v239
  %v242 = vsel %vm228, %v221, %v220
  %v243 = vsel %vm230, %v222, %v242
  %v244 = vsel %vm232, %v223, %v243
  %v245 = vsel %vm234, %v224, %v244
  %v246 = vsel %vm236, %v225, %v245
  %v247 = vsel %vm238, %v226, %v246
  %v248 = vsel %vm240, %v227, %v247
  %vm251 = vcmask 64512
  %v252 = vsel %vm251, %v241, -inf
  %253 = vmax.xlane.f32.xlu0 %v252
  %v254 = vpop.xlane.xlu0 %253
  %v255 = vsel %vm251, %v248, -inf
  %256 = vmax.xlane.f32.xlu0 %v255
  %v257 = vpop.xlane.xlu0 %256
  %v260 = vperm.slane %v254, 0
  %v261 = vperm.slane %v254, 1
  %v262 = vperm.slane %v254, 2
  %v263 = vperm.slane %v254, 3
  %v264 = vperm.slane %v254, 4
  %v265 = vperm.slane %v254, 5
  %v266 = vperm.slane %v254, 6
  %v267 = vperm.slane %v254, 7
  %v268 = vperm.slane %v257, 0
  %v269 = vperm.slane %v257, 1
  %v270 = vperm.slane %v257, 2
  %v271 = vperm.slane %v257, 3
  %v272 = vperm.slane %v257, 4
  %v273 = vperm.slane %v257, 5
  %v274 = vperm.slane %v257, 6
  %v275 = vperm.slane %v257, 7
  %v292 = vsub.f32 %v130, %v260
  %v293 = vsub.f32 %v131, %v261
  %v294 = vsub.f32 %v132, %v262
  %v295 = vsub.f32 %v133, %v263
  %v296 = vsub.f32 %v134, %v264
  %v297 = vsub.f32 %v135, %v265
  %v298 = vsub.f32 %v136, %v266
  %v299 = vsub.f32 %v137, %v267
  %v300 = vsub.f32 %v138, %v268
  %v301 = vsub.f32 %v139, %v269
  %v302 = vsub.f32 %v140, %v270
  %v303 = vsub.f32 %v141, %v271
  %v304 = vsub.f32 %v142, %v272
  %v305 = vsub.f32 %v143, %v273
  %v306 = vsub.f32 %v144, %v274
  %v307 = vsub.f32 %v145, %v275
  %v308 = vmul.f32 %v292, 1.442695
  %v309 = vpow.pop %v308
  %v310 = vmul.f32 %v293, 1.442695
  %v311 = vpow.pop %v310
  %v312 = vmul.f32 %v294, 1.442695
  %v313 = vpow.pop %v312
  %v314 = vmul.f32 %v295, 1.442695
  %v315 = vpow.pop %v314
  %v316 = vmul.f32 %v296, 1.442695
  %v317 = vpow.pop %v316
  %v318 = vmul.f32 %v297, 1.442695
  %v319 = vpow.pop %v318
  %v320 = vmul.f32 %v298, 1.442695
  %v321 = vpow.pop %v320
  %v322 = vmul.f32 %v299, 1.442695
  %v323 = vpow.pop %v322
  %v324 = vmul.f32 %v300, 1.442695
  %v325 = vpow.pop %v324
  %v326 = vmul.f32 %v301, 1.442695
  %v327 = vpow.pop %v326
  %v328 = vmul.f32 %v302, 1.442695
  %v329 = vpow.pop %v328
  %v330 = vmul.f32 %v303, 1.442695
  %v331 = vpow.pop %v330
  %v332 = vmul.f32 %v304, 1.442695
  %v333 = vpow.pop %v332
  %v334 = vmul.f32 %v305, 1.442695
  %v335 = vpow.pop %v334
  %v336 = vmul.f32 %v306, 1.442695
  %v337 = vpow.pop %v336
  %v338 = vmul.f32 %v307, 1.442695
  %v339 = vpow.pop %v338
  %356 = vset.pattern.permute.xlu0 0
  %357 = vperm.xlu0 %356, %v309
  %v358 = vpop.permute.xlu0 %357
  %359 = vset.pattern.permute.xlu0 0
  %360 = vperm.xlu0 %359, %v311
  %v361 = vpop.permute.xlu0 %360
  %362 = vset.pattern.permute.xlu0 0
  %363 = vperm.xlu0 %362, %v313
  %v364 = vpop.permute.xlu0 %363
  %365 = vset.pattern.permute.xlu0 0
  %366 = vperm.xlu0 %365, %v315
  %v367 = vpop.permute.xlu0 %366
  %368 = vset.pattern.permute.xlu0 0
  %369 = vperm.xlu0 %368, %v317
  %v370 = vpop.permute.xlu0 %369
  %371 = vset.pattern.permute.xlu0 0
  %372 = vperm.xlu0 %371, %v319
  %v373 = vpop.permute.xlu0 %372
  %374 = vset.pattern.permute.xlu0 0
  %375 = vperm.xlu0 %374, %v321
  %v376 = vpop.permute.xlu0 %375
  %377 = vset.pattern.permute.xlu0 0
  %378 = vperm.xlu0 %377, %v323
  %v379 = vpop.permute.xlu0 %378
  %380 = vset.pattern.permute.xlu0 0
  %381 = vperm.xlu0 %380, %v325
  %v382 = vpop.permute.xlu0 %381
  %383 = vset.pattern.permute.xlu0 0
  %384 = vperm.xlu0 %383, %v327
  %v385 = vpop.permute.xlu0 %384
  %386 = vset.pattern.permute.xlu0 0
  %387 = vperm.xlu0 %386, %v329
  %v388 = vpop.permute.xlu0 %387
  %389 = vset.pattern.permute.xlu0 0
  %390 = vperm.xlu0 %389, %v331
  %v391 = vpop.permute.xlu0 %390
  %392 = vset.pattern.permute.xlu0 0
  %393 = vperm.xlu0 %392, %v333
  %v394 = vpop.permute.xlu0 %393
  %395 = vset.pattern.permute.xlu0 0
  %396 = vperm.xlu0 %395, %v335
  %v397 = vpop.permute.xlu0 %396
  %398 = vset.pattern.permute.xlu0 0
  %399 = vperm.xlu0 %398, %v337
  %v400 = vpop.permute.xlu0 %399
  %401 = vset.pattern.permute.xlu0 0
  %402 = vperm.xlu0 %401, %v339
  %v403 = vpop.permute.xlu0 %402
  %v404 = vperm.slane %v358, %v211
  %v405 = vperm.slane %v361, %v211
  %v406 = vperm.slane %v364, %v211
  %v407 = vperm.slane %v367, %v211
  %v408 = vperm.slane %v370, %v211
  %v409 = vperm.slane %v373, %v211
  %v410 = vperm.slane %v376, %v211
  %v411 = vperm.slane %v379, %v211
  %v412 = vperm.slane %v382, %v211
  %v413 = vperm.slane %v385, %v211
  %v414 = vperm.slane %v388, %v211
  %v415 = vperm.slane %v391, %v211
  %v416 = vperm.slane %v394, %v211
  %v417 = vperm.slane %v397, %v211
  %v418 = vperm.slane %v400, %v211
  %v419 = vperm.slane %v403, %v211
  %v420 = vsel %vm228, %v405, %v404
  %v421 = vsel %vm230, %v406, %v420
  %v422 = vsel %vm232, %v407, %v421
  %v423 = vsel %vm234, %v408, %v422
  %v424 = vsel %vm236, %v409, %v423
  %v425 = vsel %vm238, %v410, %v424
  %v426 = vsel %vm240, %v411, %v425
  %v427 = vsel %vm228, %v413, %v412
  %v428 = vsel %vm230, %v414, %v427
  %v429 = vsel %vm232, %v415, %v428
  %v430 = vsel %vm234, %v416, %v429
  %v431 = vsel %vm236, %v417, %v430
  %v432 = vsel %vm238, %v418, %v431
  %v433 = vsel %vm240, %v419, %v432
  %v436 = vsel %vm251, %v426, 0.0
  %437 = vadd.xlane.f32.xlu0 %v436
  %v438 = vpop.xlane.xlu0 %437
  %v439 = vsel %vm251, %v433, 0.0
  %440 = vadd.xlane.f32.xlu0 %v439
  %v441 = vpop.xlane.xlu0 %440
  %v442 = vrcp.pop %v438
  %v443 = vmul.f32 %v438, %v442
  %v444 = vsub.f32 1.0, %v443
  %v445 = vmul.f32 %v442, %v444
  %v446 = vadd.f32 %v442, %v445
  %vm447 = vweird.f32 %v438
  %vm448 = vweird.f32 %v442
  %vm449 = vmor %vm447, %vm448
  %v450 = vsel %vm449, %v442, %v446
  %v451 = vand.u32 2147483647, %v438
  %vm452 = vcmp.eq.f32.partialorder %v451, 8.507059e+37
  %v453 = vand.u32 %v438, 2147483648
  %v454 = vor.u32 1.1754944e-38, %v453
  %v455 = vsel %vm452, %v454, %v450
  %v456 = vrcp.pop %v441
  %v457 = vmul.f32 %v441, %v456
  %v458 = vsub.f32 1.0, %v457
  %v459 = vmul.f32 %v456, %v458
  %v460 = vadd.f32 %v456, %v459
  %vm461 = vweird.f32 %v441
  %vm462 = vweird.f32 %v456
  %vm463 = vmor %vm461, %vm462
  %v464 = vsel %vm463, %v456, %v460
  %v465 = vand.u32 2147483647, %v441
  %vm466 = vcmp.eq.f32.partialorder %v465, 8.507059e+37
  %v467 = vand.u32 %v441, 2147483648
  %v468 = vor.u32 1.1754944e-38, %v467
  %v469 = vsel %vm466, %v468, %v464
  %v472 = vperm.slane %v455, 0
  %v473 = vperm.slane %v455, 1
  %v474 = vperm.slane %v455, 2
  %v475 = vperm.slane %v455, 3
  %v476 = vperm.slane %v455, 4
  %v477 = vperm.slane %v455, 5
  %v478 = vperm.slane %v455, 6
  %v479 = vperm.slane %v455, 7
  %v480 = vperm.slane %v469, 0
  %v481 = vperm.slane %v469, 1
  %v482 = vperm.slane %v469, 2
  %v483 = vperm.slane %v469, 3
  %v484 = vperm.slane %v469, 4
  %v485 = vperm.slane %v469, 5
  %v486 = vperm.slane %v469, 6
  %v487 = vperm.slane %v469, 7
  %v504 = vmul.f32 %v309, %v472
  %v505 = vmul.f32 %v311, %v473
  %v506 = vmul.f32 %v313, %v474
  %v507 = vmul.f32 %v315, %v475
  %v508 = vmul.f32 %v317, %v476
  %v509 = vmul.f32 %v319, %v477
  %v510 = vmul.f32 %v321, %v478
  %v511 = vmul.f32 %v323, %v479
  %v512 = vmul.f32 %v325, %v480
  %v513 = vmul.f32 %v327, %v481
  %v514 = vmul.f32 %v329, %v482
  %v515 = vmul.f32 %v331, %v483
  %v516 = vmul.f32 %v333, %v484
  %v517 = vmul.f32 %v335, %v485
  %v518 = vmul.f32 %v337, %v486
  %v519 = vmul.f32 %v339, %v487
  %521 = vset.pattern.permute.xlu0 0
  %522 = vperm.xlu0 %521, %v504
  %v523 = vpop.permute.xlu0 %522
  %526 = vset.pattern.permute.xlu0 0
  %527 = vperm.xlu0 %526, %v505
  %v528 = vpop.permute.xlu0 %527
  %531 = vset.pattern.permute.xlu0 0
  %532 = vperm.xlu0 %531, %v506
  %v533 = vpop.permute.xlu0 %532
  %536 = vset.pattern.permute.xlu0 0
  %537 = vperm.xlu0 %536, %v507
  %v538 = vpop.permute.xlu0 %537
  %541 = vset.pattern.permute.xlu0 0
  %542 = vperm.xlu0 %541, %v508
  %v543 = vpop.permute.xlu0 %542
  %546 = vset.pattern.permute.xlu0 0
  %547 = vperm.xlu0 %546, %v509
  %v548 = vpop.permute.xlu0 %547
  %551 = vset.pattern.permute.xlu0 0
  %552 = vperm.xlu0 %551, %v510
  %v553 = vpop.permute.xlu0 %552
  %556 = vset.pattern.permute.xlu0 0
  %557 = vperm.xlu0 %556, %v511
  %v558 = vpop.permute.xlu0 %557
  %561 = vset.pattern.permute.xlu0 0
  %562 = vperm.xlu0 %561, %v512
  %v563 = vpop.permute.xlu0 %562
  %566 = vset.pattern.permute.xlu0 0
  %567 = vperm.xlu0 %566, %v513
  %v568 = vpop.permute.xlu0 %567
  %571 = vset.pattern.permute.xlu0 0
  %572 = vperm.xlu0 %571, %v514
  %v573 = vpop.permute.xlu0 %572
  %576 = vset.pattern.permute.xlu0 0
  %577 = vperm.xlu0 %576, %v515
  %v578 = vpop.permute.xlu0 %577
  %581 = vset.pattern.permute.xlu0 0
  %582 = vperm.xlu0 %581, %v516
  %v583 = vpop.permute.xlu0 %582
  %586 = vset.pattern.permute.xlu0 0
  %587 = vperm.xlu0 %586, %v517
  %v588 = vpop.permute.xlu0 %587
  %591 = vset.pattern.permute.xlu0 0
  %592 = vperm.xlu0 %591, %v518
  %v593 = vpop.permute.xlu0 %592
  %596 = vset.pattern.permute.xlu0 0
  %597 = vperm.xlu0 %596, %v519
  %v598 = vpop.permute.xlu0 %597
  %v600 = vmul.f32 %v523, %v20
  %v601 = vmul.f32 %v528, %v21
  %v602 = vmul.f32 %v533, %v22
  %v603 = vmul.f32 %v538, %v23
  %v604 = vmul.f32 %v543, %v24
  %v605 = vmul.f32 %v548, %v25
  %v606 = vmul.f32 %v553, %v26
  %v607 = vmul.f32 %v558, %v27
  %v608 = vmul.f32 %v563, %v28
  %v609 = vmul.f32 %v568, %v29
  %v610 = vmul.f32 %v573, %v30
  %v611 = vmul.f32 %v578, %v31
  %v612 = vmul.f32 %v583, %v32
  %v613 = vmul.f32 %v588, %v33
  %v614 = vmul.f32 %v593, %v34
  %v615 = vmul.f32 %v598, %v35
  %v616 = vrot.slane %v600, 4
  %v617 = vadd.f32 %v600, %v616
  %v618 = vrot.slane %v617, 2
  %v619 = vadd.f32 %v617, %v618
  %v620 = vrot.slane %v619, 1
  %v621 = vadd.f32 %v619, %v620
  %v622 = vrot.slane %v601, 4
  %v623 = vadd.f32 %v601, %v622
  %v624 = vrot.slane %v623, 2
  %v625 = vadd.f32 %v623, %v624
  %v626 = vrot.slane %v625, 1
  %v627 = vadd.f32 %v625, %v626
  %v628 = vrot.slane %v602, 4
  %v629 = vadd.f32 %v602, %v628
  %v630 = vrot.slane %v629, 2
  %v631 = vadd.f32 %v629, %v630
  %v632 = vrot.slane %v631, 1
  %v633 = vadd.f32 %v631, %v632
  %v634 = vrot.slane %v603, 4
  %v635 = vadd.f32 %v603, %v634
  %v636 = vrot.slane %v635, 2
  %v637 = vadd.f32 %v635, %v636
  %v638 = vrot.slane %v637, 1
  %v639 = vadd.f32 %v637, %v638
  %v640 = vrot.slane %v604, 4
  %v641 = vadd.f32 %v604, %v640
  %v642 = vrot.slane %v641, 2
  %v643 = vadd.f32 %v641, %v642
  %v644 = vrot.slane %v643, 1
  %v645 = vadd.f32 %v643, %v644
  %v646 = vrot.slane %v605, 4
  %v647 = vadd.f32 %v605, %v646
  %v648 = vrot.slane %v647, 2
  %v649 = vadd.f32 %v647, %v648
  %v650 = vrot.slane %v649, 1
  %v651 = vadd.f32 %v649, %v650
  %v652 = vrot.slane %v606, 4
  %v653 = vadd.f32 %v606, %v652
  %v654 = vrot.slane %v653, 2
  %v655 = vadd.f32 %v653, %v654
  %v656 = vrot.slane %v655, 1
  %v657 = vadd.f32 %v655, %v656
  %v658 = vrot.slane %v607, 4
  %v659 = vadd.f32 %v607, %v658
  %v660 = vrot.slane %v659, 2
  %v661 = vadd.f32 %v659, %v660
  %v662 = vrot.slane %v661, 1
  %v663 = vadd.f32 %v661, %v662
  %v664 = vrot.slane %v608, 4
  %v665 = vadd.f32 %v608, %v664
  %v666 = vrot.slane %v665, 2
  %v667 = vadd.f32 %v665, %v666
  %v668 = vrot.slane %v667, 1
  %v669 = vadd.f32 %v667, %v668
  %v670 = vrot.slane %v609, 4
  %v671 = vadd.f32 %v609, %v670
  %v672 = vrot.slane %v671, 2
  %v673 = vadd.f32 %v671, %v672
  %v674 = vrot.slane %v673, 1
  %v675 = vadd.f32 %v673, %v674
  %v676 = vrot.slane %v610, 4
  %v677 = vadd.f32 %v610, %v676
  %v678 = vrot.slane %v677, 2
  %v679 = vadd.f32 %v677, %v678
  %v680 = vrot.slane %v679, 1
  %v681 = vadd.f32 %v679, %v680
  %v682 = vrot.slane %v611, 4
  %v683 = vadd.f32 %v611, %v682
  %v684 = vrot.slane %v683, 2
  %v685 = vadd.f32 %v683, %v684
  %v686 = vrot.slane %v685, 1
  %v687 = vadd.f32 %v685, %v686
  %v688 = vrot.slane %v612, 4
  %v689 = vadd.f32 %v612, %v688
  %v690 = vrot.slane %v689, 2
  %v691 = vadd.f32 %v689, %v690
  %v692 = vrot.slane %v691, 1
  %v693 = vadd.f32 %v691, %v692
  %v694 = vrot.slane %v613, 4
  %v695 = vadd.f32 %v613, %v694
  %v696 = vrot.slane %v695, 2
  %v697 = vadd.f32 %v695, %v696
  %v698 = vrot.slane %v697, 1
  %v699 = vadd.f32 %v697, %v698
  %v700 = vrot.slane %v614, 4
  %v701 = vadd.f32 %v614, %v700
  %v702 = vrot.slane %v701, 2
  %v703 = vadd.f32 %v701, %v702
  %v704 = vrot.slane %v703, 1
  %v705 = vadd.f32 %v703, %v704
  %v706 = vrot.slane %v615, 4
  %v707 = vadd.f32 %v615, %v706
  %v708 = vrot.slane %v707, 2
  %v709 = vadd.f32 %v707, %v708
  %v710 = vrot.slane %v709, 1
  %v711 = vadd.f32 %v709, %v710
  %v712 = vld [vmem:[%s3] sm:$0xff]
  %v713 = vld [vmem:[%s3 + $0x8] sm:$0xff]
  %v714 = vld [vmem:[%s3 + $0x10] sm:$0xff]
  %v715 = vld [vmem:[%s3 + $0x18] sm:$0xff]
  %v716 = vld [vmem:[%s3 + $0x20] sm:$0xff]
  %v717 = vld [vmem:[%s3 + $0x28] sm:$0xff]
  %v718 = vld [vmem:[%s3 + $0x30] sm:$0xff]
  %v719 = vld [vmem:[%s3 + $0x38] sm:$0xff]
  %v720 = vld [vmem:[%s3 + $0x40] sm:$0xff]
  %v721 = vld [vmem:[%s3 + $0x48] sm:$0xff]
  %v722 = vld [vmem:[%s3 + $0x50] sm:$0xff]
  %v723 = vld [vmem:[%s3 + $0x58] sm:$0xff]
  %v724 = vld [vmem:[%s3 + $0x60] sm:$0xff]
  %v725 = vld [vmem:[%s3 + $0x68] sm:$0xff]
  %v726 = vld [vmem:[%s3 + $0x70] sm:$0xff]
  %v727 = vld [vmem:[%s3 + $0x78] sm:$0xff]
  %v728 = vld [vmem:[%s4] sm:$0x1]
  %v730 = vperm.slane %v728, 0
  %v748 = vsel %vm228, %v627, %v621
  %v749 = vsel %vm230, %v633, %v748
  %v750 = vsel %vm232, %v639, %v749
  %v751 = vsel %vm234, %v645, %v750
  %v752 = vsel %vm236, %v651, %v751
  %v753 = vsel %vm238, %v657, %v752
  %v754 = vsel %vm240, %v663, %v753
  %v755 = vsel %vm228, %v675, %v669
  %v756 = vsel %vm230, %v681, %v755
  %v757 = vsel %vm232, %v687, %v756
  %v758 = vsel %vm234, %v693, %v757
  %v759 = vsel %vm236, %v699, %v758
  %v760 = vsel %vm238, %v705, %v759
  %v761 = vsel %vm240, %v711, %v760
  %764 = vmatpush.msra.mxu0 %v727
  %765 = vmatpush.msra.mxu0 %v726
  %766 = vmatpush.msra.mxu0 %v725
  %767 = vmatpush.msra.mxu0 %v724
  %768 = vmatpush.msra.mxu0 %v723
  %769 = vmatpush.msra.mxu0 %v722
  %770 = vmatpush.msra.mxu0 %v721
  %771 = vmatpush.msra.mxu0 %v720
  %772 = vmatpush.msra.mxu0 %v719
  %773 = vmatpush.msra.mxu0 %v718
  %774 = vmatpush.msra.mxu0 %v717
  %775 = vmatpush.msra.mxu0 %v716
  %776 = vmatpush.msra.mxu0 %v715
  %777 = vmatpush.msra.mxu0 %v714
  %778 = vmatpush.msra.mxu0 %v713
  %779 = vmatpush.msra.mxu0 %v712
  %780 = vmatmul.f32.gmra.mxu0 %v754
  %v781 = vpop.f32.mrf.mxu0
  %v782 = vadd.f32 %v730, %v781
  %783 = vmatmul.f32.gmra.mxu0 %v761
  %v784 = vpop.f32.mrf.mxu0
  %v785 = vadd.f32 %v730, %v784
  %786 = vdwg.mxu0
  %787 = vst [vmem:[%s5] sm:$0xff] %v782
  %788 = vst [vmem:[%s5 + $0x8] sm:$0xff] %v785
  // Predicated region
  $region22: #{atae_lstm_forward.5} parent=0 // pred_check
    _
  $region23: #{atae_lstm_forward.5} parent=0 // pred_check_branch
    %790 = sbr.rel (0) target = $region25
  $region24: #{atae_lstm_forward.5} parent=0 // pred_region
    _
  $region25: #{atae_lstm_forward.5} parent=0 // pred_fallthru
    _
  // Predicated region
  $region26: #{atae_lstm_forward.5} parent=0 // pred_check
    _
  $region27: #{atae_lstm_forward.5} parent=0 // pred_check_branch
    %792 = sbr.rel (0) target = $region29
  $region28: #{atae_lstm_forward.5} parent=0 // pred_region
    _
  $region29: #{atae_lstm_forward.5} parent=0 // pred_fallthru
    _

// kernel: atae_lstm_forward.3
$region0: #{atae_lstm_forward.3}
  #allocation0 [shape = 'u32[]', space=smem, size = 0x4, offset = 0x4, fixed_abs, tag = 'smem constant byte address 0x4 - core index']
  #allocation1 [shape = 'u32[72,128]{1,0:T(1,128)}', space=vmem, size = 0x9000, scoped, tag = 'internal scratch']
  %s0 = inlined_call_operand.vmem [shape: bf16[128,256], index: 0, kind: input, shape index: {}]
  %s1 = inlined_call_operand.vmem [shape: bf16[256,512], index: 1, kind: input, shape index: {}]
  %s2 = inlined_call_operand.vmem [shape: f32[1,512], index: 2, kind: input, shape index: {}]
  %s3 = inlined_call_operand.vmem [shape: f32[128,512], index: 3, kind: output, shape index: {}]
  %s4 = sld [smem:[#allocation0]]
  $region22: #{atae_lstm_forward.3} parent=0
    _
  %s6 = ssub.s32 1, %s4
  %s7 = scalar_select 0, %s6, %s4
  // Predicated region
  $region2: #{atae_lstm_forward.3} parent=0 // pred_check
    _
  $region3: #{atae_lstm_forward.3} parent=0 // pred_check_branch
    %9 = sbr.rel (0) target = $region5
  $region4: #{atae_lstm_forward.3} parent=0 // pred_region
    _
  $region5: #{atae_lstm_forward.3} parent=0 // pred_fallthru
    _
  // Predicated region
  $region6: #{atae_lstm_forward.3} parent=0 // pred_check
    _
  $region7: #{atae_lstm_forward.3} parent=0 // pred_check_branch
    %11 = sbr.rel (0) target = $region9
  $region8: #{atae_lstm_forward.3} parent=0 // pred_region
    _
  $region9: #{atae_lstm_forward.3} parent=0 // pred_fallthru
    _
  // Predicated region
  $region10: #{atae_lstm_forward.3} parent=0 // pred_check
    _
  $region11: #{atae_lstm_forward.3} parent=0 // pred_check_branch
    %13 = sbr.rel (0) target = $region13
  $region12: #{atae_lstm_forward.3} parent=0 // pred_region
    _
  $region13: #{atae_lstm_forward.3} parent=0 // pred_fallthru
    _
  %v14 = vld [vmem:[%s0] sm:$0xff]
  %v15 = vld [vmem:[%s0 + $0x8] sm:$0xff]
  %v16 = vld [vmem:[%s0 + $0x10] sm:$0xff]
  %v17 = vld [vmem:[%s0 + $0x18] sm:$0xff]
  %v18 = vld [vmem:[%s0 + $0x20] sm:$0xff]
  %v19 = vld [vmem:[%s0 + $0x28] sm:$0xff]
  %v20 = vld [vmem:[%s0 + $0x30] sm:$0xff]
  %v21 = vld [vmem:[%s0 + $0x38] sm:$0xff]
  %v22 = vld [vmem:[%s0 + $0x40] sm:$0xff]
  %v23 = vld [vmem:[%s0 + $0x48] sm:$0xff]
  %v24 = vld [vmem:[%s0 + $0x50] sm:$0xff]
  %v25 = vld [vmem:[%s0 + $0x58] sm:$0xff]
  %v26 = vld [vmem:[%s0 + $0x60] sm:$0xff]
  %v27 = vld [vmem:[%s0 + $0x68] sm:$0xff]
  %v28 = vld [vmem:[%s0 + $0x70] sm:$0xff]
  %v29 = vld [vmem:[%s0 + $0x78] sm:$0xff]
  %v30 = vld [vmem:[%s1] sm:$0xff]
  %v31 = vld [vmem:[%s1 + $0x8] sm:$0xff]
  %v32 = vld [vmem:[%s1 + $0x10] sm:$0xff]
  %v33 = vld [vmem:[%s1 + $0x18] sm:$0xff]
  %v34 = vld [vmem:[%s1 + $0x20] sm:$0xff]
  %v35 = vld [vmem:[%s1 + $0x28] sm:$0xff]
  %v36 = vld [vmem:[%s1 + $0x30] sm:$0xff]
  %v37 = vld [vmem:[%s1 + $0x38] sm:$0xff]
  %v38 = vld [vmem:[%s1 + $0x40] sm:$0xff]
  %v39 = vld [vmem:[%s1 + $0x48] sm:$0xff]
  %v40 = vld [vmem:[%s1 + $0x50] sm:$0xff]
  %v41 = vld [vmem:[%s1 + $0x58] sm:$0xff]
  %v42 = vld [vmem:[%s1 + $0x60] sm:$0xff]
  %v43 = vld [vmem:[%s1 + $0x68] sm:$0xff]
  %v44 = vld [vmem:[%s1 + $0x70] sm:$0xff]
  %v45 = vld [vmem:[%s1 + $0x78] sm:$0xff]
  %v46 = vld [vmem:[%s1 + $0x80] sm:$0xff]
  %v47 = vld [vmem:[%s1 + $0x88] sm:$0xff]
  %v48 = vld [vmem:[%s1 + $0x90] sm:$0xff]
  %v49 = vld [vmem:[%s1 + $0x98] sm:$0xff]
  %v50 = vld [vmem:[%s1 + $0xa0] sm:$0xff]
  %v51 = vld [vmem:[%s1 + $0xa8] sm:$0xff]
  %v52 = vld [vmem:[%s1 + $0xb0] sm:$0xff]
  %v53 = vld [vmem:[%s1 + $0xb8] sm:$0xff]
  %v54 = vld [vmem:[%s1 + $0xc0] sm:$0xff]
  %v55 = vld [vmem:[%s1 + $0xc8] sm:$0xff]
  %v56 = vld [vmem:[%s1 + $0xd0] sm:$0xff]
  %v57 = vld [vmem:[%s1 + $0xd8] sm:$0xff]
  %v58 = vld [vmem:[%s1 + $0xe0] sm:$0xff]
  %v59 = vld [vmem:[%s1 + $0xe8] sm:$0xff]
  %v60 = vld [vmem:[%s1 + $0xf0] sm:$0xff]
  %v61 = vld [vmem:[%s1 + $0xf8] sm:$0xff]
  %v62 = vld [vmem:[%s1 + $0x100] sm:$0xff]
  %v63 = vld [vmem:[%s1 + $0x108] sm:$0xff]
  %v64 = vld [vmem:[%s1 + $0x110] sm:$0xff]
  %v65 = vld [vmem:[%s1 + $0x118] sm:$0xff]
  %v66 = vld [vmem:[%s1 + $0x120] sm:$0xff]
  %v67 = vld [vmem:[%s1 + $0x128] sm:$0xff]
  %v68 = vld [vmem:[%s1 + $0x130] sm:$0xff]
  %v69 = vld [vmem:[%s1 + $0x138] sm:$0xff]
  %v70 = vld [vmem:[%s1 + $0x140] sm:$0xff]
  %v71 = vld [vmem:[%s1 + $0x148] sm:$0xff]
  %v72 = vld [vmem:[%s1 + $0x150] sm:$0xff]
  %v73 = vld [vmem:[%s1 + $0x158] sm:$0xff]
  %v74 = vld [vmem:[%s1 + $0x160] sm:$0xff]
  %v75 = vld [vmem:[%s1 + $0x168] sm:$0xff]
  %v76 = vld [vmem:[%s1 + $0x170] sm:$0xff]
  %v77 = vld [vmem:[%s1 + $0x178] sm:$0xff]
  %v78 = vld [vmem:[%s1 + $0x180] sm:$0xff]
  %v79 = vld [vmem:[%s1 + $0x188] sm:$0xff]
  %v80 = vld [vmem:[%s1 + $0x190] sm:$0xff]
  %v81 = vld [vmem:[%s1 + $0x198] sm:$0xff]
  %v82 = vld [vmem:[%s1 + $0x1a0] sm:$0xff]
  %v83 = vld [vmem:[%s1 + $0x1a8] sm:$0xff]
  %v84 = vld [vmem:[%s1 + $0x1b0] sm:$0xff]
  %v85 = vld [vmem:[%s1 + $0x1b8] sm:$0xff]
  %v86 = vld [vmem:[%s1 + $0x1c0] sm:$0xff]
  %v87 = vld [vmem:[%s1 + $0x1c8] sm:$0xff]
  %v88 = vld [vmem:[%s1 + $0x1d0] sm:$0xff]
  %v89 = vld [vmem:[%s1 + $0x1d8] sm:$0xff]
  %v90 = vld [vmem:[%s1 + $0x1e0] sm:$0xff]
  %v91 = vld [vmem:[%s1 + $0x1e8] sm:$0xff]
  %v92 = vld [vmem:[%s1 + $0x1f0] sm:$0xff]
  %v93 = vld [vmem:[%s1 + $0x1f8] sm:$0xff]
  %v94 = vld [vmem:[%s2] sm:$0xf]
  %v96 = vperm.slane %v94, 0
  %v97 = vperm.slane %v94, 1
  %v98 = vperm.slane %v94, 2
  %v99 = vperm.slane %v94, 3
  %v120 = vunpack.c.l.b16 %v14
  %v121 = vunpack.c.h.b16 %v14
  %v122 = vunpack.c.l.b16 %v15
  %v123 = vunpack.c.h.b16 %v15
  %v124 = vunpack.c.l.b16 %v16
  %v125 = vunpack.c.h.b16 %v16
  %v126 = vunpack.c.l.b16 %v17
  %v127 = vunpack.c.h.b16 %v17
  %v128 = vunpack.c.l.b16 %v18
  %v129 = vunpack.c.h.b16 %v18
  %v130 = vunpack.c.l.b16 %v19
  %v131 = vunpack.c.h.b16 %v19
  %v132 = vunpack.c.l.b16 %v20
  %v133 = vunpack.c.h.b16 %v20
  %v134 = vunpack.c.l.b16 %v21
  %v135 = vunpack.c.h.b16 %v21
  %v136 = vunpack.c.l.b16 %v22
  %v137 = vunpack.c.h.b16 %v22
  %v138 = vunpack.c.l.b16 %v23
  %v139 = vunpack.c.h.b16 %v23
  %v140 = vunpack.c.l.b16 %v24
  %v141 = vunpack.c.h.b16 %v24
  %v142 = vunpack.c.l.b16 %v25
  %v143 = vunpack.c.h.b16 %v25
  %v144 = vunpack.c.l.b16 %v26
  %v145 = vunpack.c.h.b16 %v26
  %v146 = vunpack.c.l.b16 %v27
  %v147 = vunpack.c.h.b16 %v27
  %v148 = vunpack.c.l.b16 %v28
  %v149 = vunpack.c.h.b16 %v28
  %v150 = vunpack.c.l.b16 %v29
  %v151 = vunpack.c.h.b16 %v29
  %v152 = vpack.c.b16 %v122, %v120
  %v153 = vpack.c.b16 %v123, %v121
  %v154 = vpack.c.b16 %v126, %v124
  %v155 = vpack.c.b16 %v127, %v125
  %v156 = vpack.c.b16 %v130, %v128
  %v157 = vpack.c.b16 %v131, %v129
  %v158 = vpack.c.b16 %v134, %v132
  %v159 = vpack.c.b16 %v135, %v133
  %v160 = vpack.c.b16 %v138, %v136
  %v161 = vpack.c.b16 %v139, %v137
  %v162 = vpack.c.b16 %v142, %v140
  %v163 = vpack.c.b16 %v143, %v141
  %v164 = vpack.c.b16 %v146, %v144
  %v165 = vpack.c.b16 %v147, %v145
  %v166 = vpack.c.b16 %v150, %v148
  %v167 = vpack.c.b16 %v151, %v149
  %v248 = vunpack.c.l.b16 %v30
  %v249 = vunpack.c.h.b16 %v30
  %v250 = vunpack.c.l.b16 %v31
  %v251 = vunpack.c.h.b16 %v31
  %v252 = vunpack.c.l.b16 %v32
  %v253 = vunpack.c.h.b16 %v32
  %v254 = vunpack.c.l.b16 %v33
  %v255 = vunpack.c.h.b16 %v33
  %v256 = vunpack.c.l.b16 %v34
  %v257 = vunpack.c.h.b16 %v34
  %v258 = vunpack.c.l.b16 %v35
  %v259 = vunpack.c.h.b16 %v35
  %v260 = vunpack.c.l.b16 %v36
  %v261 = vunpack.c.h.b16 %v36
  %v262 = vunpack.c.l.b16 %v37
  %v263 = vunpack.c.h.b16 %v37
  %v264 = vunpack.c.l.b16 %v38
  %v265 = vunpack.c.h.b16 %v38
  %v266 = vunpack.c.l.b16 %v39
  %v267 = vunpack.c.h.b16 %v39
  %v268 = vunpack.c.l.b16 %v40
  %v269 = vunpack.c.h.b16 %v40
  %v270 = vunpack.c.l.b16 %v41
  %v271 = vunpack.c.h.b16 %v41
  %v272 = vunpack.c.l.b16 %v42
  %v273 = vunpack.c.h.b16 %v42
  %v274 = vunpack.c.l.b16 %v43
  %v275 = vunpack.c.h.b16 %v43
  %v276 = vunpack.c.l.b16 %v44
  %v277 = vunpack.c.h.b16 %v44
  %v278 = vunpack.c.l.b16 %v45
  %v279 = vunpack.c.h.b16 %v45
  %v280 = vunpack.c.l.b16 %v46
  %v281 = vunpack.c.h.b16 %v46
  %v282 = vunpack.c.l.b16 %v47
  %v283 = vunpack.c.h.b16 %v47
  %v284 = vunpack.c.l.b16 %v48
  %v285 = vunpack.c.h.b16 %v48
  %v286 = vunpack.c.l.b16 %v49
  %v287 = vunpack.c.h.b16 %v49
  %v288 = vunpack.c.l.b16 %v50
  %v289 = vunpack.c.h.b16 %v50
  %v290 = vunpack.c.l.b16 %v51
  %v291 = vunpack.c.h.b16 %v51
  %v292 = vunpack.c.l.b16 %v52
  %v293 = vunpack.c.h.b16 %v52
  %v294 = vunpack.c.l.b16 %v53
  %v295 = vunpack.c.h.b16 %v53
  %v296 = vunpack.c.l.b16 %v54
  %v297 = vunpack.c.h.b16 %v54
  %v298 = vunpack.c.l.b16 %v55
  %v299 = vunpack.c.h.b16 %v55
  %v300 = vunpack.c.l.b16 %v56
  %v301 = vunpack.c.h.b16 %v56
  %v302 = vunpack.c.l.b16 %v57
  %v303 = vunpack.c.h.b16 %v57
  %v304 = vunpack.c.l.b16 %v58
  %v305 = vunpack.c.h.b16 %v58
  %v306 = vunpack.c.l.b16 %v59
  %v307 = vunpack.c.h.b16 %v59
  %v308 = vunpack.c.l.b16 %v60
  %v309 = vunpack.c.h.b16 %v60
  %v310 = vunpack.c.l.b16 %v61
  %v311 = vunpack.c.h.b16 %v61
  %v312 = vunpack.c.l.b16 %v62
  %v313 = vunpack.c.h.b16 %v62
  %v314 = vunpack.c.l.b16 %v63
  %v315 = vunpack.c.h.b16 %v63
  %v316 = vunpack.c.l.b16 %v64
  %v317 = vunpack.c.h.b16 %v64
  %v318 = vunpack.c.l.b16 %v65
  %v319 = vunpack.c.h.b16 %v65
  %v320 = vunpack.c.l.b16 %v66
  %v321 = vunpack.c.h.b16 %v66
  %v322 = vunpack.c.l.b16 %v67
  %v323 = vunpack.c.h.b16 %v67
  %v324 = vunpack.c.l.b16 %v68
  %v325 = vunpack.c.h.b16 %v68
  %v326 = vunpack.c.l.b16 %v69
  %v327 = vunpack.c.h.b16 %v69
  %v328 = vunpack.c.l.b16 %v70
  %v329 = vunpack.c.h.b16 %v70
  %v330 = vunpack.c.l.b16 %v71
  %v331 = vunpack.c.h.b16 %v71
  %v332 = vunpack.c.l.b16 %v72
  %v333 = vunpack.c.h.b16 %v72
  %v334 = vunpack.c.l.b16 %v73
  %v335 = vunpack.c.h.b16 %v73
  %v336 = vunpack.c.l.b16 %v74
  %v337 = vunpack.c.h.b16 %v74
  %v338 = vunpack.c.l.b16 %v75
  %v339 = vunpack.c.h.b16 %v75
  %v340 = vunpack.c.l.b16 %v76
  %v341 = vunpack.c.h.b16 %v76
  %v342 = vunpack.c.l.b16 %v77
  %v343 = vunpack.c.h.b16 %v77
  %v344 = vunpack.c.l.b16 %v78
  %v345 = vunpack.c.h.b16 %v78
  %v346 = vunpack.c.l.b16 %v79
  %v347 = vunpack.c.h.b16 %v79
  %v348 = vunpack.c.l.b16 %v80
  %v349 = vunpack.c.h.b16 %v80
  %v350 = vunpack.c.l.b16 %v81
  %v351 = vunpack.c.h.b16 %v81
  %v352 = vunpack.c.l.b16 %v82
  %v353 = vunpack.c.h.b16 %v82
  %v354 = vunpack.c.l.b16 %v83
  %v355 = vunpack.c.h.b16 %v83
  %v356 = vunpack.c.l.b16 %v84
  %v357 = vunpack.c.h.b16 %v84
  %v358 = vunpack.c.l.b16 %v85
  %v359 = vunpack.c.h.b16 %v85
  %v360 = vunpack.c.l.b16 %v86
  %v361 = vunpack.c.h.b16 %v86
  %v362 = vunpack.c.l.b16 %v87
  %v363 = vunpack.c.h.b16 %v87
  %v364 = vunpack.c.l.b16 %v88
  %v365 = vunpack.c.h.b16 %v88
  %v366 = vunpack.c.l.b16 %v89
  %v367 = vunpack.c.h.b16 %v89
  %v368 = vunpack.c.l.b16 %v90
  %v369 = vunpack.c.h.b16 %v90
  %v370 = vunpack.c.l.b16 %v91
  %v371 = vunpack.c.h.b16 %v91
  %v372 = vunpack.c.l.b16 %v92
  %v373 = vunpack.c.h.b16 %v92
  %v374 = vunpack.c.l.b16 %v93
  %v375 = vunpack.c.h.b16 %v93
  %v376 = vpack.c.b16 %v252, %v248
  %v377 = vpack.c.b16 %v253, %v249
  %v378 = vpack.c.b16 %v254, %v250
  %v379 = vpack.c.b16 %v255, %v251
  %v380 = vpack.c.b16 %v260, %v256
  %v381 = vpack.c.b16 %v261, %v257
  %v382 = vpack.c.b16 %v262, %v258
  %v383 = vpack.c.b16 %v263, %v259
  %v384 = vpack.c.b16 %v268, %v264
  %v385 = vpack.c.b16 %v269, %v265
  %v386 = vpack.c.b16 %v270, %v266
  %v387 = vpack.c.b16 %v271, %v267
  %v388 = vpack.c.b16 %v276, %v272
  %v389 = vpack.c.b16 %v277, %v273
  %v390 = vpack.c.b16 %v278, %v274
  %v391 = vpack.c.b16 %v279, %v275
  %v392 = vpack.c.b16 %v284, %v280
  %v393 = vpack.c.b16 %v285, %v281
  %v394 = vpack.c.b16 %v286, %v282
  %v395 = vpack.c.b16 %v287, %v283
  %v396 = vpack.c.b16 %v292, %v288
  %v397 = vpack.c.b16 %v293, %v289
  %v398 = vpack.c.b16 %v294, %v290
  %v399 = vpack.c.b16 %v295, %v291
  %v400 = vpack.c.b16 %v300, %v296
  %v401 = vpack.c.b16 %v301, %v297
  %v402 = vpack.c.b16 %v302, %v298
  %v403 = vpack.c.b16 %v303, %v299
  %v404 = vpack.c.b16 %v308, %v304
  %v405 = vpack.c.b16 %v309, %v305
  %v406 = vpack.c.b16 %v310, %v306
  %v407 = vpack.c.b16 %v311, %v307
  %v408 = vpack.c.b16 %v316, %v312
  %v409 = vpack.c.b16 %v317, %v313
  %v410 = vpack.c.b16 %v318, %v314
  %v411 = vpack.c.b16 %v319, %v315
  %v412 = vpack.c.b16 %v324, %v320
  %v413 = vpack.c.b16 %v325, %v321
  %v414 = vpack.c.b16 %v326, %v322
  %v415 = vpack.c.b16 %v327, %v323
  %v416 = vpack.c.b16 %v332, %v328
  %v417 = vpack.c.b16 %v333, %v329
  %v418 = vpack.c.b16 %v334, %v330
  %v419 = vpack.c.b16 %v335, %v331
  %v420 = vpack.c.b16 %v340, %v336
  %v421 = vpack.c.b16 %v341, %v337
  %v422 = vpack.c.b16 %v342, %v338
  %v423 = vpack.c.b16 %v343, %v339
  %v424 = vpack.c.b16 %v348, %v344
  %v425 = vpack.c.b16 %v349, %v345
  %v426 = vpack.c.b16 %v350, %v346
  %v427 = vpack.c.b16 %v351, %v347
  %v428 = vpack.c.b16 %v356, %v352
  %v429 = vpack.c.b16 %v357, %v353
  %v430 = vpack.c.b16 %v358, %v354
  %v431 = vpack.c.b16 %v359, %v355
  %v432 = vpack.c.b16 %v364, %v360
  %v433 = vpack.c.b16 %v365, %v361
  %v434 = vpack.c.b16 %v366, %v362
  %v435 = vpack.c.b16 %v367, %v363
  %v436 = vpack.c.b16 %v372, %v368
  %v437 = vpack.c.b16 %v373, %v369
  %v438 = vpack.c.b16 %v374, %v370
  %v439 = vpack.c.b16 %v375, %v371
  %504 = vmatpush.bf16.msra.mxu0 %v404
  %505 = vmatpush.bf16.msra.mxu0 %v400
  %506 = vmatpush.bf16.msra.mxu0 %v396
  %507 = vmatpush.bf16.msra.mxu0 %v392
  %508 = vmatpush.bf16.msra.mxu0 %v388
  %509 = vmatpush.bf16.msra.mxu0 %v384
  %510 = vmatpush.bf16.msra.mxu0 %v380
  %511 = vmatpush.bf16.msra.mxu0 %v376
  %512 = vmatmul.bf16.gmra.mxu0 %v152
  %v513 = vpop.f32.mrf.mxu0
  %v514 = vadd.f32 %v96, %v513
  %v515 = vpop.f32.mrf.mxu0
  %v516 = vadd.f32 %v96, %v515
  %517 = vmatmul.bf16.gmra.mxu0 %v154
  %v518 = vpop.f32.mrf.mxu0
  %v519 = vadd.f32 %v96, %v518
  %v520 = vpop.f32.mrf.mxu0
  %v521 = vadd.f32 %v96, %v520
  %522 = vmatmul.bf16.gmra.mxu0 %v156
  %v523 = vpop.f32.mrf.mxu0
  %v524 = vadd.f32 %v96, %v523
  %v525 = vpop.f32.mrf.mxu0
  %v526 = vadd.f32 %v96, %v525
  %527 = vmatmul.bf16.gmra.mxu0 %v158
  %v528 = vpop.f32.mrf.mxu0
  %v529 = vadd.f32 %v96, %v528
  %v530 = vpop.f32.mrf.mxu0
  %v531 = vadd.f32 %v96, %v530
  %532 = vmatmul.bf16.gmra.mxu0 %v160
  %v533 = vpop.f32.mrf.mxu0
  %v534 = vadd.f32 %v96, %v533
  %v535 = vpop.f32.mrf.mxu0
  %v536 = vadd.f32 %v96, %v535
  %537 = vmatmul.bf16.gmra.mxu0 %v162
  %v538 = vpop.f32.mrf.mxu0
  %v539 = vadd.f32 %v96, %v538
  %v540 = vpop.f32.mrf.mxu0
  %v541 = vadd.f32 %v96, %v540
  %542 = vmatmul.bf16.gmra.mxu0 %v164
  %v543 = vpop.f32.mrf.mxu0
  %v544 = vadd.f32 %v96, %v543
  %v545 = vpop.f32.mrf.mxu0
  %v546 = vadd.f32 %v96, %v545
  %547 = vmatmul.bf16.gmra.mxu0 %v166
  %v548 = vpop.f32.mrf.mxu0
  %v549 = vadd.f32 %v96, %v548
  %v550 = vpop.f32.mrf.mxu0
  %v551 = vadd.f32 %v96, %v550
  %552 = vdwg.mxu0
  %553 = vmatpush.bf16.msra.mxu0 %v436
  %554 = vmatpush.bf16.msra.mxu0 %v432
  %555 = vmatpush.bf16.msra.mxu0 %v428
  %556 = vmatpush.bf16.msra.mxu0 %v424
  %557 = vmatpush.bf16.msra.mxu0 %v420
  %558 = vmatpush.bf16.msra.mxu0 %v416
  %559 = vmatpush.bf16.msra.mxu0 %v412
  %560 = vmatpush.bf16.msra.mxu0 %v408
  %561 = vmatmul.bf16.gmra.mxu0 %v153
  %v562 = vpop.f32.mrf.mxu0
  %v563 = vadd.f32 %v514, %v562
  %v564 = vpop.f32.mrf.mxu0
  %v565 = vadd.f32 %v516, %v564
  %566 = vmatmul.bf16.gmra.mxu0 %v155
  %v567 = vpop.f32.mrf.mxu0
  %v568 = vadd.f32 %v519, %v567
  %v569 = vpop.f32.mrf.mxu0
  %v570 = vadd.f32 %v521, %v569
  %571 = vmatmul.bf16.gmra.mxu0 %v157
  %v572 = vpop.f32.mrf.mxu0
  %v573 = vadd.f32 %v524, %v572
  %v574 = vpop.f32.mrf.mxu0
  %v575 = vadd.f32 %v526, %v574
  %576 = vmatmul.bf16.gmra.mxu0 %v159
  %v577 = vpop.f32.mrf.mxu0
  %v578 = vadd.f32 %v529, %v577
  %v579 = vpop.f32.mrf.mxu0
  %v580 = vadd.f32 %v531, %v579
  %581 = vmatmul.bf16.gmra.mxu0 %v161
  %v582 = vpop.f32.mrf.mxu0
  %v583 = vadd.f32 %v534, %v582
  %v584 = vpop.f32.mrf.mxu0
  %v585 = vadd.f32 %v536, %v584
  %586 = vmatmul.bf16.gmra.mxu0 %v163
  %v587 = vpop.f32.mrf.mxu0
  %v588 = vadd.f32 %v539, %v587
  %v589 = vpop.f32.mrf.mxu0
  %v590 = vadd.f32 %v541, %v589
  %591 = vmatmul.bf16.gmra.mxu0 %v165
  %v592 = vpop.f32.mrf.mxu0
  %v593 = vadd.f32 %v544, %v592
  %v594 = vpop.f32.mrf.mxu0
  %v595 = vadd.f32 %v546, %v594
  %596 = vmatmul.bf16.gmra.mxu0 %v167
  %v597 = vpop.f32.mrf.mxu0
  %v598 = vadd.f32 %v549, %v597
  %v599 = vpop.f32.mrf.mxu0
  %v600 = vadd.f32 %v551, %v599
  %601 = vdwg.mxu0
  %602 = vmatpush.bf16.msra.mxu0 %v405
  %603 = vmatpush.bf16.msra.mxu0 %v401
  %604 = vmatpush.bf16.msra.mxu0 %v397
  %605 = vmatpush.bf16.msra.mxu0 %v393
  %606 = vmatpush.bf16.msra.mxu0 %v389
  %607 = vmatpush.bf16.msra.mxu0 %v385
  %608 = vmatpush.bf16.msra.mxu0 %v381
  %609 = vmatpush.bf16.msra.mxu0 %v377
  %610 = vmatmul.bf16.gmra.mxu0 %v152
  %v611 = vpop.f32.mrf.mxu0
  %v612 = vadd.f32 %v97, %v611
  %v613 = vpop.f32.mrf.mxu0
  %v614 = vadd.f32 %v97, %v613
  %615 = vmatmul.bf16.gmra.mxu0 %v154
  %v616 = vpop.f32.mrf.mxu0
  %v617 = vadd.f32 %v97, %v616
  %v618 = vpop.f32.mrf.mxu0
  %v619 = vadd.f32 %v97, %v618
  %620 = vmatmul.bf16.gmra.mxu0 %v156
  %v621 = vpop.f32.mrf.mxu0
  %v622 = vadd.f32 %v97, %v621
  %v623 = vpop.f32.mrf.mxu0
  %v624 = vadd.f32 %v97, %v623
  %625 = vmatmul.bf16.gmra.mxu0 %v158
  %v626 = vpop.f32.mrf.mxu0
  %v627 = vadd.f32 %v97, %v626
  %v628 = vpop.f32.mrf.mxu0
  %v629 = vadd.f32 %v97, %v628
  %630 = vmatmul.bf16.gmra.mxu0 %v160
  %v631 = vpop.f32.mrf.mxu0
  %v632 = vadd.f32 %v97, %v631
  %v633 = vpop.f32.mrf.mxu0
  %v634 = vadd.f32 %v97, %v633
  %635 = vmatmul.bf16.gmra.mxu0 %v162
  %v636 = vpop.f32.mrf.mxu0
  %v637 = vadd.f32 %v97, %v636
  %v638 = vpop.f32.mrf.mxu0
  %v639 = vadd.f32 %v97, %v638
  %640 = vmatmul.bf16.gmra.mxu0 %v164
  %v641 = vpop.f32.mrf.mxu0
  %v642 = vadd.f32 %v97, %v641
  %v643 = vpop.f32.mrf.mxu0
  %v644 = vadd.f32 %v97, %v643
  %645 = vmatmul.bf16.gmra.mxu0 %v166
  %v646 = vpop.f32.mrf.mxu0
  %v647 = vadd.f32 %v97, %v646
  %v648 = vpop.f32.mrf.mxu0
  %v649 = vadd.f32 %v97, %v648
  %650 = vdwg.mxu0
  %651 = vmatpush.bf16.msra.mxu0 %v437
  %652 = vmatpush.bf16.msra.mxu0 %v433
  %653 = vmatpush.bf16.msra.mxu0 %v429
  %654 = vmatpush.bf16.msra.mxu0 %v425
  %655 = vmatpush.bf16.msra.mxu0 %v421
  %656 = vmatpush.bf16.msra.mxu0 %v417
  %657 = vmatpush.bf16.msra.mxu0 %v413
  %658 = vmatpush.bf16.msra.mxu0 %v409
  %659 = vmatmul.bf16.gmra.mxu0 %v153
  %v660 = vpop.f32.mrf.mxu0
  %v661 = vadd.f32 %v612, %v660
  %v662 = vpop.f32.mrf.mxu0
  %v663 = vadd.f32 %v614, %v662
  %664 = vmatmul.bf16.gmra.mxu0 %v155
  %v665 = vpop.f32.mrf.mxu0
  %v666 = vadd.f32 %v617, %v665
  %v667 = vpop.f32.mrf.mxu0
  %v668 = vadd.f32 %v619, %v667
  %669 = vmatmul.bf16.gmra.mxu0 %v157
  %v670 = vpop.f32.mrf.mxu0
  %v671 = vadd.f32 %v622, %v670
  %v672 = vpop.f32.mrf.mxu0
  %v673 = vadd.f32 %v624, %v672
  %674 = vmatmul.bf16.gmra.mxu0 %v159
  %v675 = vpop.f32.mrf.mxu0
  %v676 = vadd.f32 %v627, %v675
  %v677 = vpop.f32.mrf.mxu0
  %v678 = vadd.f32 %v629, %v677
  %679 = vmatmul.bf16.gmra.mxu0 %v161
  %v680 = vpop.f32.mrf.mxu0
  %v681 = vadd.f32 %v632, %v680
  %v682 = vpop.f32.mrf.mxu0
  %v683 = vadd.f32 %v634, %v682
  %684 = vmatmul.bf16.gmra.mxu0 %v163
  %v685 = vpop.f32.mrf.mxu0
  %v686 = vadd.f32 %v637, %v685
  %v687 = vpop.f32.mrf.mxu0
  %v688 = vadd.f32 %v639, %v687
  %689 = vmatmul.bf16.gmra.mxu0 %v165
  %v690 = vpop.f32.mrf.mxu0
  %v691 = vadd.f32 %v642, %v690
  %v692 = vpop.f32.mrf.mxu0
  %v693 = vadd.f32 %v644, %v692
  %694 = vmatmul.bf16.gmra.mxu0 %v167
  %v695 = vpop.f32.mrf.mxu0
  %v696 = vadd.f32 %v647, %v695
  %v697 = vpop.f32.mrf.mxu0
  %v698 = vadd.f32 %v649, %v697
  %699 = vdwg.mxu0
  %700 = vmatpush.bf16.msra.mxu0 %v406
  %701 = vmatpush.bf16.msra.mxu0 %v402
  %702 = vmatpush.bf16.msra.mxu0 %v398
  %703 = vmatpush.bf16.msra.mxu0 %v394
  %704 = vmatpush.bf16.msra.mxu0 %v390
  %705 = vmatpush.bf16.msra.mxu0 %v386
  %706 = vmatpush.bf16.msra.mxu0 %v382
  %707 = vmatpush.bf16.msra.mxu0 %v378
  %708 = vmatmul.bf16.gmra.mxu0 %v152
  %v709 = vpop.f32.mrf.mxu0
  %v710 = vadd.f32 %v98, %v709
  %v711 = vpop.f32.mrf.mxu0
  %v712 = vadd.f32 %v98, %v711
  %713 = vmatmul.bf16.gmra.mxu0 %v154
  %v714 = vpop.f32.mrf.mxu0
  %v715 = vadd.f32 %v98, %v714
  %v716 = vpop.f32.mrf.mxu0
  %v717 = vadd.f32 %v98, %v716
  %718 = vmatmul.bf16.gmra.mxu0 %v156
  %v719 = vpop.f32.mrf.mxu0
  %v720 = vadd.f32 %v98, %v719
  %v721 = vpop.f32.mrf.mxu0
  %v722 = vadd.f32 %v98, %v721
  %723 = vmatmul.bf16.gmra.mxu0 %v158
  %v724 = vpop.f32.mrf.mxu0
  %v725 = vadd.f32 %v98, %v724
  %v726 = vpop.f32.mrf.mxu0
  %v727 = vadd.f32 %v98, %v726
  %728 = vmatmul.bf16.gmra.mxu0 %v160
  %v729 = vpop.f32.mrf.mxu0
  %v730 = vadd.f32 %v98, %v729
  %v731 = vpop.f32.mrf.mxu0
  %v732 = vadd.f32 %v98, %v731
  %733 = vmatmul.bf16.gmra.mxu0 %v162
  %v734 = vpop.f32.mrf.mxu0
  %v735 = vadd.f32 %v98, %v734
  %v736 = vpop.f32.mrf.mxu0
  %v737 = vadd.f32 %v98, %v736
  %738 = vmatmul.bf16.gmra.mxu0 %v164
  %v739 = vpop.f32.mrf.mxu0
  %v740 = vadd.f32 %v98, %v739
  %v741 = vpop.f32.mrf.mxu0
  %v742 = vadd.f32 %v98, %v741
  %743 = vmatmul.bf16.gmra.mxu0 %v166
  %v744 = vpop.f32.mrf.mxu0
  %v745 = vadd.f32 %v98, %v744
  %v746 = vpop.f32.mrf.mxu0
  %v747 = vadd.f32 %v98, %v746
  %748 = vdwg.mxu0
  %749 = vmatpush.bf16.msra.mxu0 %v438
  %750 = vmatpush.bf16.msra.mxu0 %v434
  %751 = vmatpush.bf16.msra.mxu0 %v430
  %752 = vmatpush.bf16.msra.mxu0 %v426
  %753 = vmatpush.bf16.msra.mxu0 %v422
  %754 = vmatpush.bf16.msra.mxu0 %v418
  %755 = vmatpush.bf16.msra.mxu0 %v414
  %756 = vmatpush.bf16.msra.mxu0 %v410
  %757 = vmatmul.bf16.gmra.mxu0 %v153
  %v758 = vpop.f32.mrf.mxu0
  %v759 = vadd.f32 %v710, %v758
  %v760 = vpop.f32.mrf.mxu0
  %v761 = vadd.f32 %v712, %v760
  %762 = vmatmul.bf16.gmra.mxu0 %v155
  %v763 = vpop.f32.mrf.mxu0
  %v764 = vadd.f32 %v715, %v763
  %v765 = vpop.f32.mrf.mxu0
  %v766 = vadd.f32 %v717, %v765
  %767 = vmatmul.bf16.gmra.mxu0 %v157
  %v768 = vpop.f32.mrf.mxu0
  %v769 = vadd.f32 %v720, %v768
  %v770 = vpop.f32.mrf.mxu0
  %v771 = vadd.f32 %v722, %v770
  %772 = vmatmul.bf16.gmra.mxu0 %v159
  %v773 = vpop.f32.mrf.mxu0
  %v774 = vadd.f32 %v725, %v773
  %v775 = vpop.f32.mrf.mxu0
  %v776 = vadd.f32 %v727, %v775
  %777 = vmatmul.bf16.gmra.mxu0 %v161
  %v778 = vpop.f32.mrf.mxu0
  %v779 = vadd.f32 %v730, %v778
  %v780 = vpop.f32.mrf.mxu0
  %v781 = vadd.f32 %v732, %v780
  %782 = vmatmul.bf16.gmra.mxu0 %v163
  %v783 = vpop.f32.mrf.mxu0
  %v784 = vadd.f32 %v735, %v783
  %v785 = vpop.f32.mrf.mxu0
  %v786 = vadd.f32 %v737, %v785
  %787 = vmatmul.bf16.gmra.mxu0 %v165
  %v788 = vpop.f32.mrf.mxu0
  %v789 = vadd.f32 %v740, %v788
  %v790 = vpop.f32.mrf.mxu0
  %v791 = vadd.f32 %v742, %v790
  %792 = vmatmul.bf16.gmra.mxu0 %v167
  %v793 = vpop.f32.mrf.mxu0
  %v794 = vadd.f32 %v745, %v793
  %v795 = vpop.f32.mrf.mxu0
  %v796 = vadd.f32 %v747, %v795
  %797 = vdwg.mxu0
  %798 = vmatpush.bf16.msra.mxu0 %v407
  %799 = vmatpush.bf16.msra.mxu0 %v403
  %800 = vmatpush.bf16.msra.mxu0 %v399
  %801 = vmatpush.bf16.msra.mxu0 %v395
  %802 = vmatpush.bf16.msra.mxu0 %v391
  %803 = vmatpush.bf16.msra.mxu0 %v387
  %804 = vmatpush.bf16.msra.mxu0 %v383
  %805 = vmatpush.bf16.msra.mxu0 %v379
  %806 = vmatmul.bf16.gmra.mxu0 %v152
  %v807 = vpop.f32.mrf.mxu0
  %v808 = vadd.f32 %v99, %v807
  %v809 = vpop.f32.mrf.mxu0
  %v810 = vadd.f32 %v99, %v809
  %811 = vmatmul.bf16.gmra.mxu0 %v154
  %v812 = vpop.f32.mrf.mxu0
  %v813 = vadd.f32 %v99, %v812
  %v814 = vpop.f32.mrf.mxu0
  %v815 = vadd.f32 %v99, %v814
  %816 = vmatmul.bf16.gmra.mxu0 %v156
  %v817 = vpop.f32.mrf.mxu0
  %v818 = vadd.f32 %v99, %v817
  %v819 = vpop.f32.mrf.mxu0
  %v820 = vadd.f32 %v99, %v819
  %821 = vmatmul.bf16.gmra.mxu0 %v158
  %v822 = vpop.f32.mrf.mxu0
  %v823 = vadd.f32 %v99, %v822
  %v824 = vpop.f32.mrf.mxu0
  %v825 = vadd.f32 %v99, %v824
  %826 = vmatmul.bf16.gmra.mxu0 %v160
  %v827 = vpop.f32.mrf.mxu0
  %v828 = vadd.f32 %v99, %v827
  %v829 = vpop.f32.mrf.mxu0
  %v830 = vadd.f32 %v99, %v829
  %831 = vmatmul.bf16.gmra.mxu0 %v162
  %v832 = vpop.f32.mrf.mxu0
  %v833 = vadd.f32 %v99, %v832
  %v834 = vpop.f32.mrf.mxu0
  %v835 = vadd.f32 %v99, %v834
  %836 = vmatmul.bf16.gmra.mxu0 %v164
  %v837 = vpop.f32.mrf.mxu0
  %v838 = vadd.f32 %v99, %v837
  %v839 = vpop.f32.mrf.mxu0
  %v840 = vadd.f32 %v99, %v839
  %841 = vmatmul.bf16.gmra.mxu0 %v166
  %v842 = vpop.f32.mrf.mxu0
  %v843 = vadd.f32 %v99, %v842
  %v844 = vpop.f32.mrf.mxu0
  %v845 = vadd.f32 %v99, %v844
  %846 = vdwg.mxu0
  %847 = vmatpush.bf16.msra.mxu0 %v439
  %848 = vmatpush.bf16.msra.mxu0 %v435
  %849 = vmatpush.bf16.msra.mxu0 %v431
  %850 = vmatpush.bf16.msra.mxu0 %v427
  %851 = vmatpush.bf16.msra.mxu0 %v423
  %852 = vmatpush.bf16.msra.mxu0 %v419
  %853 = vmatpush.bf16.msra.mxu0 %v415
  %854 = vmatpush.bf16.msra.mxu0 %v411
  %855 = vmatmul.bf16.gmra.mxu0 %v153
  %v856 = vpop.f32.mrf.mxu0
  %v857 = vadd.f32 %v808, %v856
  %v858 = vpop.f32.mrf.mxu0
  %v859 = vadd.f32 %v810, %v858
  %860 = vmatmul.bf16.gmra.mxu0 %v155
  %v861 = vpop.f32.mrf.mxu0
  %v862 = vadd.f32 %v813, %v861
  %v863 = vpop.f32.mrf.mxu0
  %v864 = vadd.f32 %v815, %v863
  %865 = vmatmul.bf16.gmra.mxu0 %v157
  %v866 = vpop.f32.mrf.mxu0
  %v867 = vadd.f32 %v818, %v866
  %v868 = vpop.f32.mrf.mxu0
  %v869 = vadd.f32 %v820, %v868
  %870 = vmatmul.bf16.gmra.mxu0 %v159
  %v871 = vpop.f32.mrf.mxu0
  %v872 = vadd.f32 %v823, %v871
  %v873 = vpop.f32.mrf.mxu0
  %v874 = vadd.f32 %v825, %v873
  %875 = vmatmul.bf16.gmra.mxu0 %v161
  %v876 = vpop.f32.mrf.mxu0
  %v877 = vadd.f32 %v828, %v876
  %v878 = vpop.f32.mrf.mxu0
  %v879 = vadd.f32 %v830, %v878
  %880 = vmatmul.bf16.gmra.mxu0 %v163
  %v881 = vpop.f32.mrf.mxu0
  %v882 = vadd.f32 %v833, %v881
  %v883 = vpop.f32.mrf.mxu0
  %v884 = vadd.f32 %v835, %v883
  %885 = vmatmul.bf16.gmra.mxu0 %v165
  %v886 = vpop.f32.mrf.mxu0
  %v887 = vadd.f32 %v838, %v886
  %v888 = vpop.f32.mrf.mxu0
  %v889 = vadd.f32 %v840, %v888
  %890 = vmatmul.bf16.gmra.mxu0 %v167
  %v891 = vpop.f32.mrf.mxu0
  %v892 = vadd.f32 %v843, %v891
  %v893 = vpop.f32.mrf.mxu0
  %v894 = vadd.f32 %v845, %v893
  %895 = vdwg.mxu0
  %896 = vst [vmem:[%s3] sm:$0xff] %v563
  %897 = vst [vmem:[%s3 + $0x8] sm:$0xff] %v661
  %898 = vst [vmem:[%s3 + $0x10] sm:$0xff] %v759
  %899 = vst [vmem:[%s3 + $0x18] sm:$0xff] %v857
  %900 = vst [vmem:[%s3 + $0x20] sm:$0xff] %v565
  %901 = vst [vmem:[%s3 + $0x28] sm:$0xff] %v663
  %902 = vst [vmem:[%s3 + $0x30] sm:$0xff] %v761
  %903 = vst [vmem:[%s3 + $0x38] sm:$0xff] %v859
  %904 = vst [vmem:[%s3 + $0x40] sm:$0xff] %v568
  %905 = vst [vmem:[%s3 + $0x48] sm:$0xff] %v666
  %906 = vst [vmem:[%s3 + $0x50] sm:$0xff] %v764
  %907 = vst [vmem:[%s3 + $0x58] sm:$0xff] %v862
  %908 = vst [vmem:[%s3 + $0x60] sm:$0xff] %v570
  %909 = vst [vmem:[%s3 + $0x68] sm:$0xff] %v668
  %910 = vst [vmem:[%s3 + $0x70] sm:$0xff] %v766
  %911 = vst [vmem:[%s3 + $0x78] sm:$0xff] %v864
  %912 = vst [vmem:[%s3 + $0x80] sm:$0xff] %v573
  %913 = vst [vmem:[%s3 + $0x88] sm:$0xff] %v671
  %914 = vst [vmem:[%s3 + $0x90] sm:$0xff] %v769
  %915 = vst [vmem:[%s3 + $0x98] sm:$0xff] %v867
  %916 = vst [vmem:[%s3 + $0xa0] sm:$0xff] %v575
  %917 = vst [vmem:[%s3 + $0xa8] sm:$0xff] %v673
  %918 = vst [vmem:[%s3 + $0xb0] sm:$0xff] %v771
  %919 = vst [vmem:[%s3 + $0xb8] sm:$0xff] %v869
  %920 = vst [vmem:[%s3 + $0xc0] sm:$0xff] %v578
  %921 = vst [vmem:[%s3 + $0xc8] sm:$0xff] %v676
  %922 = vst [vmem:[%s3 + $0xd0] sm:$0xff] %v774
  %923 = vst [vmem:[%s3 + $0xd8] sm:$0xff] %v872
  %924 = vst [vmem:[%s3 + $0xe0] sm:$0xff] %v580
  %925 = vst [vmem:[%s3 + $0xe8] sm:$0xff] %v678
  %926 = vst [vmem:[%s3 + $0xf0] sm:$0xff] %v776
  %927 = vst [vmem:[%s3 + $0xf8] sm:$0xff] %v874
  %928 = vst [vmem:[%s3 + $0x100] sm:$0xff] %v583
  %929 = vst [vmem:[%s3 + $0x108] sm:$0xff] %v681
  %930 = vst [vmem:[%s3 + $0x110] sm:$0xff] %v779
  %931 = vst [vmem:[%s3 + $0x118] sm:$0xff] %v877
  %932 = vst [vmem:[%s3 + $0x120] sm:$0xff] %v585
  %933 = vst [vmem:[%s3 + $0x128] sm:$0xff] %v683
  %934 = vst [vmem:[%s3 + $0x130] sm:$0xff] %v781
  %935 = vst [vmem:[%s3 + $0x138] sm:$0xff] %v879
  %936 = vst [vmem:[%s3 + $0x140] sm:$0xff] %v588
  %937 = vst [vmem:[%s3 + $0x148] sm:$0xff] %v686
  %938 = vst [vmem:[%s3 + $0x150] sm:$0xff] %v784
  %939 = vst [vmem:[%s3 + $0x158] sm:$0xff] %v882
  %940 = vst [vmem:[%s3 + $0x160] sm:$0xff] %v590
  %941 = vst [vmem:[%s3 + $0x168] sm:$0xff] %v688
  %942 = vst [vmem:[%s3 + $0x170] sm:$0xff] %v786
  %943 = vst [vmem:[%s3 + $0x178] sm:$0xff] %v884
  %944 = vst [vmem:[%s3 + $0x180] sm:$0xff] %v593
  %945 = vst [vmem:[%s3 + $0x188] sm:$0xff] %v691
  %946 = vst [vmem:[%s3 + $0x190] sm:$0xff] %v789
  %947 = vst [vmem:[%s3 + $0x198] sm:$0xff] %v887
  %948 = vst [vmem:[%s3 + $0x1a0] sm:$0xff] %v595
  %949 = vst [vmem:[%s3 + $0x1a8] sm:$0xff] %v693
  %950 = vst [vmem:[%s3 + $0x1b0] sm:$0xff] %v791
  %951 = vst [vmem:[%s3 + $0x1b8] sm:$0xff] %v889
  %952 = vst [vmem:[%s3 + $0x1c0] sm:$0xff] %v598
  %953 = vst [vmem:[%s3 + $0x1c8] sm:$0xff] %v696
  %954 = vst [vmem:[%s3 + $0x1d0] sm:$0xff] %v794
  %955 = vst [vmem:[%s3 + $0x1d8] sm:$0xff] %v892
  %956 = vst [vmem:[%s3 + $0x1e0] sm:$0xff] %v600
  %957 = vst [vmem:[%s3 + $0x1e8] sm:$0xff] %v698
  %958 = vst [vmem:[%s3 + $0x1f0] sm:$0xff] %v796
  %959 = vst [vmem:[%s3 + $0x1f8] sm:$0xff] %v894
  // Predicated region
  $region14: #{atae_lstm_forward.3} parent=0 // pred_check
    _
  $region15: #{atae_lstm_forward.3} parent=0 // pred_check_branch
    %961 = sbr.rel (0) target = $region17
  $region16: #{atae_lstm_forward.3} parent=0 // pred_region
    _
  $region17: #{atae_lstm_forward.3} parent=0 // pred_fallthru
    _
  // Predicated region
  $region18: #{atae_lstm_forward.3} parent=0 // pred_check
    _
  $region19: #{atae_lstm_forward.3} parent=0 // pred_check_branch
    %963 = sbr.rel (0) target = $region21
  $region20: #{atae_lstm_forward.3} parent=0 // pred_region
    _
  $region21: #{atae_lstm_forward.3} parent=0 // pred_fallthru
    _

// kernel: atae_lstm_forward.4
$region0: #{atae_lstm_forward.4}
  #allocation0 [shape = 'u32[]', space=smem, size = 0x4, offset = 0x4, fixed_abs, tag = 'smem constant byte address 0x4 - core index']
  #allocation1 [shape = 'u32[72,128]{1,0:T(1,128)}', space=vmem, size = 0x9000, scoped, tag = 'internal scratch']
  %s0 = inlined_call_operand.vmem [shape: s32[16,1], index: 0, kind: input, shape index: {}]
  %s1 = inlined_call_operand.vmem [shape: f32[16,8,512], index: 1, kind: input, shape index: {}]
  %s2 = inlined_call_operand.vmem [shape: bf16[128,512], index: 2, kind: input, shape index: {}]
  %s3 = inlined_call_operand.vmem [shape: f32[16,8,128], index: 3, kind: output, shape index: {}]
  %s4 = sld [smem:[#allocation0]]
  $region22: #{atae_lstm_forward.4} parent=0
    _
  %s6 = ssub.s32 1, %s4
  %s7 = scalar_select 0, %s6, %s4
  // Predicated region
  $region2: #{atae_lstm_forward.4} parent=0 // pred_check
    _
  $region3: #{atae_lstm_forward.4} parent=0 // pred_check_branch
    %9 = sbr.rel (0) target = $region5
  $region4: #{atae_lstm_forward.4} parent=0 // pred_region
    _
  $region5: #{atae_lstm_forward.4} parent=0 // pred_fallthru
    _
  // Predicated region
  $region6: #{atae_lstm_forward.4} parent=0 // pred_check
    _
  $region7: #{atae_lstm_forward.4} parent=0 // pred_check_branch
    %11 = sbr.rel (0) target = $region9
  $region8: #{atae_lstm_forward.4} parent=0 // pred_region
    _
  $region9: #{atae_lstm_forward.4} parent=0 // pred_fallthru
    _
  // Predicated region
  $region10: #{atae_lstm_forward.4} parent=0 // pred_check
    _
  $region11: #{atae_lstm_forward.4} parent=0 // pred_check_branch
    %13 = sbr.rel (0) target = $region13
  $region12: #{atae_lstm_forward.4} parent=0 // pred_region
    _
  $region13: #{atae_lstm_forward.4} parent=0 // pred_fallthru
    _
  %v15 = vld [vmem:[%s0] sm:$0xff]
  %v16 = vld [vmem:[%s0 + $0x8] sm:$0xff]
  %v17 = vld [vmem:[%s1] ss:$8 sm:$0xf]
  %s18 = scalar_lea.vmem %s1, 32
  %v19 = vld [vmem:[%s18] ss:$8 sm:$0xf]
  %s20 = scalar_lea.vmem %s1, 64
  %v21 = vld [vmem:[%s20] ss:$8 sm:$0xf]
  %s22 = scalar_lea.vmem %s1, 96
  %v23 = vld [vmem:[%s22] ss:$8 sm:$0xf]
  %s24 = scalar_lea.vmem %s1, 128
  %v25 = vld [vmem:[%s24] ss:$8 sm:$0xf]
  %s26 = scalar_lea.vmem %s1, 160
  %v27 = vld [vmem:[%s26] ss:$8 sm:$0xf]
  %s28 = scalar_lea.vmem %s1, 192
  %v29 = vld [vmem:[%s28] ss:$8 sm:$0xf]
  %s30 = scalar_lea.vmem %s1, 224
  %v31 = vld [vmem:[%s30] ss:$8 sm:$0xf]
  %s32 = scalar_lea.vmem %s1, 256
  %v33 = vld [vmem:[%s32] ss:$8 sm:$0xf]
  %s34 = scalar_lea.vmem %s1, 288
  %v35 = vld [vmem:[%s34] ss:$8 sm:$0xf]
  %s36 = scalar_lea.vmem %s1, 320
  %v37 = vld [vmem:[%s36] ss:$8 sm:$0xf]
  %s38 = scalar_lea.vmem %s1, 352
  %v39 = vld [vmem:[%s38] ss:$8 sm:$0xf]
  %s40 = scalar_lea.vmem %s1, 384
  %v41 = vld [vmem:[%s40] ss:$8 sm:$0xf]
  %s42 = scalar_lea.vmem %s1, 416
  %v43 = vld [vmem:[%s42] ss:$8 sm:$0xf]
  %s44 = scalar_lea.vmem %s1, 448
  %v45 = vld [vmem:[%s44] ss:$8 sm:$0xf]
  %s46 = scalar_lea.vmem %s1, 480
  %v47 = vld [vmem:[%s46] ss:$8 sm:$0xf]
  %v48 = vld [vmem:[%s2] sm:$0xff]
  %v49 = vld [vmem:[%s2 + $0x8] sm:$0xff]
  %v50 = vld [vmem:[%s2 + $0x10] sm:$0xff]
  %v51 = vld [vmem:[%s2 + $0x18] sm:$0xff]
  %v52 = vld [vmem:[%s2 + $0x20] sm:$0xff]
  %v53 = vld [vmem:[%s2 + $0x28] sm:$0xff]
  %v54 = vld [vmem:[%s2 + $0x30] sm:$0xff]
  %v55 = vld [vmem:[%s2 + $0x38] sm:$0xff]
  %v56 = vld [vmem:[%s2 + $0x40] sm:$0xff]
  %v57 = vld [vmem:[%s2 + $0x48] sm:$0xff]
  %v58 = vld [vmem:[%s2 + $0x50] sm:$0xff]
  %v59 = vld [vmem:[%s2 + $0x58] sm:$0xff]
  %v60 = vld [vmem:[%s2 + $0x60] sm:$0xff]
  %v61 = vld [vmem:[%s2 + $0x68] sm:$0xff]
  %v62 = vld [vmem:[%s2 + $0x70] sm:$0xff]
  %v63 = vld [vmem:[%s2 + $0x78] sm:$0xff]
  %v64 = vld [vmem:[%s2 + $0x80] sm:$0xff]
  %v65 = vld [vmem:[%s2 + $0x88] sm:$0xff]
  %v66 = vld [vmem:[%s2 + $0x90] sm:$0xff]
  %v67 = vld [vmem:[%s2 + $0x98] sm:$0xff]
  %v68 = vld [vmem:[%s2 + $0xa0] sm:$0xff]
  %v69 = vld [vmem:[%s2 + $0xa8] sm:$0xff]
  %v70 = vld [vmem:[%s2 + $0xb0] sm:$0xff]
  %v71 = vld [vmem:[%s2 + $0xb8] sm:$0xff]
  %v72 = vld [vmem:[%s2 + $0xc0] sm:$0xff]
  %v73 = vld [vmem:[%s2 + $0xc8] sm:$0xff]
  %v74 = vld [vmem:[%s2 + $0xd0] sm:$0xff]
  %v75 = vld [vmem:[%s2 + $0xd8] sm:$0xff]
  %v76 = vld [vmem:[%s2 + $0xe0] sm:$0xff]
  %v77 = vld [vmem:[%s2 + $0xe8] sm:$0xff]
  %v78 = vld [vmem:[%s2 + $0xf0] sm:$0xff]
  %v79 = vld [vmem:[%s2 + $0xf8] sm:$0xff]
  %v112 = vunpack.c.l.b16 %v48
  %v113 = vunpack.c.h.b16 %v48
  %v114 = vunpack.c.l.b16 %v49
  %v115 = vunpack.c.h.b16 %v49
  %v116 = vunpack.c.l.b16 %v50
  %v117 = vunpack.c.h.b16 %v50
  %v118 = vunpack.c.l.b16 %v51
  %v119 = vunpack.c.h.b16 %v51
  %v120 = vunpack.c.l.b16 %v52
  %v121 = vunpack.c.h.b16 %v52
  %v122 = vunpack.c.l.b16 %v53
  %v123 = vunpack.c.h.b16 %v53
  %v124 = vunpack.c.l.b16 %v54
  %v125 = vunpack.c.h.b16 %v54
  %v126 = vunpack.c.l.b16 %v55
  %v127 = vunpack.c.h.b16 %v55
  %v128 = vunpack.c.l.b16 %v56
  %v129 = vunpack.c.h.b16 %v56
  %v130 = vunpack.c.l.b16 %v57
  %v131 = vunpack.c.h.b16 %v57
  %v132 = vunpack.c.l.b16 %v58
  %v133 = vunpack.c.h.b16 %v58
  %v134 = vunpack.c.l.b16 %v59
  %v135 = vunpack.c.h.b16 %v59
  %v136 = vunpack.c.l.b16 %v60
  %v137 = vunpack.c.h.b16 %v60
  %v138 = vunpack.c.l.b16 %v61
  %v139 = vunpack.c.h.b16 %v61
  %v140 = vunpack.c.l.b16 %v62
  %v141 = vunpack.c.h.b16 %v62
  %v142 = vunpack.c.l.b16 %v63
  %v143 = vunpack.c.h.b16 %v63
  %v144 = vunpack.c.l.b16 %v64
  %v145 = vunpack.c.h.b16 %v64
  %v146 = vunpack.c.l.b16 %v65
  %v147 = vunpack.c.h.b16 %v65
  %v148 = vunpack.c.l.b16 %v66
  %v149 = vunpack.c.h.b16 %v66
  %v150 = vunpack.c.l.b16 %v67
  %v151 = vunpack.c.h.b16 %v67
  %v152 = vunpack.c.l.b16 %v68
  %v153 = vunpack.c.h.b16 %v68
  %v154 = vunpack.c.l.b16 %v69
  %v155 = vunpack.c.h.b16 %v69
  %v156 = vunpack.c.l.b16 %v70
  %v157 = vunpack.c.h.b16 %v70
  %v158 = vunpack.c.l.b16 %v71
  %v159 = vunpack.c.h.b16 %v71
  %v160 = vunpack.c.l.b16 %v72
  %v161 = vunpack.c.h.b16 %v72
  %v162 = vunpack.c.l.b16 %v73
  %v163 = vunpack.c.h.b16 %v73
  %v164 = vunpack.c.l.b16 %v74
  %v165 = vunpack.c.h.b16 %v74
  %v166 = vunpack.c.l.b16 %v75
  %v167 = vunpack.c.h.b16 %v75
  %v168 = vunpack.c.l.b16 %v76
  %v169 = vunpack.c.h.b16 %v76
  %v170 = vunpack.c.l.b16 %v77
  %v171 = vunpack.c.h.b16 %v77
  %v172 = vunpack.c.l.b16 %v78
  %v173 = vunpack.c.h.b16 %v78
  %v174 = vunpack.c.l.b16 %v79
  %v175 = vunpack.c.h.b16 %v79
  %v176 = vpack.c.b16 %v116, %v112
  %v177 = vpack.c.b16 %v117, %v113
  %v178 = vpack.c.b16 %v118, %v114
  %v179 = vpack.c.b16 %v119, %v115
  %v180 = vpack.c.b16 %v124, %v120
  %v181 = vpack.c.b16 %v125, %v121
  %v182 = vpack.c.b16 %v126, %v122
  %v183 = vpack.c.b16 %v127, %v123
  %v184 = vpack.c.b16 %v132, %v128
  %v185 = vpack.c.b16 %v133, %v129
  %v186 = vpack.c.b16 %v134, %v130
  %v187 = vpack.c.b16 %v135, %v131
  %v188 = vpack.c.b16 %v140, %v136
  %v189 = vpack.c.b16 %v141, %v137
  %v190 = vpack.c.b16 %v142, %v138
  %v191 = vpack.c.b16 %v143, %v139
  %v192 = vpack.c.b16 %v148, %v144
  %v193 = vpack.c.b16 %v149, %v145
  %v194 = vpack.c.b16 %v150, %v146
  %v195 = vpack.c.b16 %v151, %v147
  %v196 = vpack.c.b16 %v156, %v152
  %v197 = vpack.c.b16 %v157, %v153
  %v198 = vpack.c.b16 %v158, %v154
  %v199 = vpack.c.b16 %v159, %v155
  %v200 = vpack.c.b16 %v164, %v160
  %v201 = vpack.c.b16 %v165, %v161
  %v202 = vpack.c.b16 %v166, %v162
  %v203 = vpack.c.b16 %v167, %v163
  %v204 = vpack.c.b16 %v172, %v168
  %v205 = vpack.c.b16 %v173, %v169
  %v206 = vpack.c.b16 %v174, %v170
  %v207 = vpack.c.b16 %v175, %v171
  %240 = vmatpush.bf16.msra.mxu0 %v204
  %241 = vmatpush.bf16.msra.mxu0 %v200
  %242 = vmatpush.bf16.msra.mxu0 %v196
  %243 = vmatpush.bf16.msra.mxu0 %v192
  %244 = vmatpush.bf16.msra.mxu0 %v188
  %245 = vmatpush.bf16.msra.mxu0 %v184
  %246 = vmatpush.bf16.msra.mxu0 %v180
  %247 = vmatpush.bf16.msra.mxu0 %v176
  %248 = vmatmul.bf16.gmra.mxu0 0
  %v249 = vpop.f32.mrf.mxu0
  %v250 = vadd.f32 0.0, %v249
  %v251 = vpop.f32.mrf.mxu0
  %v252 = vadd.f32 0.0, %v251
  %253 = vdwg.mxu0
  %254 = vmatpush.bf16.msra.mxu0 %v205
  %255 = vmatpush.bf16.msra.mxu0 %v201
  %256 = vmatpush.bf16.msra.mxu0 %v197
  %257 = vmatpush.bf16.msra.mxu0 %v193
  %258 = vmatpush.bf16.msra.mxu0 %v189
  %259 = vmatpush.bf16.msra.mxu0 %v185
  %260 = vmatpush.bf16.msra.mxu0 %v181
  %261 = vmatpush.bf16.msra.mxu0 %v177
  %262 = vmatmul.bf16.gmra.mxu0 0
  %v263 = vpop.f32.mrf.mxu0
  %v264 = vadd.f32 0.0, %v263
  %v265 = vpop.f32.mrf.mxu0
  %v266 = vadd.f32 0.0, %v265
  %267 = vdwg.mxu0
  %268 = vmatpush.bf16.msra.mxu0 %v206
  %269 = vmatpush.bf16.msra.mxu0 %v202
  %270 = vmatpush.bf16.msra.mxu0 %v198
  %271 = vmatpush.bf16.msra.mxu0 %v194
  %272 = vmatpush.bf16.msra.mxu0 %v190
  %273 = vmatpush.bf16.msra.mxu0 %v186
  %274 = vmatpush.bf16.msra.mxu0 %v182
  %275 = vmatpush.bf16.msra.mxu0 %v178
  %276 = vmatmul.bf16.gmra.mxu0 0
  %v277 = vpop.f32.mrf.mxu0
  %v278 = vadd.f32 0.0, %v277
  %v279 = vpop.f32.mrf.mxu0
  %v280 = vadd.f32 0.0, %v279
  %281 = vdwg.mxu0
  %282 = vmatpush.bf16.msra.mxu0 %v207
  %283 = vmatpush.bf16.msra.mxu0 %v203
  %284 = vmatpush.bf16.msra.mxu0 %v199
  %285 = vmatpush.bf16.msra.mxu0 %v195
  %286 = vmatpush.bf16.msra.mxu0 %v191
  %287 = vmatpush.bf16.msra.mxu0 %v187
  %288 = vmatpush.bf16.msra.mxu0 %v183
  %289 = vmatpush.bf16.msra.mxu0 %v179
  %290 = vmatmul.bf16.gmra.mxu0 0
  %v291 = vpop.f32.mrf.mxu0
  %v292 = vadd.f32 0.0, %v291
  %v293 = vpop.f32.mrf.mxu0
  %v294 = vadd.f32 0.0, %v293
  %295 = vdwg.mxu0
  %v304 = vrot.slane %v264, 7
  %v305 = vrot.slane %v278, 6
  %v306 = vrot.slane %v292, 5
  %v307 = vrot.slane %v266, 7
  %v308 = vrot.slane %v280, 6
  %v309 = vrot.slane %v294, 5
  %vm310 = vcmask 1040384
  %v311 = vsel %vm310, %v250, %v304
  %vm312 = vcmask 1042434
  %v313 = vsel %vm312, %v305, %v306
  %vm314 = vcmask 1041408
  %v315 = vsel %vm314, %v311, %v313
  %vm316 = vcmask 1041409
  %v317 = vsel %vm316, %v250, %v304
  %vm318 = vcmask 1043459
  %v319 = vsel %vm318, %v305, %v306
  %vm320 = vcmask 1042433
  %v321 = vsel %vm320, %v317, %v319
  %v322 = vrot.slane %v321, 1
  %v323 = vsel %vm312, %v250, %v304
  %vm324 = vcmask 1044484
  %v325 = vsel %vm324, %v305, %v306
  %vm326 = vcmask 1043458
  %v327 = vsel %vm326, %v323, %v325
  %v328 = vrot.slane %v327, 2
  %v329 = vsel %vm318, %v250, %v304
  %vm330 = vcmask 1045509
  %v331 = vsel %vm330, %v305, %v306
  %vm332 = vcmask 1044483
  %v333 = vsel %vm332, %v329, %v331
  %v334 = vrot.slane %v333, 3
  %v335 = vsel %vm324, %v250, %v304
  %vm336 = vcmask 1046534
  %v337 = vsel %vm336, %v305, %v306
  %vm338 = vcmask 1045508
  %v339 = vsel %vm338, %v335, %v337
  %v340 = vrot.slane %v339, 4
  %v341 = vsel %vm330, %v250, %v304
  %vm342 = vcmask 1046528
  %v343 = vsel %vm342, %v306, %v305
  %vm344 = vcmask 1046533
  %v345 = vsel %vm344, %v341, %v343
  %v346 = vrot.slane %v345, 5
  %v347 = vsel %vm336, %v250, %v304
  %v348 = vsel %vm310, %v305, %v306
  %vm349 = vcmask 1045504
  %v350 = vsel %vm349, %v348, %v347
  %v351 = vrot.slane %v350, 6
  %v352 = vsel %vm342, %v304, %v250
  %v353 = vsel %vm316, %v305, %v306
  %vm354 = vcmask 1046529
  %v355 = vsel %vm354, %v353, %v352
  %v356 = vrot.slane %v355, 7
  %v357 = vsel %vm310, %v252, %v307
  %v358 = vsel %vm312, %v308, %v309
  %v359 = vsel %vm314, %v357, %v358
  %v360 = vsel %vm316, %v252, %v307
  %v361 = vsel %vm318, %v308, %v309
  %v362 = vsel %vm320, %v360, %v361
  %v363 = vrot.slane %v362, 1
  %v364 = vsel %vm312, %v252, %v307
  %v365 = vsel %vm324, %v308, %v309
  %v366 = vsel %vm326, %v364, %v365
  %v367 = vrot.slane %v366, 2
  %v368 = vsel %vm318, %v252, %v307
  %v369 = vsel %vm330, %v308, %v309
  %v370 = vsel %vm332, %v368, %v369
  %v371 = vrot.slane %v370, 3
  %v372 = vsel %vm324, %v252, %v307
  %v373 = vsel %vm336, %v308, %v309
  %v374 = vsel %vm338, %v372, %v373
  %v375 = vrot.slane %v374, 4
  %v376 = vsel %vm330, %v252, %v307
  %v377 = vsel %vm342, %v309, %v308
  %v378 = vsel %vm344, %v376, %v377
  %v379 = vrot.slane %v378, 5
  %v380 = vsel %vm336, %v252, %v307
  %v381 = vsel %vm310, %v308, %v309
  %v382 = vsel %vm349, %v381, %v380
  %v383 = vrot.slane %v382, 6
  %v384 = vsel %vm342, %v307, %v252
  %v385 = vsel %vm316, %v308, %v309
  %v386 = vsel %vm354, %v385, %v384
  %v387 = vrot.slane %v386, 7
  %v404 = vadd.f32 %v17, %v315
  %v405 = vadd.f32 %v19, %v322
  %v406 = vadd.f32 %v21, %v328
  %v407 = vadd.f32 %v23, %v334
  %v408 = vadd.f32 %v25, %v340
  %v409 = vadd.f32 %v27, %v346
  %v410 = vadd.f32 %v29, %v351
  %v411 = vadd.f32 %v31, %v356
  %v412 = vadd.f32 %v33, %v359
  %v413 = vadd.f32 %v35, %v363
  %v414 = vadd.f32 %v37, %v367
  %v415 = vadd.f32 %v39, %v371
  %v416 = vadd.f32 %v41, %v375
  %v417 = vadd.f32 %v43, %v379
  %v418 = vadd.f32 %v45, %v383
  %v419 = vadd.f32 %v47, %v387
  %v420 = vmul.f32 %v404, 0.5
  %v421 = vmul.f32 %v405, 0.5
  %v422 = vmul.f32 %v406, 0.5
  %v423 = vmul.f32 %v407, 0.5
  %v424 = vmul.f32 %v408, 0.5
  %v425 = vmul.f32 %v409, 0.5
  %v426 = vmul.f32 %v410, 0.5
  %v427 = vmul.f32 %v411, 0.5
  %v428 = vmul.f32 %v412, 0.5
  %v429 = vmul.f32 %v413, 0.5
  %v430 = vmul.f32 %v414, 0.5
  %v431 = vmul.f32 %v415, 0.5
  %v432 = vmul.f32 %v416, 0.5
  %v433 = vmul.f32 %v417, 0.5
  %v434 = vmul.f32 %v418, 0.5
  %v435 = vmul.f32 %v419, 0.5
  %v436 = vtanh.pop %v420
  %v437 = vtanh.pop %v421
  %v438 = vtanh.pop %v422
  %v439 = vtanh.pop %v423
  %v440 = vtanh.pop %v424
  %v441 = vtanh.pop %v425
  %v442 = vtanh.pop %v426
  %v443 = vtanh.pop %v427
  %v444 = vtanh.pop %v428
  %v445 = vtanh.pop %v429
  %v446 = vtanh.pop %v430
  %v447 = vtanh.pop %v431
  %v448 = vtanh.pop %v432
  %v449 = vtanh.pop %v433
  %v450 = vtanh.pop %v434
  %v451 = vtanh.pop %v435
  %v452 = vmul.f32 %v436, 0.5
  %v453 = vmul.f32 %v437, 0.5
  %v454 = vmul.f32 %v438, 0.5
  %v455 = vmul.f32 %v439, 0.5
  %v456 = vmul.f32 %v440, 0.5
  %v457 = vmul.f32 %v441, 0.5
  %v458 = vmul.f32 %v442, 0.5
  %v459 = vmul.f32 %v443, 0.5
  %v460 = vmul.f32 %v444, 0.5
  %v461 = vmul.f32 %v445, 0.5
  %v462 = vmul.f32 %v446, 0.5
  %v463 = vmul.f32 %v447, 0.5
  %v464 = vmul.f32 %v448, 0.5
  %v465 = vmul.f32 %v449, 0.5
  %v466 = vmul.f32 %v450, 0.5
  %v467 = vmul.f32 %v451, 0.5
  %v468 = vadd.f32 %v452, 0.5
  %v469 = vadd.f32 %v453, 0.5
  %v470 = vadd.f32 %v454, 0.5
  %v471 = vadd.f32 %v455, 0.5
  %v472 = vadd.f32 %v456, 0.5
  %v473 = vadd.f32 %v457, 0.5
  %v474 = vadd.f32 %v458, 0.5
  %v475 = vadd.f32 %v459, 0.5
  %v476 = vadd.f32 %v460, 0.5
  %v477 = vadd.f32 %v461, 0.5
  %v478 = vadd.f32 %v462, 0.5
  %v479 = vadd.f32 %v463, 0.5
  %v480 = vadd.f32 %v464, 0.5
  %v481 = vadd.f32 %v465, 0.5
  %v482 = vadd.f32 %v466, 0.5
  %v483 = vadd.f32 %v467, 0.5
  %v500 = vrot.slane %v404, 1
  %v501 = vrot.slane %v405, 1
  %v502 = vrot.slane %v406, 1
  %v503 = vrot.slane %v407, 1
  %v504 = vrot.slane %v408, 1
  %v505 = vrot.slane %v409, 1
  %v506 = vrot.slane %v410, 1
  %v507 = vrot.slane %v411, 1
  %v508 = vrot.slane %v412, 1
  %v509 = vrot.slane %v413, 1
  %v510 = vrot.slane %v414, 1
  %v511 = vrot.slane %v415, 1
  %v512 = vrot.slane %v416, 1
  %v513 = vrot.slane %v417, 1
  %v514 = vrot.slane %v418, 1
  %v515 = vrot.slane %v419, 1
  %v532 = vmul.f32 %v500, 0.5
  %v533 = vmul.f32 %v501, 0.5
  %v534 = vmul.f32 %v502, 0.5
  %v535 = vmul.f32 %v503, 0.5
  %v536 = vmul.f32 %v504, 0.5
  %v537 = vmul.f32 %v505, 0.5
  %v538 = vmul.f32 %v506, 0.5
  %v539 = vmul.f32 %v507, 0.5
  %v540 = vmul.f32 %v508, 0.5
  %v541 = vmul.f32 %v509, 0.5
  %v542 = vmul.f32 %v510, 0.5
  %v543 = vmul.f32 %v511, 0.5
  %v544 = vmul.f32 %v512, 0.5
  %v545 = vmul.f32 %v513, 0.5
  %v546 = vmul.f32 %v514, 0.5
  %v547 = vmul.f32 %v515, 0.5
  %v548 = vtanh.pop %v532
  %v549 = vtanh.pop %v533
  %v550 = vtanh.pop %v534
  %v551 = vtanh.pop %v535
  %v552 = vtanh.pop %v536
  %v553 = vtanh.pop %v537
  %v554 = vtanh.pop %v538
  %v555 = vtanh.pop %v539
  %v556 = vtanh.pop %v540
  %v557 = vtanh.pop %v541
  %v558 = vtanh.pop %v542
  %v559 = vtanh.pop %v543
  %v560 = vtanh.pop %v544
  %v561 = vtanh.pop %v545
  %v562 = vtanh.pop %v546
  %v563 = vtanh.pop %v547
  %v564 = vmul.f32 %v548, 0.5
  %v565 = vmul.f32 %v549, 0.5
  %v566 = vmul.f32 %v550, 0.5
  %v567 = vmul.f32 %v551, 0.5
  %v568 = vmul.f32 %v552, 0.5
  %v569 = vmul.f32 %v553, 0.5
  %v570 = vmul.f32 %v554, 0.5
  %v571 = vmul.f32 %v555, 0.5
  %v572 = vmul.f32 %v556, 0.5
  %v573 = vmul.f32 %v557, 0.5
  %v574 = vmul.f32 %v558, 0.5
  %v575 = vmul.f32 %v559, 0.5
  %v576 = vmul.f32 %v560, 0.5
  %v577 = vmul.f32 %v561, 0.5
  %v578 = vmul.f32 %v562, 0.5
  %v579 = vmul.f32 %v563, 0.5
  %v580 = vadd.f32 %v564, 0.5
  %v581 = vadd.f32 %v565, 0.5
  %v582 = vadd.f32 %v566, 0.5
  %v583 = vadd.f32 %v567, 0.5
  %v584 = vadd.f32 %v568, 0.5
  %v585 = vadd.f32 %v569, 0.5
  %v586 = vadd.f32 %v570, 0.5
  %v587 = vadd.f32 %v571, 0.5
  %v588 = vadd.f32 %v572, 0.5
  %v589 = vadd.f32 %v573, 0.5
  %v590 = vadd.f32 %v574, 0.5
  %v591 = vadd.f32 %v575, 0.5
  %v592 = vadd.f32 %v576, 0.5
  %v593 = vadd.f32 %v577, 0.5
  %v594 = vadd.f32 %v578, 0.5
  %v595 = vadd.f32 %v579, 0.5
  %v596 = vrot.slane %v404, 2
  %v597 = vrot.slane %v405, 2
  %v598 = vrot.slane %v406, 2
  %v599 = vrot.slane %v407, 2
  %v600 = vrot.slane %v408, 2
  %v601 = vrot.slane %v409, 2
  %v602 = vrot.slane %v410, 2
  %v603 = vrot.slane %v411, 2
  %v604 = vrot.slane %v412, 2
  %v605 = vrot.slane %v413, 2
  %v606 = vrot.slane %v414, 2
  %v607 = vrot.slane %v415, 2
  %v608 = vrot.slane %v416, 2
  %v609 = vrot.slane %v417, 2
  %v610 = vrot.slane %v418, 2
  %v611 = vrot.slane %v419, 2
  %v628 = vtanh.pop %v596
  %v629 = vtanh.pop %v597
  %v630 = vtanh.pop %v598
  %v631 = vtanh.pop %v599
  %v632 = vtanh.pop %v600
  %v633 = vtanh.pop %v601
  %v634 = vtanh.pop %v602
  %v635 = vtanh.pop %v603
  %v636 = vtanh.pop %v604
  %v637 = vtanh.pop %v605
  %v638 = vtanh.pop %v606
  %v639 = vtanh.pop %v607
  %v640 = vtanh.pop %v608
  %v641 = vtanh.pop %v609
  %v642 = vtanh.pop %v610
  %v643 = vtanh.pop %v611
  %v644 = vrot.slane %v404, 3
  %v645 = vrot.slane %v405, 3
  %v646 = vrot.slane %v406, 3
  %v647 = vrot.slane %v407, 3
  %v648 = vrot.slane %v408, 3
  %v649 = vrot.slane %v409, 3
  %v650 = vrot.slane %v410, 3
  %v651 = vrot.slane %v411, 3
  %v652 = vrot.slane %v412, 3
  %v653 = vrot.slane %v413, 3
  %v654 = vrot.slane %v414, 3
  %v655 = vrot.slane %v415, 3
  %v656 = vrot.slane %v416, 3
  %v657 = vrot.slane %v417, 3
  %v658 = vrot.slane %v418, 3
  %v659 = vrot.slane %v419, 3
  %v676 = vmul.f32 %v644, 0.5
  %v677 = vmul.f32 %v645, 0.5
  %v678 = vmul.f32 %v646, 0.5
  %v679 = vmul.f32 %v647, 0.5
  %v680 = vmul.f32 %v648, 0.5
  %v681 = vmul.f32 %v649, 0.5
  %v682 = vmul.f32 %v650, 0.5
  %v683 = vmul.f32 %v651, 0.5
  %v684 = vmul.f32 %v652, 0.5
  %v685 = vmul.f32 %v653, 0.5
  %v686 = vmul.f32 %v654, 0.5
  %v687 = vmul.f32 %v655, 0.5
  %v688 = vmul.f32 %v656, 0.5
  %v689 = vmul.f32 %v657, 0.5
  %v690 = vmul.f32 %v658, 0.5
  %v691 = vmul.f32 %v659, 0.5
  %v692 = vtanh.pop %v676
  %v693 = vtanh.pop %v677
  %v694 = vtanh.pop %v678
  %v695 = vtanh.pop %v679
  %v696 = vtanh.pop %v680
  %v697 = vtanh.pop %v681
  %v698 = vtanh.pop %v682
  %v699 = vtanh.pop %v683
  %v700 = vtanh.pop %v684
  %v701 = vtanh.pop %v685
  %v702 = vtanh.pop %v686
  %v703 = vtanh.pop %v687
  %v704 = vtanh.pop %v688
  %v705 = vtanh.pop %v689
  %v706 = vtanh.pop %v690
  %v707 = vtanh.pop %v691
  %v708 = vmul.f32 %v692, 0.5
  %v709 = vmul.f32 %v693, 0.5
  %v710 = vmul.f32 %v694, 0.5
  %v711 = vmul.f32 %v695, 0.5
  %v712 = vmul.f32 %v696, 0.5
  %v713 = vmul.f32 %v697, 0.5
  %v714 = vmul.f32 %v698, 0.5
  %v715 = vmul.f32 %v699, 0.5
  %v716 = vmul.f32 %v700, 0.5
  %v717 = vmul.f32 %v701, 0.5
  %v718 = vmul.f32 %v702, 0.5
  %v719 = vmul.f32 %v703, 0.5
  %v720 = vmul.f32 %v704, 0.5
  %v721 = vmul.f32 %v705, 0.5
  %v722 = vmul.f32 %v706, 0.5
  %v723 = vmul.f32 %v707, 0.5
  %v724 = vadd.f32 %v708, 0.5
  %v725 = vadd.f32 %v709, 0.5
  %v726 = vadd.f32 %v710, 0.5
  %v727 = vadd.f32 %v711, 0.5
  %v728 = vadd.f32 %v712, 0.5
  %v729 = vadd.f32 %v713, 0.5
  %v730 = vadd.f32 %v714, 0.5
  %v731 = vadd.f32 %v715, 0.5
  %v732 = vadd.f32 %v716, 0.5
  %v733 = vadd.f32 %v717, 0.5
  %v734 = vadd.f32 %v718, 0.5
  %v735 = vadd.f32 %v719, 0.5
  %v736 = vadd.f32 %v720, 0.5
  %v737 = vadd.f32 %v721, 0.5
  %v738 = vadd.f32 %v722, 0.5
  %v739 = vadd.f32 %v723, 0.5
  %v740 = vmul.f32 %v580, 0.0
  %v741 = vmul.f32 %v581, 0.0
  %v742 = vmul.f32 %v582, 0.0
  %v743 = vmul.f32 %v583, 0.0
  %v744 = vmul.f32 %v584, 0.0
  %v745 = vmul.f32 %v585, 0.0
  %v746 = vmul.f32 %v586, 0.0
  %v747 = vmul.f32 %v587, 0.0
  %v748 = vmul.f32 %v588, 0.0
  %v749 = vmul.f32 %v589, 0.0
  %v750 = vmul.f32 %v590, 0.0
  %v751 = vmul.f32 %v591, 0.0
  %v752 = vmul.f32 %v592, 0.0
  %v753 = vmul.f32 %v593, 0.0
  %v754 = vmul.f32 %v594, 0.0
  %v755 = vmul.f32 %v595, 0.0
  %v756 = vmul.f32 %v468, %v628
  %v757 = vmul.f32 %v469, %v629
  %v758 = vmul.f32 %v470, %v630
  %v759 = vmul.f32 %v471, %v631
  %v760 = vmul.f32 %v472, %v632
  %v761 = vmul.f32 %v473, %v633
  %v762 = vmul.f32 %v474, %v634
  %v763 = vmul.f32 %v475, %v635
  %v764 = vmul.f32 %v476, %v636
  %v765 = vmul.f32 %v477, %v637
  %v766 = vmul.f32 %v478, %v638
  %v767 = vmul.f32 %v479, %v639
  %v768 = vmul.f32 %v480, %v640
  %v769 = vmul.f32 %v481, %v641
  %v770 = vmul.f32 %v482, %v642
  %v771 = vmul.f32 %v483, %v643
  %v772 = vadd.f32 %v740, %v756
  %v773 = vadd.f32 %v741, %v757
  %v774 = vadd.f32 %v742, %v758
  %v775 = vadd.f32 %v743, %v759
  %v776 = vadd.f32 %v744, %v760
  %v777 = vadd.f32 %v745, %v761
  %v778 = vadd.f32 %v746, %v762
  %v779 = vadd.f32 %v747, %v763
  %v780 = vadd.f32 %v748, %v764
  %v781 = vadd.f32 %v749, %v765
  %v782 = vadd.f32 %v750, %v766
  %v783 = vadd.f32 %v751, %v767
  %v784 = vadd.f32 %v752, %v768
  %v785 = vadd.f32 %v753, %v769
  %v786 = vadd.f32 %v754, %v770
  %v787 = vadd.f32 %v755, %v771
  %v788 = vtanh.pop %v772
  %v789 = vtanh.pop %v773
  %v790 = vtanh.pop %v774
  %v791 = vtanh.pop %v775
  %v792 = vtanh.pop %v776
  %v793 = vtanh.pop %v777
  %v794 = vtanh.pop %v778
  %v795 = vtanh.pop %v779
  %v796 = vtanh.pop %v780
  %v797 = vtanh.pop %v781
  %v798 = vtanh.pop %v782
  %v799 = vtanh.pop %v783
  %v800 = vtanh.pop %v784
  %v801 = vtanh.pop %v785
  %v802 = vtanh.pop %v786
  %v803 = vtanh.pop %v787
  %v804 = vmul.f32 %v724, %v788
  %v805 = vmul.f32 %v725, %v789
  %v806 = vmul.f32 %v726, %v790
  %v807 = vmul.f32 %v727, %v791
  %v808 = vmul.f32 %v728, %v792
  %v809 = vmul.f32 %v729, %v793
  %v810 = vmul.f32 %v730, %v794
  %v811 = vmul.f32 %v731, %v795
  %v812 = vmul.f32 %v732, %v796
  %v813 = vmul.f32 %v733, %v797
  %v814 = vmul.f32 %v734, %v798
  %v815 = vmul.f32 %v735, %v799
  %v816 = vmul.f32 %v736, %v800
  %v817 = vmul.f32 %v737, %v801
  %v818 = vmul.f32 %v738, %v802
  %v819 = vmul.f32 %v739, %v803
  %vm820 = vcmp.gt.s32.totalorder %v15, 0
  %vm821 = vcmp.gt.s32.totalorder %v16, 0
  %v822 = vsel %vm820, 1, 0
  %v823 = vsel %vm821, 1, 0
  %v824 = vcvt.s32.f32 %v822
  %v825 = vcvt.s32.f32 %v823
  %827 = vset.pattern.permute.xlu0 0
  %828 = vperm.xlu0 %827, %v824
  %v829 = vpop.permute.xlu0 %828
  %831 = vset.pattern.permute.xlu0 0
  %832 = vperm.xlu0 %831, %v825
  %v833 = vpop.permute.xlu0 %832
  %v834 = vperm.slane %v829, 0
  %v835 = vperm.slane %v829, 1
  %v836 = vperm.slane %v829, 2
  %v837 = vperm.slane %v829, 3
  %v838 = vperm.slane %v829, 4
  %v839 = vperm.slane %v829, 5
  %v840 = vperm.slane %v829, 6
  %v841 = vperm.slane %v829, 7
  %v842 = vperm.slane %v833, 0
  %v843 = vperm.slane %v833, 1
  %v844 = vperm.slane %v833, 2
  %v845 = vperm.slane %v833, 3
  %v846 = vperm.slane %v833, 4
  %v847 = vperm.slane %v833, 5
  %v848 = vperm.slane %v833, 6
  %v849 = vperm.slane %v833, 7
  %v866 = vmul.f32 %v804, %v834
  %v867 = vmul.f32 %v805, %v835
  %v868 = vmul.f32 %v806, %v836
  %v869 = vmul.f32 %v807, %v837
  %v870 = vmul.f32 %v808, %v838
  %v871 = vmul.f32 %v809, %v839
  %v872 = vmul.f32 %v810, %v840
  %v873 = vmul.f32 %v811, %v841
  %v874 = vmul.f32 %v812, %v842
  %v875 = vmul.f32 %v813, %v843
  %v876 = vmul.f32 %v814, %v844
  %v877 = vmul.f32 %v815, %v845
  %v878 = vmul.f32 %v816, %v846
  %v879 = vmul.f32 %v817, %v847
  %v880 = vmul.f32 %v818, %v848
  %v881 = vmul.f32 %v819, %v849
  %882 = vst [vmem:[%s3] sm:$0x1] %v866
  %883 = vst [vmem:[%s3 + $0x8] sm:$0x1] %v867
  %884 = vst [vmem:[%s3 + $0x10] sm:$0x1] %v868
  %885 = vst [vmem:[%s3 + $0x18] sm:$0x1] %v869
  %886 = vst [vmem:[%s3 + $0x20] sm:$0x1] %v870
  %887 = vst [vmem:[%s3 + $0x28] sm:$0x1] %v871
  %888 = vst [vmem:[%s3 + $0x30] sm:$0x1] %v872
  %889 = vst [vmem:[%s3 + $0x38] sm:$0x1] %v873
  %890 = vst [vmem:[%s3 + $0x40] sm:$0x1] %v874
  %891 = vst [vmem:[%s3 + $0x48] sm:$0x1] %v875
  %892 = vst [vmem:[%s3 + $0x50] sm:$0x1] %v876
  %893 = vst [vmem:[%s3 + $0x58] sm:$0x1] %v877
  %894 = vst [vmem:[%s3 + $0x60] sm:$0x1] %v878
  %895 = vst [vmem:[%s3 + $0x68] sm:$0x1] %v879
  %896 = vst [vmem:[%s3 + $0x70] sm:$0x1] %v880
  %897 = vst [vmem:[%s3 + $0x78] sm:$0x1] %v881
  %s898 = scalar_lea.vmem %s1, 1
  %v899 = vld [vmem:[%s898] ss:$8 sm:$0xf]
  %s900 = scalar_lea.vmem %s1, 33
  %v901 = vld [vmem:[%s900] ss:$8 sm:$0xf]
  %s902 = scalar_lea.vmem %s1, 65
  %v903 = vld [vmem:[%s902] ss:$8 sm:$0xf]
  %s904 = scalar_lea.vmem %s1, 97
  %v905 = vld [vmem:[%s904] ss:$8 sm:$0xf]
  %s906 = scalar_lea.vmem %s1, 129
  %v907 = vld [vmem:[%s906] ss:$8 sm:$0xf]
  %s908 = scalar_lea.vmem %s1, 161
  %v909 = vld [vmem:[%s908] ss:$8 sm:$0xf]
  %s910 = scalar_lea.vmem %s1, 193
  %v911 = vld [vmem:[%s910] ss:$8 sm:$0xf]
  %s912 = scalar_lea.vmem %s1, 225
  %v913 = vld [vmem:[%s912] ss:$8 sm:$0xf]
  %s914 = scalar_lea.vmem %s1, 257
  %v915 = vld [vmem:[%s914] ss:$8 sm:$0xf]
  %s916 = scalar_lea.vmem %s1, 289
  %v917 = vld [vmem:[%s916] ss:$8 sm:$0xf]
  %s918 = scalar_lea.vmem %s1, 321
  %v919 = vld [vmem:[%s918] ss:$8 sm:$0xf]
  %s920 = scalar_lea.vmem %s1, 353
  %v921 = vld [vmem:[%s920] ss:$8 sm:$0xf]
  %s922 = scalar_lea.vmem %s1, 385
  %v923 = vld [vmem:[%s922] ss:$8 sm:$0xf]
  %s924 = scalar_lea.vmem %s1, 417
  %v925 = vld [vmem:[%s924] ss:$8 sm:$0xf]
  %s926 = scalar_lea.vmem %s1, 449
  %v927 = vld [vmem:[%s926] ss:$8 sm:$0xf]
  %s928 = scalar_lea.vmem %s1, 481
  %v929 = vld [vmem:[%s928] ss:$8 sm:$0xf]
  %v930 = vpack.c.bf16 %v804, %v804
  %v931 = vpack.c.bf16 %v805, %v805
  %v932 = vpack.c.bf16 %v806, %v806
  %v933 = vpack.c.bf16 %v807, %v807
  %v934 = vpack.c.bf16 %v808, %v808
  %v935 = vpack.c.bf16 %v809, %v809
  %v936 = vpack.c.bf16 %v810, %v810
  %v937 = vpack.c.bf16 %v811, %v811
  %v938 = vpack.c.bf16 %v812, %v812
  %v939 = vpack.c.bf16 %v813, %v813
  %v940 = vpack.c.bf16 %v814, %v814
  %v941 = vpack.c.bf16 %v815, %v815
  %v942 = vpack.c.bf16 %v816, %v816
  %v943 = vpack.c.bf16 %v817, %v817
  %v944 = vpack.c.bf16 %v818, %v818
  %v945 = vpack.c.bf16 %v819, %v819
  %v946 = vld [vmem:[%s2] sm:$0xff]
  %v947 = vld [vmem:[%s2 + $0x8] sm:$0xff]
  %v948 = vld [vmem:[%s2 + $0x10] sm:$0xff]
  %v949 = vld [vmem:[%s2 + $0x18] sm:$0xff]
  %v950 = vld [vmem:[%s2 + $0x20] sm:$0xff]
  %v951 = vld [vmem:[%s2 + $0x28] sm:$0xff]
  %v952 = vld [vmem:[%s2 + $0x30] sm:$0xff]
  %v953 = vld [vmem:[%s2 + $0x38] sm:$0xff]
  %v954 = vld [vmem:[%s2 + $0x40] sm:$0xff]
  %v955 = vld [vmem:[%s2 + $0x48] sm:$0xff]
  %v956 = vld [vmem:[%s2 + $0x50] sm:$0xff]
  %v957 = vld [vmem:[%s2 + $0x58] sm:$0xff]
  %v958 = vld [vmem:[%s2 + $0x60] sm:$0xff]
  %v959 = vld [vmem:[%s2 + $0x68] sm:$0xff]
  %v960 = vld [vmem:[%s2 + $0x70] sm:$0xff]
  %v961 = vld [vmem:[%s2 + $0x78] sm:$0xff]
  %v962 = vld [vmem:[%s2 + $0x80] sm:$0xff]
  %v963 = vld [vmem:[%s2 + $0x88] sm:$0xff]
  %v964 = vld [vmem:[%s2 + $0x90] sm:$0xff]
  %v965 = vld [vmem:[%s2 + $0x98] sm:$0xff]
  %v966 = vld [vmem:[%s2 + $0xa0] sm:$0xff]
  %v967 = vld [vmem:[%s2 + $0xa8] sm:$0xff]
  %v968 = vld [vmem:[%s2 + $0xb0] sm:$0xff]
  %v969 = vld [vmem:[%s2 + $0xb8] sm:$0xff]
  %v970 = vld [vmem:[%s2 + $0xc0] sm:$0xff]
  %v971 = vld [vmem:[%s2 + $0xc8] sm:$0xff]
  %v972 = vld [vmem:[%s2 + $0xd0] sm:$0xff]
  %v973 = vld [vmem:[%s2 + $0xd8] sm:$0xff]
  %v974 = vld [vmem:[%s2 + $0xe0] sm:$0xff]
  %v975 = vld [vmem:[%s2 + $0xe8] sm:$0xff]
  %v976 = vld [vmem:[%s2 + $0xf0] sm:$0xff]
  %v977 = vld [vmem:[%s2 + $0xf8] sm:$0xff]
  %v994 = vunpack.c.l.b16 %v930
  %v995 = vunpack.c.l.b16 %v931
  %v996 = vunpack.c.l.b16 %v932
  %v997 = vunpack.c.l.b16 %v933
  %v998 = vunpack.c.l.b16 %v934
  %v999 = vunpack.c.l.b16 %v935
  %v1000 = vunpack.c.l.b16 %v936
  %v1001 = vunpack.c.l.b16 %v937
  %v1002 = vunpack.c.l.b16 %v938
  %v1003 = vunpack.c.l.b16 %v939
  %v1004 = vunpack.c.l.b16 %v940
  %v1005 = vunpack.c.l.b16 %v941
  %v1006 = vunpack.c.l.b16 %v942
  %v1007 = vunpack.c.l.b16 %v943
  %v1008 = vunpack.c.l.b16 %v944
  %v1009 = vunpack.c.l.b16 %v945
  %v1010 = vrot.slane %v995, 7
  %v1011 = vsel %vm316, %v1010, %v994
  %v1012 = vrot.slane %v996, 6
  %v1013 = vsel %vm312, %v1012, %v1011
  %v1014 = vrot.slane %v997, 5
  %v1015 = vsel %vm318, %v1014, %v1013
  %v1016 = vrot.slane %v998, 4
  %v1017 = vsel %vm324, %v1016, %v1015
  %v1018 = vrot.slane %v999, 3
  %v1019 = vsel %vm330, %v1018, %v1017
  %v1020 = vrot.slane %v1000, 2
  %v1021 = vsel %vm336, %v1020, %v1019
  %v1022 = vrot.slane %v1001, 1
  %vm1023 = vcmask 1047559
  %v1024 = vsel %vm1023, %v1022, %v1021
  %v1025 = vrot.slane %v1003, 7
  %v1026 = vsel %vm316, %v1025, %v1002
  %v1027 = vrot.slane %v1004, 6
  %v1028 = vsel %vm312, %v1027, %v1026
  %v1029 = vrot.slane %v1005, 5
  %v1030 = vsel %vm318, %v1029, %v1028
  %v1031 = vrot.slane %v1006, 4
  %v1032 = vsel %vm324, %v1031, %v1030
  %v1033 = vrot.slane %v1007, 3
  %v1034 = vsel %vm330, %v1033, %v1032
  %v1035 = vrot.slane %v1008, 2
  %v1036 = vsel %vm336, %v1035, %v1034
  %v1037 = vrot.slane %v1009, 1
  %v1038 = vsel %vm1023, %v1037, %v1036
  %v1039 = vpack.c.b16 %v1038, %v1024
  %v1073 = vunpack.c.l.b16 %v946
  %v1074 = vunpack.c.h.b16 %v946
  %v1075 = vunpack.c.l.b16 %v947
  %v1076 = vunpack.c.h.b16 %v947
  %v1077 = vunpack.c.l.b16 %v948
  %v1078 = vunpack.c.h.b16 %v948
  %v1079 = vunpack.c.l.b16 %v949
  %v1080 = vunpack.c.h.b16 %v949
  %v1081 = vunpack.c.l.b16 %v950
  %v1082 = vunpack.c.h.b16 %v950
  %v1083 = vunpack.c.l.b16 %v951
  %v1084 = vunpack.c.h.b16 %v951
  %v1085 = vunpack.c.l.b16 %v952
  %v1086 = vunpack.c.h.b16 %v952
  %v1087 = vunpack.c.l.b16 %v953
  %v1088 = vunpack.c.h.b16 %v953
  %v1089 = vunpack.c.l.b16 %v954
  %v1090 = vunpack.c.h.b16 %v954
  %v1091 = vunpack.c.l.b16 %v955
  %v1092 = vunpack.c.h.b16 %v955
  %v1093 = vunpack.c.l.b16 %v956
  %v1094 = vunpack.c.h.b16 %v956
  %v1095 = vunpack.c.l.b16 %v957
  %v1096 = vunpack.c.h.b16 %v957
  %v1097 = vunpack.c.l.b16 %v958
  %v1098 = vunpack.c.h.b16 %v958
  %v1099 = vunpack.c.l.b16 %v959
  %v1100 = vunpack.c.h.b16 %v959
  %v1101 = vunpack.c.l.b16 %v960
  %v1102 = vunpack.c.h.b16 %v960
  %v1103 = vunpack.c.l.b16 %v961
  %v1104 = vunpack.c.h.b16 %v961
  %v1105 = vunpack.c.l.b16 %v962
  %v1106 = vunpack.c.h.b16 %v962
  %v1107 = vunpack.c.l.b16 %v963
  %v1108 = vunpack.c.h.b16 %v963
  %v1109 = vunpack.c.l.b16 %v964
  %v1110 = vunpack.c.h.b16 %v964
  %v1111 = vunpack.c.l.b16 %v965
  %v1112 = vunpack.c.h.b16 %v965
  %v1113 = vunpack.c.l.b16 %v966
  %v1114 = vunpack.c.h.b16 %v966
  %v1115 = vunpack.c.l.b16 %v967
  %v1116 = vunpack.c.h.b16 %v967
  %v1117 = vunpack.c.l.b16 %v968
  %v1118 = vunpack.c.h.b16 %v968
  %v1119 = vunpack.c.l.b16 %v969
  %v1120 = vunpack.c.h.b16 %v969
  %v1121 = vunpack.c.l.b16 %v970
  %v1122 = vunpack.c.h.b16 %v970
  %v1123 = vunpack.c.l.b16 %v971
  %v1124 = vunpack.c.h.b16 %v971
  %v1125 = vunpack.c.l.b16 %v972
  %v1126 = vunpack.c.h.b16 %v972
  %v1127 = vunpack.c.l.b16 %v973
  %v1128 = vunpack.c.h.b16 %v973
  %v1129 = vunpack.c.l.b16 %v974
  %v1130 = vunpack.c.h.b16 %v974
  %v1131 = vunpack.c.l.b16 %v975
  %v1132 = vunpack.c.h.b16 %v975
  %v1133 = vunpack.c.l.b16 %v976
  %v1134 = vunpack.c.h.b16 %v976
  %v1135 = vunpack.c.l.b16 %v977
  %v1136 = vunpack.c.h.b16 %v977
  %v1137 = vpack.c.b16 %v1077, %v1073
  %v1138 = vpack.c.b16 %v1078, %v1074
  %v1139 = vpack.c.b16 %v1079, %v1075
  %v1140 = vpack.c.b16 %v1080, %v1076
  %v1141 = vpack.c.b16 %v1085, %v1081
  %v1142 = vpack.c.b16 %v1086, %v1082
  %v1143 = vpack.c.b16 %v1087, %v1083
  %v1144 = vpack.c.b16 %v1088, %v1084
  %v1145 = vpack.c.b16 %v1093, %v1089
  %v1146 = vpack.c.b16 %v1094, %v1090
  %v1147 = vpack.c.b16 %v1095, %v1091
  %v1148 = vpack.c.b16 %v1096, %v1092
  %v1149 = vpack.c.b16 %v1101, %v1097
  %v1150 = vpack.c.b16 %v1102, %v1098
  %v1151 = vpack.c.b16 %v1103, %v1099
  %v1152 = vpack.c.b16 %v1104, %v1100
  %v1153 = vpack.c.b16 %v1109, %v1105
  %v1154 = vpack.c.b16 %v1110, %v1106
  %v1155 = vpack.c.b16 %v1111, %v1107
  %v1156 = vpack.c.b16 %v1112, %v1108
  %v1157 = vpack.c.b16 %v1117, %v1113
  %v1158 = vpack.c.b16 %v1118, %v1114
  %v1159 = vpack.c.b16 %v1119, %v1115
  %v1160 = vpack.c.b16 %v1120, %v1116
  %v1161 = vpack.c.b16 %v1125, %v1121
  %v1162 = vpack.c.b16 %v1126, %v1122
  %v1163 = vpack.c.b16 %v1127, %v1123
  %v1164 = vpack.c.b16 %v1128, %v1124
  %v1165 = vpack.c.b16 %v1133, %v1129
  %v1166 = vpack.c.b16 %v1134, %v1130
  %v1167 = vpack.c.b16 %v1135, %v1131
  %v1168 = vpack.c.b16 %v1136, %v1132
  %1201 = vmatpush.bf16.msra.mxu0 %v1165
  %1202 = vmatpush.bf16.msra.mxu0 %v1161
  %1203 = vmatpush.bf16.msra.mxu0 %v1157
  %1204 = vmatpush.bf16.msra.mxu0 %v1153
  %1205 = vmatpush.bf16.msra.mxu0 %v1149
  %1206 = vmatpush.bf16.msra.mxu0 %v1145
  %1207 = vmatpush.bf16.msra.mxu0 %v1141
  %1208 = vmatpush.bf16.msra.mxu0 %v1137
  %1209 = vmatmul.bf16.gmra.mxu0 %v1039
  %v1210 = vpop.f32.mrf.mxu0
  %v1211 = vadd.f32 0.0, %v1210
  %v1212 = vpop.f32.mrf.mxu0
  %v1213 = vadd.f32 0.0, %v1212
  %1214 = vdwg.mxu0
  %1215 = vmatpush.bf16.msra.mxu0 %v1166
  %1216 = vmatpush.bf16.msra.mxu0 %v1162
  %1217 = vmatpush.bf16.msra.mxu0 %v1158
  %1218 = vmatpush.bf16.msra.mxu0 %v1154
  %1219 = vmatpush.bf16.msra.mxu0 %v1150
  %1220 = vmatpush.bf16.msra.mxu0 %v1146
  %1221 = vmatpush.bf16.msra.mxu0 %v1142
  %1222 = vmatpush.bf16.msra.mxu0 %v1138
  %1223 = vmatmul.bf16.gmra.mxu0 %v1039
  %v1224 = vpop.f32.mrf.mxu0
  %v1225 = vadd.f32 0.0, %v1224
  %v1226 = vpop.f32.mrf.mxu0
  %v1227 = vadd.f32 0.0, %v1226
  %1228 = vdwg.mxu0
  %1229 = vmatpush.bf16.msra.mxu0 %v1167
  %1230 = vmatpush.bf16.msra.mxu0 %v1163
  %1231 = vmatpush.bf16.msra.mxu0 %v1159
  %1232 = vmatpush.bf16.msra.mxu0 %v1155
  %1233 = vmatpush.bf16.msra.mxu0 %v1151
  %1234 = vmatpush.bf16.msra.mxu0 %v1147
  %1235 = vmatpush.bf16.msra.mxu0 %v1143
  %1236 = vmatpush.bf16.msra.mxu0 %v1139
  %1237 = vmatmul.bf16.gmra.mxu0 %v1039
  %v1238 = vpop.f32.mrf.mxu0
  %v1239 = vadd.f32 0.0, %v1238
  %v1240 = vpop.f32.mrf.mxu0
  %v1241 = vadd.f32 0.0, %v1240
  %1242 = vdwg.mxu0
  %1243 = vmatpush.bf16.msra.mxu0 %v1168
  %1244 = vmatpush.bf16.msra.mxu0 %v1164
  %1245 = vmatpush.bf16.msra.mxu0 %v1160
  %1246 = vmatpush.bf16.msra.mxu0 %v1156
  %1247 = vmatpush.bf16.msra.mxu0 %v1152
  %1248 = vmatpush.bf16.msra.mxu0 %v1148
  %1249 = vmatpush.bf16.msra.mxu0 %v1144
  %1250 = vmatpush.bf16.msra.mxu0 %v1140
  %1251 = vmatmul.bf16.gmra.mxu0 %v1039
  %v1252 = vpop.f32.mrf.mxu0
  %v1253 = vadd.f32 0.0, %v1252
  %v1254 = vpop.f32.mrf.mxu0
  %v1255 = vadd.f32 0.0, %v1254
  %1256 = vdwg.mxu0
  %v1265 = vrot.slane %v1225, 7
  %v1266 = vrot.slane %v1239, 6
  %v1267 = vrot.slane %v1253, 5
  %v1268 = vrot.slane %v1227, 7
  %v1269 = vrot.slane %v1241, 6
  %v1270 = vrot.slane %v1255, 5
  %v1271 = vsel %vm310, %v1211, %v1265
  %v1272 = vsel %vm312, %v1266, %v1267
  %v1273 = vsel %vm314, %v1271, %v1272
  %v1274 = vsel %vm316, %v1211, %v1265
  %v1275 = vsel %vm318, %v1266, %v1267
  %v1276 = vsel %vm320, %v1274, %v1275
  %v1277 = vrot.slane %v1276, 1
  %v1278 = vsel %vm312, %v1211, %v1265
  %v1279 = vsel %vm324, %v1266, %v1267
  %v1280 = vsel %vm326, %v1278, %v1279
  %v1281 = vrot.slane %v1280, 2
  %v1282 = vsel %vm318, %v1211, %v1265
  %v1283 = vsel %vm330, %v1266, %v1267
  %v1284 = vsel %vm332, %v1282, %v1283
  %v1285 = vrot.slane %v1284, 3
  %v1286 = vsel %vm324, %v1211, %v1265
  %v1287 = vsel %vm336, %v1266, %v1267
  %v1288 = vsel %vm338, %v1286, %v1287
  %v1289 = vrot.slane %v1288, 4
  %v1290 = vsel %vm330, %v1211, %v1265
  %v1291 = vsel %vm342, %v1267, %v1266
  %v1292 = vsel %vm344, %v1290, %v1291
  %v1293 = vrot.slane %v1292, 5
  %v1294 = vsel %vm336, %v1211, %v1265
  %v1295 = vsel %vm310, %v1266, %v1267
  %v1296 = vsel %vm349, %v1295, %v1294
  %v1297 = vrot.slane %v1296, 6
  %v1298 = vsel %vm342, %v1265, %v1211
  %v1299 = vsel %vm316, %v1266, %v1267
  %v1300 = vsel %vm354, %v1299, %v1298
  %v1301 = vrot.slane %v1300, 7
  %v1302 = vsel %vm310, %v1213, %v1268
  %v1303 = vsel %vm312, %v1269, %v1270
  %v1304 = vsel %vm314, %v1302, %v1303
  %v1305 = vsel %vm316, %v1213, %v1268
  %v1306 = vsel %vm318, %v1269, %v1270
  %v1307 = vsel %vm320, %v1305, %v1306
  %v1308 = vrot.slane %v1307, 1
  %v1309 = vsel %vm312, %v1213, %v1268
  %v1310 = vsel %vm324, %v1269, %v1270
  %v1311 = vsel %vm326, %v1309, %v1310
  %v1312 = vrot.slane %v1311, 2
  %v1313 = vsel %vm318, %v1213, %v1268
  %v1314 = vsel %vm330, %v1269, %v1270
  %v1315 = vsel %vm332, %v1313, %v1314
  %v1316 = vrot.slane %v1315, 3
  %v1317 = vsel %vm324, %v1213, %v1268
  %v1318 = vsel %vm336, %v1269, %v1270
  %v1319 = vsel %vm338, %v1317, %v1318
  %v1320 = vrot.slane %v1319, 4
  %v1321 = vsel %vm330, %v1213, %v1268
  %v1322 = vsel %vm342, %v1270, %v1269
  %v1323 = vsel %vm344, %v1321, %v1322
  %v1324 = vrot.slane %v1323, 5
  %v1325 = vsel %vm336, %v1213, %v1268
  %v1326 = vsel %vm310, %v1269, %v1270
  %v1327 = vsel %vm349, %v1326, %v1325
  %v1328 = vrot.slane %v1327, 6
  %v1329 = vsel %vm342, %v1268, %v1213
  %v1330 = vsel %vm316, %v1269, %v1270
  %v1331 = vsel %vm354, %v1330, %v1329
  %v1332 = vrot.slane %v1331, 7
  %v1349 = vadd.f32 %v899, %v1273
  %v1350 = vadd.f32 %v901, %v1277
  %v1351 = vadd.f32 %v903, %v1281
  %v1352 = vadd.f32 %v905, %v1285
  %v1353 = vadd.f32 %v907, %v1289
  %v1354 = vadd.f32 %v909, %v1293
  %v1355 = vadd.f32 %v911, %v1297
  %v1356 = vadd.f32 %v913, %v1301
  %v1357 = vadd.f32 %v915, %v1304
  %v1358 = vadd.f32 %v917, %v1308
  %v1359 = vadd.f32 %v919, %v1312
  %v1360 = vadd.f32 %v921, %v1316
  %v1361 = vadd.f32 %v923, %v1320
  %v1362 = vadd.f32 %v925, %v1324
  %v1363 = vadd.f32 %v927, %v1328
  %v1364 = vadd.f32 %v929, %v1332
  %v1365 = vmul.f32 %v1349, 0.5
  %v1366 = vmul.f32 %v1350, 0.5
  %v1367 = vmul.f32 %v1351, 0.5
  %v1368 = vmul.f32 %v1352, 0.5
  %v1369 = vmul.f32 %v1353, 0.5
  %v1370 = vmul.f32 %v1354, 0.5
  %v1371 = vmul.f32 %v1355, 0.5
  %v1372 = vmul.f32 %v1356, 0.5
  %v1373 = vmul.f32 %v1357, 0.5
  %v1374 = vmul.f32 %v1358, 0.5
  %v1375 = vmul.f32 %v1359, 0.5
  %v1376 = vmul.f32 %v1360, 0.5
  %v1377 = vmul.f32 %v1361, 0.5
  %v1378 = vmul.f32 %v1362, 0.5
  %v1379 = vmul.f32 %v1363, 0.5
  %v1380 = vmul.f32 %v1364, 0.5
  %v1381 = vtanh.pop %v1365
  %v1382 = vtanh.pop %v1366
  %v1383 = vtanh.pop %v1367
  %v1384 = vtanh.pop %v1368
  %v1385 = vtanh.pop %v1369
  %v1386 = vtanh.pop %v1370
  %v1387 = vtanh.pop %v1371
  %v1388 = vtanh.pop %v1372
  %v1389 = vtanh.pop %v1373
  %v1390 = vtanh.pop %v1374
  %v1391 = vtanh.pop %v1375
  %v1392 = vtanh.pop %v1376
  %v1393 = vtanh.pop %v1377
  %v1394 = vtanh.pop %v1378
  %v1395 = vtanh.pop %v1379
  %v1396 = vtanh.pop %v1380
  %v1397 = vmul.f32 %v1381, 0.5
  %v1398 = vmul.f32 %v1382, 0.5
  %v1399 = vmul.f32 %v1383, 0.5
  %v1400 = vmul.f32 %v1384, 0.5
  %v1401 = vmul.f32 %v1385, 0.5
  %v1402 = vmul.f32 %v1386, 0.5
  %v1403 = vmul.f32 %v1387, 0.5
  %v1404 = vmul.f32 %v1388, 0.5
  %v1405 = vmul.f32 %v1389, 0.5
  %v1406 = vmul.f32 %v1390, 0.5
  %v1407 = vmul.f32 %v1391, 0.5
  %v1408 = vmul.f32 %v1392, 0.5
  %v1409 = vmul.f32 %v1393, 0.5
  %v1410 = vmul.f32 %v1394, 0.5
  %v1411 = vmul.f32 %v1395, 0.5
  %v1412 = vmul.f32 %v1396, 0.5
  %v1413 = vadd.f32 %v1397, 0.5
  %v1414 = vadd.f32 %v1398, 0.5
  %v1415 = vadd.f32 %v1399, 0.5
  %v1416 = vadd.f32 %v1400, 0.5
  %v1417 = vadd.f32 %v1401, 0.5
  %v1418 = vadd.f32 %v1402, 0.5
  %v1419 = vadd.f32 %v1403, 0.5
  %v1420 = vadd.f32 %v1404, 0.5
  %v1421 = vadd.f32 %v1405, 0.5
  %v1422 = vadd.f32 %v1406, 0.5
  %v1423 = vadd.f32 %v1407, 0.5
  %v1424 = vadd.f32 %v1408, 0.5
  %v1425 = vadd.f32 %v1409, 0.5
  %v1426 = vadd.f32 %v1410, 0.5
  %v1427 = vadd.f32 %v1411, 0.5
  %v1428 = vadd.f32 %v1412, 0.5
  %v1445 = vrot.slane %v1349, 1
  %v1446 = vrot.slane %v1350, 1
  %v1447 = vrot.slane %v1351, 1
  %v1448 = vrot.slane %v1352, 1
  %v1449 = vrot.slane %v1353, 1
  %v1450 = vrot.slane %v1354, 1
  %v1451 = vrot.slane %v1355, 1
  %v1452 = vrot.slane %v1356, 1
  %v1453 = vrot.slane %v1357, 1
  %v1454 = vrot.slane %v1358, 1
  %v1455 = vrot.slane %v1359, 1
  %v1456 = vrot.slane %v1360, 1
  %v1457 = vrot.slane %v1361, 1
  %v1458 = vrot.slane %v1362, 1
  %v1459 = vrot.slane %v1363, 1
  %v1460 = vrot.slane %v1364, 1
  %v1477 = vmul.f32 %v1445, 0.5
  %v1478 = vmul.f32 %v1446, 0.5
  %v1479 = vmul.f32 %v1447, 0.5
  %v1480 = vmul.f32 %v1448, 0.5
  %v1481 = vmul.f32 %v1449, 0.5
  %v1482 = vmul.f32 %v1450, 0.5
  %v1483 = vmul.f32 %v1451, 0.5
  %v1484 = vmul.f32 %v1452, 0.5
  %v1485 = vmul.f32 %v1453, 0.5
  %v1486 = vmul.f32 %v1454, 0.5
  %v1487 = vmul.f32 %v1455, 0.5
  %v1488 = vmul.f32 %v1456, 0.5
  %v1489 = vmul.f32 %v1457, 0.5
  %v1490 = vmul.f32 %v1458, 0.5
  %v1491 = vmul.f32 %v1459, 0.5
  %v1492 = vmul.f32 %v1460, 0.5
  %v1493 = vtanh.pop %v1477
  %v1494 = vtanh.pop %v1478
  %v1495 = vtanh.pop %v1479
  %v1496 = vtanh.pop %v1480
  %v1497 = vtanh.pop %v1481
  %v1498 = vtanh.pop %v1482
  %v1499 = vtanh.pop %v1483
  %v1500 = vtanh.pop %v1484
  %v1501 = vtanh.pop %v1485
  %v1502 = vtanh.pop %v1486
  %v1503 = vtanh.pop %v1487
  %v1504 = vtanh.pop %v1488
  %v1505 = vtanh.pop %v1489
  %v1506 = vtanh.pop %v1490
  %v1507 = vtanh.pop %v1491
  %v1508 = vtanh.pop %v1492
  %v1509 = vmul.f32 %v1493, 0.5
  %v1510 = vmul.f32 %v1494, 0.5
  %v1511 = vmul.f32 %v1495, 0.5
  %v1512 = vmul.f32 %v1496, 0.5
  %v1513 = vmul.f32 %v1497, 0.5
  %v1514 = vmul.f32 %v1498, 0.5
  %v1515 = vmul.f32 %v1499, 0.5
  %v1516 = vmul.f32 %v1500, 0.5
  %v1517 = vmul.f32 %v1501, 0.5
  %v1518 = vmul.f32 %v1502, 0.5
  %v1519 = vmul.f32 %v1503, 0.5
  %v1520 = vmul.f32 %v1504, 0.5
  %v1521 = vmul.f32 %v1505, 0.5
  %v1522 = vmul.f32 %v1506, 0.5
  %v1523 = vmul.f32 %v1507, 0.5
  %v1524 = vmul.f32 %v1508, 0.5
  %v1525 = vadd.f32 %v1509, 0.5
  %v1526 = vadd.f32 %v1510, 0.5
  %v1527 = vadd.f32 %v1511, 0.5
  %v1528 = vadd.f32 %v1512, 0.5
  %v1529 = vadd.f32 %v1513, 0.5
  %v1530 = vadd.f32 %v1514, 0.5
  %v1531 = vadd.f32 %v1515, 0.5
  %v1532 = vadd.f32 %v1516, 0.5
  %v1533 = vadd.f32 %v1517, 0.5
  %v1534 = vadd.f32 %v1518, 0.5
  %v1535 = vadd.f32 %v1519, 0.5
  %v1536 = vadd.f32 %v1520, 0.5
  %v1537 = vadd.f32 %v1521, 0.5
  %v1538 = vadd.f32 %v1522, 0.5
  %v1539 = vadd.f32 %v1523, 0.5
  %v1540 = vadd.f32 %v1524, 0.5
  %v1541 = vrot.slane %v1349, 2
  %v1542 = vrot.slane %v1350, 2
  %v1543 = vrot.slane %v1351, 2
  %v1544 = vrot.slane %v1352, 2
  %v1545 = vrot.slane %v1353, 2
  %v1546 = vrot.slane %v1354, 2
  %v1547 = vrot.slane %v1355, 2
  %v1548 = vrot.slane %v1356, 2
  %v1549 = vrot.slane %v1357, 2
  %v1550 = vrot.slane %v1358, 2
  %v1551 = vrot.slane %v1359, 2
  %v1552 = vrot.slane %v1360, 2
  %v1553 = vrot.slane %v1361, 2
  %v1554 = vrot.slane %v1362, 2
  %v1555 = vrot.slane %v1363, 2
  %v1556 = vrot.slane %v1364, 2
  %v1573 = vtanh.pop %v1541
  %v1574 = vtanh.pop %v1542
  %v1575 = vtanh.pop %v1543
  %v1576 = vtanh.pop %v1544
  %v1577 = vtanh.pop %v1545
  %v1578 = vtanh.pop %v1546
  %v1579 = vtanh.pop %v1547
  %v1580 = vtanh.pop %v1548
  %v1581 = vtanh.pop %v1549
  %v1582 = vtanh.pop %v1550
  %v1583 = vtanh.pop %v1551
  %v1584 = vtanh.pop %v1552
  %v1585 = vtanh.pop %v1553
  %v1586 = vtanh.pop %v1554
  %v1587 = vtanh.pop %v1555
  %v1588 = vtanh.pop %v1556
  %v1589 = vrot.slane %v1349, 3
  %v1590 = vrot.slane %v1350, 3
  %v1591 = vrot.slane %v1351, 3
  %v1592 = vrot.slane %v1352, 3
  %v1593 = vrot.slane %v1353, 3
  %v1594 = vrot.slane %v1354, 3
  %v1595 = vrot.slane %v1355, 3
  %v1596 = vrot.slane %v1356, 3
  %v1597 = vrot.slane %v1357, 3
  %v1598 = vrot.slane %v1358, 3
  %v1599 = vrot.slane %v1359, 3
  %v1600 = vrot.slane %v1360, 3
  %v1601 = vrot.slane %v1361, 3
  %v1602 = vrot.slane %v1362, 3
  %v1603 = vrot.slane %v1363, 3
  %v1604 = vrot.slane %v1364, 3
  %v1621 = vmul.f32 %v1589, 0.5
  %v1622 = vmul.f32 %v1590, 0.5
  %v1623 = vmul.f32 %v1591, 0.5
  %v1624 = vmul.f32 %v1592, 0.5
  %v1625 = vmul.f32 %v1593, 0.5
  %v1626 = vmul.f32 %v1594, 0.5
  %v1627 = vmul.f32 %v1595, 0.5
  %v1628 = vmul.f32 %v1596, 0.5
  %v1629 = vmul.f32 %v1597, 0.5
  %v1630 = vmul.f32 %v1598, 0.5
  %v1631 = vmul.f32 %v1599, 0.5
  %v1632 = vmul.f32 %v1600, 0.5
  %v1633 = vmul.f32 %v1601, 0.5
  %v1634 = vmul.f32 %v1602, 0.5
  %v1635 = vmul.f32 %v1603, 0.5
  %v1636 = vmul.f32 %v1604, 0.5
  %v1637 = vtanh.pop %v1621
  %v1638 = vtanh.pop %v1622
  %v1639 = vtanh.pop %v1623
  %v1640 = vtanh.pop %v1624
  %v1641 = vtanh.pop %v1625
  %v1642 = vtanh.pop %v1626
  %v1643 = vtanh.pop %v1627
  %v1644 = vtanh.pop %v1628
  %v1645 = vtanh.pop %v1629
  %v1646 = vtanh.pop %v1630
  %v1647 = vtanh.pop %v1631
  %v1648 = vtanh.pop %v1632
  %v1649 = vtanh.pop %v1633
  %v1650 = vtanh.pop %v1634
  %v1651 = vtanh.pop %v1635
  %v1652 = vtanh.pop %v1636
  %v1653 = vmul.f32 %v1637, 0.5
  %v1654 = vmul.f32 %v1638, 0.5
  %v1655 = vmul.f32 %v1639, 0.5
  %v1656 = vmul.f32 %v1640, 0.5
  %v1657 = vmul.f32 %v1641, 0.5
  %v1658 = vmul.f32 %v1642, 0.5
  %v1659 = vmul.f32 %v1643, 0.5
  %v1660 = vmul.f32 %v1644, 0.5
  %v1661 = vmul.f32 %v1645, 0.5
  %v1662 = vmul.f32 %v1646, 0.5
  %v1663 = vmul.f32 %v1647, 0.5
  %v1664 = vmul.f32 %v1648, 0.5
  %v1665 = vmul.f32 %v1649, 0.5
  %v1666 = vmul.f32 %v1650, 0.5
  %v1667 = vmul.f32 %v1651, 0.5
  %v1668 = vmul.f32 %v1652, 0.5
  %v1669 = vadd.f32 %v1653, 0.5
  %v1670 = vadd.f32 %v1654, 0.5
  %v1671 = vadd.f32 %v1655, 0.5
  %v1672 = vadd.f32 %v1656, 0.5
  %v1673 = vadd.f32 %v1657, 0.5
  %v1674 = vadd.f32 %v1658, 0.5
  %v1675 = vadd.f32 %v1659, 0.5
  %v1676 = vadd.f32 %v1660, 0.5
  %v1677 = vadd.f32 %v1661, 0.5
  %v1678 = vadd.f32 %v1662, 0.5
  %v1679 = vadd.f32 %v1663, 0.5
  %v1680 = vadd.f32 %v1664, 0.5
  %v1681 = vadd.f32 %v1665, 0.5
  %v1682 = vadd.f32 %v1666, 0.5
  %v1683 = vadd.f32 %v1667, 0.5
  %v1684 = vadd.f32 %v1668, 0.5
  %v1685 = vmul.f32 %v1525, %v772
  %v1686 = vmul.f32 %v1526, %v773
  %v1687 = vmul.f32 %v1527, %v774
  %v1688 = vmul.f32 %v1528, %v775
  %v1689 = vmul.f32 %v1529, %v776
  %v1690 = vmul.f32 %v1530, %v777
  %v1691 = vmul.f32 %v1531, %v778
  %v1692 = vmul.f32 %v1532, %v779
  %v1693 = vmul.f32 %v1533, %v780
  %v1694 = vmul.f32 %v1534, %v781
  %v1695 = vmul.f32 %v1535, %v782
  %v1696 = vmul.f32 %v1536, %v783
  %v1697 = vmul.f32 %v1537, %v784
  %v1698 = vmul.f32 %v1538, %v785
  %v1699 = vmul.f32 %v1539, %v786
  %v1700 = vmul.f32 %v1540, %v787
  %v1701 = vmul.f32 %v1413, %v1573
  %v1702 = vmul.f32 %v1414, %v1574
  %v1703 = vmul.f32 %v1415, %v1575
  %v1704 = vmul.f32 %v1416, %v1576
  %v1705 = vmul.f32 %v1417, %v1577
  %v1706 = vmul.f32 %v1418, %v1578
  %v1707 = vmul.f32 %v1419, %v1579
  %v1708 = vmul.f32 %v1420, %v1580
  %v1709 = vmul.f32 %v1421, %v1581
  %v1710 = vmul.f32 %v1422, %v1582
  %v1711 = vmul.f32 %v1423, %v1583
  %v1712 = vmul.f32 %v1424, %v1584
  %v1713 = vmul.f32 %v1425, %v1585
  %v1714 = vmul.f32 %v1426, %v1586
  %v1715 = vmul.f32 %v1427, %v1587
  %v1716 = vmul.f32 %v1428, %v1588
  %v1717 = vadd.f32 %v1685, %v1701
  %v1718 = vadd.f32 %v1686, %v1702
  %v1719 = vadd.f32 %v1687, %v1703
  %v1720 = vadd.f32 %v1688, %v1704
  %v1721 = vadd.f32 %v1689, %v1705
  %v1722 = vadd.f32 %v1690, %v1706
  %v1723 = vadd.f32 %v1691, %v1707
  %v1724 = vadd.f32 %v1692, %v1708
  %v1725 = vadd.f32 %v1693, %v1709
  %v1726 = vadd.f32 %v1694, %v1710
  %v1727 = vadd.f32 %v1695, %v1711
  %v1728 = vadd.f32 %v1696, %v1712
  %v1729 = vadd.f32 %v1697, %v1713
  %v1730 = vadd.f32 %v1698, %v1714
  %v1731 = vadd.f32 %v1699, %v1715
  %v1732 = vadd.f32 %v1700, %v1716
  %v1733 = vtanh.pop %v1717
  %v1734 = vtanh.pop %v1718
  %v1735 = vtanh.pop %v1719
  %v1736 = vtanh.pop %v1720
  %v1737 = vtanh.pop %v1721
  %v1738 = vtanh.pop %v1722
  %v1739 = vtanh.pop %v1723
  %v1740 = vtanh.pop %v1724
  %v1741 = vtanh.pop %v1725
  %v1742 = vtanh.pop %v1726
  %v1743 = vtanh.pop %v1727
  %v1744 = vtanh.pop %v1728
  %v1745 = vtanh.pop %v1729
  %v1746 = vtanh.pop %v1730
  %v1747 = vtanh.pop %v1731
  %v1748 = vtanh.pop %v1732
  %v1749 = vmul.f32 %v1669, %v1733
  %v1750 = vmul.f32 %v1670, %v1734
  %v1751 = vmul.f32 %v1671, %v1735
  %v1752 = vmul.f32 %v1672, %v1736
  %v1753 = vmul.f32 %v1673, %v1737
  %v1754 = vmul.f32 %v1674, %v1738
  %v1755 = vmul.f32 %v1675, %v1739
  %v1756 = vmul.f32 %v1676, %v1740
  %v1757 = vmul.f32 %v1677, %v1741
  %v1758 = vmul.f32 %v1678, %v1742
  %v1759 = vmul.f32 %v1679, %v1743
  %v1760 = vmul.f32 %v1680, %v1744
  %v1761 = vmul.f32 %v1681, %v1745
  %v1762 = vmul.f32 %v1682, %v1746
  %v1763 = vmul.f32 %v1683, %v1747
  %v1764 = vmul.f32 %v1684, %v1748
  %vm1765 = vcmp.gt.s32.totalorder %v15, 1
  %vm1766 = vcmp.gt.s32.totalorder %v16, 1
  %v1767 = vsel %vm1765, 1, 0
  %v1768 = vsel %vm1766, 1, 0
  %v1769 = vcvt.s32.f32 %v1767
  %v1770 = vcvt.s32.f32 %v1768
  %1772 = vset.pattern.permute.xlu0 0
  %1773 = vperm.xlu0 %1772, %v1769
  %v1774 = vpop.permute.xlu0 %1773
  %1776 = vset.pattern.permute.xlu0 0
  %1777 = vperm.xlu0 %1776, %v1770
  %v1778 = vpop.permute.xlu0 %1777
  %v1779 = vperm.slane %v1774, 0
  %v1780 = vperm.slane %v1774, 1
  %v1781 = vperm.slane %v1774, 2
  %v1782 = vperm.slane %v1774, 3
  %v1783 = vperm.slane %v1774, 4
  %v1784 = vperm.slane %v1774, 5
  %v1785 = vperm.slane %v1774, 6
  %v1786 = vperm.slane %v1774, 7
  %v1787 = vperm.slane %v1778, 0
  %v1788 = vperm.slane %v1778, 1
  %v1789 = vperm.slane %v1778, 2
  %v1790 = vperm.slane %v1778, 3
  %v1791 = vperm.slane %v1778, 4
  %v1792 = vperm.slane %v1778, 5
  %v1793 = vperm.slane %v1778, 6
  %v1794 = vperm.slane %v1778, 7
  %v1811 = vmul.f32 %v1749, %v1779
  %v1812 = vmul.f32 %v1750, %v1780
  %v1813 = vmul.f32 %v1751, %v1781
  %v1814 = vmul.f32 %v1752, %v1782
  %v1815 = vmul.f32 %v1753, %v1783
  %v1816 = vmul.f32 %v1754, %v1784
  %v1817 = vmul.f32 %v1755, %v1785
  %v1818 = vmul.f32 %v1756, %v1786
  %v1819 = vmul.f32 %v1757, %v1787
  %v1820 = vmul.f32 %v1758, %v1788
  %v1821 = vmul.f32 %v1759, %v1789
  %v1822 = vmul.f32 %v1760, %v1790
  %v1823 = vmul.f32 %v1761, %v1791
  %v1824 = vmul.f32 %v1762, %v1792
  %v1825 = vmul.f32 %v1763, %v1793
  %v1826 = vmul.f32 %v1764, %v1794
  %1827 = vst [vmem:[%s3 + $0x1] sm:$0x1] %v1811
  %1828 = vst [vmem:[%s3 + $0x9] sm:$0x1] %v1812
  %1829 = vst [vmem:[%s3 + $0x11] sm:$0x1] %v1813
  %1830 = vst [vmem:[%s3 + $0x19] sm:$0x1] %v1814
  %1831 = vst [vmem:[%s3 + $0x21] sm:$0x1] %v1815
  %1832 = vst [vmem:[%s3 + $0x29] sm:$0x1] %v1816
  %1833 = vst [vmem:[%s3 + $0x31] sm:$0x1] %v1817
  %1834 = vst [vmem:[%s3 + $0x39] sm:$0x1] %v1818
  %1835 = vst [vmem:[%s3 + $0x41] sm:$0x1] %v1819
  %1836 = vst [vmem:[%s3 + $0x49] sm:$0x1] %v1820
  %1837 = vst [vmem:[%s3 + $0x51] sm:$0x1] %v1821
  %1838 = vst [vmem:[%s3 + $0x59] sm:$0x1] %v1822
  %1839 = vst [vmem:[%s3 + $0x61] sm:$0x1] %v1823
  %1840 = vst [vmem:[%s3 + $0x69] sm:$0x1] %v1824
  %1841 = vst [vmem:[%s3 + $0x71] sm:$0x1] %v1825
  %1842 = vst [vmem:[%s3 + $0x79] sm:$0x1] %v1826
  %s1843 = scalar_lea.vmem %s1, 2
  %v1844 = vld [vmem:[%s1843] ss:$8 sm:$0xf]
  %s1845 = scalar_lea.vmem %s1, 34
  %v1846 = vld [vmem:[%s1845] ss:$8 sm:$0xf]
  %s1847 = scalar_lea.vmem %s1, 66
  %v1848 = vld [vmem:[%s1847] ss:$8 sm:$0xf]
  %s1849 = scalar_lea.vmem %s1, 98
  %v1850 = vld [vmem:[%s1849] ss:$8 sm:$0xf]
  %s1851 = scalar_lea.vmem %s1, 130
  %v1852 = vld [vmem:[%s1851] ss:$8 sm:$0xf]
  %s1853 = scalar_lea.vmem %s1, 162
  %v1854 = vld [vmem:[%s1853] ss:$8 sm:$0xf]
  %s1855 = scalar_lea.vmem %s1, 194
  %v1856 = vld [vmem:[%s1855] ss:$8 sm:$0xf]
  %s1857 = scalar_lea.vmem %s1, 226
  %v1858 = vld [vmem:[%s1857] ss:$8 sm:$0xf]
  %s1859 = scalar_lea.vmem %s1, 258
  %v1860 = vld [vmem:[%s1859] ss:$8 sm:$0xf]
  %s1861 = scalar_lea.vmem %s1, 290
  %v1862 = vld [vmem:[%s1861] ss:$8 sm:$0xf]
  %s1863 = scalar_lea.vmem %s1, 322
  %v1864 = vld [vmem:[%s1863] ss:$8 sm:$0xf]
  %s1865 = scalar_lea.vmem %s1, 354
  %v1866 = vld [vmem:[%s1865] ss:$8 sm:$0xf]
  %s1867 = scalar_lea.vmem %s1, 386
  %v1868 = vld [vmem:[%s1867] ss:$8 sm:$0xf]
  %s1869 = scalar_lea.vmem %s1, 418
  %v1870 = vld [vmem:[%s1869] ss:$8 sm:$0xf]
  %s1871 = scalar_lea.vmem %s1, 450
  %v1872 = vld [vmem:[%s1871] ss:$8 sm:$0xf]
  %s1873 = scalar_lea.vmem %s1, 482
  %v1874 = vld [vmem:[%s1873] ss:$8 sm:$0xf]
  %v1875 = vpack.c.bf16 %v1749, %v1749
  %v1876 = vpack.c.bf16 %v1750, %v1750
  %v1877 = vpack.c.bf16 %v1751, %v1751
  %v1878 = vpack.c.bf16 %v1752, %v1752
  %v1879 = vpack.c.bf16 %v1753, %v1753
  %v1880 = vpack.c.bf16 %v1754, %v1754
  %v1881 = vpack.c.bf16 %v1755, %v1755
  %v1882 = vpack.c.bf16 %v1756, %v1756
  %v1883 = vpack.c.bf16 %v1757, %v1757
  %v1884 = vpack.c.bf16 %v1758, %v1758
  %v1885 = vpack.c.bf16 %v1759, %v1759
  %v1886 = vpack.c.bf16 %v1760, %v1760
  %v1887 = vpack.c.bf16 %v1761, %v1761
  %v1888 = vpack.c.bf16 %v1762, %v1762
  %v1889 = vpack.c.bf16 %v1763, %v1763
  %v1890 = vpack.c.bf16 %v1764, %v1764
  %v1891 = vld [vmem:[%s2] sm:$0xff]
  %v1892 = vld [vmem:[%s2 + $0x8] sm:$0xff]
  %v1893 = vld [vmem:[%s2 + $0x10] sm:$0xff]
  %v1894 = vld [vmem:[%s2 + $0x18] sm:$0xff]
  %v1895 = vld [vmem:[%s2 + $0x20] sm:$0xff]
  %v1896 = vld [vmem:[%s2 + $0x28] sm:$0xff]
  %v1897 = vld [vmem:[%s2 + $0x30] sm:$0xff]
  %v1898 = vld [vmem:[%s2 + $0x38] sm:$0xff]
  %v1899 = vld [vmem:[%s2 + $0x40] sm:$0xff]
  %v1900 = vld [vmem:[%s2 + $0x48] sm:$0xff]
  %v1901 = vld [vmem:[%s2 + $0x50] sm:$0xff]
  %v1902 = vld [vmem:[%s2 + $0x58] sm:$0xff]
  %v1903 = vld [vmem:[%s2 + $0x60] sm:$0xff]
  %v1904 = vld [vmem:[%s2 + $0x68] sm:$0xff]
  %v1905 = vld [vmem:[%s2 + $0x70] sm:$0xff]
  %v1906 = vld [vmem:[%s2 + $0x78] sm:$0xff]
  %v1907 = vld [vmem:[%s2 + $0x80] sm:$0xff]
  %v1908 = vld [vmem:[%s2 + $0x88] sm:$0xff]
  %v1909 = vld [vmem:[%s2 + $0x90] sm:$0xff]
  %v1910 = vld [vmem:[%s2 + $0x98] sm:$0xff]
  %v1911 = vld [vmem:[%s2 + $0xa0] sm:$0xff]
  %v1912 = vld [vmem:[%s2 + $0xa8] sm:$0xff]
  %v1913 = vld [vmem:[%s2 + $0xb0] sm:$0xff]
  %v1914 = vld [vmem:[%s2 + $0xb8] sm:$0xff]
  %v1915 = vld [vmem:[%s2 + $0xc0] sm:$0xff]
  %v1916 = vld [vmem:[%s2 + $0xc8] sm:$0xff]
  %v1917 = vld [vmem:[%s2 + $0xd0] sm:$0xff]
  %v1918 = vld [vmem:[%s2 + $0xd8] sm:$0xff]
  %v1919 = vld [vmem:[%s2 + $0xe0] sm:$0xff]
  %v1920 = vld [vmem:[%s2 + $0xe8] sm:$0xff]
  %v1921 = vld [vmem:[%s2 + $0xf0] sm:$0xff]
  %v1922 = vld [vmem:[%s2 + $0xf8] sm:$0xff]
  %v1939 = vunpack.c.l.b16 %v1875
  %v1940 = vunpack.c.l.b16 %v1876
  %v1941 = vunpack.c.l.b16 %v1877
  %v1942 = vunpack.c.l.b16 %v1878
  %v1943 = vunpack.c.l.b16 %v1879
  %v1944 = vunpack.c.l.b16 %v1880
  %v1945 = vunpack.c.l.b16 %v1881
  %v1946 = vunpack.c.l.b16 %v1882
  %v1947 = vunpack.c.l.b16 %v1883
  %v1948 = vunpack.c.l.b16 %v1884
  %v1949 = vunpack.c.l.b16 %v1885
  %v1950 = vunpack.c.l.b16 %v1886
  %v1951 = vunpack.c.l.b16 %v1887
  %v1952 = vunpack.c.l.b16 %v1888
  %v1953 = vunpack.c.l.b16 %v1889
  %v1954 = vunpack.c.l.b16 %v1890
  %v1955 = vrot.slane %v1940, 7
  %v1956 = vsel %vm316, %v1955, %v1939
  %v1957 = vrot.slane %v1941, 6
  %v1958 = vsel %vm312, %v1957, %v1956
  %v1959 = vrot.slane %v1942, 5
  %v1960 = vsel %vm318, %v1959, %v1958
  %v1961 = vrot.slane %v1943, 4
  %v1962 = vsel %vm324, %v1961, %v1960
  %v1963 = vrot.slane %v1944, 3
  %v1964 = vsel %vm330, %v1963, %v1962
  %v1965 = vrot.slane %v1945, 2
  %v1966 = vsel %vm336, %v1965, %v1964
  %v1967 = vrot.slane %v1946, 1
  %v1968 = vsel %vm1023, %v1967, %v1966
  %v1969 = vrot.slane %v1948, 7
  %v1970 = vsel %vm316, %v1969, %v1947
  %v1971 = vrot.slane %v1949, 6
  %v1972 = vsel %vm312, %v1971, %v1970
  %v1973 = vrot.slane %v1950, 5
  %v1974 = vsel %vm318, %v1973, %v1972
  %v1975 = vrot.slane %v1951, 4
  %v1976 = vsel %vm324, %v1975, %v1974
  %v1977 = vrot.slane %v1952, 3
  %v1978 = vsel %vm330, %v1977, %v1976
  %v1979 = vrot.slane %v1953, 2
  %v1980 = vsel %vm336, %v1979, %v1978
  %v1981 = vrot.slane %v1954, 1
  %v1982 = vsel %vm1023, %v1981, %v1980
  %v1983 = vpack.c.b16 %v1982, %v1968
  %v2017 = vunpack.c.l.b16 %v1891
  %v2018 = vunpack.c.h.b16 %v1891
  %v2019 = vunpack.c.l.b16 %v1892
  %v2020 = vunpack.c.h.b16 %v1892
  %v2021 = vunpack.c.l.b16 %v1893
  %v2022 = vunpack.c.h.b16 %v1893
  %v2023 = vunpack.c.l.b16 %v1894
  %v2024 = vunpack.c.h.b16 %v1894
  %v2025 = vunpack.c.l.b16 %v1895
  %v2026 = vunpack.c.h.b16 %v1895
  %v2027 = vunpack.c.l.b16 %v1896
  %v2028 = vunpack.c.h.b16 %v1896
  %v2029 = vunpack.c.l.b16 %v1897
  %v2030 = vunpack.c.h.b16 %v1897
  %v2031 = vunpack.c.l.b16 %v1898
  %v2032 = vunpack.c.h.b16 %v1898
  %v2033 = vunpack.c.l.b16 %v1899
  %v2034 = vunpack.c.h.b16 %v1899
  %v2035 = vunpack.c.l.b16 %v1900
  %v2036 = vunpack.c.h.b16 %v1900
  %v2037 = vunpack.c.l.b16 %v1901
  %v2038 = vunpack.c.h.b16 %v1901
  %v2039 = vunpack.c.l.b16 %v1902
  %v2040 = vunpack.c.h.b16 %v1902
  %v2041 = vunpack.c.l.b16 %v1903
  %v2042 = vunpack.c.h.b16 %v1903
  %v2043 = vunpack.c.l.b16 %v1904
  %v2044 = vunpack.c.h.b16 %v1904
  %v2045 = vunpack.c.l.b16 %v1905
  %v2046 = vunpack.c.h.b16 %v1905
  %v2047 = vunpack.c.l.b16 %v1906
  %v2048 = vunpack.c.h.b16 %v1906
  %v2049 = vunpack.c.l.b16 %v1907
  %v2050 = vunpack.c.h.b16 %v1907
  %v2051 = vunpack.c.l.b16 %v1908
  %v2052 = vunpack.c.h.b16 %v1908
  %v2053 = vunpack.c.l.b16 %v1909
  %v2054 = vunpack.c.h.b16 %v1909
  %v2055 = vunpack.c.l.b16 %v1910
  %v2056 = vunpack.c.h.b16 %v1910
  %v2057 = vunpack.c.l.b16 %v1911
  %v2058 = vunpack.c.h.b16 %v1911
  %v2059 = vunpack.c.l.b16 %v1912
  %v2060 = vunpack.c.h.b16 %v1912
  %v2061 = vunpack.c.l.b16 %v1913
  %v2062 = vunpack.c.h.b16 %v1913
  %v2063 = vunpack.c.l.b16 %v1914
  %v2064 = vunpack.c.h.b16 %v1914
  %v2065 = vunpack.c.l.b16 %v1915
  %v2066 = vunpack.c.h.b16 %v1915
  %v2067 = vunpack.c.l.b16 %v1916
  %v2068 = vunpack.c.h.b16 %v1916
  %v2069 = vunpack.c.l.b16 %v1917
  %v2070 = vunpack.c.h.b16 %v1917
  %v2071 = vunpack.c.l.b16 %v1918
  %v2072 = vunpack.c.h.b16 %v1918
  %v2073 = vunpack.c.l.b16 %v1919
  %v2074 = vunpack.c.h.b16 %v1919
  %v2075 = vunpack.c.l.b16 %v1920
  %v2076 = vunpack.c.h.b16 %v1920
  %v2077 = vunpack.c.l.b16 %v1921
  %v2078 = vunpack.c.h.b16 %v1921
  %v2079 = vunpack.c.l.b16 %v1922
  %v2080 = vunpack.c.h.b16 %v1922
  %v2081 = vpack.c.b16 %v2021, %v2017
  %v2082 = vpack.c.b16 %v2022, %v2018
  %v2083 = vpack.c.b16 %v2023, %v2019
  %v2084 = vpack.c.b16 %v2024, %v2020
  %v2085 = vpack.c.b16 %v2029, %v2025
  %v2086 = vpack.c.b16 %v2030, %v2026
  %v2087 = vpack.c.b16 %v2031, %v2027
  %v2088 = vpack.c.b16 %v2032, %v2028
  %v2089 = vpack.c.b16 %v2037, %v2033
  %v2090 = vpack.c.b16 %v2038, %v2034
  %v2091 = vpack.c.b16 %v2039, %v2035
  %v2092 = vpack.c.b16 %v2040, %v2036
  %v2093 = vpack.c.b16 %v2045, %v2041
  %v2094 = vpack.c.b16 %v2046, %v2042
  %v2095 = vpack.c.b16 %v2047, %v2043
  %v2096 = vpack.c.b16 %v2048, %v2044
  %v2097 = vpack.c.b16 %v2053, %v2049
  %v2098 = vpack.c.b16 %v2054, %v2050
  %v2099 = vpack.c.b16 %v2055, %v2051
  %v2100 = vpack.c.b16 %v2056, %v2052
  %v2101 = vpack.c.b16 %v2061, %v2057
  %v2102 = vpack.c.b16 %v2062, %v2058
  %v2103 = vpack.c.b16 %v2063, %v2059
  %v2104 = vpack.c.b16 %v2064, %v2060
  %v2105 = vpack.c.b16 %v2069, %v2065
  %v2106 = vpack.c.b16 %v2070, %v2066
  %v2107 = vpack.c.b16 %v2071, %v2067
  %v2108 = vpack.c.b16 %v2072, %v2068
  %v2109 = vpack.c.b16 %v2077, %v2073
  %v2110 = vpack.c.b16 %v2078, %v2074
  %v2111 = vpack.c.b16 %v2079, %v2075
  %v2112 = vpack.c.b16 %v2080, %v2076
  %2145 = vmatpush.bf16.msra.mxu0 %v2109
  %2146 = vmatpush.bf16.msra.mxu0 %v2105
  %2147 = vmatpush.bf16.msra.mxu0 %v2101
  %2148 = vmatpush.bf16.msra.mxu0 %v2097
  %2149 = vmatpush.bf16.msra.mxu0 %v2093
  %2150 = vmatpush.bf16.msra.mxu0 %v2089
  %2151 = vmatpush.bf16.msra.mxu0 %v2085
  %2152 = vmatpush.bf16.msra.mxu0 %v2081
  %2153 = vmatmul.bf16.gmra.mxu0 %v1983
  %v2154 = vpop.f32.mrf.mxu0
  %v2155 = vadd.f32 0.0, %v2154
  %v2156 = vpop.f32.mrf.mxu0
  %v2157 = vadd.f32 0.0, %v2156
  %2158 = vdwg.mxu0
  %2159 = vmatpush.bf16.msra.mxu0 %v2110
  %2160 = vmatpush.bf16.msra.mxu0 %v2106
  %2161 = vmatpush.bf16.msra.mxu0 %v2102
  %2162 = vmatpush.bf16.msra.mxu0 %v2098
  %2163 = vmatpush.bf16.msra.mxu0 %v2094
  %2164 = vmatpush.bf16.msra.mxu0 %v2090
  %2165 = vmatpush.bf16.msra.mxu0 %v2086
  %2166 = vmatpush.bf16.msra.mxu0 %v2082
  %2167 = vmatmul.bf16.gmra.mxu0 %v1983
  %v2168 = vpop.f32.mrf.mxu0
  %v2169 = vadd.f32 0.0, %v2168
  %v2170 = vpop.f32.mrf.mxu0
  %v2171 = vadd.f32 0.0, %v2170
  %2172 = vdwg.mxu0
  %2173 = vmatpush.bf16.msra.mxu0 %v2111
  %2174 = vmatpush.bf16.msra.mxu0 %v2107
  %2175 = vmatpush.bf16.msra.mxu0 %v2103
  %2176 = vmatpush.bf16.msra.mxu0 %v2099
  %2177 = vmatpush.bf16.msra.mxu0 %v2095
  %2178 = vmatpush.bf16.msra.mxu0 %v2091
  %2179 = vmatpush.bf16.msra.mxu0 %v2087
  %2180 = vmatpush.bf16.msra.mxu0 %v2083
  %2181 = vmatmul.bf16.gmra.mxu0 %v1983
  %v2182 = vpop.f32.mrf.mxu0
  %v2183 = vadd.f32 0.0, %v2182
  %v2184 = vpop.f32.mrf.mxu0
  %v2185 = vadd.f32 0.0, %v2184
  %2186 = vdwg.mxu0
  %2187 = vmatpush.bf16.msra.mxu0 %v2112
  %2188 = vmatpush.bf16.msra.mxu0 %v2108
  %2189 = vmatpush.bf16.msra.mxu0 %v2104
  %2190 = vmatpush.bf16.msra.mxu0 %v2100
  %2191 = vmatpush.bf16.msra.mxu0 %v2096
  %2192 = vmatpush.bf16.msra.mxu0 %v2092
  %2193 = vmatpush.bf16.msra.mxu0 %v2088
  %2194 = vmatpush.bf16.msra.mxu0 %v2084
  %2195 = vmatmul.bf16.gmra.mxu0 %v1983
  %v2196 = vpop.f32.mrf.mxu0
  %v2197 = vadd.f32 0.0, %v2196
  %v2198 = vpop.f32.mrf.mxu0
  %v2199 = vadd.f32 0.0, %v2198
  %2200 = vdwg.mxu0
  %v2209 = vrot.slane %v2169, 7
  %v2210 = vrot.slane %v2183, 6
  %v2211 = vrot.slane %v2197, 5
  %v2212 = vrot.slane %v2171, 7
  %v2213 = vrot.slane %v2185, 6
  %v2214 = vrot.slane %v2199, 5
  %v2215 = vsel %vm310, %v2155, %v2209
  %v2216 = vsel %vm312, %v2210, %v2211
  %v2217 = vsel %vm314, %v2215, %v2216
  %v2218 = vsel %vm316, %v2155, %v2209
  %v2219 = vsel %vm318, %v2210, %v2211
  %v2220 = vsel %vm320, %v2218, %v2219
  %v2221 = vrot.slane %v2220, 1
  %v2222 = vsel %vm312, %v2155, %v2209
  %v2223 = vsel %vm324, %v2210, %v2211
  %v2224 = vsel %vm326, %v2222, %v2223
  %v2225 = vrot.slane %v2224, 2
  %v2226 = vsel %vm318, %v2155, %v2209
  %v2227 = vsel %vm330, %v2210, %v2211
  %v2228 = vsel %vm332, %v2226, %v2227
  %v2229 = vrot.slane %v2228, 3
  %v2230 = vsel %vm324, %v2155, %v2209
  %v2231 = vsel %vm336, %v2210, %v2211
  %v2232 = vsel %vm338, %v2230, %v2231
  %v2233 = vrot.slane %v2232, 4
  %v2234 = vsel %vm330, %v2155, %v2209
  %v2235 = vsel %vm342, %v2211, %v2210
  %v2236 = vsel %vm344, %v2234, %v2235
  %v2237 = vrot.slane %v2236, 5
  %v2238 = vsel %vm336, %v2155, %v2209
  %v2239 = vsel %vm310, %v2210, %v2211
  %v2240 = vsel %vm349, %v2239, %v2238
  %v2241 = vrot.slane %v2240, 6
  %v2242 = vsel %vm342, %v2209, %v2155
  %v2243 = vsel %vm316, %v2210, %v2211
  %v2244 = vsel %vm354, %v2243, %v2242
  %v2245 = vrot.slane %v2244, 7
  %v2246 = vsel %vm310, %v2157, %v2212
  %v2247 = vsel %vm312, %v2213, %v2214
  %v2248 = vsel %vm314, %v2246, %v2247
  %v2249 = vsel %vm316, %v2157, %v2212
  %v2250 = vsel %vm318, %v2213, %v2214
  %v2251 = vsel %vm320, %v2249, %v2250
  %v2252 = vrot.slane %v2251, 1
  %v2253 = vsel %vm312, %v2157, %v2212
  %v2254 = vsel %vm324, %v2213, %v2214
  %v2255 = vsel %vm326, %v2253, %v2254
  %v2256 = vrot.slane %v2255, 2
  %v2257 = vsel %vm318, %v2157, %v2212
  %v2258 = vsel %vm330, %v2213, %v2214
  %v2259 = vsel %vm332, %v2257, %v2258
  %v2260 = vrot.slane %v2259, 3
  %v2261 = vsel %vm324, %v2157, %v2212
  %v2262 = vsel %vm336, %v2213, %v2214
  %v2263 = vsel %vm338, %v2261, %v2262
  %v2264 = vrot.slane %v2263, 4
  %v2265 = vsel %vm330, %v2157, %v2212
  %v2266 = vsel %vm342, %v2214, %v2213
  %v2267 = vsel %vm344, %v2265, %v2266
  %v2268 = vrot.slane %v2267, 5
  %v2269 = vsel %vm336, %v2157, %v2212
  %v2270 = vsel %vm310, %v2213, %v2214
  %v2271 = vsel %vm349, %v2270, %v2269
  %v2272 = vrot.slane %v2271, 6
  %v2273 = vsel %vm342, %v2212, %v2157
  %v2274 = vsel %vm316, %v2213, %v2214
  %v2275 = vsel %vm354, %v2274, %v2273
  %v2276 = vrot.slane %v2275, 7
  %v2293 = vadd.f32 %v1844, %v2217
  %v2294 = vadd.f32 %v1846, %v2221
  %v2295 = vadd.f32 %v1848, %v2225
  %v2296 = vadd.f32 %v1850, %v2229
  %v2297 = vadd.f32 %v1852, %v2233
  %v2298 = vadd.f32 %v1854, %v2237
  %v2299 = vadd.f32 %v1856, %v2241
  %v2300 = vadd.f32 %v1858, %v2245
  %v2301 = vadd.f32 %v1860, %v2248
  %v2302 = vadd.f32 %v1862, %v2252
  %v2303 = vadd.f32 %v1864, %v2256
  %v2304 = vadd.f32 %v1866, %v2260
  %v2305 = vadd.f32 %v1868, %v2264
  %v2306 = vadd.f32 %v1870, %v2268
  %v2307 = vadd.f32 %v1872, %v2272
  %v2308 = vadd.f32 %v1874, %v2276
  %v2309 = vmul.f32 %v2293, 0.5
  %v2310 = vmul.f32 %v2294, 0.5
  %v2311 = vmul.f32 %v2295, 0.5
  %v2312 = vmul.f32 %v2296, 0.5
  %v2313 = vmul.f32 %v2297, 0.5
  %v2314 = vmul.f32 %v2298, 0.5
  %v2315 = vmul.f32 %v2299, 0.5
  %v2316 = vmul.f32 %v2300, 0.5
  %v2317 = vmul.f32 %v2301, 0.5
  %v2318 = vmul.f32 %v2302, 0.5
  %v2319 = vmul.f32 %v2303, 0.5
  %v2320 = vmul.f32 %v2304, 0.5
  %v2321 = vmul.f32 %v2305, 0.5
  %v2322 = vmul.f32 %v2306, 0.5
  %v2323 = vmul.f32 %v2307, 0.5
  %v2324 = vmul.f32 %v2308, 0.5
  %v2325 = vtanh.pop %v2309
  %v2326 = vtanh.pop %v2310
  %v2327 = vtanh.pop %v2311
  %v2328 = vtanh.pop %v2312
  %v2329 = vtanh.pop %v2313
  %v2330 = vtanh.pop %v2314
  %v2331 = vtanh.pop %v2315
  %v2332 = vtanh.pop %v2316
  %v2333 = vtanh.pop %v2317
  %v2334 = vtanh.pop %v2318
  %v2335 = vtanh.pop %v2319
  %v2336 = vtanh.pop %v2320
  %v2337 = vtanh.pop %v2321
  %v2338 = vtanh.pop %v2322
  %v2339 = vtanh.pop %v2323
  %v2340 = vtanh.pop %v2324
  %v2341 = vmul.f32 %v2325, 0.5
  %v2342 = vmul.f32 %v2326, 0.5
  %v2343 = vmul.f32 %v2327, 0.5
  %v2344 = vmul.f32 %v2328, 0.5
  %v2345 = vmul.f32 %v2329, 0.5
  %v2346 = vmul.f32 %v2330, 0.5
  %v2347 = vmul.f32 %v2331, 0.5
  %v2348 = vmul.f32 %v2332, 0.5
  %v2349 = vmul.f32 %v2333, 0.5
  %v2350 = vmul.f32 %v2334, 0.5
  %v2351 = vmul.f32 %v2335, 0.5
  %v2352 = vmul.f32 %v2336, 0.5
  %v2353 = vmul.f32 %v2337, 0.5
  %v2354 = vmul.f32 %v2338, 0.5
  %v2355 = vmul.f32 %v2339, 0.5
  %v2356 = vmul.f32 %v2340, 0.5
  %v2357 = vadd.f32 %v2341, 0.5
  %v2358 = vadd.f32 %v2342, 0.5
  %v2359 = vadd.f32 %v2343, 0.5
  %v2360 = vadd.f32 %v2344, 0.5
  %v2361 = vadd.f32 %v2345, 0.5
  %v2362 = vadd.f32 %v2346, 0.5
  %v2363 = vadd.f32 %v2347, 0.5
  %v2364 = vadd.f32 %v2348, 0.5
  %v2365 = vadd.f32 %v2349, 0.5
  %v2366 = vadd.f32 %v2350, 0.5
  %v2367 = vadd.f32 %v2351, 0.5
  %v2368 = vadd.f32 %v2352, 0.5
  %v2369 = vadd.f32 %v2353, 0.5
  %v2370 = vadd.f32 %v2354, 0.5
  %v2371 = vadd.f32 %v2355, 0.5
  %v2372 = vadd.f32 %v2356, 0.5
  %v2389 = vrot.slane %v2293, 1
  %v2390 = vrot.slane %v2294, 1
  %v2391 = vrot.slane %v2295, 1
  %v2392 = vrot.slane %v2296, 1
  %v2393 = vrot.slane %v2297, 1
  %v2394 = vrot.slane %v2298, 1
  %v2395 = vrot.slane %v2299, 1
  %v2396 = vrot.slane %v2300, 1
  %v2397 = vrot.slane %v2301, 1
  %v2398 = vrot.slane %v2302, 1
  %v2399 = vrot.slane %v2303, 1
  %v2400 = vrot.slane %v2304, 1
  %v2401 = vrot.slane %v2305, 1
  %v2402 = vrot.slane %v2306, 1
  %v2403 = vrot.slane %v2307, 1
  %v2404 = vrot.slane %v2308, 1
  %v2421 = vmul.f32 %v2389, 0.5
  %v2422 = vmul.f32 %v2390, 0.5
  %v2423 = vmul.f32 %v2391, 0.5
  %v2424 = vmul.f32 %v2392, 0.5
  %v2425 = vmul.f32 %v2393, 0.5
  %v2426 = vmul.f32 %v2394, 0.5
  %v2427 = vmul.f32 %v2395, 0.5
  %v2428 = vmul.f32 %v2396, 0.5
  %v2429 = vmul.f32 %v2397, 0.5
  %v2430 = vmul.f32 %v2398, 0.5
  %v2431 = vmul.f32 %v2399, 0.5
  %v2432 = vmul.f32 %v2400, 0.5
  %v2433 = vmul.f32 %v2401, 0.5
  %v2434 = vmul.f32 %v2402, 0.5
  %v2435 = vmul.f32 %v2403, 0.5
  %v2436 = vmul.f32 %v2404, 0.5
  %v2437 = vtanh.pop %v2421
  %v2438 = vtanh.pop %v2422
  %v2439 = vtanh.pop %v2423
  %v2440 = vtanh.pop %v2424
  %v2441 = vtanh.pop %v2425
  %v2442 = vtanh.pop %v2426
  %v2443 = vtanh.pop %v2427
  %v2444 = vtanh.pop %v2428
  %v2445 = vtanh.pop %v2429
  %v2446 = vtanh.pop %v2430
  %v2447 = vtanh.pop %v2431
  %v2448 = vtanh.pop %v2432
  %v2449 = vtanh.pop %v2433
  %v2450 = vtanh.pop %v2434
  %v2451 = vtanh.pop %v2435
  %v2452 = vtanh.pop %v2436
  %v2453 = vmul.f32 %v2437, 0.5
  %v2454 = vmul.f32 %v2438, 0.5
  %v2455 = vmul.f32 %v2439, 0.5
  %v2456 = vmul.f32 %v2440, 0.5
  %v2457 = vmul.f32 %v2441, 0.5
  %v2458 = vmul.f32 %v2442, 0.5
  %v2459 = vmul.f32 %v2443, 0.5
  %v2460 = vmul.f32 %v2444, 0.5
  %v2461 = vmul.f32 %v2445, 0.5
  %v2462 = vmul.f32 %v2446, 0.5
  %v2463 = vmul.f32 %v2447, 0.5
  %v2464 = vmul.f32 %v2448, 0.5
  %v2465 = vmul.f32 %v2449, 0.5
  %v2466 = vmul.f32 %v2450, 0.5
  %v2467 = vmul.f32 %v2451, 0.5
  %v2468 = vmul.f32 %v2452, 0.5
  %v2469 = vadd.f32 %v2453, 0.5
  %v2470 = vadd.f32 %v2454, 0.5
  %v2471 = vadd.f32 %v2455, 0.5
  %v2472 = vadd.f32 %v2456, 0.5
  %v2473 = vadd.f32 %v2457, 0.5
  %v2474 = vadd.f32 %v2458, 0.5
  %v2475 = vadd.f32 %v2459, 0.5
  %v2476 = vadd.f32 %v2460, 0.5
  %v2477 = vadd.f32 %v2461, 0.5
  %v2478 = vadd.f32 %v2462, 0.5
  %v2479 = vadd.f32 %v2463, 0.5
  %v2480 = vadd.f32 %v2464, 0.5
  %v2481 = vadd.f32 %v2465, 0.5
  %v2482 = vadd.f32 %v2466, 0.5
  %v2483 = vadd.f32 %v2467, 0.5
  %v2484 = vadd.f32 %v2468, 0.5
  %v2485 = vrot.slane %v2293, 2
  %v2486 = vrot.slane %v2294, 2
  %v2487 = vrot.slane %v2295, 2
  %v2488 = vrot.slane %v2296, 2
  %v2489 = vrot.slane %v2297, 2
  %v2490 = vrot.slane %v2298, 2
  %v2491 = vrot.slane %v2299, 2
  %v2492 = vrot.slane %v2300, 2
  %v2493 = vrot.slane %v2301, 2
  %v2494 = vrot.slane %v2302, 2
  %v2495 = vrot.slane %v2303, 2
  %v2496 = vrot.slane %v2304, 2
  %v2497 = vrot.slane %v2305, 2
  %v2498 = vrot.slane %v2306, 2
  %v2499 = vrot.slane %v2307, 2
  %v2500 = vrot.slane %v2308, 2
  %v2517 = vtanh.pop %v2485
  %v2518 = vtanh.pop %v2486
  %v2519 = vtanh.pop %v2487
  %v2520 = vtanh.pop %v2488
  %v2521 = vtanh.pop %v2489
  %v2522 = vtanh.pop %v2490
  %v2523 = vtanh.pop %v2491
  %v2524 = vtanh.pop %v2492
  %v2525 = vtanh.pop %v2493
  %v2526 = vtanh.pop %v2494
  %v2527 = vtanh.pop %v2495
  %v2528 = vtanh.pop %v2496
  %v2529 = vtanh.pop %v2497
  %v2530 = vtanh.pop %v2498
  %v2531 = vtanh.pop %v2499
  %v2532 = vtanh.pop %v2500
  %v2533 = vrot.slane %v2293, 3
  %v2534 = vrot.slane %v2294, 3
  %v2535 = vrot.slane %v2295, 3
  %v2536 = vrot.slane %v2296, 3
  %v2537 = vrot.slane %v2297, 3
  %v2538 = vrot.slane %v2298, 3
  %v2539 = vrot.slane %v2299, 3
  %v2540 = vrot.slane %v2300, 3
  %v2541 = vrot.slane %v2301, 3
  %v2542 = vrot.slane %v2302, 3
  %v2543 = vrot.slane %v2303, 3
  %v2544 = vrot.slane %v2304, 3
  %v2545 = vrot.slane %v2305, 3
  %v2546 = vrot.slane %v2306, 3
  %v2547 = vrot.slane %v2307, 3
  %v2548 = vrot.slane %v2308, 3
  %v2565 = vmul.f32 %v2533, 0.5
  %v2566 = vmul.f32 %v2534, 0.5
  %v2567 = vmul.f32 %v2535, 0.5
  %v2568 = vmul.f32 %v2536, 0.5
  %v2569 = vmul.f32 %v2537, 0.5
  %v2570 = vmul.f32 %v2538, 0.5
  %v2571 = vmul.f32 %v2539, 0.5
  %v2572 = vmul.f32 %v2540, 0.5
  %v2573 = vmul.f32 %v2541, 0.5
  %v2574 = vmul.f32 %v2542, 0.5
  %v2575 = vmul.f32 %v2543, 0.5
  %v2576 = vmul.f32 %v2544, 0.5
  %v2577 = vmul.f32 %v2545, 0.5
  %v2578 = vmul.f32 %v2546, 0.5
  %v2579 = vmul.f32 %v2547, 0.5
  %v2580 = vmul.f32 %v2548, 0.5
  %v2581 = vtanh.pop %v2565
  %v2582 = vtanh.pop %v2566
  %v2583 = vtanh.pop %v2567
  %v2584 = vtanh.pop %v2568
  %v2585 = vtanh.pop %v2569
  %v2586 = vtanh.pop %v2570
  %v2587 = vtanh.pop %v2571
  %v2588 = vtanh.pop %v2572
  %v2589 = vtanh.pop %v2573
  %v2590 = vtanh.pop %v2574
  %v2591 = vtanh.pop %v2575
  %v2592 = vtanh.pop %v2576
  %v2593 = vtanh.pop %v2577
  %v2594 = vtanh.pop %v2578
  %v2595 = vtanh.pop %v2579
  %v2596 = vtanh.pop %v2580
  %v2597 = vmul.f32 %v2581, 0.5
  %v2598 = vmul.f32 %v2582, 0.5
  %v2599 = vmul.f32 %v2583, 0.5
  %v2600 = vmul.f32 %v2584, 0.5
  %v2601 = vmul.f32 %v2585, 0.5
  %v2602 = vmul.f32 %v2586, 0.5
  %v2603 = vmul.f32 %v2587, 0.5
  %v2604 = vmul.f32 %v2588, 0.5
  %v2605 = vmul.f32 %v2589, 0.5
  %v2606 = vmul.f32 %v2590, 0.5
  %v2607 = vmul.f32 %v2591, 0.5
  %v2608 = vmul.f32 %v2592, 0.5
  %v2609 = vmul.f32 %v2593, 0.5
  %v2610 = vmul.f32 %v2594, 0.5
  %v2611 = vmul.f32 %v2595, 0.5
  %v2612 = vmul.f32 %v2596, 0.5
  %v2613 = vadd.f32 %v2597, 0.5
  %v2614 = vadd.f32 %v2598, 0.5
  %v2615 = vadd.f32 %v2599, 0.5
  %v2616 = vadd.f32 %v2600, 0.5
  %v2617 = vadd.f32 %v2601, 0.5
  %v2618 = vadd.f32 %v2602, 0.5
  %v2619 = vadd.f32 %v2603, 0.5
  %v2620 = vadd.f32 %v2604, 0.5
  %v2621 = vadd.f32 %v2605, 0.5
  %v2622 = vadd.f32 %v2606, 0.5
  %v2623 = vadd.f32 %v2607, 0.5
  %v2624 = vadd.f32 %v2608, 0.5
  %v2625 = vadd.f32 %v2609, 0.5
  %v2626 = vadd.f32 %v2610, 0.5
  %v2627 = vadd.f32 %v2611, 0.5
  %v2628 = vadd.f32 %v2612, 0.5
  %v2629 = vmul.f32 %v2469, %v1717
  %v2630 = vmul.f32 %v2470, %v1718
  %v2631 = vmul.f32 %v2471, %v1719
  %v2632 = vmul.f32 %v2472, %v1720
  %v2633 = vmul.f32 %v2473, %v1721
  %v2634 = vmul.f32 %v2474, %v1722
  %v2635 = vmul.f32 %v2475, %v1723
  %v2636 = vmul.f32 %v2476, %v1724
  %v2637 = vmul.f32 %v2477, %v1725
  %v2638 = vmul.f32 %v2478, %v1726
  %v2639 = vmul.f32 %v2479, %v1727
  %v2640 = vmul.f32 %v2480, %v1728
  %v2641 = vmul.f32 %v2481, %v1729
  %v2642 = vmul.f32 %v2482, %v1730
  %v2643 = vmul.f32 %v2483, %v1731
  %v2644 = vmul.f32 %v2484, %v1732
  %v2645 = vmul.f32 %v2357, %v2517
  %v2646 = vmul.f32 %v2358, %v2518
  %v2647 = vmul.f32 %v2359, %v2519
  %v2648 = vmul.f32 %v2360, %v2520
  %v2649 = vmul.f32 %v2361, %v2521
  %v2650 = vmul.f32 %v2362, %v2522
  %v2651 = vmul.f32 %v2363, %v2523
  %v2652 = vmul.f32 %v2364, %v2524
  %v2653 = vmul.f32 %v2365, %v2525
  %v2654 = vmul.f32 %v2366, %v2526
  %v2655 = vmul.f32 %v2367, %v2527
  %v2656 = vmul.f32 %v2368, %v2528
  %v2657 = vmul.f32 %v2369, %v2529
  %v2658 = vmul.f32 %v2370, %v2530
  %v2659 = vmul.f32 %v2371, %v2531
  %v2660 = vmul.f32 %v2372, %v2532
  %v2661 = vadd.f32 %v2629, %v2645
  %v2662 = vadd.f32 %v2630, %v2646
  %v2663 = vadd.f32 %v2631, %v2647
  %v2664 = vadd.f32 %v2632, %v2648
  %v2665 = vadd.f32 %v2633, %v2649
  %v2666 = vadd.f32 %v2634, %v2650
  %v2667 = vadd.f32 %v2635, %v2651
  %v2668 = vadd.f32 %v2636, %v2652
  %v2669 = vadd.f32 %v2637, %v2653
  %v2670 = vadd.f32 %v2638, %v2654
  %v2671 = vadd.f32 %v2639, %v2655
  %v2672 = vadd.f32 %v2640, %v2656
  %v2673 = vadd.f32 %v2641, %v2657
  %v2674 = vadd.f32 %v2642, %v2658
  %v2675 = vadd.f32 %v2643, %v2659
  %v2676 = vadd.f32 %v2644, %v2660
  %v2677 = vtanh.pop %v2661
  %v2678 = vtanh.pop %v2662
  %v2679 = vtanh.pop %v2663
  %v2680 = vtanh.pop %v2664
  %v2681 = vtanh.pop %v2665
  %v2682 = vtanh.pop %v2666
  %v2683 = vtanh.pop %v2667
  %v2684 = vtanh.pop %v2668
  %v2685 = vtanh.pop %v2669
  %v2686 = vtanh.pop %v2670
  %v2687 = vtanh.pop %v2671
  %v2688 = vtanh.pop %v2672
  %v2689 = vtanh.pop %v2673
  %v2690 = vtanh.pop %v2674
  %v2691 = vtanh.pop %v2675
  %v2692 = vtanh.pop %v2676
  %v2693 = vmul.f32 %v2613, %v2677
  %v2694 = vmul.f32 %v2614, %v2678
  %v2695 = vmul.f32 %v2615, %v2679
  %v2696 = vmul.f32 %v2616, %v2680
  %v2697 = vmul.f32 %v2617, %v2681
  %v2698 = vmul.f32 %v2618, %v2682
  %v2699 = vmul.f32 %v2619, %v2683
  %v2700 = vmul.f32 %v2620, %v2684
  %v2701 = vmul.f32 %v2621, %v2685
  %v2702 = vmul.f32 %v2622, %v2686
  %v2703 = vmul.f32 %v2623, %v2687
  %v2704 = vmul.f32 %v2624, %v2688
  %v2705 = vmul.f32 %v2625, %v2689
  %v2706 = vmul.f32 %v2626, %v2690
  %v2707 = vmul.f32 %v2627, %v2691
  %v2708 = vmul.f32 %v2628, %v2692
  %vm2709 = vcmp.gt.s32.totalorder %v15, 2
  %vm2710 = vcmp.gt.s32.totalorder %v16, 2
  %v2711 = vsel %vm2709, 1, 0
  %v2712 = vsel %vm2710, 1, 0
  %v2713 = vcvt.s32.f32 %v2711
  %v2714 = vcvt.s32.f32 %v2712
  %2716 = vset.pattern.permute.xlu0 0
  %2717 = vperm.xlu0 %2716, %v2713
  %v2718 = vpop.permute.xlu0 %2717
  %2720 = vset.pattern.permute.xlu0 0
  %2721 = vperm.xlu0 %2720, %v2714
  %v2722 = vpop.permute.xlu0 %2721
  %v2723 = vperm.slane %v2718, 0
  %v2724 = vperm.slane %v2718, 1
  %v2725 = vperm.slane %v2718, 2
  %v2726 = vperm.slane %v2718, 3
  %v2727 = vperm.slane %v2718, 4
  %v2728 = vperm.slane %v2718, 5
  %v2729 = vperm.slane %v2718, 6
  %v2730 = vperm.slane %v2718, 7
  %v2731 = vperm.slane %v2722, 0
  %v2732 = vperm.slane %v2722, 1
  %v2733 = vperm.slane %v2722, 2
  %v2734 = vperm.slane %v2722, 3
  %v2735 = vperm.slane %v2722, 4
  %v2736 = vperm.slane %v2722, 5
  %v2737 = vperm.slane %v2722, 6
  %v2738 = vperm.slane %v2722, 7
  %v2755 = vmul.f32 %v2693, %v2723
  %v2756 = vmul.f32 %v2694, %v2724
  %v2757 = vmul.f32 %v2695, %v2725
  %v2758 = vmul.f32 %v2696, %v2726
  %v2759 = vmul.f32 %v2697, %v2727
  %v2760 = vmul.f32 %v2698, %v2728
  %v2761 = vmul.f32 %v2699, %v2729
  %v2762 = vmul.f32 %v2700, %v2730
  %v2763 = vmul.f32 %v2701, %v2731
  %v2764 = vmul.f32 %v2702, %v2732
  %v2765 = vmul.f32 %v2703, %v2733
  %v2766 = vmul.f32 %v2704, %v2734
  %v2767 = vmul.f32 %v2705, %v2735
  %v2768 = vmul.f32 %v2706, %v2736
  %v2769 = vmul.f32 %v2707, %v2737
  %v2770 = vmul.f32 %v2708, %v2738
  %2771 = vst [vmem:[%s3 + $0x2] sm:$0x1] %v2755
  %2772 = vst [vmem:[%s3 + $0xa] sm:$0x1] %v2756
  %2773 = vst [vmem:[%s3 + $0x12] sm:$0x1] %v2757
  %2774 = vst [vmem:[%s3 + $0x1a] sm:$0x1] %v2758
  %2775 = vst [vmem:[%s3 + $0x22] sm:$0x1] %v2759
  %2776 = vst [vmem:[%s3 + $0x2a] sm:$0x1] %v2760
  %2777 = vst [vmem:[%s3 + $0x32] sm:$0x1] %v2761
  %2778 = vst [vmem:[%s3 + $0x3a] sm:$0x1] %v2762
  %2779 = vst [vmem:[%s3 + $0x42] sm:$0x1] %v2763
  %2780 = vst [vmem:[%s3 + $0x4a] sm:$0x1] %v2764
  %2781 = vst [vmem:[%s3 + $0x52] sm:$0x1] %v2765
  %2782 = vst [vmem:[%s3 + $0x5a] sm:$0x1] %v2766
  %2783 = vst [vmem:[%s3 + $0x62] sm:$0x1] %v2767
  %2784 = vst [vmem:[%s3 + $0x6a] sm:$0x1] %v2768
  %2785 = vst [vmem:[%s3 + $0x72] sm:$0x1] %v2769
  %2786 = vst [vmem:[%s3 + $0x7a] sm:$0x1] %v2770
  %s2787 = scalar_lea.vmem %s1, 3
  %v2788 = vld [vmem:[%s2787] ss:$8 sm:$0xf]
  %s2789 = scalar_lea.vmem %s1, 35
  %v2790 = vld [vmem:[%s2789] ss:$8 sm:$0xf]
  %s2791 = scalar_lea.vmem %s1, 67
  %v2792 = vld [vmem:[%s2791] ss:$8 sm:$0xf]
  %s2793 = scalar_lea.vmem %s1, 99
  %v2794 = vld [vmem:[%s2793] ss:$8 sm:$0xf]
  %s2795 = scalar_lea.vmem %s1, 131
  %v2796 = vld [vmem:[%s2795] ss:$8 sm:$0xf]
  %s2797 = scalar_lea.vmem %s1, 163
  %v2798 = vld [vmem:[%s2797] ss:$8 sm:$0xf]
  %s2799 = scalar_lea.vmem %s1, 195
  %v2800 = vld [vmem:[%s2799] ss:$8 sm:$0xf]
  %s2801 = scalar_lea.vmem %s1, 227
  %v2802 = vld [vmem:[%s2801] ss:$8 sm:$0xf]
  %s2803 = scalar_lea.vmem %s1, 259
  %v2804 = vld [vmem:[%s2803] ss:$8 sm:$0xf]
  %s2805 = scalar_lea.vmem %s1, 291
  %v2806 = vld [vmem:[%s2805] ss:$8 sm:$0xf]
  %s2807 = scalar_lea.vmem %s1, 323
  %v2808 = vld [vmem:[%s2807] ss:$8 sm:$0xf]
  %s2809 = scalar_lea.vmem %s1, 355
  %v2810 = vld [vmem:[%s2809] ss:$8 sm:$0xf]
  %s2811 = scalar_lea.vmem %s1, 387
  %v2812 = vld [vmem:[%s2811] ss:$8 sm:$0xf]
  %s2813 = scalar_lea.vmem %s1, 419
  %v2814 = vld [vmem:[%s2813] ss:$8 sm:$0xf]
  %s2815 = scalar_lea.vmem %s1, 451
  %v2816 = vld [vmem:[%s2815] ss:$8 sm:$0xf]
  %s2817 = scalar_lea.vmem %s1, 483
  %v2818 = vld [vmem:[%s2817] ss:$8 sm:$0xf]
  %v2819 = vpack.c.bf16 %v2693, %v2693
  %v2820 = vpack.c.bf16 %v2694, %v2694
  %v2821 = vpack.c.bf16 %v2695, %v2695
  %v2822 = vpack.c.bf16 %v2696, %v2696
  %v2823 = vpack.c.bf16 %v2697, %v2697
  %v2824 = vpack.c.bf16 %v2698, %v2698
  %v2825 = vpack.c.bf16 %v2699, %v2699
  %v2826 = vpack.c.bf16 %v2700, %v2700
  %v2827 = vpack.c.bf16 %v2701, %v2701
  %v2828 = vpack.c.bf16 %v2702, %v2702
  %v2829 = vpack.c.bf16 %v2703, %v2703
  %v2830 = vpack.c.bf16 %v2704, %v2704
  %v2831 = vpack.c.bf16 %v2705, %v2705
  %v2832 = vpack.c.bf16 %v2706, %v2706
  %v2833 = vpack.c.bf16 %v2707, %v2707
  %v2834 = vpack.c.bf16 %v2708, %v2708
  %v2835 = vld [vmem:[%s2] sm:$0xff]
  %v2836 = vld [vmem:[%s2 + $0x8] sm:$0xff]
  %v2837 = vld [vmem:[%s2 + $0x10] sm:$0xff]
  %v2838 = vld [vmem:[%s2 + $0x18] sm:$0xff]
  %v2839 = vld [vmem:[%s2 + $0x20] sm:$0xff]
  %v2840 = vld [vmem:[%s2 + $0x28] sm:$0xff]
  %v2841 = vld [vmem:[%s2 + $0x30] sm:$0xff]
  %v2842 = vld [vmem:[%s2 + $0x38] sm:$0xff]
  %v2843 = vld [vmem:[%s2 + $0x40] sm:$0xff]
  %v2844 = vld [vmem:[%s2 + $0x48] sm:$0xff]
  %v2845 = vld [vmem:[%s2 + $0x50] sm:$0xff]
  %v2846 = vld [vmem:[%s2 + $0x58] sm:$0xff]
  %v2847 = vld [vmem:[%s2 + $0x60] sm:$0xff]
  %v2848 = vld [vmem:[%s2 + $0x68] sm:$0xff]
  %v2849 = vld [vmem:[%s2 + $0x70] sm:$0xff]
  %v2850 = vld [vmem:[%s2 + $0x78] sm:$0xff]
  %v2851 = vld [vmem:[%s2 + $0x80] sm:$0xff]
  %v2852 = vld [vmem:[%s2 + $0x88] sm:$0xff]
  %v2853 = vld [vmem:[%s2 + $0x90] sm:$0xff]
  %v2854 = vld [vmem:[%s2 + $0x98] sm:$0xff]
  %v2855 = vld [vmem:[%s2 + $0xa0] sm:$0xff]
  %v2856 = vld [vmem:[%s2 + $0xa8] sm:$0xff]
  %v2857 = vld [vmem:[%s2 + $0xb0] sm:$0xff]
  %v2858 = vld [vmem:[%s2 + $0xb8] sm:$0xff]
  %v2859 = vld [vmem:[%s2 + $0xc0] sm:$0xff]
  %v2860 = vld [vmem:[%s2 + $0xc8] sm:$0xff]
  %v2861 = vld [vmem:[%s2 + $0xd0] sm:$0xff]
  %v2862 = vld [vmem:[%s2 + $0xd8] sm:$0xff]
  %v2863 = vld [vmem:[%s2 + $0xe0] sm:$0xff]
  %v2864 = vld [vmem:[%s2 + $0xe8] sm:$0xff]
  %v2865 = vld [vmem:[%s2 + $0xf0] sm:$0xff]
  %v2866 = vld [vmem:[%s2 + $0xf8] sm:$0xff]
  %v2883 = vunpack.c.l.b16 %v2819
  %v2884 = vunpack.c.l.b16 %v2820
  %v2885 = vunpack.c.l.b16 %v2821
  %v2886 = vunpack.c.l.b16 %v2822
  %v2887 = vunpack.c.l.b16 %v2823
  %v2888 = vunpack.c.l.b16 %v2824
  %v2889 = vunpack.c.l.b16 %v2825
  %v2890 = vunpack.c.l.b16 %v2826
  %v2891 = vunpack.c.l.b16 %v2827
  %v2892 = vunpack.c.l.b16 %v2828
  %v2893 = vunpack.c.l.b16 %v2829
  %v2894 = vunpack.c.l.b16 %v2830
  %v2895 = vunpack.c.l.b16 %v2831
  %v2896 = vunpack.c.l.b16 %v2832
  %v2897 = vunpack.c.l.b16 %v2833
  %v2898 = vunpack.c.l.b16 %v2834
  %v2899 = vrot.slane %v2884, 7
  %v2900 = vsel %vm316, %v2899, %v2883
  %v2901 = vrot.slane %v2885, 6
  %v2902 = vsel %vm312, %v2901, %v2900
  %v2903 = vrot.slane %v2886, 5
  %v2904 = vsel %vm318, %v2903, %v2902
  %v2905 = vrot.slane %v2887, 4
  %v2906 = vsel %vm324, %v2905, %v2904
  %v2907 = vrot.slane %v2888, 3
  %v2908 = vsel %vm330, %v2907, %v2906
  %v2909 = vrot.slane %v2889, 2
  %v2910 = vsel %vm336, %v2909, %v2908
  %v2911 = vrot.slane %v2890, 1
  %v2912 = vsel %vm1023, %v2911, %v2910
  %v2913 = vrot.slane %v2892, 7
  %v2914 = vsel %vm316, %v2913, %v2891
  %v2915 = vrot.slane %v2893, 6
  %v2916 = vsel %vm312, %v2915, %v2914
  %v2917 = vrot.slane %v2894, 5
  %v2918 = vsel %vm318, %v2917, %v2916
  %v2919 = vrot.slane %v2895, 4
  %v2920 = vsel %vm324, %v2919, %v2918
  %v2921 = vrot.slane %v2896, 3
  %v2922 = vsel %vm330, %v2921, %v2920
  %v2923 = vrot.slane %v2897, 2
  %v2924 = vsel %vm336, %v2923, %v2922
  %v2925 = vrot.slane %v2898, 1
  %v2926 = vsel %vm1023, %v2925, %v2924
  %v2927 = vpack.c.b16 %v2926, %v2912
  %v2961 = vunpack.c.l.b16 %v2835
  %v2962 = vunpack.c.h.b16 %v2835
  %v2963 = vunpack.c.l.b16 %v2836
  %v2964 = vunpack.c.h.b16 %v2836
  %v2965 = vunpack.c.l.b16 %v2837
  %v2966 = vunpack.c.h.b16 %v2837
  %v2967 = vunpack.c.l.b16 %v2838
  %v2968 = vunpack.c.h.b16 %v2838
  %v2969 = vunpack.c.l.b16 %v2839
  %v2970 = vunpack.c.h.b16 %v2839
  %v2971 = vunpack.c.l.b16 %v2840
  %v2972 = vunpack.c.h.b16 %v2840
  %v2973 = vunpack.c.l.b16 %v2841
  %v2974 = vunpack.c.h.b16 %v2841
  %v2975 = vunpack.c.l.b16 %v2842
  %v2976 = vunpack.c.h.b16 %v2842
  %v2977 = vunpack.c.l.b16 %v2843
  %v2978 = vunpack.c.h.b16 %v2843
  %v2979 = vunpack.c.l.b16 %v2844
  %v2980 = vunpack.c.h.b16 %v2844
  %v2981 = vunpack.c.l.b16 %v2845
  %v2982 = vunpack.c.h.b16 %v2845
  %v2983 = vunpack.c.l.b16 %v2846
  %v2984 = vunpack.c.h.b16 %v2846
  %v2985 = vunpack.c.l.b16 %v2847
  %v2986 = vunpack.c.h.b16 %v2847
  %v2987 = vunpack.c.l.b16 %v2848
  %v2988 = vunpack.c.h.b16 %v2848
  %v2989 = vunpack.c.l.b16 %v2849
  %v2990 = vunpack.c.h.b16 %v2849
  %v2991 = vunpack.c.l.b16 %v2850
  %v2992 = vunpack.c.h.b16 %v2850
  %v2993 = vunpack.c.l.b16 %v2851
  %v2994 = vunpack.c.h.b16 %v2851
  %v2995 = vunpack.c.l.b16 %v2852
  %v2996 = vunpack.c.h.b16 %v2852
  %v2997 = vunpack.c.l.b16 %v2853
  %v2998 = vunpack.c.h.b16 %v2853
  %v2999 = vunpack.c.l.b16 %v2854
  %v3000 = vunpack.c.h.b16 %v2854
  %v3001 = vunpack.c.l.b16 %v2855
  %v3002 = vunpack.c.h.b16 %v2855
  %v3003 = vunpack.c.l.b16 %v2856
  %v3004 = vunpack.c.h.b16 %v2856
  %v3005 = vunpack.c.l.b16 %v2857
  %v3006 = vunpack.c.h.b16 %v2857
  %v3007 = vunpack.c.l.b16 %v2858
  %v3008 = vunpack.c.h.b16 %v2858
  %v3009 = vunpack.c.l.b16 %v2859
  %v3010 = vunpack.c.h.b16 %v2859
  %v3011 = vunpack.c.l.b16 %v2860
  %v3012 = vunpack.c.h.b16 %v2860
  %v3013 = vunpack.c.l.b16 %v2861
  %v3014 = vunpack.c.h.b16 %v2861
  %v3015 = vunpack.c.l.b16 %v2862
  %v3016 = vunpack.c.h.b16 %v2862
  %v3017 = vunpack.c.l.b16 %v2863
  %v3018 = vunpack.c.h.b16 %v2863
  %v3019 = vunpack.c.l.b16 %v2864
  %v3020 = vunpack.c.h.b16 %v2864
  %v3021 = vunpack.c.l.b16 %v2865
  %v3022 = vunpack.c.h.b16 %v2865
  %v3023 = vunpack.c.l.b16 %v2866
  %v3024 = vunpack.c.h.b16 %v2866
  %v3025 = vpack.c.b16 %v2965, %v2961
  %v3026 = vpack.c.b16 %v2966, %v2962
  %v3027 = vpack.c.b16 %v2967, %v2963
  %v3028 = vpack.c.b16 %v2968, %v2964
  %v3029 = vpack.c.b16 %v2973, %v2969
  %v3030 = vpack.c.b16 %v2974, %v2970
  %v3031 = vpack.c.b16 %v2975, %v2971
  %v3032 = vpack.c.b16 %v2976, %v2972
  %v3033 = vpack.c.b16 %v2981, %v2977
  %v3034 = vpack.c.b16 %v2982, %v2978
  %v3035 = vpack.c.b16 %v2983, %v2979
  %v3036 = vpack.c.b16 %v2984, %v2980
  %v3037 = vpack.c.b16 %v2989, %v2985
  %v3038 = vpack.c.b16 %v2990, %v2986
  %v3039 = vpack.c.b16 %v2991, %v2987
  %v3040 = vpack.c.b16 %v2992, %v2988
  %v3041 = vpack.c.b16 %v2997, %v2993
  %v3042 = vpack.c.b16 %v2998, %v2994
  %v3043 = vpack.c.b16 %v2999, %v2995
  %v3044 = vpack.c.b16 %v3000, %v2996
  %v3045 = vpack.c.b16 %v3005, %v3001
  %v3046 = vpack.c.b16 %v3006, %v3002
  %v3047 = vpack.c.b16 %v3007, %v3003
  %v3048 = vpack.c.b16 %v3008, %v3004
  %v3049 = vpack.c.b16 %v3013, %v3009
  %v3050 = vpack.c.b16 %v3014, %v3010
  %v3051 = vpack.c.b16 %v3015, %v3011
  %v3052 = vpack.c.b16 %v3016, %v3012
  %v3053 = vpack.c.b16 %v3021, %v3017
  %v3054 = vpack.c.b16 %v3022, %v3018
  %v3055 = vpack.c.b16 %v3023, %v3019
  %v3056 = vpack.c.b16 %v3024, %v3020
  %3089 = vmatpush.bf16.msra.mxu0 %v3053
  %3090 = vmatpush.bf16.msra.mxu0 %v3049
  %3091 = vmatpush.bf16.msra.mxu0 %v3045
  %3092 = vmatpush.bf16.msra.mxu0 %v3041
  %3093 = vmatpush.bf16.msra.mxu0 %v3037
  %3094 = vmatpush.bf16.msra.mxu0 %v3033
  %3095 = vmatpush.bf16.msra.mxu0 %v3029
  %3096 = vmatpush.bf16.msra.mxu0 %v3025
  %3097 = vmatmul.bf16.gmra.mxu0 %v2927
  %v3098 = vpop.f32.mrf.mxu0
  %v3099 = vadd.f32 0.0, %v3098
  %v3100 = vpop.f32.mrf.mxu0
  %v3101 = vadd.f32 0.0, %v3100
  %3102 = vdwg.mxu0
  %3103 = vmatpush.bf16.msra.mxu0 %v3054
  %3104 = vmatpush.bf16.msra.mxu0 %v3050
  %3105 = vmatpush.bf16.msra.mxu0 %v3046
  %3106 = vmatpush.bf16.msra.mxu0 %v3042
  %3107 = vmatpush.bf16.msra.mxu0 %v3038
  %3108 = vmatpush.bf16.msra.mxu0 %v3034
  %3109 = vmatpush.bf16.msra.mxu0 %v3030
  %3110 = vmatpush.bf16.msra.mxu0 %v3026
  %3111 = vmatmul.bf16.gmra.mxu0 %v2927
  %v3112 = vpop.f32.mrf.mxu0
  %v3113 = vadd.f32 0.0, %v3112
  %v3114 = vpop.f32.mrf.mxu0
  %v3115 = vadd.f32 0.0, %v3114
  %3116 = vdwg.mxu0
  %3117 = vmatpush.bf16.msra.mxu0 %v3055
  %3118 = vmatpush.bf16.msra.mxu0 %v3051
  %3119 = vmatpush.bf16.msra.mxu0 %v3047
  %3120 = vmatpush.bf16.msra.mxu0 %v3043
  %3121 = vmatpush.bf16.msra.mxu0 %v3039
  %3122 = vmatpush.bf16.msra.mxu0 %v3035
  %3123 = vmatpush.bf16.msra.mxu0 %v3031
  %3124 = vmatpush.bf16.msra.mxu0 %v3027
  %3125 = vmatmul.bf16.gmra.mxu0 %v2927
  %v3126 = vpop.f32.mrf.mxu0
  %v3127 = vadd.f32 0.0, %v3126
  %v3128 = vpop.f32.mrf.mxu0
  %v3129 = vadd.f32 0.0, %v3128
  %3130 = vdwg.mxu0
  %3131 = vmatpush.bf16.msra.mxu0 %v3056
  %3132 = vmatpush.bf16.msra.mxu0 %v3052
  %3133 = vmatpush.bf16.msra.mxu0 %v3048
  %3134 = vmatpush.bf16.msra.mxu0 %v3044
  %3135 = vmatpush.bf16.msra.mxu0 %v3040
  %3136 = vmatpush.bf16.msra.mxu0 %v3036
  %3137 = vmatpush.bf16.msra.mxu0 %v3032
  %3138 = vmatpush.bf16.msra.mxu0 %v3028
  %3139 = vmatmul.bf16.gmra.mxu0 %v2927
  %v3140 = vpop.f32.mrf.mxu0
  %v3141 = vadd.f32 0.0, %v3140
  %v3142 = vpop.f32.mrf.mxu0
  %v3143 = vadd.f32 0.0, %v3142
  %3144 = vdwg.mxu0
  %v3153 = vrot.slane %v3113, 7
  %v3154 = vrot.slane %v3127, 6
  %v3155 = vrot.slane %v3141, 5
  %v3156 = vrot.slane %v3115, 7
  %v3157 = vrot.slane %v3129, 6
  %v3158 = vrot.slane %v3143, 5
  %v3159 = vsel %vm310, %v3099, %v3153
  %v3160 = vsel %vm312, %v3154, %v3155
  %v3161 = vsel %vm314, %v3159, %v3160
  %v3162 = vsel %vm316, %v3099, %v3153
  %v3163 = vsel %vm318, %v3154, %v3155
  %v3164 = vsel %vm320, %v3162, %v3163
  %v3165 = vrot.slane %v3164, 1
  %v3166 = vsel %vm312, %v3099, %v3153
  %v3167 = vsel %vm324, %v3154, %v3155
  %v3168 = vsel %vm326, %v3166, %v3167
  %v3169 = vrot.slane %v3168, 2
  %v3170 = vsel %vm318, %v3099, %v3153
  %v3171 = vsel %vm330, %v3154, %v3155
  %v3172 = vsel %vm332, %v3170, %v3171
  %v3173 = vrot.slane %v3172, 3
  %v3174 = vsel %vm324, %v3099, %v3153
  %v3175 = vsel %vm336, %v3154, %v3155
  %v3176 = vsel %vm338, %v3174, %v3175
  %v3177 = vrot.slane %v3176, 4
  %v3178 = vsel %vm330, %v3099, %v3153
  %v3179 = vsel %vm342, %v3155, %v3154
  %v3180 = vsel %vm344, %v3178, %v3179
  %v3181 = vrot.slane %v3180, 5
  %v3182 = vsel %vm336, %v3099, %v3153
  %v3183 = vsel %vm310, %v3154, %v3155
  %v3184 = vsel %vm349, %v3183, %v3182
  %v3185 = vrot.slane %v3184, 6
  %v3186 = vsel %vm342, %v3153, %v3099
  %v3187 = vsel %vm316, %v3154, %v3155
  %v3188 = vsel %vm354, %v3187, %v3186
  %v3189 = vrot.slane %v3188, 7
  %v3190 = vsel %vm310, %v3101, %v3156
  %v3191 = vsel %vm312, %v3157, %v3158
  %v3192 = vsel %vm314, %v3190, %v3191
  %v3193 = vsel %vm316, %v3101, %v3156
  %v3194 = vsel %vm318, %v3157, %v3158
  %v3195 = vsel %vm320, %v3193, %v3194
  %v3196 = vrot.slane %v3195, 1
  %v3197 = vsel %vm312, %v3101, %v3156
  %v3198 = vsel %vm324, %v3157, %v3158
  %v3199 = vsel %vm326, %v3197, %v3198
  %v3200 = vrot.slane %v3199, 2
  %v3201 = vsel %vm318, %v3101, %v3156
  %v3202 = vsel %vm330, %v3157, %v3158
  %v3203 = vsel %vm332, %v3201, %v3202
  %v3204 = vrot.slane %v3203, 3
  %v3205 = vsel %vm324, %v3101, %v3156
  %v3206 = vsel %vm336, %v3157, %v3158
  %v3207 = vsel %vm338, %v3205, %v3206
  %v3208 = vrot.slane %v3207, 4
  %v3209 = vsel %vm330, %v3101, %v3156
  %v3210 = vsel %vm342, %v3158, %v3157
  %v3211 = vsel %vm344, %v3209, %v3210
  %v3212 = vrot.slane %v3211, 5
  %v3213 = vsel %vm336, %v3101, %v3156
  %v3214 = vsel %vm310, %v3157, %v3158
  %v3215 = vsel %vm349, %v3214, %v3213
  %v3216 = vrot.slane %v3215, 6
  %v3217 = vsel %vm342, %v3156, %v3101
  %v3218 = vsel %vm316, %v3157, %v3158
  %v3219 = vsel %vm354, %v3218, %v3217
  %v3220 = vrot.slane %v3219, 7
  %v3237 = vadd.f32 %v2788, %v3161
  %v3238 = vadd.f32 %v2790, %v3165
  %v3239 = vadd.f32 %v2792, %v3169
  %v3240 = vadd.f32 %v2794, %v3173
  %v3241 = vadd.f32 %v2796, %v3177
  %v3242 = vadd.f32 %v2798, %v3181
  %v3243 = vadd.f32 %v2800, %v3185
  %v3244 = vadd.f32 %v2802, %v3189
  %v3245 = vadd.f32 %v2804, %v3192
  %v3246 = vadd.f32 %v2806, %v3196
  %v3247 = vadd.f32 %v2808, %v3200
  %v3248 = vadd.f32 %v2810, %v3204
  %v3249 = vadd.f32 %v2812, %v3208
  %v3250 = vadd.f32 %v2814, %v3212
  %v3251 = vadd.f32 %v2816, %v3216
  %v3252 = vadd.f32 %v2818, %v3220
  %v3253 = vmul.f32 %v3237, 0.5
  %v3254 = vmul.f32 %v3238, 0.5
  %v3255 = vmul.f32 %v3239, 0.5
  %v3256 = vmul.f32 %v3240, 0.5
  %v3257 = vmul.f32 %v3241, 0.5
  %v3258 = vmul.f32 %v3242, 0.5
  %v3259 = vmul.f32 %v3243, 0.5
  %v3260 = vmul.f32 %v3244, 0.5
  %v3261 = vmul.f32 %v3245, 0.5
  %v3262 = vmul.f32 %v3246, 0.5
  %v3263 = vmul.f32 %v3247, 0.5
  %v3264 = vmul.f32 %v3248, 0.5
  %v3265 = vmul.f32 %v3249, 0.5
  %v3266 = vmul.f32 %v3250, 0.5
  %v3267 = vmul.f32 %v3251, 0.5
  %v3268 = vmul.f32 %v3252, 0.5
  %v3269 = vtanh.pop %v3253
  %v3270 = vtanh.pop %v3254
  %v3271 = vtanh.pop %v3255
  %v3272 = vtanh.pop %v3256
  %v3273 = vtanh.pop %v3257
  %v3274 = vtanh.pop %v3258
  %v3275 = vtanh.pop %v3259
  %v3276 = vtanh.pop %v3260
  %v3277 = vtanh.pop %v3261
  %v3278 = vtanh.pop %v3262
  %v3279 = vtanh.pop %v3263
  %v3280 = vtanh.pop %v3264
  %v3281 = vtanh.pop %v3265
  %v3282 = vtanh.pop %v3266
  %v3283 = vtanh.pop %v3267
  %v3284 = vtanh.pop %v3268
  %v3285 = vmul.f32 %v3269, 0.5
  %v3286 = vmul.f32 %v3270, 0.5
  %v3287 = vmul.f32 %v3271, 0.5
  %v3288 = vmul.f32 %v3272, 0.5
  %v3289 = vmul.f32 %v3273, 0.5
  %v3290 = vmul.f32 %v3274, 0.5
  %v3291 = vmul.f32 %v3275, 0.5
  %v3292 = vmul.f32 %v3276, 0.5
  %v3293 = vmul.f32 %v3277, 0.5
  %v3294 = vmul.f32 %v3278, 0.5
  %v3295 = vmul.f32 %v3279, 0.5
  %v3296 = vmul.f32 %v3280, 0.5
  %v3297 = vmul.f32 %v3281, 0.5
  %v3298 = vmul.f32 %v3282, 0.5
  %v3299 = vmul.f32 %v3283, 0.5
  %v3300 = vmul.f32 %v3284, 0.5
  %v3301 = vadd.f32 %v3285, 0.5
  %v3302 = vadd.f32 %v3286, 0.5
  %v3303 = vadd.f32 %v3287, 0.5
  %v3304 = vadd.f32 %v3288, 0.5
  %v3305 = vadd.f32 %v3289, 0.5
  %v3306 = vadd.f32 %v3290, 0.5
  %v3307 = vadd.f32 %v3291, 0.5
  %v3308 = vadd.f32 %v3292, 0.5
  %v3309 = vadd.f32 %v3293, 0.5
  %v3310 = vadd.f32 %v3294, 0.5
  %v3311 = vadd.f32 %v3295, 0.5
  %v3312 = vadd.f32 %v3296, 0.5
  %v3313 = vadd.f32 %v3297, 0.5
  %v3314 = vadd.f32 %v3298, 0.5
  %v3315 = vadd.f32 %v3299, 0.5
  %v3316 = vadd.f32 %v3300, 0.5
  %v3333 = vrot.slane %v3237, 1
  %v3334 = vrot.slane %v3238, 1
  %v3335 = vrot.slane %v3239, 1
  %v3336 = vrot.slane %v3240, 1
  %v3337 = vrot.slane %v3241, 1
  %v3338 = vrot.slane %v3242, 1
  %v3339 = vrot.slane %v3243, 1
  %v3340 = vrot.slane %v3244, 1
  %v3341 = vrot.slane %v3245, 1
  %v3342 = vrot.slane %v3246, 1
  %v3343 = vrot.slane %v3247, 1
  %v3344 = vrot.slane %v3248, 1
  %v3345 = vrot.slane %v3249, 1
  %v3346 = vrot.slane %v3250, 1
  %v3347 = vrot.slane %v3251, 1
  %v3348 = vrot.slane %v3252, 1
  %v3365 = vmul.f32 %v3333, 0.5
  %v3366 = vmul.f32 %v3334, 0.5
  %v3367 = vmul.f32 %v3335, 0.5
  %v3368 = vmul.f32 %v3336, 0.5
  %v3369 = vmul.f32 %v3337, 0.5
  %v3370 = vmul.f32 %v3338, 0.5
  %v3371 = vmul.f32 %v3339, 0.5
  %v3372 = vmul.f32 %v3340, 0.5
  %v3373 = vmul.f32 %v3341, 0.5
  %v3374 = vmul.f32 %v3342, 0.5
  %v3375 = vmul.f32 %v3343, 0.5
  %v3376 = vmul.f32 %v3344, 0.5
  %v3377 = vmul.f32 %v3345, 0.5
  %v3378 = vmul.f32 %v3346, 0.5
  %v3379 = vmul.f32 %v3347, 0.5
  %v3380 = vmul.f32 %v3348, 0.5
  %v3381 = vtanh.pop %v3365
  %v3382 = vtanh.pop %v3366
  %v3383 = vtanh.pop %v3367
  %v3384 = vtanh.pop %v3368
  %v3385 = vtanh.pop %v3369
  %v3386 = vtanh.pop %v3370
  %v3387 = vtanh.pop %v3371
  %v3388 = vtanh.pop %v3372
  %v3389 = vtanh.pop %v3373
  %v3390 = vtanh.pop %v3374
  %v3391 = vtanh.pop %v3375
  %v3392 = vtanh.pop %v3376
  %v3393 = vtanh.pop %v3377
  %v3394 = vtanh.pop %v3378
  %v3395 = vtanh.pop %v3379
  %v3396 = vtanh.pop %v3380
  %v3397 = vmul.f32 %v3381, 0.5
  %v3398 = vmul.f32 %v3382, 0.5
  %v3399 = vmul.f32 %v3383, 0.5
  %v3400 = vmul.f32 %v3384, 0.5
  %v3401 = vmul.f32 %v3385, 0.5
  %v3402 = vmul.f32 %v3386, 0.5
  %v3403 = vmul.f32 %v3387, 0.5
  %v3404 = vmul.f32 %v3388, 0.5
  %v3405 = vmul.f32 %v3389, 0.5
  %v3406 = vmul.f32 %v3390, 0.5
  %v3407 = vmul.f32 %v3391, 0.5
  %v3408 = vmul.f32 %v3392, 0.5
  %v3409 = vmul.f32 %v3393, 0.5
  %v3410 = vmul.f32 %v3394, 0.5
  %v3411 = vmul.f32 %v3395, 0.5
  %v3412 = vmul.f32 %v3396, 0.5
  %v3413 = vadd.f32 %v3397, 0.5
  %v3414 = vadd.f32 %v3398, 0.5
  %v3415 = vadd.f32 %v3399, 0.5
  %v3416 = vadd.f32 %v3400, 0.5
  %v3417 = vadd.f32 %v3401, 0.5
  %v3418 = vadd.f32 %v3402, 0.5
  %v3419 = vadd.f32 %v3403, 0.5
  %v3420 = vadd.f32 %v3404, 0.5
  %v3421 = vadd.f32 %v3405, 0.5
  %v3422 = vadd.f32 %v3406, 0.5
  %v3423 = vadd.f32 %v3407, 0.5
  %v3424 = vadd.f32 %v3408, 0.5
  %v3425 = vadd.f32 %v3409, 0.5
  %v3426 = vadd.f32 %v3410, 0.5
  %v3427 = vadd.f32 %v3411, 0.5
  %v3428 = vadd.f32 %v3412, 0.5
  %v3429 = vrot.slane %v3237, 2
  %v3430 = vrot.slane %v3238, 2
  %v3431 = vrot.slane %v3239, 2
  %v3432 = vrot.slane %v3240, 2
  %v3433 = vrot.slane %v3241, 2
  %v3434 = vrot.slane %v3242, 2
  %v3435 = vrot.slane %v3243, 2
  %v3436 = vrot.slane %v3244, 2
  %v3437 = vrot.slane %v3245, 2
  %v3438 = vrot.slane %v3246, 2
  %v3439 = vrot.slane %v3247, 2
  %v3440 = vrot.slane %v3248, 2
  %v3441 = vrot.slane %v3249, 2
  %v3442 = vrot.slane %v3250, 2
  %v3443 = vrot.slane %v3251, 2
  %v3444 = vrot.slane %v3252, 2
  %v3461 = vtanh.pop %v3429
  %v3462 = vtanh.pop %v3430
  %v3463 = vtanh.pop %v3431
  %v3464 = vtanh.pop %v3432
  %v3465 = vtanh.pop %v3433
  %v3466 = vtanh.pop %v3434
  %v3467 = vtanh.pop %v3435
  %v3468 = vtanh.pop %v3436
  %v3469 = vtanh.pop %v3437
  %v3470 = vtanh.pop %v3438
  %v3471 = vtanh.pop %v3439
  %v3472 = vtanh.pop %v3440
  %v3473 = vtanh.pop %v3441
  %v3474 = vtanh.pop %v3442
  %v3475 = vtanh.pop %v3443
  %v3476 = vtanh.pop %v3444
  %v3477 = vrot.slane %v3237, 3
  %v3478 = vrot.slane %v3238, 3
  %v3479 = vrot.slane %v3239, 3
  %v3480 = vrot.slane %v3240, 3
  %v3481 = vrot.slane %v3241, 3
  %v3482 = vrot.slane %v3242, 3
  %v3483 = vrot.slane %v3243, 3
  %v3484 = vrot.slane %v3244, 3
  %v3485 = vrot.slane %v3245, 3
  %v3486 = vrot.slane %v3246, 3
  %v3487 = vrot.slane %v3247, 3
  %v3488 = vrot.slane %v3248, 3
  %v3489 = vrot.slane %v3249, 3
  %v3490 = vrot.slane %v3250, 3
  %v3491 = vrot.slane %v3251, 3
  %v3492 = vrot.slane %v3252, 3
  %v3509 = vmul.f32 %v3477, 0.5
  %v3510 = vmul.f32 %v3478, 0.5
  %v3511 = vmul.f32 %v3479, 0.5
  %v3512 = vmul.f32 %v3480, 0.5
  %v3513 = vmul.f32 %v3481, 0.5
  %v3514 = vmul.f32 %v3482, 0.5
  %v3515 = vmul.f32 %v3483, 0.5
  %v3516 = vmul.f32 %v3484, 0.5
  %v3517 = vmul.f32 %v3485, 0.5
  %v3518 = vmul.f32 %v3486, 0.5
  %v3519 = vmul.f32 %v3487, 0.5
  %v3520 = vmul.f32 %v3488, 0.5
  %v3521 = vmul.f32 %v3489, 0.5
  %v3522 = vmul.f32 %v3490, 0.5
  %v3523 = vmul.f32 %v3491, 0.5
  %v3524 = vmul.f32 %v3492, 0.5
  %v3525 = vtanh.pop %v3509
  %v3526 = vtanh.pop %v3510
  %v3527 = vtanh.pop %v3511
  %v3528 = vtanh.pop %v3512
  %v3529 = vtanh.pop %v3513
  %v3530 = vtanh.pop %v3514
  %v3531 = vtanh.pop %v3515
  %v3532 = vtanh.pop %v3516
  %v3533 = vtanh.pop %v3517
  %v3534 = vtanh.pop %v3518
  %v3535 = vtanh.pop %v3519
  %v3536 = vtanh.pop %v3520
  %v3537 = vtanh.pop %v3521
  %v3538 = vtanh.pop %v3522
  %v3539 = vtanh.pop %v3523
  %v3540 = vtanh.pop %v3524
  %v3541 = vmul.f32 %v3525, 0.5
  %v3542 = vmul.f32 %v3526, 0.5
  %v3543 = vmul.f32 %v3527, 0.5
  %v3544 = vmul.f32 %v3528, 0.5
  %v3545 = vmul.f32 %v3529, 0.5
  %v3546 = vmul.f32 %v3530, 0.5
  %v3547 = vmul.f32 %v3531, 0.5
  %v3548 = vmul.f32 %v3532, 0.5
  %v3549 = vmul.f32 %v3533, 0.5
  %v3550 = vmul.f32 %v3534, 0.5
  %v3551 = vmul.f32 %v3535, 0.5
  %v3552 = vmul.f32 %v3536, 0.5
  %v3553 = vmul.f32 %v3537, 0.5
  %v3554 = vmul.f32 %v3538, 0.5
  %v3555 = vmul.f32 %v3539, 0.5
  %v3556 = vmul.f32 %v3540, 0.5
  %v3557 = vadd.f32 %v3541, 0.5
  %v3558 = vadd.f32 %v3542, 0.5
  %v3559 = vadd.f32 %v3543, 0.5
  %v3560 = vadd.f32 %v3544, 0.5
  %v3561 = vadd.f32 %v3545, 0.5
  %v3562 = vadd.f32 %v3546, 0.5
  %v3563 = vadd.f32 %v3547, 0.5
  %v3564 = vadd.f32 %v3548, 0.5
  %v3565 = vadd.f32 %v3549, 0.5
  %v3566 = vadd.f32 %v3550, 0.5
  %v3567 = vadd.f32 %v3551, 0.5
  %v3568 = vadd.f32 %v3552, 0.5
  %v3569 = vadd.f32 %v3553, 0.5
  %v3570 = vadd.f32 %v3554, 0.5
  %v3571 = vadd.f32 %v3555, 0.5
  %v3572 = vadd.f32 %v3556, 0.5
  %v3573 = vmul.f32 %v3413, %v2661
  %v3574 = vmul.f32 %v3414, %v2662
  %v3575 = vmul.f32 %v3415, %v2663
  %v3576 = vmul.f32 %v3416, %v2664
  %v3577 = vmul.f32 %v3417, %v2665
  %v3578 = vmul.f32 %v3418, %v2666
  %v3579 = vmul.f32 %v3419, %v2667
  %v3580 = vmul.f32 %v3420, %v2668
  %v3581 = vmul.f32 %v3421, %v2669
  %v3582 = vmul.f32 %v3422, %v2670
  %v3583 = vmul.f32 %v3423, %v2671
  %v3584 = vmul.f32 %v3424, %v2672
  %v3585 = vmul.f32 %v3425, %v2673
  %v3586 = vmul.f32 %v3426, %v2674
  %v3587 = vmul.f32 %v3427, %v2675
  %v3588 = vmul.f32 %v3428, %v2676
  %v3589 = vmul.f32 %v3301, %v3461
  %v3590 = vmul.f32 %v3302, %v3462
  %v3591 = vmul.f32 %v3303, %v3463
  %v3592 = vmul.f32 %v3304, %v3464
  %v3593 = vmul.f32 %v3305, %v3465
  %v3594 = vmul.f32 %v3306, %v3466
  %v3595 = vmul.f32 %v3307, %v3467
  %v3596 = vmul.f32 %v3308, %v3468
  %v3597 = vmul.f32 %v3309, %v3469
  %v3598 = vmul.f32 %v3310, %v3470
  %v3599 = vmul.f32 %v3311, %v3471
  %v3600 = vmul.f32 %v3312, %v3472
  %v3601 = vmul.f32 %v3313, %v3473
  %v3602 = vmul.f32 %v3314, %v3474
  %v3603 = vmul.f32 %v3315, %v3475
  %v3604 = vmul.f32 %v3316, %v3476
  %v3605 = vadd.f32 %v3573, %v3589
  %v3606 = vadd.f32 %v3574, %v3590
  %v3607 = vadd.f32 %v3575, %v3591
  %v3608 = vadd.f32 %v3576, %v3592
  %v3609 = vadd.f32 %v3577, %v3593
  %v3610 = vadd.f32 %v3578, %v3594
  %v3611 = vadd.f32 %v3579, %v3595
  %v3612 = vadd.f32 %v3580, %v3596
  %v3613 = vadd.f32 %v3581, %v3597
  %v3614 = vadd.f32 %v3582, %v3598
  %v3615 = vadd.f32 %v3583, %v3599
  %v3616 = vadd.f32 %v3584, %v3600
  %v3617 = vadd.f32 %v3585, %v3601
  %v3618 = vadd.f32 %v3586, %v3602
  %v3619 = vadd.f32 %v3587, %v3603
  %v3620 = vadd.f32 %v3588, %v3604
  %v3621 = vtanh.pop %v3605
  %v3622 = vtanh.pop %v3606
  %v3623 = vtanh.pop %v3607
  %v3624 = vtanh.pop %v3608
  %v3625 = vtanh.pop %v3609
  %v3626 = vtanh.pop %v3610
  %v3627 = vtanh.pop %v3611
  %v3628 = vtanh.pop %v3612
  %v3629 = vtanh.pop %v3613
  %v3630 = vtanh.pop %v3614
  %v3631 = vtanh.pop %v3615
  %v3632 = vtanh.pop %v3616
  %v3633 = vtanh.pop %v3617
  %v3634 = vtanh.pop %v3618
  %v3635 = vtanh.pop %v3619
  %v3636 = vtanh.pop %v3620
  %v3637 = vmul.f32 %v3557, %v3621
  %v3638 = vmul.f32 %v3558, %v3622
  %v3639 = vmul.f32 %v3559, %v3623
  %v3640 = vmul.f32 %v3560, %v3624
  %v3641 = vmul.f32 %v3561, %v3625
  %v3642 = vmul.f32 %v3562, %v3626
  %v3643 = vmul.f32 %v3563, %v3627
  %v3644 = vmul.f32 %v3564, %v3628
  %v3645 = vmul.f32 %v3565, %v3629
  %v3646 = vmul.f32 %v3566, %v3630
  %v3647 = vmul.f32 %v3567, %v3631
  %v3648 = vmul.f32 %v3568, %v3632
  %v3649 = vmul.f32 %v3569, %v3633
  %v3650 = vmul.f32 %v3570, %v3634
  %v3651 = vmul.f32 %v3571, %v3635
  %v3652 = vmul.f32 %v3572, %v3636
  %vm3653 = vcmp.gt.s32.totalorder %v15, 3
  %vm3654 = vcmp.gt.s32.totalorder %v16, 3
  %v3655 = vsel %vm3653, 1, 0
  %v3656 = vsel %vm3654, 1, 0
  %v3657 = vcvt.s32.f32 %v3655
  %v3658 = vcvt.s32.f32 %v3656
  %3660 = vset.pattern.permute.xlu0 0
  %3661 = vperm.xlu0 %3660, %v3657
  %v3662 = vpop.permute.xlu0 %3661
  %3664 = vset.pattern.permute.xlu0 0
  %3665 = vperm.xlu0 %3664, %v3658
  %v3666 = vpop.permute.xlu0 %3665
  %v3667 = vperm.slane %v3662, 0
  %v3668 = vperm.slane %v3662, 1
  %v3669 = vperm.slane %v3662, 2
  %v3670 = vperm.slane %v3662, 3
  %v3671 = vperm.slane %v3662, 4
  %v3672 = vperm.slane %v3662, 5
  %v3673 = vperm.slane %v3662, 6
  %v3674 = vperm.slane %v3662, 7
  %v3675 = vperm.slane %v3666, 0
  %v3676 = vperm.slane %v3666, 1
  %v3677 = vperm.slane %v3666, 2
  %v3678 = vperm.slane %v3666, 3
  %v3679 = vperm.slane %v3666, 4
  %v3680 = vperm.slane %v3666, 5
  %v3681 = vperm.slane %v3666, 6
  %v3682 = vperm.slane %v3666, 7
  %v3699 = vmul.f32 %v3637, %v3667
  %v3700 = vmul.f32 %v3638, %v3668
  %v3701 = vmul.f32 %v3639, %v3669
  %v3702 = vmul.f32 %v3640, %v3670
  %v3703 = vmul.f32 %v3641, %v3671
  %v3704 = vmul.f32 %v3642, %v3672
  %v3705 = vmul.f32 %v3643, %v3673
  %v3706 = vmul.f32 %v3644, %v3674
  %v3707 = vmul.f32 %v3645, %v3675
  %v3708 = vmul.f32 %v3646, %v3676
  %v3709 = vmul.f32 %v3647, %v3677
  %v3710 = vmul.f32 %v3648, %v3678
  %v3711 = vmul.f32 %v3649, %v3679
  %v3712 = vmul.f32 %v3650, %v3680
  %v3713 = vmul.f32 %v3651, %v3681
  %v3714 = vmul.f32 %v3652, %v3682
  %3715 = vst [vmem:[%s3 + $0x3] sm:$0x1] %v3699
  %3716 = vst [vmem:[%s3 + $0xb] sm:$0x1] %v3700
  %3717 = vst [vmem:[%s3 + $0x13] sm:$0x1] %v3701
  %3718 = vst [vmem:[%s3 + $0x1b] sm:$0x1] %v3702
  %3719 = vst [vmem:[%s3 + $0x23] sm:$0x1] %v3703
  %3720 = vst [vmem:[%s3 + $0x2b] sm:$0x1] %v3704
  %3721 = vst [vmem:[%s3 + $0x33] sm:$0x1] %v3705
  %3722 = vst [vmem:[%s3 + $0x3b] sm:$0x1] %v3706
  %3723 = vst [vmem:[%s3 + $0x43] sm:$0x1] %v3707
  %3724 = vst [vmem:[%s3 + $0x4b] sm:$0x1] %v3708
  %3725 = vst [vmem:[%s3 + $0x53] sm:$0x1] %v3709
  %3726 = vst [vmem:[%s3 + $0x5b] sm:$0x1] %v3710
  %3727 = vst [vmem:[%s3 + $0x63] sm:$0x1] %v3711
  %3728 = vst [vmem:[%s3 + $0x6b] sm:$0x1] %v3712
  %3729 = vst [vmem:[%s3 + $0x73] sm:$0x1] %v3713
  %3730 = vst [vmem:[%s3 + $0x7b] sm:$0x1] %v3714
  %s3731 = scalar_lea.vmem %s1, 4
  %v3732 = vld [vmem:[%s3731] ss:$8 sm:$0xf]
  %s3733 = scalar_lea.vmem %s1, 36
  %v3734 = vld [vmem:[%s3733] ss:$8 sm:$0xf]
  %s3735 = scalar_lea.vmem %s1, 68
  %v3736 = vld [vmem:[%s3735] ss:$8 sm:$0xf]
  %s3737 = scalar_lea.vmem %s1, 100
  %v3738 = vld [vmem:[%s3737] ss:$8 sm:$0xf]
  %s3739 = scalar_lea.vmem %s1, 132
  %v3740 = vld [vmem:[%s3739] ss:$8 sm:$0xf]
  %s3741 = scalar_lea.vmem %s1, 164
  %v3742 = vld [vmem:[%s3741] ss:$8 sm:$0xf]
  %s3743 = scalar_lea.vmem %s1, 196
  %v3744 = vld [vmem:[%s3743] ss:$8 sm:$0xf]
  %s3745 = scalar_lea.vmem %s1, 228
  %v3746 = vld [vmem:[%s3745] ss:$8 sm:$0xf]
  %s3747 = scalar_lea.vmem %s1, 260
  %v3748 = vld [vmem:[%s3747] ss:$8 sm:$0xf]
  %s3749 = scalar_lea.vmem %s1, 292
  %v3750 = vld [vmem:[%s3749] ss:$8 sm:$0xf]
  %s3751 = scalar_lea.vmem %s1, 324
  %v3752 = vld [vmem:[%s3751] ss:$8 sm:$0xf]
  %s3753 = scalar_lea.vmem %s1, 356
  %v3754 = vld [vmem:[%s3753] ss:$8 sm:$0xf]
  %s3755 = scalar_lea.vmem %s1, 388
  %v3756 = vld [vmem:[%s3755] ss:$8 sm:$0xf]
  %s3757 = scalar_lea.vmem %s1, 420
  %v3758 = vld [vmem:[%s3757] ss:$8 sm:$0xf]
  %s3759 = scalar_lea.vmem %s1, 452
  %v3760 = vld [vmem:[%s3759] ss:$8 sm:$0xf]
  %s3761 = scalar_lea.vmem %s1, 484
  %v3762 = vld [vmem:[%s3761] ss:$8 sm:$0xf]
  %v3763 = vpack.c.bf16 %v3637, %v3637
  %v3764 = vpack.c.bf16 %v3638, %v3638
  %v3765 = vpack.c.bf16 %v3639, %v3639
  %v3766 = vpack.c.bf16 %v3640, %v3640
  %v3767 = vpack.c.bf16 %v3641, %v3641
  %v3768 = vpack.c.bf16 %v3642, %v3642
  %v3769 = vpack.c.bf16 %v3643, %v3643
  %v3770 = vpack.c.bf16 %v3644, %v3644
  %v3771 = vpack.c.bf16 %v3645, %v3645
  %v3772 = vpack.c.bf16 %v3646, %v3646
  %v3773 = vpack.c.bf16 %v3647, %v3647
  %v3774 = vpack.c.bf16 %v3648, %v3648
  %v3775 = vpack.c.bf16 %v3649, %v3649
  %v3776 = vpack.c.bf16 %v3650, %v3650
  %v3777 = vpack.c.bf16 %v3651, %v3651
  %v3778 = vpack.c.bf16 %v3652, %v3652
  %v3779 = vld [vmem:[%s2] sm:$0xff]
  %v3780 = vld [vmem:[%s2 + $0x8] sm:$0xff]
  %v3781 = vld [vmem:[%s2 + $0x10] sm:$0xff]
  %v3782 = vld [vmem:[%s2 + $0x18] sm:$0xff]
  %v3783 = vld [vmem:[%s2 + $0x20] sm:$0xff]
  %v3784 = vld [vmem:[%s2 + $0x28] sm:$0xff]
  %v3785 = vld [vmem:[%s2 + $0x30] sm:$0xff]
  %v3786 = vld [vmem:[%s2 + $0x38] sm:$0xff]
  %v3787 = vld [vmem:[%s2 + $0x40] sm:$0xff]
  %v3788 = vld [vmem:[%s2 + $0x48] sm:$0xff]
  %v3789 = vld [vmem:[%s2 + $0x50] sm:$0xff]
  %v3790 = vld [vmem:[%s2 + $0x58] sm:$0xff]
  %v3791 = vld [vmem:[%s2 + $0x60] sm:$0xff]
  %v3792 = vld [vmem:[%s2 + $0x68] sm:$0xff]
  %v3793 = vld [vmem:[%s2 + $0x70] sm:$0xff]
  %v3794 = vld [vmem:[%s2 + $0x78] sm:$0xff]
  %v3795 = vld [vmem:[%s2 + $0x80] sm:$0xff]
  %v3796 = vld [vmem:[%s2 + $0x88] sm:$0xff]
  %v3797 = vld [vmem:[%s2 + $0x90] sm:$0xff]
  %v3798 = vld [vmem:[%s2 + $0x98] sm:$0xff]
  %v3799 = vld [vmem:[%s2 + $0xa0] sm:$0xff]
  %v3800 = vld [vmem:[%s2 + $0xa8] sm:$0xff]
  %v3801 = vld [vmem:[%s2 + $0xb0] sm:$0xff]
  %v3802 = vld [vmem:[%s2 + $0xb8] sm:$0xff]
  %v3803 = vld [vmem:[%s2 + $0xc0] sm:$0xff]
  %v3804 = vld [vmem:[%s2 + $0xc8] sm:$0xff]
  %v3805 = vld [vmem:[%s2 + $0xd0] sm:$0xff]
  %v3806 = vld [vmem:[%s2 + $0xd8] sm:$0xff]
  %v3807 = vld [vmem:[%s2 + $0xe0] sm:$0xff]
  %v3808 = vld [vmem:[%s2 + $0xe8] sm:$0xff]
  %v3809 = vld [vmem:[%s2 + $0xf0] sm:$0xff]
  %v3810 = vld [vmem:[%s2 + $0xf8] sm:$0xff]
  %v3827 = vunpack.c.l.b16 %v3763
  %v3828 = vunpack.c.l.b16 %v3764
  %v3829 = vunpack.c.l.b16 %v3765
  %v3830 = vunpack.c.l.b16 %v3766
  %v3831 = vunpack.c.l.b16 %v3767
  %v3832 = vunpack.c.l.b16 %v3768
  %v3833 = vunpack.c.l.b16 %v3769
  %v3834 = vunpack.c.l.b16 %v3770
  %v3835 = vunpack.c.l.b16 %v3771
  %v3836 = vunpack.c.l.b16 %v3772
  %v3837 = vunpack.c.l.b16 %v3773
  %v3838 = vunpack.c.l.b16 %v3774
  %v3839 = vunpack.c.l.b16 %v3775
  %v3840 = vunpack.c.l.b16 %v3776
  %v3841 = vunpack.c.l.b16 %v3777
  %v3842 = vunpack.c.l.b16 %v3778
  %v3843 = vrot.slane %v3828, 7
  %v3844 = vsel %vm316, %v3843, %v3827
  %v3845 = vrot.slane %v3829, 6
  %v3846 = vsel %vm312, %v3845, %v3844
  %v3847 = vrot.slane %v3830, 5
  %v3848 = vsel %vm318, %v3847, %v3846
  %v3849 = vrot.slane %v3831, 4
  %v3850 = vsel %vm324, %v3849, %v3848
  %v3851 = vrot.slane %v3832, 3
  %v3852 = vsel %vm330, %v3851, %v3850
  %v3853 = vrot.slane %v3833, 2
  %v3854 = vsel %vm336, %v3853, %v3852
  %v3855 = vrot.slane %v3834, 1
  %v3856 = vsel %vm1023, %v3855, %v3854
  %v3857 = vrot.slane %v3836, 7
  %v3858 = vsel %vm316, %v3857, %v3835
  %v3859 = vrot.slane %v3837, 6
  %v3860 = vsel %vm312, %v3859, %v3858
  %v3861 = vrot.slane %v3838, 5
  %v3862 = vsel %vm318, %v3861, %v3860
  %v3863 = vrot.slane %v3839, 4
  %v3864 = vsel %vm324, %v3863, %v3862
  %v3865 = vrot.slane %v3840, 3
  %v3866 = vsel %vm330, %v3865, %v3864
  %v3867 = vrot.slane %v3841, 2
  %v3868 = vsel %vm336, %v3867, %v3866
  %v3869 = vrot.slane %v3842, 1
  %v3870 = vsel %vm1023, %v3869, %v3868
  %v3871 = vpack.c.b16 %v3870, %v3856
  %v3905 = vunpack.c.l.b16 %v3779
  %v3906 = vunpack.c.h.b16 %v3779
  %v3907 = vunpack.c.l.b16 %v3780
  %v3908 = vunpack.c.h.b16 %v3780
  %v3909 = vunpack.c.l.b16 %v3781
  %v3910 = vunpack.c.h.b16 %v3781
  %v3911 = vunpack.c.l.b16 %v3782
  %v3912 = vunpack.c.h.b16 %v3782
  %v3913 = vunpack.c.l.b16 %v3783
  %v3914 = vunpack.c.h.b16 %v3783
  %v3915 = vunpack.c.l.b16 %v3784
  %v3916 = vunpack.c.h.b16 %v3784
  %v3917 = vunpack.c.l.b16 %v3785
  %v3918 = vunpack.c.h.b16 %v3785
  %v3919 = vunpack.c.l.b16 %v3786
  %v3920 = vunpack.c.h.b16 %v3786
  %v3921 = vunpack.c.l.b16 %v3787
  %v3922 = vunpack.c.h.b16 %v3787
  %v3923 = vunpack.c.l.b16 %v3788
  %v3924 = vunpack.c.h.b16 %v3788
  %v3925 = vunpack.c.l.b16 %v3789
  %v3926 = vunpack.c.h.b16 %v3789
  %v3927 = vunpack.c.l.b16 %v3790
  %v3928 = vunpack.c.h.b16 %v3790
  %v3929 = vunpack.c.l.b16 %v3791
  %v3930 = vunpack.c.h.b16 %v3791
  %v3931 = vunpack.c.l.b16 %v3792
  %v3932 = vunpack.c.h.b16 %v3792
  %v3933 = vunpack.c.l.b16 %v3793
  %v3934 = vunpack.c.h.b16 %v3793
  %v3935 = vunpack.c.l.b16 %v3794
  %v3936 = vunpack.c.h.b16 %v3794
  %v3937 = vunpack.c.l.b16 %v3795
  %v3938 = vunpack.c.h.b16 %v3795
  %v3939 = vunpack.c.l.b16 %v3796
  %v3940 = vunpack.c.h.b16 %v3796
  %v3941 = vunpack.c.l.b16 %v3797
  %v3942 = vunpack.c.h.b16 %v3797
  %v3943 = vunpack.c.l.b16 %v3798
  %v3944 = vunpack.c.h.b16 %v3798
  %v3945 = vunpack.c.l.b16 %v3799
  %v3946 = vunpack.c.h.b16 %v3799
  %v3947 = vunpack.c.l.b16 %v3800
  %v3948 = vunpack.c.h.b16 %v3800
  %v3949 = vunpack.c.l.b16 %v3801
  %v3950 = vunpack.c.h.b16 %v3801
  %v3951 = vunpack.c.l.b16 %v3802
  %v3952 = vunpack.c.h.b16 %v3802
  %v3953 = vunpack.c.l.b16 %v3803
  %v3954 = vunpack.c.h.b16 %v3803
  %v3955 = vunpack.c.l.b16 %v3804
  %v3956 = vunpack.c.h.b16 %v3804
  %v3957 = vunpack.c.l.b16 %v3805
  %v3958 = vunpack.c.h.b16 %v3805
  %v3959 = vunpack.c.l.b16 %v3806
  %v3960 = vunpack.c.h.b16 %v3806
  %v3961 = vunpack.c.l.b16 %v3807
  %v3962 = vunpack.c.h.b16 %v3807
  %v3963 = vunpack.c.l.b16 %v3808
  %v3964 = vunpack.c.h.b16 %v3808
  %v3965 = vunpack.c.l.b16 %v3809
  %v3966 = vunpack.c.h.b16 %v3809
  %v3967 = vunpack.c.l.b16 %v3810
  %v3968 = vunpack.c.h.b16 %v3810
  %v3969 = vpack.c.b16 %v3909, %v3905
  %v3970 = vpack.c.b16 %v3910, %v3906
  %v3971 = vpack.c.b16 %v3911, %v3907
  %v3972 = vpack.c.b16 %v3912, %v3908
  %v3973 = vpack.c.b16 %v3917, %v3913
  %v3974 = vpack.c.b16 %v3918, %v3914
  %v3975 = vpack.c.b16 %v3919, %v3915
  %v3976 = vpack.c.b16 %v3920, %v3916
  %v3977 = vpack.c.b16 %v3925, %v3921
  %v3978 = vpack.c.b16 %v3926, %v3922
  %v3979 = vpack.c.b16 %v3927, %v3923
  %v3980 = vpack.c.b16 %v3928, %v3924
  %v3981 = vpack.c.b16 %v3933, %v3929
  %v3982 = vpack.c.b16 %v3934, %v3930
  %v3983 = vpack.c.b16 %v3935, %v3931
  %v3984 = vpack.c.b16 %v3936, %v3932
  %v3985 = vpack.c.b16 %v3941, %v3937
  %v3986 = vpack.c.b16 %v3942, %v3938
  %v3987 = vpack.c.b16 %v3943, %v3939
  %v3988 = vpack.c.b16 %v3944, %v3940
  %v3989 = vpack.c.b16 %v3949, %v3945
  %v3990 = vpack.c.b16 %v3950, %v3946
  %v3991 = vpack.c.b16 %v3951, %v3947
  %v3992 = vpack.c.b16 %v3952, %v3948
  %v3993 = vpack.c.b16 %v3957, %v3953
  %v3994 = vpack.c.b16 %v3958, %v3954
  %v3995 = vpack.c.b16 %v3959, %v3955
  %v3996 = vpack.c.b16 %v3960, %v3956
  %v3997 = vpack.c.b16 %v3965, %v3961
  %v3998 = vpack.c.b16 %v3966, %v3962
  %v3999 = vpack.c.b16 %v3967, %v3963
  %v4000 = vpack.c.b16 %v3968, %v3964
  %4033 = vmatpush.bf16.msra.mxu0 %v3997
  %4034 = vmatpush.bf16.msra.mxu0 %v3993
  %4035 = vmatpush.bf16.msra.mxu0 %v3989
  %4036 = vmatpush.bf16.msra.mxu0 %v3985
  %4037 = vmatpush.bf16.msra.mxu0 %v3981
  %4038 = vmatpush.bf16.msra.mxu0 %v3977
  %4039 = vmatpush.bf16.msra.mxu0 %v3973
  %4040 = vmatpush.bf16.msra.mxu0 %v3969
  %4041 = vmatmul.bf16.gmra.mxu0 %v3871
  %v4042 = vpop.f32.mrf.mxu0
  %v4043 = vadd.f32 0.0, %v4042
  %v4044 = vpop.f32.mrf.mxu0
  %v4045 = vadd.f32 0.0, %v4044
  %4046 = vdwg.mxu0
  %4047 = vmatpush.bf16.msra.mxu0 %v3998
  %4048 = vmatpush.bf16.msra.mxu0 %v3994
  %4049 = vmatpush.bf16.msra.mxu0 %v3990
  %4050 = vmatpush.bf16.msra.mxu0 %v3986
  %4051 = vmatpush.bf16.msra.mxu0 %v3982
  %4052 = vmatpush.bf16.msra.mxu0 %v3978
  %4053 = vmatpush.bf16.msra.mxu0 %v3974
  %4054 = vmatpush.bf16.msra.mxu0 %v3970
  %4055 = vmatmul.bf16.gmra.mxu0 %v3871
  %v4056 = vpop.f32.mrf.mxu0
  %v4057 = vadd.f32 0.0, %v4056
  %v4058 = vpop.f32.mrf.mxu0
  %v4059 = vadd.f32 0.0, %v4058
  %4060 = vdwg.mxu0
  %4061 = vmatpush.bf16.msra.mxu0 %v3999
  %4062 = vmatpush.bf16.msra.mxu0 %v3995
  %4063 = vmatpush.bf16.msra.mxu0 %v3991
  %4064 = vmatpush.bf16.msra.mxu0 %v3987
  %4065 = vmatpush.bf16.msra.mxu0 %v3983
  %4066 = vmatpush.bf16.msra.mxu0 %v3979
  %4067 = vmatpush.bf16.msra.mxu0 %v3975
  %4068 = vmatpush.bf16.msra.mxu0 %v3971
  %4069 = vmatmul.bf16.gmra.mxu0 %v3871
  %v4070 = vpop.f32.mrf.mxu0
  %v4071 = vadd.f32 0.0, %v4070
  %v4072 = vpop.f32.mrf.mxu0
  %v4073 = vadd.f32 0.0, %v4072
  %4074 = vdwg.mxu0
  %4075 = vmatpush.bf16.msra.mxu0 %v4000
  %4076 = vmatpush.bf16.msra.mxu0 %v3996
  %4077 = vmatpush.bf16.msra.mxu0 %v3992
  %4078 = vmatpush.bf16.msra.mxu0 %v3988
  %4079 = vmatpush.bf16.msra.mxu0 %v3984
  %4080 = vmatpush.bf16.msra.mxu0 %v3980
  %4081 = vmatpush.bf16.msra.mxu0 %v3976
  %4082 = vmatpush.bf16.msra.mxu0 %v3972
  %4083 = vmatmul.bf16.gmra.mxu0 %v3871
  %v4084 = vpop.f32.mrf.mxu0
  %v4085 = vadd.f32 0.0, %v4084
  %v4086 = vpop.f32.mrf.mxu0
  %v4087 = vadd.f32 0.0, %v4086
  %4088 = vdwg.mxu0
  %v4097 = vrot.slane %v4057, 7
  %v4098 = vrot.slane %v4071, 6
  %v4099 = vrot.slane %v4085, 5
  %v4100 = vrot.slane %v4059, 7
  %v4101 = vrot.slane %v4073, 6
  %v4102 = vrot.slane %v4087, 5
  %v4103 = vsel %vm310, %v4043, %v4097
  %v4104 = vsel %vm312, %v4098, %v4099
  %v4105 = vsel %vm314, %v4103, %v4104
  %v4106 = vsel %vm316, %v4043, %v4097
  %v4107 = vsel %vm318, %v4098, %v4099
  %v4108 = vsel %vm320, %v4106, %v4107
  %v4109 = vrot.slane %v4108, 1
  %v4110 = vsel %vm312, %v4043, %v4097
  %v4111 = vsel %vm324, %v4098, %v4099
  %v4112 = vsel %vm326, %v4110, %v4111
  %v4113 = vrot.slane %v4112, 2
  %v4114 = vsel %vm318, %v4043, %v4097
  %v4115 = vsel %vm330, %v4098, %v4099
  %v4116 = vsel %vm332, %v4114, %v4115
  %v4117 = vrot.slane %v4116, 3
  %v4118 = vsel %vm324, %v4043, %v4097
  %v4119 = vsel %vm336, %v4098, %v4099
  %v4120 = vsel %vm338, %v4118, %v4119
  %v4121 = vrot.slane %v4120, 4
  %v4122 = vsel %vm330, %v4043, %v4097
  %v4123 = vsel %vm342, %v4099, %v4098
  %v4124 = vsel %vm344, %v4122, %v4123
  %v4125 = vrot.slane %v4124, 5
  %v4126 = vsel %vm336, %v4043, %v4097
  %v4127 = vsel %vm310, %v4098, %v4099
  %v4128 = vsel %vm349, %v4127, %v4126
  %v4129 = vrot.slane %v4128, 6
  %v4130 = vsel %vm342, %v4097, %v4043
  %v4131 = vsel %vm316, %v4098, %v4099
  %v4132 = vsel %vm354, %v4131, %v4130
  %v4133 = vrot.slane %v4132, 7
  %v4134 = vsel %vm310, %v4045, %v4100
  %v4135 = vsel %vm312, %v4101, %v4102
  %v4136 = vsel %vm314, %v4134, %v4135
  %v4137 = vsel %vm316, %v4045, %v4100
  %v4138 = vsel %vm318, %v4101, %v4102
  %v4139 = vsel %vm320, %v4137, %v4138
  %v4140 = vrot.slane %v4139, 1
  %v4141 = vsel %vm312, %v4045, %v4100
  %v4142 = vsel %vm324, %v4101, %v4102
  %v4143 = vsel %vm326, %v4141, %v4142
  %v4144 = vrot.slane %v4143, 2
  %v4145 = vsel %vm318, %v4045, %v4100
  %v4146 = vsel %vm330, %v4101, %v4102
  %v4147 = vsel %vm332, %v4145, %v4146
  %v4148 = vrot.slane %v4147, 3
  %v4149 = vsel %vm324, %v4045, %v4100
  %v4150 = vsel %vm336, %v4101, %v4102
  %v4151 = vsel %vm338, %v4149, %v4150
  %v4152 = vrot.slane %v4151, 4
  %v4153 = vsel %vm330, %v4045, %v4100
  %v4154 = vsel %vm342, %v4102, %v4101
  %v4155 = vsel %vm344, %v4153, %v4154
  %v4156 = vrot.slane %v4155, 5
  %v4157 = vsel %vm336, %v4045, %v4100
  %v4158 = vsel %vm310, %v4101, %v4102
  %v4159 = vsel %vm349, %v4158, %v4157
  %v4160 = vrot.slane %v4159, 6
  %v4161 = vsel %vm342, %v4100, %v4045
  %v4162 = vsel %vm316, %v4101, %v4102
  %v4163 = vsel %vm354, %v4162, %v4161
  %v4164 = vrot.slane %v4163, 7
  %v4181 = vadd.f32 %v3732, %v4105
  %v4182 = vadd.f32 %v3734, %v4109
  %v4183 = vadd.f32 %v3736, %v4113
  %v4184 = vadd.f32 %v3738, %v4117
  %v4185 = vadd.f32 %v3740, %v4121
  %v4186 = vadd.f32 %v3742, %v4125
  %v4187 = vadd.f32 %v3744, %v4129
  %v4188 = vadd.f32 %v3746, %v4133
  %v4189 = vadd.f32 %v3748, %v4136
  %v4190 = vadd.f32 %v3750, %v4140
  %v4191 = vadd.f32 %v3752, %v4144
  %v4192 = vadd.f32 %v3754, %v4148
  %v4193 = vadd.f32 %v3756, %v4152
  %v4194 = vadd.f32 %v3758, %v4156
  %v4195 = vadd.f32 %v3760, %v4160
  %v4196 = vadd.f32 %v3762, %v4164
  %v4197 = vmul.f32 %v4181, 0.5
  %v4198 = vmul.f32 %v4182, 0.5
  %v4199 = vmul.f32 %v4183, 0.5
  %v4200 = vmul.f32 %v4184, 0.5
  %v4201 = vmul.f32 %v4185, 0.5
  %v4202 = vmul.f32 %v4186, 0.5
  %v4203 = vmul.f32 %v4187, 0.5
  %v4204 = vmul.f32 %v4188, 0.5
  %v4205 = vmul.f32 %v4189, 0.5
  %v4206 = vmul.f32 %v4190, 0.5
  %v4207 = vmul.f32 %v4191, 0.5
  %v4208 = vmul.f32 %v4192, 0.5
  %v4209 = vmul.f32 %v4193, 0.5
  %v4210 = vmul.f32 %v4194, 0.5
  %v4211 = vmul.f32 %v4195, 0.5
  %v4212 = vmul.f32 %v4196, 0.5
  %v4213 = vtanh.pop %v4197
  %v4214 = vtanh.pop %v4198
  %v4215 = vtanh.pop %v4199
  %v4216 = vtanh.pop %v4200
  %v4217 = vtanh.pop %v4201
  %v4218 = vtanh.pop %v4202
  %v4219 = vtanh.pop %v4203
  %v4220 = vtanh.pop %v4204
  %v4221 = vtanh.pop %v4205
  %v4222 = vtanh.pop %v4206
  %v4223 = vtanh.pop %v4207
  %v4224 = vtanh.pop %v4208
  %v4225 = vtanh.pop %v4209
  %v4226 = vtanh.pop %v4210
  %v4227 = vtanh.pop %v4211
  %v4228 = vtanh.pop %v4212
  %v4229 = vmul.f32 %v4213, 0.5
  %v4230 = vmul.f32 %v4214, 0.5
  %v4231 = vmul.f32 %v4215, 0.5
  %v4232 = vmul.f32 %v4216, 0.5
  %v4233 = vmul.f32 %v4217, 0.5
  %v4234 = vmul.f32 %v4218, 0.5
  %v4235 = vmul.f32 %v4219, 0.5
  %v4236 = vmul.f32 %v4220, 0.5
  %v4237 = vmul.f32 %v4221, 0.5
  %v4238 = vmul.f32 %v4222, 0.5
  %v4239 = vmul.f32 %v4223, 0.5
  %v4240 = vmul.f32 %v4224, 0.5
  %v4241 = vmul.f32 %v4225, 0.5
  %v4242 = vmul.f32 %v4226, 0.5
  %v4243 = vmul.f32 %v4227, 0.5
  %v4244 = vmul.f32 %v4228, 0.5
  %v4245 = vadd.f32 %v4229, 0.5
  %v4246 = vadd.f32 %v4230, 0.5
  %v4247 = vadd.f32 %v4231, 0.5
  %v4248 = vadd.f32 %v4232, 0.5
  %v4249 = vadd.f32 %v4233, 0.5
  %v4250 = vadd.f32 %v4234, 0.5
  %v4251 = vadd.f32 %v4235, 0.5
  %v4252 = vadd.f32 %v4236, 0.5
  %v4253 = vadd.f32 %v4237, 0.5
  %v4254 = vadd.f32 %v4238, 0.5
  %v4255 = vadd.f32 %v4239, 0.5
  %v4256 = vadd.f32 %v4240, 0.5
  %v4257 = vadd.f32 %v4241, 0.5
  %v4258 = vadd.f32 %v4242, 0.5
  %v4259 = vadd.f32 %v4243, 0.5
  %v4260 = vadd.f32 %v4244, 0.5
  %v4277 = vrot.slane %v4181, 1
  %v4278 = vrot.slane %v4182, 1
  %v4279 = vrot.slane %v4183, 1
  %v4280 = vrot.slane %v4184, 1
  %v4281 = vrot.slane %v4185, 1
  %v4282 = vrot.slane %v4186, 1
  %v4283 = vrot.slane %v4187, 1
  %v4284 = vrot.slane %v4188, 1
  %v4285 = vrot.slane %v4189, 1
  %v4286 = vrot.slane %v4190, 1
  %v4287 = vrot.slane %v4191, 1
  %v4288 = vrot.slane %v4192, 1
  %v4289 = vrot.slane %v4193, 1
  %v4290 = vrot.slane %v4194, 1
  %v4291 = vrot.slane %v4195, 1
  %v4292 = vrot.slane %v4196, 1
  %v4309 = vmul.f32 %v4277, 0.5
  %v4310 = vmul.f32 %v4278, 0.5
  %v4311 = vmul.f32 %v4279, 0.5
  %v4312 = vmul.f32 %v4280, 0.5
  %v4313 = vmul.f32 %v4281, 0.5
  %v4314 = vmul.f32 %v4282, 0.5
  %v4315 = vmul.f32 %v4283, 0.5
  %v4316 = vmul.f32 %v4284, 0.5
  %v4317 = vmul.f32 %v4285, 0.5
  %v4318 = vmul.f32 %v4286, 0.5
  %v4319 = vmul.f32 %v4287, 0.5
  %v4320 = vmul.f32 %v4288, 0.5
  %v4321 = vmul.f32 %v4289, 0.5
  %v4322 = vmul.f32 %v4290, 0.5
  %v4323 = vmul.f32 %v4291, 0.5
  %v4324 = vmul.f32 %v4292, 0.5
  %v4325 = vtanh.pop %v4309
  %v4326 = vtanh.pop %v4310
  %v4327 = vtanh.pop %v4311
  %v4328 = vtanh.pop %v4312
  %v4329 = vtanh.pop %v4313
  %v4330 = vtanh.pop %v4314
  %v4331 = vtanh.pop %v4315
  %v4332 = vtanh.pop %v4316
  %v4333 = vtanh.pop %v4317
  %v4334 = vtanh.pop %v4318
  %v4335 = vtanh.pop %v4319
  %v4336 = vtanh.pop %v4320
  %v4337 = vtanh.pop %v4321
  %v4338 = vtanh.pop %v4322
  %v4339 = vtanh.pop %v4323
  %v4340 = vtanh.pop %v4324
  %v4341 = vmul.f32 %v4325, 0.5
  %v4342 = vmul.f32 %v4326, 0.5
  %v4343 = vmul.f32 %v4327, 0.5
  %v4344 = vmul.f32 %v4328, 0.5
  %v4345 = vmul.f32 %v4329, 0.5
  %v4346 = vmul.f32 %v4330, 0.5
  %v4347 = vmul.f32 %v4331, 0.5
  %v4348 = vmul.f32 %v4332, 0.5
  %v4349 = vmul.f32 %v4333, 0.5
  %v4350 = vmul.f32 %v4334, 0.5
  %v4351 = vmul.f32 %v4335, 0.5
  %v4352 = vmul.f32 %v4336, 0.5
  %v4353 = vmul.f32 %v4337, 0.5
  %v4354 = vmul.f32 %v4338, 0.5
  %v4355 = vmul.f32 %v4339, 0.5
  %v4356 = vmul.f32 %v4340, 0.5
  %v4357 = vadd.f32 %v4341, 0.5
  %v4358 = vadd.f32 %v4342, 0.5
  %v4359 = vadd.f32 %v4343, 0.5
  %v4360 = vadd.f32 %v4344, 0.5
  %v4361 = vadd.f32 %v4345, 0.5
  %v4362 = vadd.f32 %v4346, 0.5
  %v4363 = vadd.f32 %v4347, 0.5
  %v4364 = vadd.f32 %v4348, 0.5
  %v4365 = vadd.f32 %v4349, 0.5
  %v4366 = vadd.f32 %v4350, 0.5
  %v4367 = vadd.f32 %v4351, 0.5
  %v4368 = vadd.f32 %v4352, 0.5
  %v4369 = vadd.f32 %v4353, 0.5
  %v4370 = vadd.f32 %v4354, 0.5
  %v4371 = vadd.f32 %v4355, 0.5
  %v4372 = vadd.f32 %v4356, 0.5
  %v4373 = vrot.slane %v4181, 2
  %v4374 = vrot.slane %v4182, 2
  %v4375 = vrot.slane %v4183, 2
  %v4376 = vrot.slane %v4184, 2
  %v4377 = vrot.slane %v4185, 2
  %v4378 = vrot.slane %v4186, 2
  %v4379 = vrot.slane %v4187, 2
  %v4380 = vrot.slane %v4188, 2
  %v4381 = vrot.slane %v4189, 2
  %v4382 = vrot.slane %v4190, 2
  %v4383 = vrot.slane %v4191, 2
  %v4384 = vrot.slane %v4192, 2
  %v4385 = vrot.slane %v4193, 2
  %v4386 = vrot.slane %v4194, 2
  %v4387 = vrot.slane %v4195, 2
  %v4388 = vrot.slane %v4196, 2
  %v4405 = vtanh.pop %v4373
  %v4406 = vtanh.pop %v4374
  %v4407 = vtanh.pop %v4375
  %v4408 = vtanh.pop %v4376
  %v4409 = vtanh.pop %v4377
  %v4410 = vtanh.pop %v4378
  %v4411 = vtanh.pop %v4379
  %v4412 = vtanh.pop %v4380
  %v4413 = vtanh.pop %v4381
  %v4414 = vtanh.pop %v4382
  %v4415 = vtanh.pop %v4383
  %v4416 = vtanh.pop %v4384
  %v4417 = vtanh.pop %v4385
  %v4418 = vtanh.pop %v4386
  %v4419 = vtanh.pop %v4387
  %v4420 = vtanh.pop %v4388
  %v4421 = vrot.slane %v4181, 3
  %v4422 = vrot.slane %v4182, 3
  %v4423 = vrot.slane %v4183, 3
  %v4424 = vrot.slane %v4184, 3
  %v4425 = vrot.slane %v4185, 3
  %v4426 = vrot.slane %v4186, 3
  %v4427 = vrot.slane %v4187, 3
  %v4428 = vrot.slane %v4188, 3
  %v4429 = vrot.slane %v4189, 3
  %v4430 = vrot.slane %v4190, 3
  %v4431 = vrot.slane %v4191, 3
  %v4432 = vrot.slane %v4192, 3
  %v4433 = vrot.slane %v4193, 3
  %v4434 = vrot.slane %v4194, 3
  %v4435 = vrot.slane %v4195, 3
  %v4436 = vrot.slane %v4196, 3
  %v4453 = vmul.f32 %v4421, 0.5
  %v4454 = vmul.f32 %v4422, 0.5
  %v4455 = vmul.f32 %v4423, 0.5
  %v4456 = vmul.f32 %v4424, 0.5
  %v4457 = vmul.f32 %v4425, 0.5
  %v4458 = vmul.f32 %v4426, 0.5
  %v4459 = vmul.f32 %v4427, 0.5
  %v4460 = vmul.f32 %v4428, 0.5
  %v4461 = vmul.f32 %v4429, 0.5
  %v4462 = vmul.f32 %v4430, 0.5
  %v4463 = vmul.f32 %v4431, 0.5
  %v4464 = vmul.f32 %v4432, 0.5
  %v4465 = vmul.f32 %v4433, 0.5
  %v4466 = vmul.f32 %v4434, 0.5
  %v4467 = vmul.f32 %v4435, 0.5
  %v4468 = vmul.f32 %v4436, 0.5
  %v4469 = vtanh.pop %v4453
  %v4470 = vtanh.pop %v4454
  %v4471 = vtanh.pop %v4455
  %v4472 = vtanh.pop %v4456
  %v4473 = vtanh.pop %v4457
  %v4474 = vtanh.pop %v4458
  %v4475 = vtanh.pop %v4459
  %v4476 = vtanh.pop %v4460
  %v4477 = vtanh.pop %v4461
  %v4478 = vtanh.pop %v4462
  %v4479 = vtanh.pop %v4463
  %v4480 = vtanh.pop %v4464
  %v4481 = vtanh.pop %v4465
  %v4482 = vtanh.pop %v4466
  %v4483 = vtanh.pop %v4467
  %v4484 = vtanh.pop %v4468
  %v4485 = vmul.f32 %v4469, 0.5
  %v4486 = vmul.f32 %v4470, 0.5
  %v4487 = vmul.f32 %v4471, 0.5
  %v4488 = vmul.f32 %v4472, 0.5
  %v4489 = vmul.f32 %v4473, 0.5
  %v4490 = vmul.f32 %v4474, 0.5
  %v4491 = vmul.f32 %v4475, 0.5
  %v4492 = vmul.f32 %v4476, 0.5
  %v4493 = vmul.f32 %v4477, 0.5
  %v4494 = vmul.f32 %v4478, 0.5
  %v4495 = vmul.f32 %v4479, 0.5
  %v4496 = vmul.f32 %v4480, 0.5
  %v4497 = vmul.f32 %v4481, 0.5
  %v4498 = vmul.f32 %v4482, 0.5
  %v4499 = vmul.f32 %v4483, 0.5
  %v4500 = vmul.f32 %v4484, 0.5
  %v4501 = vadd.f32 %v4485, 0.5
  %v4502 = vadd.f32 %v4486, 0.5
  %v4503 = vadd.f32 %v4487, 0.5
  %v4504 = vadd.f32 %v4488, 0.5
  %v4505 = vadd.f32 %v4489, 0.5
  %v4506 = vadd.f32 %v4490, 0.5
  %v4507 = vadd.f32 %v4491, 0.5
  %v4508 = vadd.f32 %v4492, 0.5
  %v4509 = vadd.f32 %v4493, 0.5
  %v4510 = vadd.f32 %v4494, 0.5
  %v4511 = vadd.f32 %v4495, 0.5
  %v4512 = vadd.f32 %v4496, 0.5
  %v4513 = vadd.f32 %v4497, 0.5
  %v4514 = vadd.f32 %v4498, 0.5
  %v4515 = vadd.f32 %v4499, 0.5
  %v4516 = vadd.f32 %v4500, 0.5
  %v4517 = vmul.f32 %v4357, %v3605
  %v4518 = vmul.f32 %v4358, %v3606
  %v4519 = vmul.f32 %v4359, %v3607
  %v4520 = vmul.f32 %v4360, %v3608
  %v4521 = vmul.f32 %v4361, %v3609
  %v4522 = vmul.f32 %v4362, %v3610
  %v4523 = vmul.f32 %v4363, %v3611
  %v4524 = vmul.f32 %v4364, %v3612
  %v4525 = vmul.f32 %v4365, %v3613
  %v4526 = vmul.f32 %v4366, %v3614
  %v4527 = vmul.f32 %v4367, %v3615
  %v4528 = vmul.f32 %v4368, %v3616
  %v4529 = vmul.f32 %v4369, %v3617
  %v4530 = vmul.f32 %v4370, %v3618
  %v4531 = vmul.f32 %v4371, %v3619
  %v4532 = vmul.f32 %v4372, %v3620
  %v4533 = vmul.f32 %v4245, %v4405
  %v4534 = vmul.f32 %v4246, %v4406
  %v4535 = vmul.f32 %v4247, %v4407
  %v4536 = vmul.f32 %v4248, %v4408
  %v4537 = vmul.f32 %v4249, %v4409
  %v4538 = vmul.f32 %v4250, %v4410
  %v4539 = vmul.f32 %v4251, %v4411
  %v4540 = vmul.f32 %v4252, %v4412
  %v4541 = vmul.f32 %v4253, %v4413
  %v4542 = vmul.f32 %v4254, %v4414
  %v4543 = vmul.f32 %v4255, %v4415
  %v4544 = vmul.f32 %v4256, %v4416
  %v4545 = vmul.f32 %v4257, %v4417
  %v4546 = vmul.f32 %v4258, %v4418
  %v4547 = vmul.f32 %v4259, %v4419
  %v4548 = vmul.f32 %v4260, %v4420
  %v4549 = vadd.f32 %v4517, %v4533
  %v4550 = vadd.f32 %v4518, %v4534
  %v4551 = vadd.f32 %v4519, %v4535
  %v4552 = vadd.f32 %v4520, %v4536
  %v4553 = vadd.f32 %v4521, %v4537
  %v4554 = vadd.f32 %v4522, %v4538
  %v4555 = vadd.f32 %v4523, %v4539
  %v4556 = vadd.f32 %v4524, %v4540
  %v4557 = vadd.f32 %v4525, %v4541
  %v4558 = vadd.f32 %v4526, %v4542
  %v4559 = vadd.f32 %v4527, %v4543
  %v4560 = vadd.f32 %v4528, %v4544
  %v4561 = vadd.f32 %v4529, %v4545
  %v4562 = vadd.f32 %v4530, %v4546
  %v4563 = vadd.f32 %v4531, %v4547
  %v4564 = vadd.f32 %v4532, %v4548
  %v4565 = vtanh.pop %v4549
  %v4566 = vtanh.pop %v4550
  %v4567 = vtanh.pop %v4551
  %v4568 = vtanh.pop %v4552
  %v4569 = vtanh.pop %v4553
  %v4570 = vtanh.pop %v4554
  %v4571 = vtanh.pop %v4555
  %v4572 = vtanh.pop %v4556
  %v4573 = vtanh.pop %v4557
  %v4574 = vtanh.pop %v4558
  %v4575 = vtanh.pop %v4559
  %v4576 = vtanh.pop %v4560
  %v4577 = vtanh.pop %v4561
  %v4578 = vtanh.pop %v4562
  %v4579 = vtanh.pop %v4563
  %v4580 = vtanh.pop %v4564
  %v4581 = vmul.f32 %v4501, %v4565
  %v4582 = vmul.f32 %v4502, %v4566
  %v4583 = vmul.f32 %v4503, %v4567
  %v4584 = vmul.f32 %v4504, %v4568
  %v4585 = vmul.f32 %v4505, %v4569
  %v4586 = vmul.f32 %v4506, %v4570
  %v4587 = vmul.f32 %v4507, %v4571
  %v4588 = vmul.f32 %v4508, %v4572
  %v4589 = vmul.f32 %v4509, %v4573
  %v4590 = vmul.f32 %v4510, %v4574
  %v4591 = vmul.f32 %v4511, %v4575
  %v4592 = vmul.f32 %v4512, %v4576
  %v4593 = vmul.f32 %v4513, %v4577
  %v4594 = vmul.f32 %v4514, %v4578
  %v4595 = vmul.f32 %v4515, %v4579
  %v4596 = vmul.f32 %v4516, %v4580
  %vm4597 = vcmp.gt.s32.totalorder %v15, 4
  %vm4598 = vcmp.gt.s32.totalorder %v16, 4
  %v4599 = vsel %vm4597, 1, 0
  %v4600 = vsel %vm4598, 1, 0
  %v4601 = vcvt.s32.f32 %v4599
  %v4602 = vcvt.s32.f32 %v4600
  %4604 = vset.pattern.permute.xlu0 0
  %4605 = vperm.xlu0 %4604, %v4601
  %v4606 = vpop.permute.xlu0 %4605
  %4608 = vset.pattern.permute.xlu0 0
  %4609 = vperm.xlu0 %4608, %v4602
  %v4610 = vpop.permute.xlu0 %4609
  %v4611 = vperm.slane %v4606, 0
  %v4612 = vperm.slane %v4606, 1
  %v4613 = vperm.slane %v4606, 2
  %v4614 = vperm.slane %v4606, 3
  %v4615 = vperm.slane %v4606, 4
  %v4616 = vperm.slane %v4606, 5
  %v4617 = vperm.slane %v4606, 6
  %v4618 = vperm.slane %v4606, 7
  %v4619 = vperm.slane %v4610, 0
  %v4620 = vperm.slane %v4610, 1
  %v4621 = vperm.slane %v4610, 2
  %v4622 = vperm.slane %v4610, 3
  %v4623 = vperm.slane %v4610, 4
  %v4624 = vperm.slane %v4610, 5
  %v4625 = vperm.slane %v4610, 6
  %v4626 = vperm.slane %v4610, 7
  %v4643 = vmul.f32 %v4581, %v4611
  %v4644 = vmul.f32 %v4582, %v4612
  %v4645 = vmul.f32 %v4583, %v4613
  %v4646 = vmul.f32 %v4584, %v4614
  %v4647 = vmul.f32 %v4585, %v4615
  %v4648 = vmul.f32 %v4586, %v4616
  %v4649 = vmul.f32 %v4587, %v4617
  %v4650 = vmul.f32 %v4588, %v4618
  %v4651 = vmul.f32 %v4589, %v4619
  %v4652 = vmul.f32 %v4590, %v4620
  %v4653 = vmul.f32 %v4591, %v4621
  %v4654 = vmul.f32 %v4592, %v4622
  %v4655 = vmul.f32 %v4593, %v4623
  %v4656 = vmul.f32 %v4594, %v4624
  %v4657 = vmul.f32 %v4595, %v4625
  %v4658 = vmul.f32 %v4596, %v4626
  %4659 = vst [vmem:[%s3 + $0x4] sm:$0x1] %v4643
  %4660 = vst [vmem:[%s3 + $0xc] sm:$0x1] %v4644
  %4661 = vst [vmem:[%s3 + $0x14] sm:$0x1] %v4645
  %4662 = vst [vmem:[%s3 + $0x1c] sm:$0x1] %v4646
  %4663 = vst [vmem:[%s3 + $0x24] sm:$0x1] %v4647
  %4664 = vst [vmem:[%s3 + $0x2c] sm:$0x1] %v4648
  %4665 = vst [vmem:[%s3 + $0x34] sm:$0x1] %v4649
  %4666 = vst [vmem:[%s3 + $0x3c] sm:$0x1] %v4650
  %4667 = vst [vmem:[%s3 + $0x44] sm:$0x1] %v4651
  %4668 = vst [vmem:[%s3 + $0x4c] sm:$0x1] %v4652
  %4669 = vst [vmem:[%s3 + $0x54] sm:$0x1] %v4653
  %4670 = vst [vmem:[%s3 + $0x5c] sm:$0x1] %v4654
  %4671 = vst [vmem:[%s3 + $0x64] sm:$0x1] %v4655
  %4672 = vst [vmem:[%s3 + $0x6c] sm:$0x1] %v4656
  %4673 = vst [vmem:[%s3 + $0x74] sm:$0x1] %v4657
  %4674 = vst [vmem:[%s3 + $0x7c] sm:$0x1] %v4658
  %s4675 = scalar_lea.vmem %s1, 5
  %v4676 = vld [vmem:[%s4675] ss:$8 sm:$0xf]
  %s4677 = scalar_lea.vmem %s1, 37
  %v4678 = vld [vmem:[%s4677] ss:$8 sm:$0xf]
  %s4679 = scalar_lea.vmem %s1, 69
  %v4680 = vld [vmem:[%s4679] ss:$8 sm:$0xf]
  %s4681 = scalar_lea.vmem %s1, 101
  %v4682 = vld [vmem:[%s4681] ss:$8 sm:$0xf]
  %s4683 = scalar_lea.vmem %s1, 133
  %v4684 = vld [vmem:[%s4683] ss:$8 sm:$0xf]
  %s4685 = scalar_lea.vmem %s1, 165
  %v4686 = vld [vmem:[%s4685] ss:$8 sm:$0xf]
  %s4687 = scalar_lea.vmem %s1, 197
  %v4688 = vld [vmem:[%s4687] ss:$8 sm:$0xf]
  %s4689 = scalar_lea.vmem %s1, 229
  %v4690 = vld [vmem:[%s4689] ss:$8 sm:$0xf]
  %s4691 = scalar_lea.vmem %s1, 261
  %v4692 = vld [vmem:[%s4691] ss:$8 sm:$0xf]
  %s4693 = scalar_lea.vmem %s1, 293
  %v4694 = vld [vmem:[%s4693] ss:$8 sm:$0xf]
  %s4695 = scalar_lea.vmem %s1, 325
  %v4696 = vld [vmem:[%s4695] ss:$8 sm:$0xf]
  %s4697 = scalar_lea.vmem %s1, 357
  %v4698 = vld [vmem:[%s4697] ss:$8 sm:$0xf]
  %s4699 = scalar_lea.vmem %s1, 389
  %v4700 = vld [vmem:[%s4699] ss:$8 sm:$0xf]
  %s4701 = scalar_lea.vmem %s1, 421
  %v4702 = vld [vmem:[%s4701] ss:$8 sm:$0xf]
  %s4703 = scalar_lea.vmem %s1, 453
  %v4704 = vld [vmem:[%s4703] ss:$8 sm:$0xf]
  %s4705 = scalar_lea.vmem %s1, 485
  %v4706 = vld [vmem:[%s4705] ss:$8 sm:$0xf]
  %v4707 = vpack.c.bf16 %v4581, %v4581
  %v4708 = vpack.c.bf16 %v4582, %v4582
  %v4709 = vpack.c.bf16 %v4583, %v4583
  %v4710 = vpack.c.bf16 %v4584, %v4584
  %v4711 = vpack.c.bf16 %v4585, %v4585
  %v4712 = vpack.c.bf16 %v4586, %v4586
  %v4713 = vpack.c.bf16 %v4587, %v4587
  %v4714 = vpack.c.bf16 %v4588, %v4588
  %v4715 = vpack.c.bf16 %v4589, %v4589
  %v4716 = vpack.c.bf16 %v4590, %v4590
  %v4717 = vpack.c.bf16 %v4591, %v4591
  %v4718 = vpack.c.bf16 %v4592, %v4592
  %v4719 = vpack.c.bf16 %v4593, %v4593
  %v4720 = vpack.c.bf16 %v4594, %v4594
  %v4721 = vpack.c.bf16 %v4595, %v4595
  %v4722 = vpack.c.bf16 %v4596, %v4596
  %v4723 = vld [vmem:[%s2] sm:$0xff]
  %v4724 = vld [vmem:[%s2 + $0x8] sm:$0xff]
  %v4725 = vld [vmem:[%s2 + $0x10] sm:$0xff]
  %v4726 = vld [vmem:[%s2 + $0x18] sm:$0xff]
  %v4727 = vld [vmem:[%s2 + $0x20] sm:$0xff]
  %v4728 = vld [vmem:[%s2 + $0x28] sm:$0xff]
  %v4729 = vld [vmem:[%s2 + $0x30] sm:$0xff]
  %v4730 = vld [vmem:[%s2 + $0x38] sm:$0xff]
  %v4731 = vld [vmem:[%s2 + $0x40] sm:$0xff]
  %v4732 = vld [vmem:[%s2 + $0x48] sm:$0xff]
  %v4733 = vld [vmem:[%s2 + $0x50] sm:$0xff]
  %v4734 = vld [vmem:[%s2 + $0x58] sm:$0xff]
  %v4735 = vld [vmem:[%s2 + $0x60] sm:$0xff]
  %v4736 = vld [vmem:[%s2 + $0x68] sm:$0xff]
  %v4737 = vld [vmem:[%s2 + $0x70] sm:$0xff]
  %v4738 = vld [vmem:[%s2 + $0x78] sm:$0xff]
  %v4739 = vld [vmem:[%s2 + $0x80] sm:$0xff]
  %v4740 = vld [vmem:[%s2 + $0x88] sm:$0xff]
  %v4741 = vld [vmem:[%s2 + $0x90] sm:$0xff]
  %v4742 = vld [vmem:[%s2 + $0x98] sm:$0xff]
  %v4743 = vld [vmem:[%s2 + $0xa0] sm:$0xff]
  %v4744 = vld [vmem:[%s2 + $0xa8] sm:$0xff]
  %v4745 = vld [vmem:[%s2 + $0xb0] sm:$0xff]
  %v4746 = vld [vmem:[%s2 + $0xb8] sm:$0xff]
  %v4747 = vld [vmem:[%s2 + $0xc0] sm:$0xff]
  %v4748 = vld [vmem:[%s2 + $0xc8] sm:$0xff]
  %v4749 = vld [vmem:[%s2 + $0xd0] sm:$0xff]
  %v4750 = vld [vmem:[%s2 + $0xd8] sm:$0xff]
  %v4751 = vld [vmem:[%s2 + $0xe0] sm:$0xff]
  %v4752 = vld [vmem:[%s2 + $0xe8] sm:$0xff]
  %v4753 = vld [vmem:[%s2 + $0xf0] sm:$0xff]
  %v4754 = vld [vmem:[%s2 + $0xf8] sm:$0xff]
  %v4771 = vunpack.c.l.b16 %v4707
  %v4772 = vunpack.c.l.b16 %v4708
  %v4773 = vunpack.c.l.b16 %v4709
  %v4774 = vunpack.c.l.b16 %v4710
  %v4775 = vunpack.c.l.b16 %v4711
  %v4776 = vunpack.c.l.b16 %v4712
  %v4777 = vunpack.c.l.b16 %v4713
  %v4778 = vunpack.c.l.b16 %v4714
  %v4779 = vunpack.c.l.b16 %v4715
  %v4780 = vunpack.c.l.b16 %v4716
  %v4781 = vunpack.c.l.b16 %v4717
  %v4782 = vunpack.c.l.b16 %v4718
  %v4783 = vunpack.c.l.b16 %v4719
  %v4784 = vunpack.c.l.b16 %v4720
  %v4785 = vunpack.c.l.b16 %v4721
  %v4786 = vunpack.c.l.b16 %v4722
  %v4787 = vrot.slane %v4772, 7
  %v4788 = vsel %vm316, %v4787, %v4771
  %v4789 = vrot.slane %v4773, 6
  %v4790 = vsel %vm312, %v4789, %v4788
  %v4791 = vrot.slane %v4774, 5
  %v4792 = vsel %vm318, %v4791, %v4790
  %v4793 = vrot.slane %v4775, 4
  %v4794 = vsel %vm324, %v4793, %v4792
  %v4795 = vrot.slane %v4776, 3
  %v4796 = vsel %vm330, %v4795, %v4794
  %v4797 = vrot.slane %v4777, 2
  %v4798 = vsel %vm336, %v4797, %v4796
  %v4799 = vrot.slane %v4778, 1
  %v4800 = vsel %vm1023, %v4799, %v4798
  %v4801 = vrot.slane %v4780, 7
  %v4802 = vsel %vm316, %v4801, %v4779
  %v4803 = vrot.slane %v4781, 6
  %v4804 = vsel %vm312, %v4803, %v4802
  %v4805 = vrot.slane %v4782, 5
  %v4806 = vsel %vm318, %v4805, %v4804
  %v4807 = vrot.slane %v4783, 4
  %v4808 = vsel %vm324, %v4807, %v4806
  %v4809 = vrot.slane %v4784, 3
  %v4810 = vsel %vm330, %v4809, %v4808
  %v4811 = vrot.slane %v4785, 2
  %v4812 = vsel %vm336, %v4811, %v4810
  %v4813 = vrot.slane %v4786, 1
  %v4814 = vsel %vm1023, %v4813, %v4812
  %v4815 = vpack.c.b16 %v4814, %v4800
  %v4849 = vunpack.c.l.b16 %v4723
  %v4850 = vunpack.c.h.b16 %v4723
  %v4851 = vunpack.c.l.b16 %v4724
  %v4852 = vunpack.c.h.b16 %v4724
  %v4853 = vunpack.c.l.b16 %v4725
  %v4854 = vunpack.c.h.b16 %v4725
  %v4855 = vunpack.c.l.b16 %v4726
  %v4856 = vunpack.c.h.b16 %v4726
  %v4857 = vunpack.c.l.b16 %v4727
  %v4858 = vunpack.c.h.b16 %v4727
  %v4859 = vunpack.c.l.b16 %v4728
  %v4860 = vunpack.c.h.b16 %v4728
  %v4861 = vunpack.c.l.b16 %v4729
  %v4862 = vunpack.c.h.b16 %v4729
  %v4863 = vunpack.c.l.b16 %v4730
  %v4864 = vunpack.c.h.b16 %v4730
  %v4865 = vunpack.c.l.b16 %v4731
  %v4866 = vunpack.c.h.b16 %v4731
  %v4867 = vunpack.c.l.b16 %v4732
  %v4868 = vunpack.c.h.b16 %v4732
  %v4869 = vunpack.c.l.b16 %v4733
  %v4870 = vunpack.c.h.b16 %v4733
  %v4871 = vunpack.c.l.b16 %v4734
  %v4872 = vunpack.c.h.b16 %v4734
  %v4873 = vunpack.c.l.b16 %v4735
  %v4874 = vunpack.c.h.b16 %v4735
  %v4875 = vunpack.c.l.b16 %v4736
  %v4876 = vunpack.c.h.b16 %v4736
  %v4877 = vunpack.c.l.b16 %v4737
  %v4878 = vunpack.c.h.b16 %v4737
  %v4879 = vunpack.c.l.b16 %v4738
  %v4880 = vunpack.c.h.b16 %v4738
  %v4881 = vunpack.c.l.b16 %v4739
  %v4882 = vunpack.c.h.b16 %v4739
  %v4883 = vunpack.c.l.b16 %v4740
  %v4884 = vunpack.c.h.b16 %v4740
  %v4885 = vunpack.c.l.b16 %v4741
  %v4886 = vunpack.c.h.b16 %v4741
  %v4887 = vunpack.c.l.b16 %v4742
  %v4888 = vunpack.c.h.b16 %v4742
  %v4889 = vunpack.c.l.b16 %v4743
  %v4890 = vunpack.c.h.b16 %v4743
  %v4891 = vunpack.c.l.b16 %v4744
  %v4892 = vunpack.c.h.b16 %v4744
  %v4893 = vunpack.c.l.b16 %v4745
  %v4894 = vunpack.c.h.b16 %v4745
  %v4895 = vunpack.c.l.b16 %v4746
  %v4896 = vunpack.c.h.b16 %v4746
  %v4897 = vunpack.c.l.b16 %v4747
  %v4898 = vunpack.c.h.b16 %v4747
  %v4899 = vunpack.c.l.b16 %v4748
  %v4900 = vunpack.c.h.b16 %v4748
  %v4901 = vunpack.c.l.b16 %v4749
  %v4902 = vunpack.c.h.b16 %v4749
  %v4903 = vunpack.c.l.b16 %v4750
  %v4904 = vunpack.c.h.b16 %v4750
  %v4905 = vunpack.c.l.b16 %v4751
  %v4906 = vunpack.c.h.b16 %v4751
  %v4907 = vunpack.c.l.b16 %v4752
  %v4908 = vunpack.c.h.b16 %v4752
  %v4909 = vunpack.c.l.b16 %v4753
  %v4910 = vunpack.c.h.b16 %v4753
  %v4911 = vunpack.c.l.b16 %v4754
  %v4912 = vunpack.c.h.b16 %v4754
  %v4913 = vpack.c.b16 %v4853, %v4849
  %v4914 = vpack.c.b16 %v4854, %v4850
  %v4915 = vpack.c.b16 %v4855, %v4851
  %v4916 = vpack.c.b16 %v4856, %v4852
  %v4917 = vpack.c.b16 %v4861, %v4857
  %v4918 = vpack.c.b16 %v4862, %v4858
  %v4919 = vpack.c.b16 %v4863, %v4859
  %v4920 = vpack.c.b16 %v4864, %v4860
  %v4921 = vpack.c.b16 %v4869, %v4865
  %v4922 = vpack.c.b16 %v4870, %v4866
  %v4923 = vpack.c.b16 %v4871, %v4867
  %v4924 = vpack.c.b16 %v4872, %v4868
  %v4925 = vpack.c.b16 %v4877, %v4873
  %v4926 = vpack.c.b16 %v4878, %v4874
  %v4927 = vpack.c.b16 %v4879, %v4875
  %v4928 = vpack.c.b16 %v4880, %v4876
  %v4929 = vpack.c.b16 %v4885, %v4881
  %v4930 = vpack.c.b16 %v4886, %v4882
  %v4931 = vpack.c.b16 %v4887, %v4883
  %v4932 = vpack.c.b16 %v4888, %v4884
  %v4933 = vpack.c.b16 %v4893, %v4889
  %v4934 = vpack.c.b16 %v4894, %v4890
  %v4935 = vpack.c.b16 %v4895, %v4891
  %v4936 = vpack.c.b16 %v4896, %v4892
  %v4937 = vpack.c.b16 %v4901, %v4897
  %v4938 = vpack.c.b16 %v4902, %v4898
  %v4939 = vpack.c.b16 %v4903, %v4899
  %v4940 = vpack.c.b16 %v4904, %v4900
  %v4941 = vpack.c.b16 %v4909, %v4905
  %v4942 = vpack.c.b16 %v4910, %v4906
  %v4943 = vpack.c.b16 %v4911, %v4907
  %v4944 = vpack.c.b16 %v4912, %v4908
  %4977 = vmatpush.bf16.msra.mxu0 %v4941
  %4978 = vmatpush.bf16.msra.mxu0 %v4937
  %4979 = vmatpush.bf16.msra.mxu0 %v4933
  %4980 = vmatpush.bf16.msra.mxu0 %v4929
  %4981 = vmatpush.bf16.msra.mxu0 %v4925
  %4982 = vmatpush.bf16.msra.mxu0 %v4921
  %4983 = vmatpush.bf16.msra.mxu0 %v4917
  %4984 = vmatpush.bf16.msra.mxu0 %v4913
  %4985 = vmatmul.bf16.gmra.mxu0 %v4815
  %v4986 = vpop.f32.mrf.mxu0
  %v4987 = vadd.f32 0.0, %v4986
  %v4988 = vpop.f32.mrf.mxu0
  %v4989 = vadd.f32 0.0, %v4988
  %4990 = vdwg.mxu0
  %4991 = vmatpush.bf16.msra.mxu0 %v4942
  %4992 = vmatpush.bf16.msra.mxu0 %v4938
  %4993 = vmatpush.bf16.msra.mxu0 %v4934
  %4994 = vmatpush.bf16.msra.mxu0 %v4930
  %4995 = vmatpush.bf16.msra.mxu0 %v4926
  %4996 = vmatpush.bf16.msra.mxu0 %v4922
  %4997 = vmatpush.bf16.msra.mxu0 %v4918
  %4998 = vmatpush.bf16.msra.mxu0 %v4914
  %4999 = vmatmul.bf16.gmra.mxu0 %v4815
  %v5000 = vpop.f32.mrf.mxu0
  %v5001 = vadd.f32 0.0, %v5000
  %v5002 = vpop.f32.mrf.mxu0
  %v5003 = vadd.f32 0.0, %v5002
  %5004 = vdwg.mxu0
  %5005 = vmatpush.bf16.msra.mxu0 %v4943
  %5006 = vmatpush.bf16.msra.mxu0 %v4939
  %5007 = vmatpush.bf16.msra.mxu0 %v4935
  %5008 = vmatpush.bf16.msra.mxu0 %v4931
  %5009 = vmatpush.bf16.msra.mxu0 %v4927
  %5010 = vmatpush.bf16.msra.mxu0 %v4923
  %5011 = vmatpush.bf16.msra.mxu0 %v4919
  %5012 = vmatpush.bf16.msra.mxu0 %v4915
  %5013 = vmatmul.bf16.gmra.mxu0 %v4815
  %v5014 = vpop.f32.mrf.mxu0
  %v5015 = vadd.f32 0.0, %v5014
  %v5016 = vpop.f32.mrf.mxu0
  %v5017 = vadd.f32 0.0, %v5016
  %5018 = vdwg.mxu0
  %5019 = vmatpush.bf16.msra.mxu0 %v4944
  %5020 = vmatpush.bf16.msra.mxu0 %v4940
  %5021 = vmatpush.bf16.msra.mxu0 %v4936
  %5022 = vmatpush.bf16.msra.mxu0 %v4932
  %5023 = vmatpush.bf16.msra.mxu0 %v4928
  %5024 = vmatpush.bf16.msra.mxu0 %v4924
  %5025 = vmatpush.bf16.msra.mxu0 %v4920
  %5026 = vmatpush.bf16.msra.mxu0 %v4916
  %5027 = vmatmul.bf16.gmra.mxu0 %v4815
  %v5028 = vpop.f32.mrf.mxu0
  %v5029 = vadd.f32 0.0, %v5028
  %v5030 = vpop.f32.mrf.mxu0
  %v5031 = vadd.f32 0.0, %v5030
  %5032 = vdwg.mxu0
  %v5041 = vrot.slane %v5001, 7
  %v5042 = vrot.slane %v5015, 6
  %v5043 = vrot.slane %v5029, 5
  %v5044 = vrot.slane %v5003, 7
  %v5045 = vrot.slane %v5017, 6
  %v5046 = vrot.slane %v5031, 5
  %v5047 = vsel %vm310, %v4987, %v5041
  %v5048 = vsel %vm312, %v5042, %v5043
  %v5049 = vsel %vm314, %v5047, %v5048
  %v5050 = vsel %vm316, %v4987, %v5041
  %v5051 = vsel %vm318, %v5042, %v5043
  %v5052 = vsel %vm320, %v5050, %v5051
  %v5053 = vrot.slane %v5052, 1
  %v5054 = vsel %vm312, %v4987, %v5041
  %v5055 = vsel %vm324, %v5042, %v5043
  %v5056 = vsel %vm326, %v5054, %v5055
  %v5057 = vrot.slane %v5056, 2
  %v5058 = vsel %vm318, %v4987, %v5041
  %v5059 = vsel %vm330, %v5042, %v5043
  %v5060 = vsel %vm332, %v5058, %v5059
  %v5061 = vrot.slane %v5060, 3
  %v5062 = vsel %vm324, %v4987, %v5041
  %v5063 = vsel %vm336, %v5042, %v5043
  %v5064 = vsel %vm338, %v5062, %v5063
  %v5065 = vrot.slane %v5064, 4
  %v5066 = vsel %vm330, %v4987, %v5041
  %v5067 = vsel %vm342, %v5043, %v5042
  %v5068 = vsel %vm344, %v5066, %v5067
  %v5069 = vrot.slane %v5068, 5
  %v5070 = vsel %vm336, %v4987, %v5041
  %v5071 = vsel %vm310, %v5042, %v5043
  %v5072 = vsel %vm349, %v5071, %v5070
  %v5073 = vrot.slane %v5072, 6
  %v5074 = vsel %vm342, %v5041, %v4987
  %v5075 = vsel %vm316, %v5042, %v5043
  %v5076 = vsel %vm354, %v5075, %v5074
  %v5077 = vrot.slane %v5076, 7
  %v5078 = vsel %vm310, %v4989, %v5044
  %v5079 = vsel %vm312, %v5045, %v5046
  %v5080 = vsel %vm314, %v5078, %v5079
  %v5081 = vsel %vm316, %v4989, %v5044
  %v5082 = vsel %vm318, %v5045, %v5046
  %v5083 = vsel %vm320, %v5081, %v5082
  %v5084 = vrot.slane %v5083, 1
  %v5085 = vsel %vm312, %v4989, %v5044
  %v5086 = vsel %vm324, %v5045, %v5046
  %v5087 = vsel %vm326, %v5085, %v5086
  %v5088 = vrot.slane %v5087, 2
  %v5089 = vsel %vm318, %v4989, %v5044
  %v5090 = vsel %vm330, %v5045, %v5046
  %v5091 = vsel %vm332, %v5089, %v5090
  %v5092 = vrot.slane %v5091, 3
  %v5093 = vsel %vm324, %v4989, %v5044
  %v5094 = vsel %vm336, %v5045, %v5046
  %v5095 = vsel %vm338, %v5093, %v5094
  %v5096 = vrot.slane %v5095, 4
  %v5097 = vsel %vm330, %v4989, %v5044
  %v5098 = vsel %vm342, %v5046, %v5045
  %v5099 = vsel %vm344, %v5097, %v5098
  %v5100 = vrot.slane %v5099, 5
  %v5101 = vsel %vm336, %v4989, %v5044
  %v5102 = vsel %vm310, %v5045, %v5046
  %v5103 = vsel %vm349, %v5102, %v5101
  %v5104 = vrot.slane %v5103, 6
  %v5105 = vsel %vm342, %v5044, %v4989
  %v5106 = vsel %vm316, %v5045, %v5046
  %v5107 = vsel %vm354, %v5106, %v5105
  %v5108 = vrot.slane %v5107, 7
  %v5125 = vadd.f32 %v4676, %v5049
  %v5126 = vadd.f32 %v4678, %v5053
  %v5127 = vadd.f32 %v4680, %v5057
  %v5128 = vadd.f32 %v4682, %v5061
  %v5129 = vadd.f32 %v4684, %v5065
  %v5130 = vadd.f32 %v4686, %v5069
  %v5131 = vadd.f32 %v4688, %v5073
  %v5132 = vadd.f32 %v4690, %v5077
  %v5133 = vadd.f32 %v4692, %v5080
  %v5134 = vadd.f32 %v4694, %v5084
  %v5135 = vadd.f32 %v4696, %v5088
  %v5136 = vadd.f32 %v4698, %v5092
  %v5137 = vadd.f32 %v4700, %v5096
  %v5138 = vadd.f32 %v4702, %v5100
  %v5139 = vadd.f32 %v4704, %v5104
  %v5140 = vadd.f32 %v4706, %v5108
  %v5141 = vmul.f32 %v5125, 0.5
  %v5142 = vmul.f32 %v5126, 0.5
  %v5143 = vmul.f32 %v5127, 0.5
  %v5144 = vmul.f32 %v5128, 0.5
  %v5145 = vmul.f32 %v5129, 0.5
  %v5146 = vmul.f32 %v5130, 0.5
  %v5147 = vmul.f32 %v5131, 0.5
  %v5148 = vmul.f32 %v5132, 0.5
  %v5149 = vmul.f32 %v5133, 0.5
  %v5150 = vmul.f32 %v5134, 0.5
  %v5151 = vmul.f32 %v5135, 0.5
  %v5152 = vmul.f32 %v5136, 0.5
  %v5153 = vmul.f32 %v5137, 0.5
  %v5154 = vmul.f32 %v5138, 0.5
  %v5155 = vmul.f32 %v5139, 0.5
  %v5156 = vmul.f32 %v5140, 0.5
  %v5157 = vtanh.pop %v5141
  %v5158 = vtanh.pop %v5142
  %v5159 = vtanh.pop %v5143
  %v5160 = vtanh.pop %v5144
  %v5161 = vtanh.pop %v5145
  %v5162 = vtanh.pop %v5146
  %v5163 = vtanh.pop %v5147
  %v5164 = vtanh.pop %v5148
  %v5165 = vtanh.pop %v5149
  %v5166 = vtanh.pop %v5150
  %v5167 = vtanh.pop %v5151
  %v5168 = vtanh.pop %v5152
  %v5169 = vtanh.pop %v5153
  %v5170 = vtanh.pop %v5154
  %v5171 = vtanh.pop %v5155
  %v5172 = vtanh.pop %v5156
  %v5173 = vmul.f32 %v5157, 0.5
  %v5174 = vmul.f32 %v5158, 0.5
  %v5175 = vmul.f32 %v5159, 0.5
  %v5176 = vmul.f32 %v5160, 0.5
  %v5177 = vmul.f32 %v5161, 0.5
  %v5178 = vmul.f32 %v5162, 0.5
  %v5179 = vmul.f32 %v5163, 0.5
  %v5180 = vmul.f32 %v5164, 0.5
  %v5181 = vmul.f32 %v5165, 0.5
  %v5182 = vmul.f32 %v5166, 0.5
  %v5183 = vmul.f32 %v5167, 0.5
  %v5184 = vmul.f32 %v5168, 0.5
  %v5185 = vmul.f32 %v5169, 0.5
  %v5186 = vmul.f32 %v5170, 0.5
  %v5187 = vmul.f32 %v5171, 0.5
  %v5188 = vmul.f32 %v5172, 0.5
  %v5189 = vadd.f32 %v5173, 0.5
  %v5190 = vadd.f32 %v5174, 0.5
  %v5191 = vadd.f32 %v5175, 0.5
  %v5192 = vadd.f32 %v5176, 0.5
  %v5193 = vadd.f32 %v5177, 0.5
  %v5194 = vadd.f32 %v5178, 0.5
  %v5195 = vadd.f32 %v5179, 0.5
  %v5196 = vadd.f32 %v5180, 0.5
  %v5197 = vadd.f32 %v5181, 0.5
  %v5198 = vadd.f32 %v5182, 0.5
  %v5199 = vadd.f32 %v5183, 0.5
  %v5200 = vadd.f32 %v5184, 0.5
  %v5201 = vadd.f32 %v5185, 0.5
  %v5202 = vadd.f32 %v5186, 0.5
  %v5203 = vadd.f32 %v5187, 0.5
  %v5204 = vadd.f32 %v5188, 0.5
  %v5221 = vrot.slane %v5125, 1
  %v5222 = vrot.slane %v5126, 1
  %v5223 = vrot.slane %v5127, 1
  %v5224 = vrot.slane %v5128, 1
  %v5225 = vrot.slane %v5129, 1
  %v5226 = vrot.slane %v5130, 1
  %v5227 = vrot.slane %v5131, 1
  %v5228 = vrot.slane %v5132, 1
  %v5229 = vrot.slane %v5133, 1
  %v5230 = vrot.slane %v5134, 1
  %v5231 = vrot.slane %v5135, 1
  %v5232 = vrot.slane %v5136, 1
  %v5233 = vrot.slane %v5137, 1
  %v5234 = vrot.slane %v5138, 1
  %v5235 = vrot.slane %v5139, 1
  %v5236 = vrot.slane %v5140, 1
  %v5253 = vmul.f32 %v5221, 0.5
  %v5254 = vmul.f32 %v5222, 0.5
  %v5255 = vmul.f32 %v5223, 0.5
  %v5256 = vmul.f32 %v5224, 0.5
  %v5257 = vmul.f32 %v5225, 0.5
  %v5258 = vmul.f32 %v5226, 0.5
  %v5259 = vmul.f32 %v5227, 0.5
  %v5260 = vmul.f32 %v5228, 0.5
  %v5261 = vmul.f32 %v5229, 0.5
  %v5262 = vmul.f32 %v5230, 0.5
  %v5263 = vmul.f32 %v5231, 0.5
  %v5264 = vmul.f32 %v5232, 0.5
  %v5265 = vmul.f32 %v5233, 0.5
  %v5266 = vmul.f32 %v5234, 0.5
  %v5267 = vmul.f32 %v5235, 0.5
  %v5268 = vmul.f32 %v5236, 0.5
  %v5269 = vtanh.pop %v5253
  %v5270 = vtanh.pop %v5254
  %v5271 = vtanh.pop %v5255
  %v5272 = vtanh.pop %v5256
  %v5273 = vtanh.pop %v5257
  %v5274 = vtanh.pop %v5258
  %v5275 = vtanh.pop %v5259
  %v5276 = vtanh.pop %v5260
  %v5277 = vtanh.pop %v5261
  %v5278 = vtanh.pop %v5262
  %v5279 = vtanh.pop %v5263
  %v5280 = vtanh.pop %v5264
  %v5281 = vtanh.pop %v5265
  %v5282 = vtanh.pop %v5266
  %v5283 = vtanh.pop %v5267
  %v5284 = vtanh.pop %v5268
  %v5285 = vmul.f32 %v5269, 0.5
  %v5286 = vmul.f32 %v5270, 0.5
  %v5287 = vmul.f32 %v5271, 0.5
  %v5288 = vmul.f32 %v5272, 0.5
  %v5289 = vmul.f32 %v5273, 0.5
  %v5290 = vmul.f32 %v5274, 0.5
  %v5291 = vmul.f32 %v5275, 0.5
  %v5292 = vmul.f32 %v5276, 0.5
  %v5293 = vmul.f32 %v5277, 0.5
  %v5294 = vmul.f32 %v5278, 0.5
  %v5295 = vmul.f32 %v5279, 0.5
  %v5296 = vmul.f32 %v5280, 0.5
  %v5297 = vmul.f32 %v5281, 0.5
  %v5298 = vmul.f32 %v5282, 0.5
  %v5299 = vmul.f32 %v5283, 0.5
  %v5300 = vmul.f32 %v5284, 0.5
  %v5301 = vadd.f32 %v5285, 0.5
  %v5302 = vadd.f32 %v5286, 0.5
  %v5303 = vadd.f32 %v5287, 0.5
  %v5304 = vadd.f32 %v5288, 0.5
  %v5305 = vadd.f32 %v5289, 0.5
  %v5306 = vadd.f32 %v5290, 0.5
  %v5307 = vadd.f32 %v5291, 0.5
  %v5308 = vadd.f32 %v5292, 0.5
  %v5309 = vadd.f32 %v5293, 0.5
  %v5310 = vadd.f32 %v5294, 0.5
  %v5311 = vadd.f32 %v5295, 0.5
  %v5312 = vadd.f32 %v5296, 0.5
  %v5313 = vadd.f32 %v5297, 0.5
  %v5314 = vadd.f32 %v5298, 0.5
  %v5315 = vadd.f32 %v5299, 0.5
  %v5316 = vadd.f32 %v5300, 0.5
  %v5317 = vrot.slane %v5125, 2
  %v5318 = vrot.slane %v5126, 2
  %v5319 = vrot.slane %v5127, 2
  %v5320 = vrot.slane %v5128, 2
  %v5321 = vrot.slane %v5129, 2
  %v5322 = vrot.slane %v5130, 2
  %v5323 = vrot.slane %v5131, 2
  %v5324 = vrot.slane %v5132, 2
  %v5325 = vrot.slane %v5133, 2
  %v5326 = vrot.slane %v5134, 2
  %v5327 = vrot.slane %v5135, 2
  %v5328 = vrot.slane %v5136, 2
  %v5329 = vrot.slane %v5137, 2
  %v5330 = vrot.slane %v5138, 2
  %v5331 = vrot.slane %v5139, 2
  %v5332 = vrot.slane %v5140, 2
  %v5349 = vtanh.pop %v5317
  %v5350 = vtanh.pop %v5318
  %v5351 = vtanh.pop %v5319
  %v5352 = vtanh.pop %v5320
  %v5353 = vtanh.pop %v5321
  %v5354 = vtanh.pop %v5322
  %v5355 = vtanh.pop %v5323
  %v5356 = vtanh.pop %v5324
  %v5357 = vtanh.pop %v5325
  %v5358 = vtanh.pop %v5326
  %v5359 = vtanh.pop %v5327
  %v5360 = vtanh.pop %v5328
  %v5361 = vtanh.pop %v5329
  %v5362 = vtanh.pop %v5330
  %v5363 = vtanh.pop %v5331
  %v5364 = vtanh.pop %v5332
  %v5365 = vrot.slane %v5125, 3
  %v5366 = vrot.slane %v5126, 3
  %v5367 = vrot.slane %v5127, 3
  %v5368 = vrot.slane %v5128, 3
  %v5369 = vrot.slane %v5129, 3
  %v5370 = vrot.slane %v5130, 3
  %v5371 = vrot.slane %v5131, 3
  %v5372 = vrot.slane %v5132, 3
  %v5373 = vrot.slane %v5133, 3
  %v5374 = vrot.slane %v5134, 3
  %v5375 = vrot.slane %v5135, 3
  %v5376 = vrot.slane %v5136, 3
  %v5377 = vrot.slane %v5137, 3
  %v5378 = vrot.slane %v5138, 3
  %v5379 = vrot.slane %v5139, 3
  %v5380 = vrot.slane %v5140, 3
  %v5397 = vmul.f32 %v5365, 0.5
  %v5398 = vmul.f32 %v5366, 0.5
  %v5399 = vmul.f32 %v5367, 0.5
  %v5400 = vmul.f32 %v5368, 0.5
  %v5401 = vmul.f32 %v5369, 0.5
  %v5402 = vmul.f32 %v5370, 0.5
  %v5403 = vmul.f32 %v5371, 0.5
  %v5404 = vmul.f32 %v5372, 0.5
  %v5405 = vmul.f32 %v5373, 0.5
  %v5406 = vmul.f32 %v5374, 0.5
  %v5407 = vmul.f32 %v5375, 0.5
  %v5408 = vmul.f32 %v5376, 0.5
  %v5409 = vmul.f32 %v5377, 0.5
  %v5410 = vmul.f32 %v5378, 0.5
  %v5411 = vmul.f32 %v5379, 0.5
  %v5412 = vmul.f32 %v5380, 0.5
  %v5413 = vtanh.pop %v5397
  %v5414 = vtanh.pop %v5398
  %v5415 = vtanh.pop %v5399
  %v5416 = vtanh.pop %v5400
  %v5417 = vtanh.pop %v5401
  %v5418 = vtanh.pop %v5402
  %v5419 = vtanh.pop %v5403
  %v5420 = vtanh.pop %v5404
  %v5421 = vtanh.pop %v5405
  %v5422 = vtanh.pop %v5406
  %v5423 = vtanh.pop %v5407
  %v5424 = vtanh.pop %v5408
  %v5425 = vtanh.pop %v5409
  %v5426 = vtanh.pop %v5410
  %v5427 = vtanh.pop %v5411
  %v5428 = vtanh.pop %v5412
  %v5429 = vmul.f32 %v5413, 0.5
  %v5430 = vmul.f32 %v5414, 0.5
  %v5431 = vmul.f32 %v5415, 0.5
  %v5432 = vmul.f32 %v5416, 0.5
  %v5433 = vmul.f32 %v5417, 0.5
  %v5434 = vmul.f32 %v5418, 0.5
  %v5435 = vmul.f32 %v5419, 0.5
  %v5436 = vmul.f32 %v5420, 0.5
  %v5437 = vmul.f32 %v5421, 0.5
  %v5438 = vmul.f32 %v5422, 0.5
  %v5439 = vmul.f32 %v5423, 0.5
  %v5440 = vmul.f32 %v5424, 0.5
  %v5441 = vmul.f32 %v5425, 0.5
  %v5442 = vmul.f32 %v5426, 0.5
  %v5443 = vmul.f32 %v5427, 0.5
  %v5444 = vmul.f32 %v5428, 0.5
  %v5445 = vadd.f32 %v5429, 0.5
  %v5446 = vadd.f32 %v5430, 0.5
  %v5447 = vadd.f32 %v5431, 0.5
  %v5448 = vadd.f32 %v5432, 0.5
  %v5449 = vadd.f32 %v5433, 0.5
  %v5450 = vadd.f32 %v5434, 0.5
  %v5451 = vadd.f32 %v5435, 0.5
  %v5452 = vadd.f32 %v5436, 0.5
  %v5453 = vadd.f32 %v5437, 0.5
  %v5454 = vadd.f32 %v5438, 0.5
  %v5455 = vadd.f32 %v5439, 0.5
  %v5456 = vadd.f32 %v5440, 0.5
  %v5457 = vadd.f32 %v5441, 0.5
  %v5458 = vadd.f32 %v5442, 0.5
  %v5459 = vadd.f32 %v5443, 0.5
  %v5460 = vadd.f32 %v5444, 0.5
  %v5461 = vmul.f32 %v5301, %v4549
  %v5462 = vmul.f32 %v5302, %v4550
  %v5463 = vmul.f32 %v5303, %v4551
  %v5464 = vmul.f32 %v5304, %v4552
  %v5465 = vmul.f32 %v5305, %v4553
  %v5466 = vmul.f32 %v5306, %v4554
  %v5467 = vmul.f32 %v5307, %v4555
  %v5468 = vmul.f32 %v5308, %v4556
  %v5469 = vmul.f32 %v5309, %v4557
  %v5470 = vmul.f32 %v5310, %v4558
  %v5471 = vmul.f32 %v5311, %v4559
  %v5472 = vmul.f32 %v5312, %v4560
  %v5473 = vmul.f32 %v5313, %v4561
  %v5474 = vmul.f32 %v5314, %v4562
  %v5475 = vmul.f32 %v5315, %v4563
  %v5476 = vmul.f32 %v5316, %v4564
  %v5477 = vmul.f32 %v5189, %v5349
  %v5478 = vmul.f32 %v5190, %v5350
  %v5479 = vmul.f32 %v5191, %v5351
  %v5480 = vmul.f32 %v5192, %v5352
  %v5481 = vmul.f32 %v5193, %v5353
  %v5482 = vmul.f32 %v5194, %v5354
  %v5483 = vmul.f32 %v5195, %v5355
  %v5484 = vmul.f32 %v5196, %v5356
  %v5485 = vmul.f32 %v5197, %v5357
  %v5486 = vmul.f32 %v5198, %v5358
  %v5487 = vmul.f32 %v5199, %v5359
  %v5488 = vmul.f32 %v5200, %v5360
  %v5489 = vmul.f32 %v5201, %v5361
  %v5490 = vmul.f32 %v5202, %v5362
  %v5491 = vmul.f32 %v5203, %v5363
  %v5492 = vmul.f32 %v5204, %v5364
  %v5493 = vadd.f32 %v5461, %v5477
  %v5494 = vadd.f32 %v5462, %v5478
  %v5495 = vadd.f32 %v5463, %v5479
  %v5496 = vadd.f32 %v5464, %v5480
  %v5497 = vadd.f32 %v5465, %v5481
  %v5498 = vadd.f32 %v5466, %v5482
  %v5499 = vadd.f32 %v5467, %v5483
  %v5500 = vadd.f32 %v5468, %v5484
  %v5501 = vadd.f32 %v5469, %v5485
  %v5502 = vadd.f32 %v5470, %v5486
  %v5503 = vadd.f32 %v5471, %v5487
  %v5504 = vadd.f32 %v5472, %v5488
  %v5505 = vadd.f32 %v5473, %v5489
  %v5506 = vadd.f32 %v5474, %v5490
  %v5507 = vadd.f32 %v5475, %v5491
  %v5508 = vadd.f32 %v5476, %v5492
  %v5509 = vtanh.pop %v5493
  %v5510 = vtanh.pop %v5494
  %v5511 = vtanh.pop %v5495
  %v5512 = vtanh.pop %v5496
  %v5513 = vtanh.pop %v5497
  %v5514 = vtanh.pop %v5498
  %v5515 = vtanh.pop %v5499
  %v5516 = vtanh.pop %v5500
  %v5517 = vtanh.pop %v5501
  %v5518 = vtanh.pop %v5502
  %v5519 = vtanh.pop %v5503
  %v5520 = vtanh.pop %v5504
  %v5521 = vtanh.pop %v5505
  %v5522 = vtanh.pop %v5506
  %v5523 = vtanh.pop %v5507
  %v5524 = vtanh.pop %v5508
  %v5525 = vmul.f32 %v5445, %v5509
  %v5526 = vmul.f32 %v5446, %v5510
  %v5527 = vmul.f32 %v5447, %v5511
  %v5528 = vmul.f32 %v5448, %v5512
  %v5529 = vmul.f32 %v5449, %v5513
  %v5530 = vmul.f32 %v5450, %v5514
  %v5531 = vmul.f32 %v5451, %v5515
  %v5532 = vmul.f32 %v5452, %v5516
  %v5533 = vmul.f32 %v5453, %v5517
  %v5534 = vmul.f32 %v5454, %v5518
  %v5535 = vmul.f32 %v5455, %v5519
  %v5536 = vmul.f32 %v5456, %v5520
  %v5537 = vmul.f32 %v5457, %v5521
  %v5538 = vmul.f32 %v5458, %v5522
  %v5539 = vmul.f32 %v5459, %v5523
  %v5540 = vmul.f32 %v5460, %v5524
  %vm5541 = vcmp.gt.s32.totalorder %v15, 5
  %vm5542 = vcmp.gt.s32.totalorder %v16, 5
  %v5543 = vsel %vm5541, 1, 0
  %v5544 = vsel %vm5542, 1, 0
  %v5545 = vcvt.s32.f32 %v5543
  %v5546 = vcvt.s32.f32 %v5544
  %5548 = vset.pattern.permute.xlu0 0
  %5549 = vperm.xlu0 %5548, %v5545
  %v5550 = vpop.permute.xlu0 %5549
  %5552 = vset.pattern.permute.xlu0 0
  %5553 = vperm.xlu0 %5552, %v5546
  %v5554 = vpop.permute.xlu0 %5553
  %v5555 = vperm.slane %v5550, 0
  %v5556 = vperm.slane %v5550, 1
  %v5557 = vperm.slane %v5550, 2
  %v5558 = vperm.slane %v5550, 3
  %v5559 = vperm.slane %v5550, 4
  %v5560 = vperm.slane %v5550, 5
  %v5561 = vperm.slane %v5550, 6
  %v5562 = vperm.slane %v5550, 7
  %v5563 = vperm.slane %v5554, 0
  %v5564 = vperm.slane %v5554, 1
  %v5565 = vperm.slane %v5554, 2
  %v5566 = vperm.slane %v5554, 3
  %v5567 = vperm.slane %v5554, 4
  %v5568 = vperm.slane %v5554, 5
  %v5569 = vperm.slane %v5554, 6
  %v5570 = vperm.slane %v5554, 7
  %v5587 = vmul.f32 %v5525, %v5555
  %v5588 = vmul.f32 %v5526, %v5556
  %v5589 = vmul.f32 %v5527, %v5557
  %v5590 = vmul.f32 %v5528, %v5558
  %v5591 = vmul.f32 %v5529, %v5559
  %v5592 = vmul.f32 %v5530, %v5560
  %v5593 = vmul.f32 %v5531, %v5561
  %v5594 = vmul.f32 %v5532, %v5562
  %v5595 = vmul.f32 %v5533, %v5563
  %v5596 = vmul.f32 %v5534, %v5564
  %v5597 = vmul.f32 %v5535, %v5565
  %v5598 = vmul.f32 %v5536, %v5566
  %v5599 = vmul.f32 %v5537, %v5567
  %v5600 = vmul.f32 %v5538, %v5568
  %v5601 = vmul.f32 %v5539, %v5569
  %v5602 = vmul.f32 %v5540, %v5570
  %5603 = vst [vmem:[%s3 + $0x5] sm:$0x1] %v5587
  %5604 = vst [vmem:[%s3 + $0xd] sm:$0x1] %v5588
  %5605 = vst [vmem:[%s3 + $0x15] sm:$0x1] %v5589
  %5606 = vst [vmem:[%s3 + $0x1d] sm:$0x1] %v5590
  %5607 = vst [vmem:[%s3 + $0x25] sm:$0x1] %v5591
  %5608 = vst [vmem:[%s3 + $0x2d] sm:$0x1] %v5592
  %5609 = vst [vmem:[%s3 + $0x35] sm:$0x1] %v5593
  %5610 = vst [vmem:[%s3 + $0x3d] sm:$0x1] %v5594
  %5611 = vst [vmem:[%s3 + $0x45] sm:$0x1] %v5595
  %5612 = vst [vmem:[%s3 + $0x4d] sm:$0x1] %v5596
  %5613 = vst [vmem:[%s3 + $0x55] sm:$0x1] %v5597
  %5614 = vst [vmem:[%s3 + $0x5d] sm:$0x1] %v5598
  %5615 = vst [vmem:[%s3 + $0x65] sm:$0x1] %v5599
  %5616 = vst [vmem:[%s3 + $0x6d] sm:$0x1] %v5600
  %5617 = vst [vmem:[%s3 + $0x75] sm:$0x1] %v5601
  %5618 = vst [vmem:[%s3 + $0x7d] sm:$0x1] %v5602
  %s5619 = scalar_lea.vmem %s1, 6
  %v5620 = vld [vmem:[%s5619] ss:$8 sm:$0xf]
  %s5621 = scalar_lea.vmem %s1, 38
  %v5622 = vld [vmem:[%s5621] ss:$8 sm:$0xf]
  %s5623 = scalar_lea.vmem %s1, 70
  %v5624 = vld [vmem:[%s5623] ss:$8 sm:$0xf]
  %s5625 = scalar_lea.vmem %s1, 102
  %v5626 = vld [vmem:[%s5625] ss:$8 sm:$0xf]
  %s5627 = scalar_lea.vmem %s1, 134
  %v5628 = vld [vmem:[%s5627] ss:$8 sm:$0xf]
  %s5629 = scalar_lea.vmem %s1, 166
  %v5630 = vld [vmem:[%s5629] ss:$8 sm:$0xf]
  %s5631 = scalar_lea.vmem %s1, 198
  %v5632 = vld [vmem:[%s5631] ss:$8 sm:$0xf]
  %s5633 = scalar_lea.vmem %s1, 230
  %v5634 = vld [vmem:[%s5633] ss:$8 sm:$0xf]
  %s5635 = scalar_lea.vmem %s1, 262
  %v5636 = vld [vmem:[%s5635] ss:$8 sm:$0xf]
  %s5637 = scalar_lea.vmem %s1, 294
  %v5638 = vld [vmem:[%s5637] ss:$8 sm:$0xf]
  %s5639 = scalar_lea.vmem %s1, 326
  %v5640 = vld [vmem:[%s5639] ss:$8 sm:$0xf]
  %s5641 = scalar_lea.vmem %s1, 358
  %v5642 = vld [vmem:[%s5641] ss:$8 sm:$0xf]
  %s5643 = scalar_lea.vmem %s1, 390
  %v5644 = vld [vmem:[%s5643] ss:$8 sm:$0xf]
  %s5645 = scalar_lea.vmem %s1, 422
  %v5646 = vld [vmem:[%s5645] ss:$8 sm:$0xf]
  %s5647 = scalar_lea.vmem %s1, 454
  %v5648 = vld [vmem:[%s5647] ss:$8 sm:$0xf]
  %s5649 = scalar_lea.vmem %s1, 486
  %v5650 = vld [vmem:[%s5649] ss:$8 sm:$0xf]
  %v5651 = vpack.c.bf16 %v5525, %v5525
  %v5652 = vpack.c.bf16 %v5526, %v5526
  %v5653 = vpack.c.bf16 %v5527, %v5527
  %v5654 = vpack.c.bf16 %v5528, %v5528
  %v5655 = vpack.c.bf16 %v5529, %v5529
  %v5656 = vpack.c.bf16 %v5530, %v5530
  %v5657 = vpack.c.bf16 %v5531, %v5531
  %v5658 = vpack.c.bf16 %v5532, %v5532
  %v5659 = vpack.c.bf16 %v5533, %v5533
  %v5660 = vpack.c.bf16 %v5534, %v5534
  %v5661 = vpack.c.bf16 %v5535, %v5535
  %v5662 = vpack.c.bf16 %v5536, %v5536
  %v5663 = vpack.c.bf16 %v5537, %v5537
  %v5664 = vpack.c.bf16 %v5538, %v5538
  %v5665 = vpack.c.bf16 %v5539, %v5539
  %v5666 = vpack.c.bf16 %v5540, %v5540
  %v5667 = vld [vmem:[%s2] sm:$0xff]
  %v5668 = vld [vmem:[%s2 + $0x8] sm:$0xff]
  %v5669 = vld [vmem:[%s2 + $0x10] sm:$0xff]
  %v5670 = vld [vmem:[%s2 + $0x18] sm:$0xff]
  %v5671 = vld [vmem:[%s2 + $0x20] sm:$0xff]
  %v5672 = vld [vmem:[%s2 + $0x28] sm:$0xff]
  %v5673 = vld [vmem:[%s2 + $0x30] sm:$0xff]
  %v5674 = vld [vmem:[%s2 + $0x38] sm:$0xff]
  %v5675 = vld [vmem:[%s2 + $0x40] sm:$0xff]
  %v5676 = vld [vmem:[%s2 + $0x48] sm:$0xff]
  %v5677 = vld [vmem:[%s2 + $0x50] sm:$0xff]
  %v5678 = vld [vmem:[%s2 + $0x58] sm:$0xff]
  %v5679 = vld [vmem:[%s2 + $0x60] sm:$0xff]
  %v5680 = vld [vmem:[%s2 + $0x68] sm:$0xff]
  %v5681 = vld [vmem:[%s2 + $0x70] sm:$0xff]
  %v5682 = vld [vmem:[%s2 + $0x78] sm:$0xff]
  %v5683 = vld [vmem:[%s2 + $0x80] sm:$0xff]
  %v5684 = vld [vmem:[%s2 + $0x88] sm:$0xff]
  %v5685 = vld [vmem:[%s2 + $0x90] sm:$0xff]
  %v5686 = vld [vmem:[%s2 + $0x98] sm:$0xff]
  %v5687 = vld [vmem:[%s2 + $0xa0] sm:$0xff]
  %v5688 = vld [vmem:[%s2 + $0xa8] sm:$0xff]
  %v5689 = vld [vmem:[%s2 + $0xb0] sm:$0xff]
  %v5690 = vld [vmem:[%s2 + $0xb8] sm:$0xff]
  %v5691 = vld [vmem:[%s2 + $0xc0] sm:$0xff]
  %v5692 = vld [vmem:[%s2 + $0xc8] sm:$0xff]
  %v5693 = vld [vmem:[%s2 + $0xd0] sm:$0xff]
  %v5694 = vld [vmem:[%s2 + $0xd8] sm:$0xff]
  %v5695 = vld [vmem:[%s2 + $0xe0] sm:$0xff]
  %v5696 = vld [vmem:[%s2 + $0xe8] sm:$0xff]
  %v5697 = vld [vmem:[%s2 + $0xf0] sm:$0xff]
  %v5698 = vld [vmem:[%s2 + $0xf8] sm:$0xff]
  %v5715 = vunpack.c.l.b16 %v5651
  %v5716 = vunpack.c.l.b16 %v5652
  %v5717 = vunpack.c.l.b16 %v5653
  %v5718 = vunpack.c.l.b16 %v5654
  %v5719 = vunpack.c.l.b16 %v5655
  %v5720 = vunpack.c.l.b16 %v5656
  %v5721 = vunpack.c.l.b16 %v5657
  %v5722 = vunpack.c.l.b16 %v5658
  %v5723 = vunpack.c.l.b16 %v5659
  %v5724 = vunpack.c.l.b16 %v5660
  %v5725 = vunpack.c.l.b16 %v5661
  %v5726 = vunpack.c.l.b16 %v5662
  %v5727 = vunpack.c.l.b16 %v5663
  %v5728 = vunpack.c.l.b16 %v5664
  %v5729 = vunpack.c.l.b16 %v5665
  %v5730 = vunpack.c.l.b16 %v5666
  %v5731 = vrot.slane %v5716, 7
  %v5732 = vsel %vm316, %v5731, %v5715
  %v5733 = vrot.slane %v5717, 6
  %v5734 = vsel %vm312, %v5733, %v5732
  %v5735 = vrot.slane %v5718, 5
  %v5736 = vsel %vm318, %v5735, %v5734
  %v5737 = vrot.slane %v5719, 4
  %v5738 = vsel %vm324, %v5737, %v5736
  %v5739 = vrot.slane %v5720, 3
  %v5740 = vsel %vm330, %v5739, %v5738
  %v5741 = vrot.slane %v5721, 2
  %v5742 = vsel %vm336, %v5741, %v5740
  %v5743 = vrot.slane %v5722, 1
  %v5744 = vsel %vm1023, %v5743, %v5742
  %v5745 = vrot.slane %v5724, 7
  %v5746 = vsel %vm316, %v5745, %v5723
  %v5747 = vrot.slane %v5725, 6
  %v5748 = vsel %vm312, %v5747, %v5746
  %v5749 = vrot.slane %v5726, 5
  %v5750 = vsel %vm318, %v5749, %v5748
  %v5751 = vrot.slane %v5727, 4
  %v5752 = vsel %vm324, %v5751, %v5750
  %v5753 = vrot.slane %v5728, 3
  %v5754 = vsel %vm330, %v5753, %v5752
  %v5755 = vrot.slane %v5729, 2
  %v5756 = vsel %vm336, %v5755, %v5754
  %v5757 = vrot.slane %v5730, 1
  %v5758 = vsel %vm1023, %v5757, %v5756
  %v5759 = vpack.c.b16 %v5758, %v5744
  %v5793 = vunpack.c.l.b16 %v5667
  %v5794 = vunpack.c.h.b16 %v5667
  %v5795 = vunpack.c.l.b16 %v5668
  %v5796 = vunpack.c.h.b16 %v5668
  %v5797 = vunpack.c.l.b16 %v5669
  %v5798 = vunpack.c.h.b16 %v5669
  %v5799 = vunpack.c.l.b16 %v5670
  %v5800 = vunpack.c.h.b16 %v5670
  %v5801 = vunpack.c.l.b16 %v5671
  %v5802 = vunpack.c.h.b16 %v5671
  %v5803 = vunpack.c.l.b16 %v5672
  %v5804 = vunpack.c.h.b16 %v5672
  %v5805 = vunpack.c.l.b16 %v5673
  %v5806 = vunpack.c.h.b16 %v5673
  %v5807 = vunpack.c.l.b16 %v5674
  %v5808 = vunpack.c.h.b16 %v5674
  %v5809 = vunpack.c.l.b16 %v5675
  %v5810 = vunpack.c.h.b16 %v5675
  %v5811 = vunpack.c.l.b16 %v5676
  %v5812 = vunpack.c.h.b16 %v5676
  %v5813 = vunpack.c.l.b16 %v5677
  %v5814 = vunpack.c.h.b16 %v5677
  %v5815 = vunpack.c.l.b16 %v5678
  %v5816 = vunpack.c.h.b16 %v5678
  %v5817 = vunpack.c.l.b16 %v5679
  %v5818 = vunpack.c.h.b16 %v5679
  %v5819 = vunpack.c.l.b16 %v5680
  %v5820 = vunpack.c.h.b16 %v5680
  %v5821 = vunpack.c.l.b16 %v5681
  %v5822 = vunpack.c.h.b16 %v5681
  %v5823 = vunpack.c.l.b16 %v5682
  %v5824 = vunpack.c.h.b16 %v5682
  %v5825 = vunpack.c.l.b16 %v5683
  %v5826 = vunpack.c.h.b16 %v5683
  %v5827 = vunpack.c.l.b16 %v5684
  %v5828 = vunpack.c.h.b16 %v5684
  %v5829 = vunpack.c.l.b16 %v5685
  %v5830 = vunpack.c.h.b16 %v5685
  %v5831 = vunpack.c.l.b16 %v5686
  %v5832 = vunpack.c.h.b16 %v5686
  %v5833 = vunpack.c.l.b16 %v5687
  %v5834 = vunpack.c.h.b16 %v5687
  %v5835 = vunpack.c.l.b16 %v5688
  %v5836 = vunpack.c.h.b16 %v5688
  %v5837 = vunpack.c.l.b16 %v5689
  %v5838 = vunpack.c.h.b16 %v5689
  %v5839 = vunpack.c.l.b16 %v5690
  %v5840 = vunpack.c.h.b16 %v5690
  %v5841 = vunpack.c.l.b16 %v5691
  %v5842 = vunpack.c.h.b16 %v5691
  %v5843 = vunpack.c.l.b16 %v5692
  %v5844 = vunpack.c.h.b16 %v5692
  %v5845 = vunpack.c.l.b16 %v5693
  %v5846 = vunpack.c.h.b16 %v5693
  %v5847 = vunpack.c.l.b16 %v5694
  %v5848 = vunpack.c.h.b16 %v5694
  %v5849 = vunpack.c.l.b16 %v5695
  %v5850 = vunpack.c.h.b16 %v5695
  %v5851 = vunpack.c.l.b16 %v5696
  %v5852 = vunpack.c.h.b16 %v5696
  %v5853 = vunpack.c.l.b16 %v5697
  %v5854 = vunpack.c.h.b16 %v5697
  %v5855 = vunpack.c.l.b16 %v5698
  %v5856 = vunpack.c.h.b16 %v5698
  %v5857 = vpack.c.b16 %v5797, %v5793
  %v5858 = vpack.c.b16 %v5798, %v5794
  %v5859 = vpack.c.b16 %v5799, %v5795
  %v5860 = vpack.c.b16 %v5800, %v5796
  %v5861 = vpack.c.b16 %v5805, %v5801
  %v5862 = vpack.c.b16 %v5806, %v5802
  %v5863 = vpack.c.b16 %v5807, %v5803
  %v5864 = vpack.c.b16 %v5808, %v5804
  %v5865 = vpack.c.b16 %v5813, %v5809
  %v5866 = vpack.c.b16 %v5814, %v5810
  %v5867 = vpack.c.b16 %v5815, %v5811
  %v5868 = vpack.c.b16 %v5816, %v5812
  %v5869 = vpack.c.b16 %v5821, %v5817
  %v5870 = vpack.c.b16 %v5822, %v5818
  %v5871 = vpack.c.b16 %v5823, %v5819
  %v5872 = vpack.c.b16 %v5824, %v5820
  %v5873 = vpack.c.b16 %v5829, %v5825
  %v5874 = vpack.c.b16 %v5830, %v5826
  %v5875 = vpack.c.b16 %v5831, %v5827
  %v5876 = vpack.c.b16 %v5832, %v5828
  %v5877 = vpack.c.b16 %v5837, %v5833
  %v5878 = vpack.c.b16 %v5838, %v5834
  %v5879 = vpack.c.b16 %v5839, %v5835
  %v5880 = vpack.c.b16 %v5840, %v5836
  %v5881 = vpack.c.b16 %v5845, %v5841
  %v5882 = vpack.c.b16 %v5846, %v5842
  %v5883 = vpack.c.b16 %v5847, %v5843
  %v5884 = vpack.c.b16 %v5848, %v5844
  %v5885 = vpack.c.b16 %v5853, %v5849
  %v5886 = vpack.c.b16 %v5854, %v5850
  %v5887 = vpack.c.b16 %v5855, %v5851
  %v5888 = vpack.c.b16 %v5856, %v5852
  %5921 = vmatpush.bf16.msra.mxu0 %v5885
  %5922 = vmatpush.bf16.msra.mxu0 %v5881
  %5923 = vmatpush.bf16.msra.mxu0 %v5877
  %5924 = vmatpush.bf16.msra.mxu0 %v5873
  %5925 = vmatpush.bf16.msra.mxu0 %v5869
  %5926 = vmatpush.bf16.msra.mxu0 %v5865
  %5927 = vmatpush.bf16.msra.mxu0 %v5861
  %5928 = vmatpush.bf16.msra.mxu0 %v5857
  %5929 = vmatmul.bf16.gmra.mxu0 %v5759
  %v5930 = vpop.f32.mrf.mxu0
  %v5931 = vadd.f32 0.0, %v5930
  %v5932 = vpop.f32.mrf.mxu0
  %v5933 = vadd.f32 0.0, %v5932
  %5934 = vdwg.mxu0
  %5935 = vmatpush.bf16.msra.mxu0 %v5886
  %5936 = vmatpush.bf16.msra.mxu0 %v5882
  %5937 = vmatpush.bf16.msra.mxu0 %v5878
  %5938 = vmatpush.bf16.msra.mxu0 %v5874
  %5939 = vmatpush.bf16.msra.mxu0 %v5870
  %5940 = vmatpush.bf16.msra.mxu0 %v5866
  %5941 = vmatpush.bf16.msra.mxu0 %v5862
  %5942 = vmatpush.bf16.msra.mxu0 %v5858
  %5943 = vmatmul.bf16.gmra.mxu0 %v5759
  %v5944 = vpop.f32.mrf.mxu0
  %v5945 = vadd.f32 0.0, %v5944
  %v5946 = vpop.f32.mrf.mxu0
  %v5947 = vadd.f32 0.0, %v5946
  %5948 = vdwg.mxu0
  %5949 = vmatpush.bf16.msra.mxu0 %v5887
  %5950 = vmatpush.bf16.msra.mxu0 %v5883
  %5951 = vmatpush.bf16.msra.mxu0 %v5879
  %5952 = vmatpush.bf16.msra.mxu0 %v5875
  %5953 = vmatpush.bf16.msra.mxu0 %v5871
  %5954 = vmatpush.bf16.msra.mxu0 %v5867
  %5955 = vmatpush.bf16.msra.mxu0 %v5863
  %5956 = vmatpush.bf16.msra.mxu0 %v5859
  %5957 = vmatmul.bf16.gmra.mxu0 %v5759
  %v5958 = vpop.f32.mrf.mxu0
  %v5959 = vadd.f32 0.0, %v5958
  %v5960 = vpop.f32.mrf.mxu0
  %v5961 = vadd.f32 0.0, %v5960
  %5962 = vdwg.mxu0
  %5963 = vmatpush.bf16.msra.mxu0 %v5888
  %5964 = vmatpush.bf16.msra.mxu0 %v5884
  %5965 = vmatpush.bf16.msra.mxu0 %v5880
  %5966 = vmatpush.bf16.msra.mxu0 %v5876
  %5967 = vmatpush.bf16.msra.mxu0 %v5872
  %5968 = vmatpush.bf16.msra.mxu0 %v5868
  %5969 = vmatpush.bf16.msra.mxu0 %v5864
  %5970 = vmatpush.bf16.msra.mxu0 %v5860
  %5971 = vmatmul.bf16.gmra.mxu0 %v5759
  %v5972 = vpop.f32.mrf.mxu0
  %v5973 = vadd.f32 0.0, %v5972
  %v5974 = vpop.f32.mrf.mxu0
  %v5975 = vadd.f32 0.0, %v5974
  %5976 = vdwg.mxu0
  %v5985 = vrot.slane %v5945, 7
  %v5986 = vrot.slane %v5959, 6
  %v5987 = vrot.slane %v5973, 5
  %v5988 = vrot.slane %v5947, 7
  %v5989 = vrot.slane %v5961, 6
  %v5990 = vrot.slane %v5975, 5
  %v5991 = vsel %vm310, %v5931, %v5985
  %v5992 = vsel %vm312, %v5986, %v5987
  %v5993 = vsel %vm314, %v5991, %v5992
  %v5994 = vsel %vm316, %v5931, %v5985
  %v5995 = vsel %vm318, %v5986, %v5987
  %v5996 = vsel %vm320, %v5994, %v5995
  %v5997 = vrot.slane %v5996, 1
  %v5998 = vsel %vm312, %v5931, %v5985
  %v5999 = vsel %vm324, %v5986, %v5987
  %v6000 = vsel %vm326, %v5998, %v5999
  %v6001 = vrot.slane %v6000, 2
  %v6002 = vsel %vm318, %v5931, %v5985
  %v6003 = vsel %vm330, %v5986, %v5987
  %v6004 = vsel %vm332, %v6002, %v6003
  %v6005 = vrot.slane %v6004, 3
  %v6006 = vsel %vm324, %v5931, %v5985
  %v6007 = vsel %vm336, %v5986, %v5987
  %v6008 = vsel %vm338, %v6006, %v6007
  %v6009 = vrot.slane %v6008, 4
  %v6010 = vsel %vm330, %v5931, %v5985
  %v6011 = vsel %vm342, %v5987, %v5986
  %v6012 = vsel %vm344, %v6010, %v6011
  %v6013 = vrot.slane %v6012, 5
  %v6014 = vsel %vm336, %v5931, %v5985
  %v6015 = vsel %vm310, %v5986, %v5987
  %v6016 = vsel %vm349, %v6015, %v6014
  %v6017 = vrot.slane %v6016, 6
  %v6018 = vsel %vm342, %v5985, %v5931
  %v6019 = vsel %vm316, %v5986, %v5987
  %v6020 = vsel %vm354, %v6019, %v6018
  %v6021 = vrot.slane %v6020, 7
  %v6022 = vsel %vm310, %v5933, %v5988
  %v6023 = vsel %vm312, %v5989, %v5990
  %v6024 = vsel %vm314, %v6022, %v6023
  %v6025 = vsel %vm316, %v5933, %v5988
  %v6026 = vsel %vm318, %v5989, %v5990
  %v6027 = vsel %vm320, %v6025, %v6026
  %v6028 = vrot.slane %v6027, 1
  %v6029 = vsel %vm312, %v5933, %v5988
  %v6030 = vsel %vm324, %v5989, %v5990
  %v6031 = vsel %vm326, %v6029, %v6030
  %v6032 = vrot.slane %v6031, 2
  %v6033 = vsel %vm318, %v5933, %v5988
  %v6034 = vsel %vm330, %v5989, %v5990
  %v6035 = vsel %vm332, %v6033, %v6034
  %v6036 = vrot.slane %v6035, 3
  %v6037 = vsel %vm324, %v5933, %v5988
  %v6038 = vsel %vm336, %v5989, %v5990
  %v6039 = vsel %vm338, %v6037, %v6038
  %v6040 = vrot.slane %v6039, 4
  %v6041 = vsel %vm330, %v5933, %v5988
  %v6042 = vsel %vm342, %v5990, %v5989
  %v6043 = vsel %vm344, %v6041, %v6042
  %v6044 = vrot.slane %v6043, 5
  %v6045 = vsel %vm336, %v5933, %v5988
  %v6046 = vsel %vm310, %v5989, %v5990
  %v6047 = vsel %vm349, %v6046, %v6045
  %v6048 = vrot.slane %v6047, 6
  %v6049 = vsel %vm342, %v5988, %v5933
  %v6050 = vsel %vm316, %v5989, %v5990
  %v6051 = vsel %vm354, %v6050, %v6049
  %v6052 = vrot.slane %v6051, 7
  %v6069 = vadd.f32 %v5620, %v5993
  %v6070 = vadd.f32 %v5622, %v5997
  %v6071 = vadd.f32 %v5624, %v6001
  %v6072 = vadd.f32 %v5626, %v6005
  %v6073 = vadd.f32 %v5628, %v6009
  %v6074 = vadd.f32 %v5630, %v6013
  %v6075 = vadd.f32 %v5632, %v6017
  %v6076 = vadd.f32 %v5634, %v6021
  %v6077 = vadd.f32 %v5636, %v6024
  %v6078 = vadd.f32 %v5638, %v6028
  %v6079 = vadd.f32 %v5640, %v6032
  %v6080 = vadd.f32 %v5642, %v6036
  %v6081 = vadd.f32 %v5644, %v6040
  %v6082 = vadd.f32 %v5646, %v6044
  %v6083 = vadd.f32 %v5648, %v6048
  %v6084 = vadd.f32 %v5650, %v6052
  %v6085 = vmul.f32 %v6069, 0.5
  %v6086 = vmul.f32 %v6070, 0.5
  %v6087 = vmul.f32 %v6071, 0.5
  %v6088 = vmul.f32 %v6072, 0.5
  %v6089 = vmul.f32 %v6073, 0.5
  %v6090 = vmul.f32 %v6074, 0.5
  %v6091 = vmul.f32 %v6075, 0.5
  %v6092 = vmul.f32 %v6076, 0.5
  %v6093 = vmul.f32 %v6077, 0.5
  %v6094 = vmul.f32 %v6078, 0.5
  %v6095 = vmul.f32 %v6079, 0.5
  %v6096 = vmul.f32 %v6080, 0.5
  %v6097 = vmul.f32 %v6081, 0.5
  %v6098 = vmul.f32 %v6082, 0.5
  %v6099 = vmul.f32 %v6083, 0.5
  %v6100 = vmul.f32 %v6084, 0.5
  %v6101 = vtanh.pop %v6085
  %v6102 = vtanh.pop %v6086
  %v6103 = vtanh.pop %v6087
  %v6104 = vtanh.pop %v6088
  %v6105 = vtanh.pop %v6089
  %v6106 = vtanh.pop %v6090
  %v6107 = vtanh.pop %v6091
  %v6108 = vtanh.pop %v6092
  %v6109 = vtanh.pop %v6093
  %v6110 = vtanh.pop %v6094
  %v6111 = vtanh.pop %v6095
  %v6112 = vtanh.pop %v6096
  %v6113 = vtanh.pop %v6097
  %v6114 = vtanh.pop %v6098
  %v6115 = vtanh.pop %v6099
  %v6116 = vtanh.pop %v6100
  %v6117 = vmul.f32 %v6101, 0.5
  %v6118 = vmul.f32 %v6102, 0.5
  %v6119 = vmul.f32 %v6103, 0.5
  %v6120 = vmul.f32 %v6104, 0.5
  %v6121 = vmul.f32 %v6105, 0.5
  %v6122 = vmul.f32 %v6106, 0.5
  %v6123 = vmul.f32 %v6107, 0.5
  %v6124 = vmul.f32 %v6108, 0.5
  %v6125 = vmul.f32 %v6109, 0.5
  %v6126 = vmul.f32 %v6110, 0.5
  %v6127 = vmul.f32 %v6111, 0.5
  %v6128 = vmul.f32 %v6112, 0.5
  %v6129 = vmul.f32 %v6113, 0.5
  %v6130 = vmul.f32 %v6114, 0.5
  %v6131 = vmul.f32 %v6115, 0.5
  %v6132 = vmul.f32 %v6116, 0.5
  %v6133 = vadd.f32 %v6117, 0.5
  %v6134 = vadd.f32 %v6118, 0.5
  %v6135 = vadd.f32 %v6119, 0.5
  %v6136 = vadd.f32 %v6120, 0.5
  %v6137 = vadd.f32 %v6121, 0.5
  %v6138 = vadd.f32 %v6122, 0.5
  %v6139 = vadd.f32 %v6123, 0.5
  %v6140 = vadd.f32 %v6124, 0.5
  %v6141 = vadd.f32 %v6125, 0.5
  %v6142 = vadd.f32 %v6126, 0.5
  %v6143 = vadd.f32 %v6127, 0.5
  %v6144 = vadd.f32 %v6128, 0.5
  %v6145 = vadd.f32 %v6129, 0.5
  %v6146 = vadd.f32 %v6130, 0.5
  %v6147 = vadd.f32 %v6131, 0.5
  %v6148 = vadd.f32 %v6132, 0.5
  %v6165 = vrot.slane %v6069, 1
  %v6166 = vrot.slane %v6070, 1
  %v6167 = vrot.slane %v6071, 1
  %v6168 = vrot.slane %v6072, 1
  %v6169 = vrot.slane %v6073, 1
  %v6170 = vrot.slane %v6074, 1
  %v6171 = vrot.slane %v6075, 1
  %v6172 = vrot.slane %v6076, 1
  %v6173 = vrot.slane %v6077, 1
  %v6174 = vrot.slane %v6078, 1
  %v6175 = vrot.slane %v6079, 1
  %v6176 = vrot.slane %v6080, 1
  %v6177 = vrot.slane %v6081, 1
  %v6178 = vrot.slane %v6082, 1
  %v6179 = vrot.slane %v6083, 1
  %v6180 = vrot.slane %v6084, 1
  %v6197 = vmul.f32 %v6165, 0.5
  %v6198 = vmul.f32 %v6166, 0.5
  %v6199 = vmul.f32 %v6167, 0.5
  %v6200 = vmul.f32 %v6168, 0.5
  %v6201 = vmul.f32 %v6169, 0.5
  %v6202 = vmul.f32 %v6170, 0.5
  %v6203 = vmul.f32 %v6171, 0.5
  %v6204 = vmul.f32 %v6172, 0.5
  %v6205 = vmul.f32 %v6173, 0.5
  %v6206 = vmul.f32 %v6174, 0.5
  %v6207 = vmul.f32 %v6175, 0.5
  %v6208 = vmul.f32 %v6176, 0.5
  %v6209 = vmul.f32 %v6177, 0.5
  %v6210 = vmul.f32 %v6178, 0.5
  %v6211 = vmul.f32 %v6179, 0.5
  %v6212 = vmul.f32 %v6180, 0.5
  %v6213 = vtanh.pop %v6197
  %v6214 = vtanh.pop %v6198
  %v6215 = vtanh.pop %v6199
  %v6216 = vtanh.pop %v6200
  %v6217 = vtanh.pop %v6201
  %v6218 = vtanh.pop %v6202
  %v6219 = vtanh.pop %v6203
  %v6220 = vtanh.pop %v6204
  %v6221 = vtanh.pop %v6205
  %v6222 = vtanh.pop %v6206
  %v6223 = vtanh.pop %v6207
  %v6224 = vtanh.pop %v6208
  %v6225 = vtanh.pop %v6209
  %v6226 = vtanh.pop %v6210
  %v6227 = vtanh.pop %v6211
  %v6228 = vtanh.pop %v6212
  %v6229 = vmul.f32 %v6213, 0.5
  %v6230 = vmul.f32 %v6214, 0.5
  %v6231 = vmul.f32 %v6215, 0.5
  %v6232 = vmul.f32 %v6216, 0.5
  %v6233 = vmul.f32 %v6217, 0.5
  %v6234 = vmul.f32 %v6218, 0.5
  %v6235 = vmul.f32 %v6219, 0.5
  %v6236 = vmul.f32 %v6220, 0.5
  %v6237 = vmul.f32 %v6221, 0.5
  %v6238 = vmul.f32 %v6222, 0.5
  %v6239 = vmul.f32 %v6223, 0.5
  %v6240 = vmul.f32 %v6224, 0.5
  %v6241 = vmul.f32 %v6225, 0.5
  %v6242 = vmul.f32 %v6226, 0.5
  %v6243 = vmul.f32 %v6227, 0.5
  %v6244 = vmul.f32 %v6228, 0.5
  %v6245 = vadd.f32 %v6229, 0.5
  %v6246 = vadd.f32 %v6230, 0.5
  %v6247 = vadd.f32 %v6231, 0.5
  %v6248 = vadd.f32 %v6232, 0.5
  %v6249 = vadd.f32 %v6233, 0.5
  %v6250 = vadd.f32 %v6234, 0.5
  %v6251 = vadd.f32 %v6235, 0.5
  %v6252 = vadd.f32 %v6236, 0.5
  %v6253 = vadd.f32 %v6237, 0.5
  %v6254 = vadd.f32 %v6238, 0.5
  %v6255 = vadd.f32 %v6239, 0.5
  %v6256 = vadd.f32 %v6240, 0.5
  %v6257 = vadd.f32 %v6241, 0.5
  %v6258 = vadd.f32 %v6242, 0.5
  %v6259 = vadd.f32 %v6243, 0.5
  %v6260 = vadd.f32 %v6244, 0.5
  %v6261 = vrot.slane %v6069, 2
  %v6262 = vrot.slane %v6070, 2
  %v6263 = vrot.slane %v6071, 2
  %v6264 = vrot.slane %v6072, 2
  %v6265 = vrot.slane %v6073, 2
  %v6266 = vrot.slane %v6074, 2
  %v6267 = vrot.slane %v6075, 2
  %v6268 = vrot.slane %v6076, 2
  %v6269 = vrot.slane %v6077, 2
  %v6270 = vrot.slane %v6078, 2
  %v6271 = vrot.slane %v6079, 2
  %v6272 = vrot.slane %v6080, 2
  %v6273 = vrot.slane %v6081, 2
  %v6274 = vrot.slane %v6082, 2
  %v6275 = vrot.slane %v6083, 2
  %v6276 = vrot.slane %v6084, 2
  %v6293 = vtanh.pop %v6261
  %v6294 = vtanh.pop %v6262
  %v6295 = vtanh.pop %v6263
  %v6296 = vtanh.pop %v6264
  %v6297 = vtanh.pop %v6265
  %v6298 = vtanh.pop %v6266
  %v6299 = vtanh.pop %v6267
  %v6300 = vtanh.pop %v6268
  %v6301 = vtanh.pop %v6269
  %v6302 = vtanh.pop %v6270
  %v6303 = vtanh.pop %v6271
  %v6304 = vtanh.pop %v6272
  %v6305 = vtanh.pop %v6273
  %v6306 = vtanh.pop %v6274
  %v6307 = vtanh.pop %v6275
  %v6308 = vtanh.pop %v6276
  %v6309 = vrot.slane %v6069, 3
  %v6310 = vrot.slane %v6070, 3
  %v6311 = vrot.slane %v6071, 3
  %v6312 = vrot.slane %v6072, 3
  %v6313 = vrot.slane %v6073, 3
  %v6314 = vrot.slane %v6074, 3
  %v6315 = vrot.slane %v6075, 3
  %v6316 = vrot.slane %v6076, 3
  %v6317 = vrot.slane %v6077, 3
  %v6318 = vrot.slane %v6078, 3
  %v6319 = vrot.slane %v6079, 3
  %v6320 = vrot.slane %v6080, 3
  %v6321 = vrot.slane %v6081, 3
  %v6322 = vrot.slane %v6082, 3
  %v6323 = vrot.slane %v6083, 3
  %v6324 = vrot.slane %v6084, 3
  %v6341 = vmul.f32 %v6309, 0.5
  %v6342 = vmul.f32 %v6310, 0.5
  %v6343 = vmul.f32 %v6311, 0.5
  %v6344 = vmul.f32 %v6312, 0.5
  %v6345 = vmul.f32 %v6313, 0.5
  %v6346 = vmul.f32 %v6314, 0.5
  %v6347 = vmul.f32 %v6315, 0.5
  %v6348 = vmul.f32 %v6316, 0.5
  %v6349 = vmul.f32 %v6317, 0.5
  %v6350 = vmul.f32 %v6318, 0.5
  %v6351 = vmul.f32 %v6319, 0.5
  %v6352 = vmul.f32 %v6320, 0.5
  %v6353 = vmul.f32 %v6321, 0.5
  %v6354 = vmul.f32 %v6322, 0.5
  %v6355 = vmul.f32 %v6323, 0.5
  %v6356 = vmul.f32 %v6324, 0.5
  %v6357 = vtanh.pop %v6341
  %v6358 = vtanh.pop %v6342
  %v6359 = vtanh.pop %v6343
  %v6360 = vtanh.pop %v6344
  %v6361 = vtanh.pop %v6345
  %v6362 = vtanh.pop %v6346
  %v6363 = vtanh.pop %v6347
  %v6364 = vtanh.pop %v6348
  %v6365 = vtanh.pop %v6349
  %v6366 = vtanh.pop %v6350
  %v6367 = vtanh.pop %v6351
  %v6368 = vtanh.pop %v6352
  %v6369 = vtanh.pop %v6353
  %v6370 = vtanh.pop %v6354
  %v6371 = vtanh.pop %v6355
  %v6372 = vtanh.pop %v6356
  %v6373 = vmul.f32 %v6357, 0.5
  %v6374 = vmul.f32 %v6358, 0.5
  %v6375 = vmul.f32 %v6359, 0.5
  %v6376 = vmul.f32 %v6360, 0.5
  %v6377 = vmul.f32 %v6361, 0.5
  %v6378 = vmul.f32 %v6362, 0.5
  %v6379 = vmul.f32 %v6363, 0.5
  %v6380 = vmul.f32 %v6364, 0.5
  %v6381 = vmul.f32 %v6365, 0.5
  %v6382 = vmul.f32 %v6366, 0.5
  %v6383 = vmul.f32 %v6367, 0.5
  %v6384 = vmul.f32 %v6368, 0.5
  %v6385 = vmul.f32 %v6369, 0.5
  %v6386 = vmul.f32 %v6370, 0.5
  %v6387 = vmul.f32 %v6371, 0.5
  %v6388 = vmul.f32 %v6372, 0.5
  %v6389 = vadd.f32 %v6373, 0.5
  %v6390 = vadd.f32 %v6374, 0.5
  %v6391 = vadd.f32 %v6375, 0.5
  %v6392 = vadd.f32 %v6376, 0.5
  %v6393 = vadd.f32 %v6377, 0.5
  %v6394 = vadd.f32 %v6378, 0.5
  %v6395 = vadd.f32 %v6379, 0.5
  %v6396 = vadd.f32 %v6380, 0.5
  %v6397 = vadd.f32 %v6381, 0.5
  %v6398 = vadd.f32 %v6382, 0.5
  %v6399 = vadd.f32 %v6383, 0.5
  %v6400 = vadd.f32 %v6384, 0.5
  %v6401 = vadd.f32 %v6385, 0.5
  %v6402 = vadd.f32 %v6386, 0.5
  %v6403 = vadd.f32 %v6387, 0.5
  %v6404 = vadd.f32 %v6388, 0.5
  %v6405 = vmul.f32 %v6245, %v5493
  %v6406 = vmul.f32 %v6246, %v5494
  %v6407 = vmul.f32 %v6247, %v5495
  %v6408 = vmul.f32 %v6248, %v5496
  %v6409 = vmul.f32 %v6249, %v5497
  %v6410 = vmul.f32 %v6250, %v5498
  %v6411 = vmul.f32 %v6251, %v5499
  %v6412 = vmul.f32 %v6252, %v5500
  %v6413 = vmul.f32 %v6253, %v5501
  %v6414 = vmul.f32 %v6254, %v5502
  %v6415 = vmul.f32 %v6255, %v5503
  %v6416 = vmul.f32 %v6256, %v5504
  %v6417 = vmul.f32 %v6257, %v5505
  %v6418 = vmul.f32 %v6258, %v5506
  %v6419 = vmul.f32 %v6259, %v5507
  %v6420 = vmul.f32 %v6260, %v5508
  %v6421 = vmul.f32 %v6133, %v6293
  %v6422 = vmul.f32 %v6134, %v6294
  %v6423 = vmul.f32 %v6135, %v6295
  %v6424 = vmul.f32 %v6136, %v6296
  %v6425 = vmul.f32 %v6137, %v6297
  %v6426 = vmul.f32 %v6138, %v6298
  %v6427 = vmul.f32 %v6139, %v6299
  %v6428 = vmul.f32 %v6140, %v6300
  %v6429 = vmul.f32 %v6141, %v6301
  %v6430 = vmul.f32 %v6142, %v6302
  %v6431 = vmul.f32 %v6143, %v6303
  %v6432 = vmul.f32 %v6144, %v6304
  %v6433 = vmul.f32 %v6145, %v6305
  %v6434 = vmul.f32 %v6146, %v6306
  %v6435 = vmul.f32 %v6147, %v6307
  %v6436 = vmul.f32 %v6148, %v6308
  %v6437 = vadd.f32 %v6405, %v6421
  %v6438 = vadd.f32 %v6406, %v6422
  %v6439 = vadd.f32 %v6407, %v6423
  %v6440 = vadd.f32 %v6408, %v6424
  %v6441 = vadd.f32 %v6409, %v6425
  %v6442 = vadd.f32 %v6410, %v6426
  %v6443 = vadd.f32 %v6411, %v6427
  %v6444 = vadd.f32 %v6412, %v6428
  %v6445 = vadd.f32 %v6413, %v6429
  %v6446 = vadd.f32 %v6414, %v6430
  %v6447 = vadd.f32 %v6415, %v6431
  %v6448 = vadd.f32 %v6416, %v6432
  %v6449 = vadd.f32 %v6417, %v6433
  %v6450 = vadd.f32 %v6418, %v6434
  %v6451 = vadd.f32 %v6419, %v6435
  %v6452 = vadd.f32 %v6420, %v6436
  %v6453 = vtanh.pop %v6437
  %v6454 = vtanh.pop %v6438
  %v6455 = vtanh.pop %v6439
  %v6456 = vtanh.pop %v6440
  %v6457 = vtanh.pop %v6441
  %v6458 = vtanh.pop %v6442
  %v6459 = vtanh.pop %v6443
  %v6460 = vtanh.pop %v6444
  %v6461 = vtanh.pop %v6445
  %v6462 = vtanh.pop %v6446
  %v6463 = vtanh.pop %v6447
  %v6464 = vtanh.pop %v6448
  %v6465 = vtanh.pop %v6449
  %v6466 = vtanh.pop %v6450
  %v6467 = vtanh.pop %v6451
  %v6468 = vtanh.pop %v6452
  %v6469 = vmul.f32 %v6389, %v6453
  %v6470 = vmul.f32 %v6390, %v6454
  %v6471 = vmul.f32 %v6391, %v6455
  %v6472 = vmul.f32 %v6392, %v6456
  %v6473 = vmul.f32 %v6393, %v6457
  %v6474 = vmul.f32 %v6394, %v6458
  %v6475 = vmul.f32 %v6395, %v6459
  %v6476 = vmul.f32 %v6396, %v6460
  %v6477 = vmul.f32 %v6397, %v6461
  %v6478 = vmul.f32 %v6398, %v6462
  %v6479 = vmul.f32 %v6399, %v6463
  %v6480 = vmul.f32 %v6400, %v6464
  %v6481 = vmul.f32 %v6401, %v6465
  %v6482 = vmul.f32 %v6402, %v6466
  %v6483 = vmul.f32 %v6403, %v6467
  %v6484 = vmul.f32 %v6404, %v6468
  %vm6485 = vcmp.gt.s32.totalorder %v15, 6
  %vm6486 = vcmp.gt.s32.totalorder %v16, 6
  %v6487 = vsel %vm6485, 1, 0
  %v6488 = vsel %vm6486, 1, 0
  %v6489 = vcvt.s32.f32 %v6487
  %v6490 = vcvt.s32.f32 %v6488
  %6492 = vset.pattern.permute.xlu0 0
  %6493 = vperm.xlu0 %6492, %v6489
  %v6494 = vpop.permute.xlu0 %6493
  %6496 = vset.pattern.permute.xlu0 0
  %6497 = vperm.xlu0 %6496, %v6490
  %v6498 = vpop.permute.xlu0 %6497
  %v6499 = vperm.slane %v6494, 0
  %v6500 = vperm.slane %v6494, 1
  %v6501 = vperm.slane %v6494, 2
  %v6502 = vperm.slane %v6494, 3
  %v6503 = vperm.slane %v6494, 4
  %v6504 = vperm.slane %v6494, 5
  %v6505 = vperm.slane %v6494, 6
  %v6506 = vperm.slane %v6494, 7
  %v6507 = vperm.slane %v6498, 0
  %v6508 = vperm.slane %v6498, 1
  %v6509 = vperm.slane %v6498, 2
  %v6510 = vperm.slane %v6498, 3
  %v6511 = vperm.slane %v6498, 4
  %v6512 = vperm.slane %v6498, 5
  %v6513 = vperm.slane %v6498, 6
  %v6514 = vperm.slane %v6498, 7
  %v6531 = vmul.f32 %v6469, %v6499
  %v6532 = vmul.f32 %v6470, %v6500
  %v6533 = vmul.f32 %v6471, %v6501
  %v6534 = vmul.f32 %v6472, %v6502
  %v6535 = vmul.f32 %v6473, %v6503
  %v6536 = vmul.f32 %v6474, %v6504
  %v6537 = vmul.f32 %v6475, %v6505
  %v6538 = vmul.f32 %v6476, %v6506
  %v6539 = vmul.f32 %v6477, %v6507
  %v6540 = vmul.f32 %v6478, %v6508
  %v6541 = vmul.f32 %v6479, %v6509
  %v6542 = vmul.f32 %v6480, %v6510
  %v6543 = vmul.f32 %v6481, %v6511
  %v6544 = vmul.f32 %v6482, %v6512
  %v6545 = vmul.f32 %v6483, %v6513
  %v6546 = vmul.f32 %v6484, %v6514
  %6547 = vst [vmem:[%s3 + $0x6] sm:$0x1] %v6531
  %6548 = vst [vmem:[%s3 + $0xe] sm:$0x1] %v6532
  %6549 = vst [vmem:[%s3 + $0x16] sm:$0x1] %v6533
  %6550 = vst [vmem:[%s3 + $0x1e] sm:$0x1] %v6534
  %6551 = vst [vmem:[%s3 + $0x26] sm:$0x1] %v6535
  %6552 = vst [vmem:[%s3 + $0x2e] sm:$0x1] %v6536
  %6553 = vst [vmem:[%s3 + $0x36] sm:$0x1] %v6537
  %6554 = vst [vmem:[%s3 + $0x3e] sm:$0x1] %v6538
  %6555 = vst [vmem:[%s3 + $0x46] sm:$0x1] %v6539
  %6556 = vst [vmem:[%s3 + $0x4e] sm:$0x1] %v6540
  %6557 = vst [vmem:[%s3 + $0x56] sm:$0x1] %v6541
  %6558 = vst [vmem:[%s3 + $0x5e] sm:$0x1] %v6542
  %6559 = vst [vmem:[%s3 + $0x66] sm:$0x1] %v6543
  %6560 = vst [vmem:[%s3 + $0x6e] sm:$0x1] %v6544
  %6561 = vst [vmem:[%s3 + $0x76] sm:$0x1] %v6545
  %6562 = vst [vmem:[%s3 + $0x7e] sm:$0x1] %v6546
  %s6563 = scalar_lea.vmem %s1, 7
  %v6564 = vld [vmem:[%s6563] ss:$8 sm:$0xf]
  %s6565 = scalar_lea.vmem %s1, 39
  %v6566 = vld [vmem:[%s6565] ss:$8 sm:$0xf]
  %s6567 = scalar_lea.vmem %s1, 71
  %v6568 = vld [vmem:[%s6567] ss:$8 sm:$0xf]
  %s6569 = scalar_lea.vmem %s1, 103
  %v6570 = vld [vmem:[%s6569] ss:$8 sm:$0xf]
  %s6571 = scalar_lea.vmem %s1, 135
  %v6572 = vld [vmem:[%s6571] ss:$8 sm:$0xf]
  %s6573 = scalar_lea.vmem %s1, 167
  %v6574 = vld [vmem:[%s6573] ss:$8 sm:$0xf]
  %s6575 = scalar_lea.vmem %s1, 199
  %v6576 = vld [vmem:[%s6575] ss:$8 sm:$0xf]
  %s6577 = scalar_lea.vmem %s1, 231
  %v6578 = vld [vmem:[%s6577] ss:$8 sm:$0xf]
  %s6579 = scalar_lea.vmem %s1, 263
  %v6580 = vld [vmem:[%s6579] ss:$8 sm:$0xf]
  %s6581 = scalar_lea.vmem %s1, 295
  %v6582 = vld [vmem:[%s6581] ss:$8 sm:$0xf]
  %s6583 = scalar_lea.vmem %s1, 327
  %v6584 = vld [vmem:[%s6583] ss:$8 sm:$0xf]
  %s6585 = scalar_lea.vmem %s1, 359
  %v6586 = vld [vmem:[%s6585] ss:$8 sm:$0xf]
  %s6587 = scalar_lea.vmem %s1, 391
  %v6588 = vld [vmem:[%s6587] ss:$8 sm:$0xf]
  %s6589 = scalar_lea.vmem %s1, 423
  %v6590 = vld [vmem:[%s6589] ss:$8 sm:$0xf]
  %s6591 = scalar_lea.vmem %s1, 455
  %v6592 = vld [vmem:[%s6591] ss:$8 sm:$0xf]
  %s6593 = scalar_lea.vmem %s1, 487
  %v6594 = vld [vmem:[%s6593] ss:$8 sm:$0xf]
  %v6595 = vpack.c.bf16 %v6469, %v6469
  %v6596 = vpack.c.bf16 %v6470, %v6470
  %v6597 = vpack.c.bf16 %v6471, %v6471
  %v6598 = vpack.c.bf16 %v6472, %v6472
  %v6599 = vpack.c.bf16 %v6473, %v6473
  %v6600 = vpack.c.bf16 %v6474, %v6474
  %v6601 = vpack.c.bf16 %v6475, %v6475
  %v6602 = vpack.c.bf16 %v6476, %v6476
  %v6603 = vpack.c.bf16 %v6477, %v6477
  %v6604 = vpack.c.bf16 %v6478, %v6478
  %v6605 = vpack.c.bf16 %v6479, %v6479
  %v6606 = vpack.c.bf16 %v6480, %v6480
  %v6607 = vpack.c.bf16 %v6481, %v6481
  %v6608 = vpack.c.bf16 %v6482, %v6482
  %v6609 = vpack.c.bf16 %v6483, %v6483
  %v6610 = vpack.c.bf16 %v6484, %v6484
  %v6611 = vld [vmem:[%s2] sm:$0xff]
  %v6612 = vld [vmem:[%s2 + $0x8] sm:$0xff]
  %v6613 = vld [vmem:[%s2 + $0x10] sm:$0xff]
  %v6614 = vld [vmem:[%s2 + $0x18] sm:$0xff]
  %v6615 = vld [vmem:[%s2 + $0x20] sm:$0xff]
  %v6616 = vld [vmem:[%s2 + $0x28] sm:$0xff]
  %v6617 = vld [vmem:[%s2 + $0x30] sm:$0xff]
  %v6618 = vld [vmem:[%s2 + $0x38] sm:$0xff]
  %v6619 = vld [vmem:[%s2 + $0x40] sm:$0xff]
  %v6620 = vld [vmem:[%s2 + $0x48] sm:$0xff]
  %v6621 = vld [vmem:[%s2 + $0x50] sm:$0xff]
  %v6622 = vld [vmem:[%s2 + $0x58] sm:$0xff]
  %v6623 = vld [vmem:[%s2 + $0x60] sm:$0xff]
  %v6624 = vld [vmem:[%s2 + $0x68] sm:$0xff]
  %v6625 = vld [vmem:[%s2 + $0x70] sm:$0xff]
  %v6626 = vld [vmem:[%s2 + $0x78] sm:$0xff]
  %v6627 = vld [vmem:[%s2 + $0x80] sm:$0xff]
  %v6628 = vld [vmem:[%s2 + $0x88] sm:$0xff]
  %v6629 = vld [vmem:[%s2 + $0x90] sm:$0xff]
  %v6630 = vld [vmem:[%s2 + $0x98] sm:$0xff]
  %v6631 = vld [vmem:[%s2 + $0xa0] sm:$0xff]
  %v6632 = vld [vmem:[%s2 + $0xa8] sm:$0xff]
  %v6633 = vld [vmem:[%s2 + $0xb0] sm:$0xff]
  %v6634 = vld [vmem:[%s2 + $0xb8] sm:$0xff]
  %v6635 = vld [vmem:[%s2 + $0xc0] sm:$0xff]
  %v6636 = vld [vmem:[%s2 + $0xc8] sm:$0xff]
  %v6637 = vld [vmem:[%s2 + $0xd0] sm:$0xff]
  %v6638 = vld [vmem:[%s2 + $0xd8] sm:$0xff]
  %v6639 = vld [vmem:[%s2 + $0xe0] sm:$0xff]
  %v6640 = vld [vmem:[%s2 + $0xe8] sm:$0xff]
  %v6641 = vld [vmem:[%s2 + $0xf0] sm:$0xff]
  %v6642 = vld [vmem:[%s2 + $0xf8] sm:$0xff]
  %v6659 = vunpack.c.l.b16 %v6595
  %v6660 = vunpack.c.l.b16 %v6596
  %v6661 = vunpack.c.l.b16 %v6597
  %v6662 = vunpack.c.l.b16 %v6598
  %v6663 = vunpack.c.l.b16 %v6599
  %v6664 = vunpack.c.l.b16 %v6600
  %v6665 = vunpack.c.l.b16 %v6601
  %v6666 = vunpack.c.l.b16 %v6602
  %v6667 = vunpack.c.l.b16 %v6603
  %v6668 = vunpack.c.l.b16 %v6604
  %v6669 = vunpack.c.l.b16 %v6605
  %v6670 = vunpack.c.l.b16 %v6606
  %v6671 = vunpack.c.l.b16 %v6607
  %v6672 = vunpack.c.l.b16 %v6608
  %v6673 = vunpack.c.l.b16 %v6609
  %v6674 = vunpack.c.l.b16 %v6610
  %v6675 = vrot.slane %v6660, 7
  %v6676 = vsel %vm316, %v6675, %v6659
  %v6677 = vrot.slane %v6661, 6
  %v6678 = vsel %vm312, %v6677, %v6676
  %v6679 = vrot.slane %v6662, 5
  %v6680 = vsel %vm318, %v6679, %v6678
  %v6681 = vrot.slane %v6663, 4
  %v6682 = vsel %vm324, %v6681, %v6680
  %v6683 = vrot.slane %v6664, 3
  %v6684 = vsel %vm330, %v6683, %v6682
  %v6685 = vrot.slane %v6665, 2
  %v6686 = vsel %vm336, %v6685, %v6684
  %v6687 = vrot.slane %v6666, 1
  %v6688 = vsel %vm1023, %v6687, %v6686
  %v6689 = vrot.slane %v6668, 7
  %v6690 = vsel %vm316, %v6689, %v6667
  %v6691 = vrot.slane %v6669, 6
  %v6692 = vsel %vm312, %v6691, %v6690
  %v6693 = vrot.slane %v6670, 5
  %v6694 = vsel %vm318, %v6693, %v6692
  %v6695 = vrot.slane %v6671, 4
  %v6696 = vsel %vm324, %v6695, %v6694
  %v6697 = vrot.slane %v6672, 3
  %v6698 = vsel %vm330, %v6697, %v6696
  %v6699 = vrot.slane %v6673, 2
  %v6700 = vsel %vm336, %v6699, %v6698
  %v6701 = vrot.slane %v6674, 1
  %v6702 = vsel %vm1023, %v6701, %v6700
  %v6703 = vpack.c.b16 %v6702, %v6688
  %v6737 = vunpack.c.l.b16 %v6611
  %v6738 = vunpack.c.h.b16 %v6611
  %v6739 = vunpack.c.l.b16 %v6612
  %v6740 = vunpack.c.h.b16 %v6612
  %v6741 = vunpack.c.l.b16 %v6613
  %v6742 = vunpack.c.h.b16 %v6613
  %v6743 = vunpack.c.l.b16 %v6614
  %v6744 = vunpack.c.h.b16 %v6614
  %v6745 = vunpack.c.l.b16 %v6615
  %v6746 = vunpack.c.h.b16 %v6615
  %v6747 = vunpack.c.l.b16 %v6616
  %v6748 = vunpack.c.h.b16 %v6616
  %v6749 = vunpack.c.l.b16 %v6617
  %v6750 = vunpack.c.h.b16 %v6617
  %v6751 = vunpack.c.l.b16 %v6618
  %v6752 = vunpack.c.h.b16 %v6618
  %v6753 = vunpack.c.l.b16 %v6619
  %v6754 = vunpack.c.h.b16 %v6619
  %v6755 = vunpack.c.l.b16 %v6620
  %v6756 = vunpack.c.h.b16 %v6620
  %v6757 = vunpack.c.l.b16 %v6621
  %v6758 = vunpack.c.h.b16 %v6621
  %v6759 = vunpack.c.l.b16 %v6622
  %v6760 = vunpack.c.h.b16 %v6622
  %v6761 = vunpack.c.l.b16 %v6623
  %v6762 = vunpack.c.h.b16 %v6623
  %v6763 = vunpack.c.l.b16 %v6624
  %v6764 = vunpack.c.h.b16 %v6624
  %v6765 = vunpack.c.l.b16 %v6625
  %v6766 = vunpack.c.h.b16 %v6625
  %v6767 = vunpack.c.l.b16 %v6626
  %v6768 = vunpack.c.h.b16 %v6626
  %v6769 = vunpack.c.l.b16 %v6627
  %v6770 = vunpack.c.h.b16 %v6627
  %v6771 = vunpack.c.l.b16 %v6628
  %v6772 = vunpack.c.h.b16 %v6628
  %v6773 = vunpack.c.l.b16 %v6629
  %v6774 = vunpack.c.h.b16 %v6629
  %v6775 = vunpack.c.l.b16 %v6630
  %v6776 = vunpack.c.h.b16 %v6630
  %v6777 = vunpack.c.l.b16 %v6631
  %v6778 = vunpack.c.h.b16 %v6631
  %v6779 = vunpack.c.l.b16 %v6632
  %v6780 = vunpack.c.h.b16 %v6632
  %v6781 = vunpack.c.l.b16 %v6633
  %v6782 = vunpack.c.h.b16 %v6633
  %v6783 = vunpack.c.l.b16 %v6634
  %v6784 = vunpack.c.h.b16 %v6634
  %v6785 = vunpack.c.l.b16 %v6635
  %v6786 = vunpack.c.h.b16 %v6635
  %v6787 = vunpack.c.l.b16 %v6636
  %v6788 = vunpack.c.h.b16 %v6636
  %v6789 = vunpack.c.l.b16 %v6637
  %v6790 = vunpack.c.h.b16 %v6637
  %v6791 = vunpack.c.l.b16 %v6638
  %v6792 = vunpack.c.h.b16 %v6638
  %v6793 = vunpack.c.l.b16 %v6639
  %v6794 = vunpack.c.h.b16 %v6639
  %v6795 = vunpack.c.l.b16 %v6640
  %v6796 = vunpack.c.h.b16 %v6640
  %v6797 = vunpack.c.l.b16 %v6641
  %v6798 = vunpack.c.h.b16 %v6641
  %v6799 = vunpack.c.l.b16 %v6642
  %v6800 = vunpack.c.h.b16 %v6642
  %v6801 = vpack.c.b16 %v6741, %v6737
  %v6802 = vpack.c.b16 %v6742, %v6738
  %v6803 = vpack.c.b16 %v6743, %v6739
  %v6804 = vpack.c.b16 %v6744, %v6740
  %v6805 = vpack.c.b16 %v6749, %v6745
  %v6806 = vpack.c.b16 %v6750, %v6746
  %v6807 = vpack.c.b16 %v6751, %v6747
  %v6808 = vpack.c.b16 %v6752, %v6748
  %v6809 = vpack.c.b16 %v6757, %v6753
  %v6810 = vpack.c.b16 %v6758, %v6754
  %v6811 = vpack.c.b16 %v6759, %v6755
  %v6812 = vpack.c.b16 %v6760, %v6756
  %v6813 = vpack.c.b16 %v6765, %v6761
  %v6814 = vpack.c.b16 %v6766, %v6762
  %v6815 = vpack.c.b16 %v6767, %v6763
  %v6816 = vpack.c.b16 %v6768, %v6764
  %v6817 = vpack.c.b16 %v6773, %v6769
  %v6818 = vpack.c.b16 %v6774, %v6770
  %v6819 = vpack.c.b16 %v6775, %v6771
  %v6820 = vpack.c.b16 %v6776, %v6772
  %v6821 = vpack.c.b16 %v6781, %v6777
  %v6822 = vpack.c.b16 %v6782, %v6778
  %v6823 = vpack.c.b16 %v6783, %v6779
  %v6824 = vpack.c.b16 %v6784, %v6780
  %v6825 = vpack.c.b16 %v6789, %v6785
  %v6826 = vpack.c.b16 %v6790, %v6786
  %v6827 = vpack.c.b16 %v6791, %v6787
  %v6828 = vpack.c.b16 %v6792, %v6788
  %v6829 = vpack.c.b16 %v6797, %v6793
  %v6830 = vpack.c.b16 %v6798, %v6794
  %v6831 = vpack.c.b16 %v6799, %v6795
  %v6832 = vpack.c.b16 %v6800, %v6796
  %6865 = vmatpush.bf16.msra.mxu0 %v6829
  %6866 = vmatpush.bf16.msra.mxu0 %v6825
  %6867 = vmatpush.bf16.msra.mxu0 %v6821
  %6868 = vmatpush.bf16.msra.mxu0 %v6817
  %6869 = vmatpush.bf16.msra.mxu0 %v6813
  %6870 = vmatpush.bf16.msra.mxu0 %v6809
  %6871 = vmatpush.bf16.msra.mxu0 %v6805
  %6872 = vmatpush.bf16.msra.mxu0 %v6801
  %6873 = vmatmul.bf16.gmra.mxu0 %v6703
  %v6874 = vpop.f32.mrf.mxu0
  %v6875 = vadd.f32 0.0, %v6874
  %v6876 = vpop.f32.mrf.mxu0
  %v6877 = vadd.f32 0.0, %v6876
  %6878 = vdwg.mxu0
  %6879 = vmatpush.bf16.msra.mxu0 %v6830
  %6880 = vmatpush.bf16.msra.mxu0 %v6826
  %6881 = vmatpush.bf16.msra.mxu0 %v6822
  %6882 = vmatpush.bf16.msra.mxu0 %v6818
  %6883 = vmatpush.bf16.msra.mxu0 %v6814
  %6884 = vmatpush.bf16.msra.mxu0 %v6810
  %6885 = vmatpush.bf16.msra.mxu0 %v6806
  %6886 = vmatpush.bf16.msra.mxu0 %v6802
  %6887 = vmatmul.bf16.gmra.mxu0 %v6703
  %v6888 = vpop.f32.mrf.mxu0
  %v6889 = vadd.f32 0.0, %v6888
  %v6890 = vpop.f32.mrf.mxu0
  %v6891 = vadd.f32 0.0, %v6890
  %6892 = vdwg.mxu0
  %6893 = vmatpush.bf16.msra.mxu0 %v6831
  %6894 = vmatpush.bf16.msra.mxu0 %v6827
  %6895 = vmatpush.bf16.msra.mxu0 %v6823
  %6896 = vmatpush.bf16.msra.mxu0 %v6819
  %6897 = vmatpush.bf16.msra.mxu0 %v6815
  %6898 = vmatpush.bf16.msra.mxu0 %v6811
  %6899 = vmatpush.bf16.msra.mxu0 %v6807
  %6900 = vmatpush.bf16.msra.mxu0 %v6803
  %6901 = vmatmul.bf16.gmra.mxu0 %v6703
  %v6902 = vpop.f32.mrf.mxu0
  %v6903 = vadd.f32 0.0, %v6902
  %v6904 = vpop.f32.mrf.mxu0
  %v6905 = vadd.f32 0.0, %v6904
  %6906 = vdwg.mxu0
  %6907 = vmatpush.bf16.msra.mxu0 %v6832
  %6908 = vmatpush.bf16.msra.mxu0 %v6828
  %6909 = vmatpush.bf16.msra.mxu0 %v6824
  %6910 = vmatpush.bf16.msra.mxu0 %v6820
  %6911 = vmatpush.bf16.msra.mxu0 %v6816
  %6912 = vmatpush.bf16.msra.mxu0 %v6812
  %6913 = vmatpush.bf16.msra.mxu0 %v6808
  %6914 = vmatpush.bf16.msra.mxu0 %v6804
  %6915 = vmatmul.bf16.gmra.mxu0 %v6703
  %v6916 = vpop.f32.mrf.mxu0
  %v6917 = vadd.f32 0.0, %v6916
  %v6918 = vpop.f32.mrf.mxu0
  %v6919 = vadd.f32 0.0, %v6918
  %6920 = vdwg.mxu0
  %v6929 = vrot.slane %v6889, 7
  %v6930 = vrot.slane %v6903, 6
  %v6931 = vrot.slane %v6917, 5
  %v6932 = vrot.slane %v6891, 7
  %v6933 = vrot.slane %v6905, 6
  %v6934 = vrot.slane %v6919, 5
  %v6935 = vsel %vm310, %v6875, %v6929
  %v6936 = vsel %vm312, %v6930, %v6931
  %v6937 = vsel %vm314, %v6935, %v6936
  %v6938 = vsel %vm316, %v6875, %v6929
  %v6939 = vsel %vm318, %v6930, %v6931
  %v6940 = vsel %vm320, %v6938, %v6939
  %v6941 = vrot.slane %v6940, 1
  %v6942 = vsel %vm312, %v6875, %v6929
  %v6943 = vsel %vm324, %v6930, %v6931
  %v6944 = vsel %vm326, %v6942, %v6943
  %v6945 = vrot.slane %v6944, 2
  %v6946 = vsel %vm318, %v6875, %v6929
  %v6947 = vsel %vm330, %v6930, %v6931
  %v6948 = vsel %vm332, %v6946, %v6947
  %v6949 = vrot.slane %v6948, 3
  %v6950 = vsel %vm324, %v6875, %v6929
  %v6951 = vsel %vm336, %v6930, %v6931
  %v6952 = vsel %vm338, %v6950, %v6951
  %v6953 = vrot.slane %v6952, 4
  %v6954 = vsel %vm330, %v6875, %v6929
  %v6955 = vsel %vm342, %v6931, %v6930
  %v6956 = vsel %vm344, %v6954, %v6955
  %v6957 = vrot.slane %v6956, 5
  %v6958 = vsel %vm336, %v6875, %v6929
  %v6959 = vsel %vm310, %v6930, %v6931
  %v6960 = vsel %vm349, %v6959, %v6958
  %v6961 = vrot.slane %v6960, 6
  %v6962 = vsel %vm342, %v6929, %v6875
  %v6963 = vsel %vm316, %v6930, %v6931
  %v6964 = vsel %vm354, %v6963, %v6962
  %v6965 = vrot.slane %v6964, 7
  %v6966 = vsel %vm310, %v6877, %v6932
  %v6967 = vsel %vm312, %v6933, %v6934
  %v6968 = vsel %vm314, %v6966, %v6967
  %v6969 = vsel %vm316, %v6877, %v6932
  %v6970 = vsel %vm318, %v6933, %v6934
  %v6971 = vsel %vm320, %v6969, %v6970
  %v6972 = vrot.slane %v6971, 1
  %v6973 = vsel %vm312, %v6877, %v6932
  %v6974 = vsel %vm324, %v6933, %v6934
  %v6975 = vsel %vm326, %v6973, %v6974
  %v6976 = vrot.slane %v6975, 2
  %v6977 = vsel %vm318, %v6877, %v6932
  %v6978 = vsel %vm330, %v6933, %v6934
  %v6979 = vsel %vm332, %v6977, %v6978
  %v6980 = vrot.slane %v6979, 3
  %v6981 = vsel %vm324, %v6877, %v6932
  %v6982 = vsel %vm336, %v6933, %v6934
  %v6983 = vsel %vm338, %v6981, %v6982
  %v6984 = vrot.slane %v6983, 4
  %v6985 = vsel %vm330, %v6877, %v6932
  %v6986 = vsel %vm342, %v6934, %v6933
  %v6987 = vsel %vm344, %v6985, %v6986
  %v6988 = vrot.slane %v6987, 5
  %v6989 = vsel %vm336, %v6877, %v6932
  %v6990 = vsel %vm310, %v6933, %v6934
  %v6991 = vsel %vm349, %v6990, %v6989
  %v6992 = vrot.slane %v6991, 6
  %v6993 = vsel %vm342, %v6932, %v6877
  %v6994 = vsel %vm316, %v6933, %v6934
  %v6995 = vsel %vm354, %v6994, %v6993
  %v6996 = vrot.slane %v6995, 7
  %v7013 = vadd.f32 %v6564, %v6937
  %v7014 = vadd.f32 %v6566, %v6941
  %v7015 = vadd.f32 %v6568, %v6945
  %v7016 = vadd.f32 %v6570, %v6949
  %v7017 = vadd.f32 %v6572, %v6953
  %v7018 = vadd.f32 %v6574, %v6957
  %v7019 = vadd.f32 %v6576, %v6961
  %v7020 = vadd.f32 %v6578, %v6965
  %v7021 = vadd.f32 %v6580, %v6968
  %v7022 = vadd.f32 %v6582, %v6972
  %v7023 = vadd.f32 %v6584, %v6976
  %v7024 = vadd.f32 %v6586, %v6980
  %v7025 = vadd.f32 %v6588, %v6984
  %v7026 = vadd.f32 %v6590, %v6988
  %v7027 = vadd.f32 %v6592, %v6992
  %v7028 = vadd.f32 %v6594, %v6996
  %v7029 = vmul.f32 %v7013, 0.5
  %v7030 = vmul.f32 %v7014, 0.5
  %v7031 = vmul.f32 %v7015, 0.5
  %v7032 = vmul.f32 %v7016, 0.5
  %v7033 = vmul.f32 %v7017, 0.5
  %v7034 = vmul.f32 %v7018, 0.5
  %v7035 = vmul.f32 %v7019, 0.5
  %v7036 = vmul.f32 %v7020, 0.5
  %v7037 = vmul.f32 %v7021, 0.5
  %v7038 = vmul.f32 %v7022, 0.5
  %v7039 = vmul.f32 %v7023, 0.5
  %v7040 = vmul.f32 %v7024, 0.5
  %v7041 = vmul.f32 %v7025, 0.5
  %v7042 = vmul.f32 %v7026, 0.5
  %v7043 = vmul.f32 %v7027, 0.5
  %v7044 = vmul.f32 %v7028, 0.5
  %v7045 = vtanh.pop %v7029
  %v7046 = vtanh.pop %v7030
  %v7047 = vtanh.pop %v7031
  %v7048 = vtanh.pop %v7032
  %v7049 = vtanh.pop %v7033
  %v7050 = vtanh.pop %v7034
  %v7051 = vtanh.pop %v7035
  %v7052 = vtanh.pop %v7036
  %v7053 = vtanh.pop %v7037
  %v7054 = vtanh.pop %v7038
  %v7055 = vtanh.pop %v7039
  %v7056 = vtanh.pop %v7040
  %v7057 = vtanh.pop %v7041
  %v7058 = vtanh.pop %v7042
  %v7059 = vtanh.pop %v7043
  %v7060 = vtanh.pop %v7044
  %v7061 = vmul.f32 %v7045, 0.5
  %v7062 = vmul.f32 %v7046, 0.5
  %v7063 = vmul.f32 %v7047, 0.5
  %v7064 = vmul.f32 %v7048, 0.5
  %v7065 = vmul.f32 %v7049, 0.5
  %v7066 = vmul.f32 %v7050, 0.5
  %v7067 = vmul.f32 %v7051, 0.5
  %v7068 = vmul.f32 %v7052, 0.5
  %v7069 = vmul.f32 %v7053, 0.5
  %v7070 = vmul.f32 %v7054, 0.5
  %v7071 = vmul.f32 %v7055, 0.5
  %v7072 = vmul.f32 %v7056, 0.5
  %v7073 = vmul.f32 %v7057, 0.5
  %v7074 = vmul.f32 %v7058, 0.5
  %v7075 = vmul.f32 %v7059, 0.5
  %v7076 = vmul.f32 %v7060, 0.5
  %v7077 = vadd.f32 %v7061, 0.5
  %v7078 = vadd.f32 %v7062, 0.5
  %v7079 = vadd.f32 %v7063, 0.5
  %v7080 = vadd.f32 %v7064, 0.5
  %v7081 = vadd.f32 %v7065, 0.5
  %v7082 = vadd.f32 %v7066, 0.5
  %v7083 = vadd.f32 %v7067, 0.5
  %v7084 = vadd.f32 %v7068, 0.5
  %v7085 = vadd.f32 %v7069, 0.5
  %v7086 = vadd.f32 %v7070, 0.5
  %v7087 = vadd.f32 %v7071, 0.5
  %v7088 = vadd.f32 %v7072, 0.5
  %v7089 = vadd.f32 %v7073, 0.5
  %v7090 = vadd.f32 %v7074, 0.5
  %v7091 = vadd.f32 %v7075, 0.5
  %v7092 = vadd.f32 %v7076, 0.5
  %v7109 = vrot.slane %v7013, 1
  %v7110 = vrot.slane %v7014, 1
  %v7111 = vrot.slane %v7015, 1
  %v7112 = vrot.slane %v7016, 1
  %v7113 = vrot.slane %v7017, 1
  %v7114 = vrot.slane %v7018, 1
  %v7115 = vrot.slane %v7019, 1
  %v7116 = vrot.slane %v7020, 1
  %v7117 = vrot.slane %v7021, 1
  %v7118 = vrot.slane %v7022, 1
  %v7119 = vrot.slane %v7023, 1
  %v7120 = vrot.slane %v7024, 1
  %v7121 = vrot.slane %v7025, 1
  %v7122 = vrot.slane %v7026, 1
  %v7123 = vrot.slane %v7027, 1
  %v7124 = vrot.slane %v7028, 1
  %v7141 = vmul.f32 %v7109, 0.5
  %v7142 = vmul.f32 %v7110, 0.5
  %v7143 = vmul.f32 %v7111, 0.5
  %v7144 = vmul.f32 %v7112, 0.5
  %v7145 = vmul.f32 %v7113, 0.5
  %v7146 = vmul.f32 %v7114, 0.5
  %v7147 = vmul.f32 %v7115, 0.5
  %v7148 = vmul.f32 %v7116, 0.5
  %v7149 = vmul.f32 %v7117, 0.5
  %v7150 = vmul.f32 %v7118, 0.5
  %v7151 = vmul.f32 %v7119, 0.5
  %v7152 = vmul.f32 %v7120, 0.5
  %v7153 = vmul.f32 %v7121, 0.5
  %v7154 = vmul.f32 %v7122, 0.5
  %v7155 = vmul.f32 %v7123, 0.5
  %v7156 = vmul.f32 %v7124, 0.5
  %v7157 = vtanh.pop %v7141
  %v7158 = vtanh.pop %v7142
  %v7159 = vtanh.pop %v7143
  %v7160 = vtanh.pop %v7144
  %v7161 = vtanh.pop %v7145
  %v7162 = vtanh.pop %v7146
  %v7163 = vtanh.pop %v7147
  %v7164 = vtanh.pop %v7148
  %v7165 = vtanh.pop %v7149
  %v7166 = vtanh.pop %v7150
  %v7167 = vtanh.pop %v7151
  %v7168 = vtanh.pop %v7152
  %v7169 = vtanh.pop %v7153
  %v7170 = vtanh.pop %v7154
  %v7171 = vtanh.pop %v7155
  %v7172 = vtanh.pop %v7156
  %v7173 = vmul.f32 %v7157, 0.5
  %v7174 = vmul.f32 %v7158, 0.5
  %v7175 = vmul.f32 %v7159, 0.5
  %v7176 = vmul.f32 %v7160, 0.5
  %v7177 = vmul.f32 %v7161, 0.5
  %v7178 = vmul.f32 %v7162, 0.5
  %v7179 = vmul.f32 %v7163, 0.5
  %v7180 = vmul.f32 %v7164, 0.5
  %v7181 = vmul.f32 %v7165, 0.5
  %v7182 = vmul.f32 %v7166, 0.5
  %v7183 = vmul.f32 %v7167, 0.5
  %v7184 = vmul.f32 %v7168, 0.5
  %v7185 = vmul.f32 %v7169, 0.5
  %v7186 = vmul.f32 %v7170, 0.5
  %v7187 = vmul.f32 %v7171, 0.5
  %v7188 = vmul.f32 %v7172, 0.5
  %v7189 = vadd.f32 %v7173, 0.5
  %v7190 = vadd.f32 %v7174, 0.5
  %v7191 = vadd.f32 %v7175, 0.5
  %v7192 = vadd.f32 %v7176, 0.5
  %v7193 = vadd.f32 %v7177, 0.5
  %v7194 = vadd.f32 %v7178, 0.5
  %v7195 = vadd.f32 %v7179, 0.5
  %v7196 = vadd.f32 %v7180, 0.5
  %v7197 = vadd.f32 %v7181, 0.5
  %v7198 = vadd.f32 %v7182, 0.5
  %v7199 = vadd.f32 %v7183, 0.5
  %v7200 = vadd.f32 %v7184, 0.5
  %v7201 = vadd.f32 %v7185, 0.5
  %v7202 = vadd.f32 %v7186, 0.5
  %v7203 = vadd.f32 %v7187, 0.5
  %v7204 = vadd.f32 %v7188, 0.5
  %v7205 = vrot.slane %v7013, 2
  %v7206 = vrot.slane %v7014, 2
  %v7207 = vrot.slane %v7015, 2
  %v7208 = vrot.slane %v7016, 2
  %v7209 = vrot.slane %v7017, 2
  %v7210 = vrot.slane %v7018, 2
  %v7211 = vrot.slane %v7019, 2
  %v7212 = vrot.slane %v7020, 2
  %v7213 = vrot.slane %v7021, 2
  %v7214 = vrot.slane %v7022, 2
  %v7215 = vrot.slane %v7023, 2
  %v7216 = vrot.slane %v7024, 2
  %v7217 = vrot.slane %v7025, 2
  %v7218 = vrot.slane %v7026, 2
  %v7219 = vrot.slane %v7027, 2
  %v7220 = vrot.slane %v7028, 2
  %v7237 = vtanh.pop %v7205
  %v7238 = vtanh.pop %v7206
  %v7239 = vtanh.pop %v7207
  %v7240 = vtanh.pop %v7208
  %v7241 = vtanh.pop %v7209
  %v7242 = vtanh.pop %v7210
  %v7243 = vtanh.pop %v7211
  %v7244 = vtanh.pop %v7212
  %v7245 = vtanh.pop %v7213
  %v7246 = vtanh.pop %v7214
  %v7247 = vtanh.pop %v7215
  %v7248 = vtanh.pop %v7216
  %v7249 = vtanh.pop %v7217
  %v7250 = vtanh.pop %v7218
  %v7251 = vtanh.pop %v7219
  %v7252 = vtanh.pop %v7220
  %v7253 = vrot.slane %v7013, 3
  %v7254 = vrot.slane %v7014, 3
  %v7255 = vrot.slane %v7015, 3
  %v7256 = vrot.slane %v7016, 3
  %v7257 = vrot.slane %v7017, 3
  %v7258 = vrot.slane %v7018, 3
  %v7259 = vrot.slane %v7019, 3
  %v7260 = vrot.slane %v7020, 3
  %v7261 = vrot.slane %v7021, 3
  %v7262 = vrot.slane %v7022, 3
  %v7263 = vrot.slane %v7023, 3
  %v7264 = vrot.slane %v7024, 3
  %v7265 = vrot.slane %v7025, 3
  %v7266 = vrot.slane %v7026, 3
  %v7267 = vrot.slane %v7027, 3
  %v7268 = vrot.slane %v7028, 3
  %v7285 = vmul.f32 %v7253, 0.5
  %v7286 = vmul.f32 %v7254, 0.5
  %v7287 = vmul.f32 %v7255, 0.5
  %v7288 = vmul.f32 %v7256, 0.5
  %v7289 = vmul.f32 %v7257, 0.5
  %v7290 = vmul.f32 %v7258, 0.5
  %v7291 = vmul.f32 %v7259, 0.5
  %v7292 = vmul.f32 %v7260, 0.5
  %v7293 = vmul.f32 %v7261, 0.5
  %v7294 = vmul.f32 %v7262, 0.5
  %v7295 = vmul.f32 %v7263, 0.5
  %v7296 = vmul.f32 %v7264, 0.5
  %v7297 = vmul.f32 %v7265, 0.5
  %v7298 = vmul.f32 %v7266, 0.5
  %v7299 = vmul.f32 %v7267, 0.5
  %v7300 = vmul.f32 %v7268, 0.5
  %v7301 = vtanh.pop %v7285
  %v7302 = vtanh.pop %v7286
  %v7303 = vtanh.pop %v7287
  %v7304 = vtanh.pop %v7288
  %v7305 = vtanh.pop %v7289
  %v7306 = vtanh.pop %v7290
  %v7307 = vtanh.pop %v7291
  %v7308 = vtanh.pop %v7292
  %v7309 = vtanh.pop %v7293
  %v7310 = vtanh.pop %v7294
  %v7311 = vtanh.pop %v7295
  %v7312 = vtanh.pop %v7296
  %v7313 = vtanh.pop %v7297
  %v7314 = vtanh.pop %v7298
  %v7315 = vtanh.pop %v7299
  %v7316 = vtanh.pop %v7300
  %v7317 = vmul.f32 %v7301, 0.5
  %v7318 = vmul.f32 %v7302, 0.5
  %v7319 = vmul.f32 %v7303, 0.5
  %v7320 = vmul.f32 %v7304, 0.5
  %v7321 = vmul.f32 %v7305, 0.5
  %v7322 = vmul.f32 %v7306, 0.5
  %v7323 = vmul.f32 %v7307, 0.5
  %v7324 = vmul.f32 %v7308, 0.5
  %v7325 = vmul.f32 %v7309, 0.5
  %v7326 = vmul.f32 %v7310, 0.5
  %v7327 = vmul.f32 %v7311, 0.5
  %v7328 = vmul.f32 %v7312, 0.5
  %v7329 = vmul.f32 %v7313, 0.5
  %v7330 = vmul.f32 %v7314, 0.5
  %v7331 = vmul.f32 %v7315, 0.5
  %v7332 = vmul.f32 %v7316, 0.5
  %v7333 = vadd.f32 %v7317, 0.5
  %v7334 = vadd.f32 %v7318, 0.5
  %v7335 = vadd.f32 %v7319, 0.5
  %v7336 = vadd.f32 %v7320, 0.5
  %v7337 = vadd.f32 %v7321, 0.5
  %v7338 = vadd.f32 %v7322, 0.5
  %v7339 = vadd.f32 %v7323, 0.5
  %v7340 = vadd.f32 %v7324, 0.5
  %v7341 = vadd.f32 %v7325, 0.5
  %v7342 = vadd.f32 %v7326, 0.5
  %v7343 = vadd.f32 %v7327, 0.5
  %v7344 = vadd.f32 %v7328, 0.5
  %v7345 = vadd.f32 %v7329, 0.5
  %v7346 = vadd.f32 %v7330, 0.5
  %v7347 = vadd.f32 %v7331, 0.5
  %v7348 = vadd.f32 %v7332, 0.5
  %v7349 = vmul.f32 %v7189, %v6437
  %v7350 = vmul.f32 %v7190, %v6438
  %v7351 = vmul.f32 %v7191, %v6439
  %v7352 = vmul.f32 %v7192, %v6440
  %v7353 = vmul.f32 %v7193, %v6441
  %v7354 = vmul.f32 %v7194, %v6442
  %v7355 = vmul.f32 %v7195, %v6443
  %v7356 = vmul.f32 %v7196, %v6444
  %v7357 = vmul.f32 %v7197, %v6445
  %v7358 = vmul.f32 %v7198, %v6446
  %v7359 = vmul.f32 %v7199, %v6447
  %v7360 = vmul.f32 %v7200, %v6448
  %v7361 = vmul.f32 %v7201, %v6449
  %v7362 = vmul.f32 %v7202, %v6450
  %v7363 = vmul.f32 %v7203, %v6451
  %v7364 = vmul.f32 %v7204, %v6452
  %v7365 = vmul.f32 %v7077, %v7237
  %v7366 = vmul.f32 %v7078, %v7238
  %v7367 = vmul.f32 %v7079, %v7239
  %v7368 = vmul.f32 %v7080, %v7240
  %v7369 = vmul.f32 %v7081, %v7241
  %v7370 = vmul.f32 %v7082, %v7242
  %v7371 = vmul.f32 %v7083, %v7243
  %v7372 = vmul.f32 %v7084, %v7244
  %v7373 = vmul.f32 %v7085, %v7245
  %v7374 = vmul.f32 %v7086, %v7246
  %v7375 = vmul.f32 %v7087, %v7247
  %v7376 = vmul.f32 %v7088, %v7248
  %v7377 = vmul.f32 %v7089, %v7249
  %v7378 = vmul.f32 %v7090, %v7250
  %v7379 = vmul.f32 %v7091, %v7251
  %v7380 = vmul.f32 %v7092, %v7252
  %v7381 = vadd.f32 %v7349, %v7365
  %v7382 = vadd.f32 %v7350, %v7366
  %v7383 = vadd.f32 %v7351, %v7367
  %v7384 = vadd.f32 %v7352, %v7368
  %v7385 = vadd.f32 %v7353, %v7369
  %v7386 = vadd.f32 %v7354, %v7370
  %v7387 = vadd.f32 %v7355, %v7371
  %v7388 = vadd.f32 %v7356, %v7372
  %v7389 = vadd.f32 %v7357, %v7373
  %v7390 = vadd.f32 %v7358, %v7374
  %v7391 = vadd.f32 %v7359, %v7375
  %v7392 = vadd.f32 %v7360, %v7376
  %v7393 = vadd.f32 %v7361, %v7377
  %v7394 = vadd.f32 %v7362, %v7378
  %v7395 = vadd.f32 %v7363, %v7379
  %v7396 = vadd.f32 %v7364, %v7380
  %v7397 = vtanh.pop %v7381
  %v7398 = vtanh.pop %v7382
  %v7399 = vtanh.pop %v7383
  %v7400 = vtanh.pop %v7384
  %v7401 = vtanh.pop %v7385
  %v7402 = vtanh.pop %v7386
  %v7403 = vtanh.pop %v7387
  %v7404 = vtanh.pop %v7388
  %v7405 = vtanh.pop %v7389
  %v7406 = vtanh.pop %v7390
  %v7407 = vtanh.pop %v7391
  %v7408 = vtanh.pop %v7392
  %v7409 = vtanh.pop %v7393
  %v7410 = vtanh.pop %v7394
  %v7411 = vtanh.pop %v7395
  %v7412 = vtanh.pop %v7396
  %v7413 = vmul.f32 %v7333, %v7397
  %v7414 = vmul.f32 %v7334, %v7398
  %v7415 = vmul.f32 %v7335, %v7399
  %v7416 = vmul.f32 %v7336, %v7400
  %v7417 = vmul.f32 %v7337, %v7401
  %v7418 = vmul.f32 %v7338, %v7402
  %v7419 = vmul.f32 %v7339, %v7403
  %v7420 = vmul.f32 %v7340, %v7404
  %v7421 = vmul.f32 %v7341, %v7405
  %v7422 = vmul.f32 %v7342, %v7406
  %v7423 = vmul.f32 %v7343, %v7407
  %v7424 = vmul.f32 %v7344, %v7408
  %v7425 = vmul.f32 %v7345, %v7409
  %v7426 = vmul.f32 %v7346, %v7410
  %v7427 = vmul.f32 %v7347, %v7411
  %v7428 = vmul.f32 %v7348, %v7412
  %vm7429 = vcmp.gt.s32.totalorder %v15, 7
  %vm7430 = vcmp.gt.s32.totalorder %v16, 7
  %v7431 = vsel %vm7429, 1, 0
  %v7432 = vsel %vm7430, 1, 0
  %v7433 = vcvt.s32.f32 %v7431
  %v7434 = vcvt.s32.f32 %v7432
  %7436 = vset.pattern.permute.xlu0 0
  %7437 = vperm.xlu0 %7436, %v7433
  %v7438 = vpop.permute.xlu0 %7437
  %7440 = vset.pattern.permute.xlu0 0
  %7441 = vperm.xlu0 %7440, %v7434
  %v7442 = vpop.permute.xlu0 %7441
  %v7443 = vperm.slane %v7438, 0
  %v7444 = vperm.slane %v7438, 1
  %v7445 = vperm.slane %v7438, 2
  %v7446 = vperm.slane %v7438, 3
  %v7447 = vperm.slane %v7438, 4
  %v7448 = vperm.slane %v7438, 5
  %v7449 = vperm.slane %v7438, 6
  %v7450 = vperm.slane %v7438, 7
  %v7451 = vperm.slane %v7442, 0
  %v7452 = vperm.slane %v7442, 1
  %v7453 = vperm.slane %v7442, 2
  %v7454 = vperm.slane %v7442, 3
  %v7455 = vperm.slane %v7442, 4
  %v7456 = vperm.slane %v7442, 5
  %v7457 = vperm.slane %v7442, 6
  %v7458 = vperm.slane %v7442, 7
  %v7475 = vmul.f32 %v7413, %v7443
  %v7476 = vmul.f32 %v7414, %v7444
  %v7477 = vmul.f32 %v7415, %v7445
  %v7478 = vmul.f32 %v7416, %v7446
  %v7479 = vmul.f32 %v7417, %v7447
  %v7480 = vmul.f32 %v7418, %v7448
  %v7481 = vmul.f32 %v7419, %v7449
  %v7482 = vmul.f32 %v7420, %v7450
  %v7483 = vmul.f32 %v7421, %v7451
  %v7484 = vmul.f32 %v7422, %v7452
  %v7485 = vmul.f32 %v7423, %v7453
  %v7486 = vmul.f32 %v7424, %v7454
  %v7487 = vmul.f32 %v7425, %v7455
  %v7488 = vmul.f32 %v7426, %v7456
  %v7489 = vmul.f32 %v7427, %v7457
  %v7490 = vmul.f32 %v7428, %v7458
  %7491 = vst [vmem:[%s3 + $0x7] sm:$0x1] %v7475
  %7492 = vst [vmem:[%s3 + $0xf] sm:$0x1] %v7476
  %7493 = vst [vmem:[%s3 + $0x17] sm:$0x1] %v7477
  %7494 = vst [vmem:[%s3 + $0x1f] sm:$0x1] %v7478
  %7495 = vst [vmem:[%s3 + $0x27] sm:$0x1] %v7479
  %7496 = vst [vmem:[%s3 + $0x2f] sm:$0x1] %v7480
  %7497 = vst [vmem:[%s3 + $0x37] sm:$0x1] %v7481
  %7498 = vst [vmem:[%s3 + $0x3f] sm:$0x1] %v7482
  %7499 = vst [vmem:[%s3 + $0x47] sm:$0x1] %v7483
  %7500 = vst [vmem:[%s3 + $0x4f] sm:$0x1] %v7484
  %7501 = vst [vmem:[%s3 + $0x57] sm:$0x1] %v7485
  %7502 = vst [vmem:[%s3 + $0x5f] sm:$0x1] %v7486
  %7503 = vst [vmem:[%s3 + $0x67] sm:$0x1] %v7487
  %7504 = vst [vmem:[%s3 + $0x6f] sm:$0x1] %v7488
  %7505 = vst [vmem:[%s3 + $0x77] sm:$0x1] %v7489
  %7506 = vst [vmem:[%s3 + $0x7f] sm:$0x1] %v7490
  // Predicated region
  $region14: #{atae_lstm_forward.4} parent=0 // pred_check
    _
  $region15: #{atae_lstm_forward.4} parent=0 // pred_check_branch
    %7508 = sbr.rel (0) target = $region17
  $region16: #{atae_lstm_forward.4} parent=0 // pred_region
    _
  $region17: #{atae_lstm_forward.4} parent=0 // pred_fallthru
    _
  // Predicated region
  $region18: #{atae_lstm_forward.4} parent=0 // pred_check
    _
  $region19: #{atae_lstm_forward.4} parent=0 // pred_check_branch
    %7510 = sbr.rel (0) target = $region21
  $region20: #{atae_lstm_forward.4} parent=0 // pred_region
    _
  $region21: #{atae_lstm_forward.4} parent=0 // pred_fallthru
    _

</llo_original>
